<compile_context>
chip_gen: v7x
topology: tpu7x:2x2x1
jax: 0.10.0
libtpu: 0.0.40
codegen_flags: <defaults>
</compile_context>

<pallas_src>
import functools

import jax
import jax.numpy as jnp
import numpy as np
from jax.experimental import pallas as pl
from jax.experimental.pallas import tpu as pltpu


# ------------------------------ Pallas kernel -------------------------------

def _conv3x3_accum(src_ref, w_ref, H, W, Cout):
    """Dense 3x3 'same' conv from a padded (H+2, W+2, Cin) VMEM ref.

    9 shifted (H*W, Cin) @ (Cin, Cout) MXU matmuls, f32 accumulation,
    bf16 operands.
    """
    acc = jnp.zeros((H * W, Cout), jnp.float32)
    for dy in range(3):
        for dx in range(3):
            patch = src_ref[dy:dy + H, dx:dx + W, :]            # (H, W, Cin)
            patch = patch.reshape(H * W, -1).astype(jnp.bfloat16)
            acc = acc + jnp.dot(patch, w_ref[dy * 3 + dx],
                                preferred_element_type=jnp.float32)
    return acc


def residual_block_kernel(x_ref, w1_ref, sb1_ref, w2_ref, sb2_ref, *rest,
                          H, W, Ho, Wo, stride, use_proj):
    """Whole residual block for one image, fully fused in VMEM.

    y   = relu(bn1(conv1(x)))        (dense; strided subsample via sel matmul)
    out = relu(bn2(conv2(y)) + skip) skip = x (identity) or conv1x1(x[::s,::s])
    """
    it = iter(rest)
    sel_ref = next(it) if stride > 1 else None
    w3_ref = next(it) if use_proj else None
    b3_ref = next(it) if use_proj else None
    o_ref = next(it)
    xp_ref = next(it)          # VMEM scratch: padded input     (H+2, W+2, Cin)
    yp_ref = next(it)          # VMEM scratch: padded activation (Ho+2, Wo+2, C)

    Cin = x_ref.shape[-1]
    C = o_ref.shape[-1]

    # ---- in-kernel zero padding of the input (no padded copy in HBM) ----
    xp_ref[...] = jnp.zeros_like(xp_ref)
    xp_ref[1:H + 1, 1:W + 1, :] = x_ref[0]

    # ---- conv1 + bn1 + relu (dense) ----
    acc1 = _conv3x3_accum(xp_ref, w1_ref, H, W, C)
    y = jnp.maximum(acc1 * sb1_ref[0:1, :] + sb1_ref[1:2, :], 0.0)

    # ---- strided subsampling: exact because BN/ReLU are elementwise ----
    if stride > 1:
        # (Ho*Wo, H*W) static 0/1 selection matrix applied on the MXU.
        y = jnp.dot(sel_ref[...], y.astype(jnp.bfloat16),
                    preferred_element_type=jnp.float32)

    # ---- in-kernel zero padding of the intermediate activation ----
    yp_ref[...] = jnp.zeros_like(yp_ref)
    yp_ref[1:Ho + 1, 1:Wo + 1, :] = y.reshape(Ho, Wo, C)

    # ---- conv2 + bn2 ----
    acc2 = _conv3x3_accum(yp_ref, w2_ref, Ho, Wo, C)
    acc2 = acc2 * sb2_ref[0:1, :] + sb2_ref[1:2, :]

    # ---- skip connection ----
    if use_proj:
        xs = x_ref[0].reshape(H * W, Cin).astype(jnp.bfloat16)
        if stride > 1:
            xs = jnp.dot(sel_ref[...], xs,
                         preferred_element_type=jnp.float32).astype(jnp.bfloat16)
        skip = jnp.dot(xs, w3_ref[...], preferred_element_type=jnp.float32)
        skip = skip + b3_ref[0:1, :]
    else:
        skip = x_ref[0].reshape(H * W, C)        # identity: stride==1, Cin==C

    o_ref[0] = jnp.maximum(acc2 + skip, 0.0).reshape(Ho, Wo, C)


# --------------------------------- forward ----------------------------------

def residual_forward(x_nchw, params, *, stride=1, use_1x1conv=False):
    """Pallas forward of Residual1 (inference mode).  NCHW in, NCHW out."""
    x = jnp.transpose(x_nchw, (0, 2, 3, 1)).astype(jnp.float32)      # NHWC
    N, H, W, Cin = x.shape
    C = params["w1"].shape[-1]
    Ho = (H - 1) // stride + 1
    Wo = (W - 1) // stride + 1
    if not use_1x1conv:
        assert stride == 1 and Cin == C, "identity skip requires matching shapes"

    kern = functools.partial(residual_block_kernel, H=H, W=W, Ho=Ho, Wo=Wo,
                             stride=stride, use_proj=use_1x1conv)

    operands = [
        x,
        params["w1"].astype(jnp.bfloat16), params["sb1"].astype(jnp.float32),
        params["w2"].astype(jnp.bfloat16), params["sb2"].astype(jnp.float32),
    ]
    in_specs = [
        pl.BlockSpec((1, H, W, Cin), lambda n: (n, 0, 0, 0)),
        pl.BlockSpec((9, Cin, C), lambda n: (0, 0, 0)),
        pl.BlockSpec((2, C), lambda n: (0, 0)),
        pl.BlockSpec((9, C, C), lambda n: (0, 0, 0)),
        pl.BlockSpec((2, C), lambda n: (0, 0)),
    ]
    if stride > 1:
        # Static row-selection matrix: dense conv1 output -> strided output.
        rows = np.arange(Ho * Wo)
        src = (rows // Wo) * (stride * W) + (rows % Wo) * stride
        sel = np.zeros((Ho * Wo, H * W), np.float32)
        sel[rows, src] = 1.0
        operands.append(jnp.asarray(sel, jnp.bfloat16))
        in_specs.append(pl.BlockSpec((Ho * Wo, H * W), lambda n: (0, 0)))
    if use_1x1conv:
        operands += [params["w3"].astype(jnp.bfloat16),
                     params["b3"].astype(jnp.float32)]
        in_specs += [pl.BlockSpec((Cin, C), lambda n: (0, 0)),
                     pl.BlockSpec((1, C), lambda n: (0, 0))]

    out = pl.pallas_call(
        kern,
        out_shape=jax.ShapeDtypeStruct((N, Ho, Wo, C), jnp.float32),
        grid=(N,),
        in_specs=in_specs,
        out_specs=pl.BlockSpec((1, Ho, Wo, C), lambda n: (n, 0, 0, 0)),
        scratch_shapes=[pltpu.VMEM((H + 2, W + 2, Cin), jnp.float32),
                        pltpu.VMEM((Ho + 2, Wo + 2, C), jnp.float32)],
        compiler_params=pltpu.CompilerParams(
            dimension_semantics=("parallel",),         # batch across TCs (v7x)
            vmem_limit_bytes=32 * 1024 * 1024),
    )(*operands)
    return jnp.transpose(out, (0, 3, 1, 2))                           # NCHW


# ------------------------------ parameter init ------------------------------

def init_params(key, cin, c, use_1x1conv, eps=1e-5):
    ks = jax.random.split(key, 14)

    def bn_fold(kg, kb, km, kv, kcb, cout):
        gamma = 1.0 + 0.1 * jax.random.normal(kg, (cout,), jnp.float32)
        beta = 0.1 * jax.random.normal(kb, (cout,), jnp.float32)
        mean = 0.1 * jax.random.normal(km, (cout,), jnp.float32)
        var = 1.0 + 0.1 * jnp.abs(jax.random.normal(kv, (cout,), jnp.float32))
        conv_b = 0.05 * jax.random.normal(kcb, (cout,), jnp.float32)
        scale = gamma / jnp.sqrt(var + eps)            # folded BN scale
        bias = beta + (conv_b - mean) * scale          # folded BN bias (+ conv bias)
        return jnp.stack([scale, bias])                # (2, cout)

    p = {
        "w1": jax.random.normal(ks[0], (9, cin, c), jnp.float32) / np.sqrt(9 * cin),
        "sb1": bn_fold(ks[1], ks[2], ks[3], ks[4], ks[5], c),
        "w2": jax.random.normal(ks[6], (9, c, c), jnp.float32) / np.sqrt(9 * c),
        "sb2": bn_fold(ks[7], ks[8], ks[9], ks[10], ks[11], c),
    }
    if use_1x1conv:
        p["w3"] = jax.random.normal(ks[12], (cin, c), jnp.float32) / np.sqrt(cin)
        p["b3"] = 0.05 * jax.random.normal(ks[13], (1, c), jnp.float32)
    return p


# ----------------------------- pure-JAX reference ---------------------------

def reference_forward(x_nchw, params, *, stride=1, use_1x1conv=False):
    x = jnp.transpose(x_nchw, (0, 2, 3, 1)).astype(jnp.float32)

    def conv3x3(z, w9, sb, s):
        cin, cout = z.shape[-1], w9.shape[-1]
        w = w9.reshape(3, 3, cin, cout)
        out = jax.lax.conv_general_dilated(
            z, w, (s, s), ((1, 1), (1, 1)),
            dimension_numbers=("NHWC", "HWIO", "NHWC"),
            precision=jax.lax.Precision.HIGHEST)
        return out * sb[0] + sb[1]

    y = jnp.maximum(conv3x3(x, params["w1"], params["sb1"], stride), 0.0)
    y = conv3x3(y, params["w2"], params["sb2"], 1)
    if use_1x1conv:
        xs = x[:, ::stride, ::stride, :]
        skip = jnp.dot(xs, params["w3"],
                       precision=jax.lax.Precision.HIGHEST) + params["b3"][0]
    else:
        skip = x
    out = jnp.maximum(y + skip, 0.0)
    return jnp.transpose(out, (0, 3, 1, 2))


# ----------------------------------- main -----------------------------------

if __name__ == "__main__":
    key = jax.random.PRNGKey(0)
    k1, k2, k3, k4 = jax.random.split(key, 4)

    # Config A: identity skip (stride=1, use_1x1conv=False), lane-dense C=128.
    N, C, S = 2, 128, 16
    xA = jax.random.normal(k1, (N, C, S, S), jnp.float32)
    pA = init_params(k2, C, C, use_1x1conv=False)
    fwdA = jax.jit(functools.partial(residual_forward, stride=1, use_1x1conv=False))
    outA = jax.block_until_ready(fwdA(xA, pA))
    assert outA.shape == (N, C, S, S)
    refA = reference_forward(xA, pA, stride=1, use_1x1conv=False)
    np.testing.assert_allclose(np.asarray(outA), np.asarray(refA),
                               rtol=2e-2, atol=2e-2)

    # Config B: projection skip (stride=2, use_1x1conv=True), channel change.
    Cin, Cout = 64, 128
    xB = jax.random.normal(k3, (N, Cin, S, S), jnp.float32)
    pB = init_params(k4, Cin, Cout, use_1x1conv=True)
    fwdB = jax.jit(functools.partial(residual_forward, stride=2, use_1x1conv=True))
    outB = jax.block_until_ready(fwdB(xB, pB))
    assert outB.shape == (N, Cout, S // 2, S // 2)
    refB = reference_forward(xB, pB, stride=2, use_1x1conv=True)
    np.testing.assert_allclose(np.asarray(outB), np.asarray(refB),
                               rtol=2e-2, atol=2e-2)

    print("KERNEL_OK")
</pallas_src>

<mosaic_0001>
module attributes {stable_mosaic.version = 11 : i64} {
  func.func @residual_block_kernel(%arg0: i32, %arg1: memref<1x16x16x128xf32, #tpu.memory_space<vmem>>, %arg2: memref<9x128x128xbf16, #tpu.memory_space<vmem>>, %arg3: memref<2x128xf32, #tpu.memory_space<vmem>>, %arg4: memref<9x128x128xbf16, #tpu.memory_space<vmem>>, %arg5: memref<2x128xf32, #tpu.memory_space<vmem>>, %arg6: memref<1x16x16x128xf32, #tpu.memory_space<vmem>>, %arg7: memref<18x18x128xf32, #tpu.memory_space<vmem>>, %arg8: memref<18x18x128xf32, #tpu.memory_space<vmem>>) attributes {dimension_semantics = [#tpu.dimension_semantics<parallel>], iteration_bounds = array<i64: 2>, scalar_prefetch = 0 : i64, scratch_operands = 2 : i64, tpu.core_type = #tpu.core_type<tc>, window_params = [{transform_indices = @transform_0, window_bounds = array<i64: 1, 16, 16, 128>}, {pipeline_mode = #tpu.pipeline_mode<synchronous>, transform_indices = @transform_1, window_bounds = array<i64: 9, 128, 128>}, {pipeline_mode = #tpu.pipeline_mode<synchronous>, transform_indices = @transform_2, window_bounds = array<i64: 2, 128>}, {pipeline_mode = #tpu.pipeline_mode<synchronous>, transform_indices = @transform_3, window_bounds = array<i64: 9, 128, 128>}, {pipeline_mode = #tpu.pipeline_mode<synchronous>, transform_indices = @transform_4, window_bounds = array<i64: 2, 128>}, {transform_indices = @transform_5, window_bounds = array<i64: 1, 16, 16, 128>}]} {
    %cst = arith.constant 0.000000e+00 : f32
    %0 = vector.broadcast %cst : f32 to vector<18x18x128xf32>
    %c0 = arith.constant 0 : index
    %c0_0 = arith.constant 0 : index
    %c0_1 = arith.constant 0 : index
    %1 = vector.load %arg7[%c0, %c0_0, %c0_1] : memref<18x18x128xf32, #tpu.memory_space<vmem>>, vector<18x18x128xf32>
    tpu.vector_store %arg7[%c0, %c0_0, %c0_1], %0 {strides = array<i32>} : memref<18x18x128xf32, #tpu.memory_space<vmem>>, vector<18x18x128xf32>,
    %c0_2 = arith.constant 0 : index
    %c0_3 = arith.constant 0 : index
    %c0_4 = arith.constant 0 : index
    %c0_5 = arith.constant 0 : index
    %2 = vector.load %arg1[%c0_2, %c0_3, %c0_4, %c0_5] : memref<1x16x16x128xf32, #tpu.memory_space<vmem>>, vector<1x16x16x128xf32>
    %3 = vector.shape_cast %2 : vector<1x16x16x128xf32> to vector<16x16x128xf32>
    %c1 = arith.constant 1 : index
    %c1_6 = arith.constant 1 : index
    %c0_7 = arith.constant 0 : index
    %4 = vector.load %arg7[%c1, %c1_6, %c0_7] : memref<18x18x128xf32, #tpu.memory_space<vmem>>, vector<16x16x128xf32>
    tpu.vector_store %arg7[%c1, %c1_6, %c0_7], %3 {strides = array<i32>} : memref<18x18x128xf32, #tpu.memory_space<vmem>>, vector<16x16x128xf32>,
    %cst_8 = arith.constant 0.000000e+00 : f32
    %5 = vector.broadcast %cst_8 : f32 to vector<256x128xf32>
    %c0_9 = arith.constant 0 : index
    %c0_10 = arith.constant 0 : index
    %c0_11 = arith.constant 0 : index
    %6 = vector.load %arg7[%c0_9, %c0_10, %c0_11] : memref<18x18x128xf32, #tpu.memory_space<vmem>>, vector<16x16x128xf32>
    %7 = vector.shape_cast %6 : vector<16x16x128xf32> to vector<256x128xf32>
    %8 = arith.truncf %7 : vector<256x128xf32> to vector<256x128xbf16>
    %c0_12 = arith.constant 0 : index
    %c0_13 = arith.constant 0 : index
    %c0_14 = arith.constant 0 : index
    %9 = vector.load %arg2[%c0_12, %c0_13, %c0_14] : memref<9x128x128xbf16, #tpu.memory_space<vmem>>, vector<1x128x128xbf16>
    %10 = vector.shape_cast %9 : vector<1x128x128xbf16> to vector<128x128xbf16>
    %cst_15 = arith.constant dense<0.000000e+00> : vector<256x128xf32>
    %11 = tpu.matmul %8, %10, %cst_15 {dimension_numbers = #tpu.dot_dimension_numbers<[1], [0], [0], [1], [0, 0, 1, 1], [], []>} : vector<256x128xbf16>, vector<128x128xbf16>, vector<256x128xf32> -> vector<256x128xf32>
    %12 = arith.addf %5, %11 : vector<256x128xf32>
    %c0_16 = arith.constant 0 : index
    %c1_17 = arith.constant 1 : index
    %c0_18 = arith.constant 0 : index
    %13 = vector.load %arg7[%c0_16, %c1_17, %c0_18] : memref<18x18x128xf32, #tpu.memory_space<vmem>>, vector<16x16x128xf32>
    %14 = vector.shape_cast %13 : vector<16x16x128xf32> to vector<256x128xf32>
    %15 = arith.truncf %14 : vector<256x128xf32> to vector<256x128xbf16>
    %c1_19 = arith.constant 1 : index
    %c0_20 = arith.constant 0 : index
    %c0_21 = arith.constant 0 : index
    %16 = vector.load %arg2[%c1_19, %c0_20, %c0_21] : memref<9x128x128xbf16, #tpu.memory_space<vmem>>, vector<1x128x128xbf16>
    %17 = vector.shape_cast %16 : vector<1x128x128xbf16> to vector<128x128xbf16>
    %cst_22 = arith.constant dense<0.000000e+00> : vector<256x128xf32>
    %18 = tpu.matmul %15, %17, %cst_22 {dimension_numbers = #tpu.dot_dimension_numbers<[1], [0], [0], [1], [0, 0, 1, 1], [], []>} : vector<256x128xbf16>, vector<128x128xbf16>, vector<256x128xf32> -> vector<256x128xf32>
    %19 = arith.addf %12, %18 : vector<256x128xf32>
    %c0_23 = arith.constant 0 : index
    %c2 = arith.constant 2 : index
    %c0_24 = arith.constant 0 : index
    %20 = vector.load %arg7[%c0_23, %c2, %c0_24] : memref<18x18x128xf32, #tpu.memory_space<vmem>>, vector<16x16x128xf32>
    %21 = vector.shape_cast %20 : vector<16x16x128xf32> to vector<256x128xf32>
    %22 = arith.truncf %21 : vector<256x128xf32> to vector<256x128xbf16>
    %c2_25 = arith.constant 2 : index
    %c0_26 = arith.constant 0 : index
    %c0_27 = arith.constant 0 : index
    %23 = vector.load %arg2[%c2_25, %c0_26, %c0_27] : memref<9x128x128xbf16, #tpu.memory_space<vmem>>, vector<1x128x128xbf16>
    %24 = vector.shape_cast %23 : vector<1x128x128xbf16> to vector<128x128xbf16>
    %cst_28 = arith.constant dense<0.000000e+00> : vector<256x128xf32>
    %25 = tpu.matmul %22, %24, %cst_28 {dimension_numbers = #tpu.dot_dimension_numbers<[1], [0], [0], [1], [0, 0, 1, 1], [], []>} : vector<256x128xbf16>, vector<128x128xbf16>, vector<256x128xf32> -> vector<256x128xf32>
    %26 = arith.addf %19, %25 : vector<256x128xf32>
    %c1_29 = arith.constant 1 : index
    %c0_30 = arith.constant 0 : index
    %c0_31 = arith.constant 0 : index
    %27 = vector.load %arg7[%c1_29, %c0_30, %c0_31] : memref<18x18x128xf32, #tpu.memory_space<vmem>>, vector<16x16x128xf32>
    %28 = vector.shape_cast %27 : vector<16x16x128xf32> to vector<256x128xf32>
    %29 = arith.truncf %28 : vector<256x128xf32> to vector<256x128xbf16>
    %c3 = arith.constant 3 : index
    %c0_32 = arith.constant 0 : index
    %c0_33 = arith.constant 0 : index
    %30 = vector.load %arg2[%c3, %c0_32, %c0_33] : memref<9x128x128xbf16, #tpu.memory_space<vmem>>, vector<1x128x128xbf16>
    %31 = vector.shape_cast %30 : vector<1x128x128xbf16> to vector<128x128xbf16>
    %cst_34 = arith.constant dense<0.000000e+00> : vector<256x128xf32>
    %32 = tpu.matmul %29, %31, %cst_34 {dimension_numbers = #tpu.dot_dimension_numbers<[1], [0], [0], [1], [0, 0, 1, 1], [], []>} : vector<256x128xbf16>, vector<128x128xbf16>, vector<256x128xf32> -> vector<256x128xf32>
    %33 = arith.addf %26, %32 : vector<256x128xf32>
    %c1_35 = arith.constant 1 : index
    %c1_36 = arith.constant 1 : index
    %c0_37 = arith.constant 0 : index
    %34 = vector.load %arg7[%c1_35, %c1_36, %c0_37] : memref<18x18x128xf32, #tpu.memory_space<vmem>>, vector<16x16x128xf32>
    %35 = vector.shape_cast %34 : vector<16x16x128xf32> to vector<256x128xf32>
    %36 = arith.truncf %35 : vector<256x128xf32> to vector<256x128xbf16>
    %c4 = arith.constant 4 : index
    %c0_38 = arith.constant 0 : index
    %c0_39 = arith.constant 0 : index
    %37 = vector.load %arg2[%c4, %c0_38, %c0_39] : memref<9x128x128xbf16, #tpu.memory_space<vmem>>, vector<1x128x128xbf16>
    %38 = vector.shape_cast %37 : vector<1x128x128xbf16> to vector<128x128xbf16>
    %cst_40 = arith.constant dense<0.000000e+00> : vector<256x128xf32>
    %39 = tpu.matmul %36, %38, %cst_40 {dimension_numbers = #tpu.dot_dimension_numbers<[1], [0], [0], [1], [0, 0, 1, 1], [], []>} : vector<256x128xbf16>, vector<128x128xbf16>, vector<256x128xf32> -> vector<256x128xf32>
    %40 = arith.addf %33, %39 : vector<256x128xf32>
    %c1_41 = arith.constant 1 : index
    %c2_42 = arith.constant 2 : index
    %c0_43 = arith.constant 0 : index
    %41 = vector.load %arg7[%c1_41, %c2_42, %c0_43] : memref<18x18x128xf32, #tpu.memory_space<vmem>>, vector<16x16x128xf32>
    %42 = vector.shape_cast %41 : vector<16x16x128xf32> to vector<256x128xf32>
    %43 = arith.truncf %42 : vector<256x128xf32> to vector<256x128xbf16>
    %c5 = arith.constant 5 : index
    %c0_44 = arith.constant 0 : index
    %c0_45 = arith.constant 0 : index
    %44 = vector.load %arg2[%c5, %c0_44, %c0_45] : memref<9x128x128xbf16, #tpu.memory_space<vmem>>, vector<1x128x128xbf16>
    %45 = vector.shape_cast %44 : vector<1x128x128xbf16> to vector<128x128xbf16>
    %cst_46 = arith.constant dense<0.000000e+00> : vector<256x128xf32>
    %46 = tpu.matmul %43, %45, %cst_46 {dimension_numbers = #tpu.dot_dimension_numbers<[1], [0], [0], [1], [0, 0, 1, 1], [], []>} : vector<256x128xbf16>, vector<128x128xbf16>, vector<256x128xf32> -> vector<256x128xf32>
    %47 = arith.addf %40, %46 : vector<256x128xf32>
    %c2_47 = arith.constant 2 : index
    %c0_48 = arith.constant 0 : index
    %c0_49 = arith.constant 0 : index
    %48 = vector.load %arg7[%c2_47, %c0_48, %c0_49] : memref<18x18x128xf32, #tpu.memory_space<vmem>>, vector<16x16x128xf32>
    %49 = vector.shape_cast %48 : vector<16x16x128xf32> to vector<256x128xf32>
    %50 = arith.truncf %49 : vector<256x128xf32> to vector<256x128xbf16>
    %c6 = arith.constant 6 : index
    %c0_50 = arith.constant 0 : index
    %c0_51 = arith.constant 0 : index
    %51 = vector.load %arg2[%c6, %c0_50, %c0_51] : memref<9x128x128xbf16, #tpu.memory_space<vmem>>, vector<1x128x128xbf16>
    %52 = vector.shape_cast %51 : vector<1x128x128xbf16> to vector<128x128xbf16>
    %cst_52 = arith.constant dense<0.000000e+00> : vector<256x128xf32>
    %53 = tpu.matmul %50, %52, %cst_52 {dimension_numbers = #tpu.dot_dimension_numbers<[1], [0], [0], [1], [0, 0, 1, 1], [], []>} : vector<256x128xbf16>, vector<128x128xbf16>, vector<256x128xf32> -> vector<256x128xf32>
    %54 = arith.addf %47, %53 : vector<256x128xf32>
    %c2_53 = arith.constant 2 : index
    %c1_54 = arith.constant 1 : index
    %c0_55 = arith.constant 0 : index
    %55 = vector.load %arg7[%c2_53, %c1_54, %c0_55] : memref<18x18x128xf32, #tpu.memory_space<vmem>>, vector<16x16x128xf32>
    %56 = vector.shape_cast %55 : vector<16x16x128xf32> to vector<256x128xf32>
    %57 = arith.truncf %56 : vector<256x128xf32> to vector<256x128xbf16>
    %c7 = arith.constant 7 : index
    %c0_56 = arith.constant 0 : index
    %c0_57 = arith.constant 0 : index
    %58 = vector.load %arg2[%c7, %c0_56, %c0_57] : memref<9x128x128xbf16, #tpu.memory_space<vmem>>, vector<1x128x128xbf16>
    %59 = vector.shape_cast %58 : vector<1x128x128xbf16> to vector<128x128xbf16>
    %cst_58 = arith.constant dense<0.000000e+00> : vector<256x128xf32>
    %60 = tpu.matmul %57, %59, %cst_58 {dimension_numbers = #tpu.dot_dimension_numbers<[1], [0], [0], [1], [0, 0, 1, 1], [], []>} : vector<256x128xbf16>, vector<128x128xbf16>, vector<256x128xf32> -> vector<256x128xf32>
    %61 = arith.addf %54, %60 : vector<256x128xf32>
    %c2_59 = arith.constant 2 : index
    %c2_60 = arith.constant 2 : index
    %c0_61 = arith.constant 0 : index
    %62 = vector.load %arg7[%c2_59, %c2_60, %c0_61] : memref<18x18x128xf32, #tpu.memory_space<vmem>>, vector<16x16x128xf32>
    %63 = vector.shape_cast %62 : vector<16x16x128xf32> to vector<256x128xf32>
    %64 = arith.truncf %63 : vector<256x128xf32> to vector<256x128xbf16>
    %c8 = arith.constant 8 : index
    %c0_62 = arith.constant 0 : index
    %c0_63 = arith.constant 0 : index
    %65 = vector.load %arg2[%c8, %c0_62, %c0_63] : memref<9x128x128xbf16, #tpu.memory_space<vmem>>, vector<1x128x128xbf16>
    %66 = vector.shape_cast %65 : vector<1x128x128xbf16> to vector<128x128xbf16>
    %cst_64 = arith.constant dense<0.000000e+00> : vector<256x128xf32>
    %67 = tpu.matmul %64, %66, %cst_64 {dimension_numbers = #tpu.dot_dimension_numbers<[1], [0], [0], [1], [0, 0, 1, 1], [], []>} : vector<256x128xbf16>, vector<128x128xbf16>, vector<256x128xf32> -> vector<256x128xf32>
    %68 = arith.addf %61, %67 : vector<256x128xf32>
    %c0_65 = arith.constant 0 : index
    %c0_66 = arith.constant 0 : index
    %69 = vector.load %arg3[%c0_65, %c0_66] : memref<2x128xf32, #tpu.memory_space<vmem>>, vector<1x128xf32>
    %70 = vector.broadcast %69 : vector<1x128xf32> to vector<256x128xf32>
    %71 = arith.mulf %68, %70 : vector<256x128xf32>
    %c1_67 = arith.constant 1 : index
    %c0_68 = arith.constant 0 : index
    %72 = vector.load %arg3[%c1_67, %c0_68] : memref<2x128xf32, #tpu.memory_space<vmem>>, vector<1x128xf32>
    %73 = vector.broadcast %72 : vector<1x128xf32> to vector<256x128xf32>
    %74 = arith.addf %71, %73 : vector<256x128xf32>
    %cst_69 = arith.constant 0.000000e+00 : f32
    %75 = vector.broadcast %cst_69 : f32 to vector<256x128xf32>
    %76 = arith.maximumf %74, %75 : vector<256x128xf32>
    %cst_70 = arith.constant 0.000000e+00 : f32
    %77 = vector.broadcast %cst_70 : f32 to vector<18x18x128xf32>
    %c0_71 = arith.constant 0 : index
    %c0_72 = arith.constant 0 : index
    %c0_73 = arith.constant 0 : index
    %78 = vector.load %arg8[%c0_71, %c0_72, %c0_73] : memref<18x18x128xf32, #tpu.memory_space<vmem>>, vector<18x18x128xf32>
    tpu.vector_store %arg8[%c0_71, %c0_72, %c0_73], %77 {strides = array<i32>} : memref<18x18x128xf32, #tpu.memory_space<vmem>>, vector<18x18x128xf32>,
    %79 = vector.shape_cast %76 : vector<256x128xf32> to vector<16x16x128xf32>
    %c1_74 = arith.constant 1 : index
    %c1_75 = arith.constant 1 : index
    %c0_76 = arith.constant 0 : index
    %80 = vector.load %arg8[%c1_74, %c1_75, %c0_76] : memref<18x18x128xf32, #tpu.memory_space<vmem>>, vector<16x16x128xf32>
    tpu.vector_store %arg8[%c1_74, %c1_75, %c0_76], %79 {strides = array<i32>} : memref<18x18x128xf32, #tpu.memory_space<vmem>>, vector<16x16x128xf32>,
    %cst_77 = arith.constant 0.000000e+00 : f32
    %81 = vector.broadcast %cst_77 : f32 to vector<256x128xf32>
    %c0_78 = arith.constant 0 : index
    %c0_79 = arith.constant 0 : index
    %c0_80 = arith.constant 0 : index
    %82 = vector.load %arg8[%c0_78, %c0_79, %c0_80] : memref<18x18x128xf32, #tpu.memory_space<vmem>>, vector<16x16x128xf32>
    %83 = vector.shape_cast %82 : vector<16x16x128xf32> to vector<256x128xf32>
    %84 = arith.truncf %83 : vector<256x128xf32> to vector<256x128xbf16>
    %c0_81 = arith.constant 0 : index
    %c0_82 = arith.constant 0 : index
    %c0_83 = arith.constant 0 : index
    %85 = vector.load %arg4[%c0_81, %c0_82, %c0_83] : memref<9x128x128xbf16, #tpu.memory_space<vmem>>, vector<1x128x128xbf16>
    %86 = vector.shape_cast %85 : vector<1x128x128xbf16> to vector<128x128xbf16>
    %cst_84 = arith.constant dense<0.000000e+00> : vector<256x128xf32>
    %87 = tpu.matmul %84, %86, %cst_84 {dimension_numbers = #tpu.dot_dimension_numbers<[1], [0], [0], [1], [0, 0, 1, 1], [], []>} : vector<256x128xbf16>, vector<128x128xbf16>, vector<256x128xf32> -> vector<256x128xf32>
    %88 = arith.addf %81, %87 : vector<256x128xf32>
    %c0_85 = arith.constant 0 : index
    %c1_86 = arith.constant 1 : index
    %c0_87 = arith.constant 0 : index
    %89 = vector.load %arg8[%c0_85, %c1_86, %c0_87] : memref<18x18x128xf32, #tpu.memory_space<vmem>>, vector<16x16x128xf32>
    %90 = vector.shape_cast %89 : vector<16x16x128xf32> to vector<256x128xf32>
    %91 = arith.truncf %90 : vector<256x128xf32> to vector<256x128xbf16>
    %c1_88 = arith.constant 1 : index
    %c0_89 = arith.constant 0 : index
    %c0_90 = arith.constant 0 : index
    %92 = vector.load %arg4[%c1_88, %c0_89, %c0_90] : memref<9x128x128xbf16, #tpu.memory_space<vmem>>, vector<1x128x128xbf16>
    %93 = vector.shape_cast %92 : vector<1x128x128xbf16> to vector<128x128xbf16>
    %cst_91 = arith.constant dense<0.000000e+00> : vector<256x128xf32>
    %94 = tpu.matmul %91, %93, %cst_91 {dimension_numbers = #tpu.dot_dimension_numbers<[1], [0], [0], [1], [0, 0, 1, 1], [], []>} : vector<256x128xbf16>, vector<128x128xbf16>, vector<256x128xf32> -> vector<256x128xf32>
    %95 = arith.addf %88, %94 : vector<256x128xf32>
    %c0_92 = arith.constant 0 : index
    %c2_93 = arith.constant 2 : index
    %c0_94 = arith.constant 0 : index
    %96 = vector.load %arg8[%c0_92, %c2_93, %c0_94] : memref<18x18x128xf32, #tpu.memory_space<vmem>>, vector<16x16x128xf32>
    %97 = vector.shape_cast %96 : vector<16x16x128xf32> to vector<256x128xf32>
    %98 = arith.truncf %97 : vector<256x128xf32> to vector<256x128xbf16>
    %c2_95 = arith.constant 2 : index
    %c0_96 = arith.constant 0 : index
    %c0_97 = arith.constant 0 : index
    %99 = vector.load %arg4[%c2_95, %c0_96, %c0_97] : memref<9x128x128xbf16, #tpu.memory_space<vmem>>, vector<1x128x128xbf16>
    %100 = vector.shape_cast %99 : vector<1x128x128xbf16> to vector<128x128xbf16>
    %cst_98 = arith.constant dense<0.000000e+00> : vector<256x128xf32>
    %101 = tpu.matmul %98, %100, %cst_98 {dimension_numbers = #tpu.dot_dimension_numbers<[1], [0], [0], [1], [0, 0, 1, 1], [], []>} : vector<256x128xbf16>, vector<128x128xbf16>, vector<256x128xf32> -> vector<256x128xf32>
    %102 = arith.addf %95, %101 : vector<256x128xf32>
    %c1_99 = arith.constant 1 : index
    %c0_100 = arith.constant 0 : index
    %c0_101 = arith.constant 0 : index
    %103 = vector.load %arg8[%c1_99, %c0_100, %c0_101] : memref<18x18x128xf32, #tpu.memory_space<vmem>>, vector<16x16x128xf32>
    %104 = vector.shape_cast %103 : vector<16x16x128xf32> to vector<256x128xf32>
    %105 = arith.truncf %104 : vector<256x128xf32> to vector<256x128xbf16>
    %c3_102 = arith.constant 3 : index
    %c0_103 = arith.constant 0 : index
    %c0_104 = arith.constant 0 : index
    %106 = vector.load %arg4[%c3_102, %c0_103, %c0_104] : memref<9x128x128xbf16, #tpu.memory_space<vmem>>, vector<1x128x128xbf16>
    %107 = vector.shape_cast %106 : vector<1x128x128xbf16> to vector<128x128xbf16>
    %cst_105 = arith.constant dense<0.000000e+00> : vector<256x128xf32>
    %108 = tpu.matmul %105, %107, %cst_105 {dimension_numbers = #tpu.dot_dimension_numbers<[1], [0], [0], [1], [0, 0, 1, 1], [], []>} : vector<256x128xbf16>, vector<128x128xbf16>, vector<256x128xf32> -> vector<256x128xf32>
    %109 = arith.addf %102, %108 : vector<256x128xf32>
    %c1_106 = arith.constant 1 : index
    %c1_107 = arith.constant 1 : index
    %c0_108 = arith.constant 0 : index
    %110 = vector.load %arg8[%c1_106, %c1_107, %c0_108] : memref<18x18x128xf32, #tpu.memory_space<vmem>>, vector<16x16x128xf32>
    %111 = vector.shape_cast %110 : vector<16x16x128xf32> to vector<256x128xf32>
    %112 = arith.truncf %111 : vector<256x128xf32> to vector<256x128xbf16>
    %c4_109 = arith.constant 4 : index
    %c0_110 = arith.constant 0 : index
    %c0_111 = arith.constant 0 : index
    %113 = vector.load %arg4[%c4_109, %c0_110, %c0_111] : memref<9x128x128xbf16, #tpu.memory_space<vmem>>, vector<1x128x128xbf16>
    %114 = vector.shape_cast %113 : vector<1x128x128xbf16> to vector<128x128xbf16>
    %cst_112 = arith.constant dense<0.000000e+00> : vector<256x128xf32>
    %115 = tpu.matmul %112, %114, %cst_112 {dimension_numbers = #tpu.dot_dimension_numbers<[1], [0], [0], [1], [0, 0, 1, 1], [], []>} : vector<256x128xbf16>, vector<128x128xbf16>, vector<256x128xf32> -> vector<256x128xf32>
    %116 = arith.addf %109, %115 : vector<256x128xf32>
    %c1_113 = arith.constant 1 : index
    %c2_114 = arith.constant 2 : index
    %c0_115 = arith.constant 0 : index
    %117 = vector.load %arg8[%c1_113, %c2_114, %c0_115] : memref<18x18x128xf32, #tpu.memory_space<vmem>>, vector<16x16x128xf32>
    %118 = vector.shape_cast %117 : vector<16x16x128xf32> to vector<256x128xf32>
    %119 = arith.truncf %118 : vector<256x128xf32> to vector<256x128xbf16>
    %c5_116 = arith.constant 5 : index
    %c0_117 = arith.constant 0 : index
    %c0_118 = arith.constant 0 : index
    %120 = vector.load %arg4[%c5_116, %c0_117, %c0_118] : memref<9x128x128xbf16, #tpu.memory_space<vmem>>, vector<1x128x128xbf16>
    %121 = vector.shape_cast %120 : vector<1x128x128xbf16> to vector<128x128xbf16>
    %cst_119 = arith.constant dense<0.000000e+00> : vector<256x128xf32>
    %122 = tpu.matmul %119, %121, %cst_119 {dimension_numbers = #tpu.dot_dimension_numbers<[1], [0], [0], [1], [0, 0, 1, 1], [], []>} : vector<256x128xbf16>, vector<128x128xbf16>, vector<256x128xf32> -> vector<256x128xf32>
    %123 = arith.addf %116, %122 : vector<256x128xf32>
    %c2_120 = arith.constant 2 : index
    %c0_121 = arith.constant 0 : index
    %c0_122 = arith.constant 0 : index
    %124 = vector.load %arg8[%c2_120, %c0_121, %c0_122] : memref<18x18x128xf32, #tpu.memory_space<vmem>>, vector<16x16x128xf32>
    %125 = vector.shape_cast %124 : vector<16x16x128xf32> to vector<256x128xf32>
    %126 = arith.truncf %125 : vector<256x128xf32> to vector<256x128xbf16>
    %c6_123 = arith.constant 6 : index
    %c0_124 = arith.constant 0 : index
    %c0_125 = arith.constant 0 : index
    %127 = vector.load %arg4[%c6_123, %c0_124, %c0_125] : memref<9x128x128xbf16, #tpu.memory_space<vmem>>, vector<1x128x128xbf16>
    %128 = vector.shape_cast %127 : vector<1x128x128xbf16> to vector<128x128xbf16>
    %cst_126 = arith.constant dense<0.000000e+00> : vector<256x128xf32>
    %129 = tpu.matmul %126, %128, %cst_126 {dimension_numbers = #tpu.dot_dimension_numbers<[1], [0], [0], [1], [0, 0, 1, 1], [], []>} : vector<256x128xbf16>, vector<128x128xbf16>, vector<256x128xf32> -> vector<256x128xf32>
    %130 = arith.addf %123, %129 : vector<256x128xf32>
    %c2_127 = arith.constant 2 : index
    %c1_128 = arith.constant 1 : index
    %c0_129 = arith.constant 0 : index
    %131 = vector.load %arg8[%c2_127, %c1_128, %c0_129] : memref<18x18x128xf32, #tpu.memory_space<vmem>>, vector<16x16x128xf32>
    %132 = vector.shape_cast %131 : vector<16x16x128xf32> to vector<256x128xf32>
    %133 = arith.truncf %132 : vector<256x128xf32> to vector<256x128xbf16>
    %c7_130 = arith.constant 7 : index
    %c0_131 = arith.constant 0 : index
    %c0_132 = arith.constant 0 : index
    %134 = vector.load %arg4[%c7_130, %c0_131, %c0_132] : memref<9x128x128xbf16, #tpu.memory_space<vmem>>, vector<1x128x128xbf16>
    %135 = vector.shape_cast %134 : vector<1x128x128xbf16> to vector<128x128xbf16>
    %cst_133 = arith.constant dense<0.000000e+00> : vector<256x128xf32>
    %136 = tpu.matmul %133, %135, %cst_133 {dimension_numbers = #tpu.dot_dimension_numbers<[1], [0], [0], [1], [0, 0, 1, 1], [], []>} : vector<256x128xbf16>, vector<128x128xbf16>, vector<256x128xf32> -> vector<256x128xf32>
    %137 = arith.addf %130, %136 : vector<256x128xf32>
    %c2_134 = arith.constant 2 : index
    %c2_135 = arith.constant 2 : index
    %c0_136 = arith.constant 0 : index
    %138 = vector.load %arg8[%c2_134, %c2_135, %c0_136] : memref<18x18x128xf32, #tpu.memory_space<vmem>>, vector<16x16x128xf32>
    %139 = vector.shape_cast %138 : vector<16x16x128xf32> to vector<256x128xf32>
    %140 = arith.truncf %139 : vector<256x128xf32> to vector<256x128xbf16>
    %c8_137 = arith.constant 8 : index
    %c0_138 = arith.constant 0 : index
    %c0_139 = arith.constant 0 : index
    %141 = vector.load %arg4[%c8_137, %c0_138, %c0_139] : memref<9x128x128xbf16, #tpu.memory_space<vmem>>, vector<1x128x128xbf16>
    %142 = vector.shape_cast %141 : vector<1x128x128xbf16> to vector<128x128xbf16>
    %cst_140 = arith.constant dense<0.000000e+00> : vector<256x128xf32>
    %143 = tpu.matmul %140, %142, %cst_140 {dimension_numbers = #tpu.dot_dimension_numbers<[1], [0], [0], [1], [0, 0, 1, 1], [], []>} : vector<256x128xbf16>, vector<128x128xbf16>, vector<256x128xf32> -> vector<256x128xf32>
    %144 = arith.addf %137, %143 : vector<256x128xf32>
    %c0_141 = arith.constant 0 : index
    %c0_142 = arith.constant 0 : index
    %145 = vector.load %arg5[%c0_141, %c0_142] : memref<2x128xf32, #tpu.memory_space<vmem>>, vector<1x128xf32>
    %146 = vector.broadcast %145 : vector<1x128xf32> to vector<256x128xf32>
    %147 = arith.mulf %144, %146 : vector<256x128xf32>
    %c1_143 = arith.constant 1 : index
    %c0_144 = arith.constant 0 : index
    %148 = vector.load %arg5[%c1_143, %c0_144] : memref<2x128xf32, #tpu.memory_space<vmem>>, vector<1x128xf32>
    %149 = vector.broadcast %148 : vector<1x128xf32> to vector<256x128xf32>
    %150 = arith.addf %147, %149 : vector<256x128xf32>
    %c0_145 = arith.constant 0 : index
    %c0_146 = arith.constant 0 : index
    %c0_147 = arith.constant 0 : index
    %c0_148 = arith.constant 0 : index
    %151 = vector.load %arg1[%c0_145, %c0_146, %c0_147, %c0_148] : memref<1x16x16x128xf32, #tpu.memory_space<vmem>>, vector<1x16x16x128xf32>
    %152 = vector.shape_cast %151 : vector<1x16x16x128xf32> to vector<16x16x128xf32>
    %153 = vector.shape_cast %152 : vector<16x16x128xf32> to vector<256x128xf32>
    %154 = arith.addf %150, %153 : vector<256x128xf32>
    %cst_149 = arith.constant 0.000000e+00 : f32
    %155 = vector.broadcast %cst_149 : f32 to vector<256x128xf32>
    %156 = arith.maximumf %154, %155 : vector<256x128xf32>
    %157 = vector.shape_cast %156 : vector<256x128xf32> to vector<16x16x128xf32>
    %c0_150 = arith.constant 0 : index
    %c0_151 = arith.constant 0 : index
    %c0_152 = arith.constant 0 : index
    %c0_153 = arith.constant 0 : index
    %158 = vector.load %arg6[%c0_150, %c0_151, %c0_152, %c0_153] : memref<1x16x16x128xf32, #tpu.memory_space<vmem>>, vector<1x16x16x128xf32>
    %159 = vector.shape_cast %158 : vector<1x16x16x128xf32> to vector<16x16x128xf32>
    %160 = vector.shape_cast %157 : vector<16x16x128xf32> to vector<1x16x16x128xf32>
    tpu.vector_store %arg6[%c0_150, %c0_151, %c0_152, %c0_153], %160 {strides = array<i32>} : memref<1x16x16x128xf32, #tpu.memory_space<vmem>>, vector<1x16x16x128xf32>,
    return
  }
  func.func @transform_0(%arg0: i32) -> (i32, i32, i32, i32) {
    %c0_i32 = arith.constant 0 : i32
    %c0_i32_0 = arith.constant 0 : i32
    %c0_i32_1 = arith.constant 0 : i32
    %c0_i32_2 = arith.constant 0 : i32
    return %arg0, %c0_i32, %c0_i32_0, %c0_i32_1 : i32, i32, i32, i32
  }
  func.func @transform_1(%arg0: i32) -> (i32, i32, i32) {
    %c0_i32 = arith.constant 0 : i32
    %c0_i32_0 = arith.constant 0 : i32
    %c0_i32_1 = arith.constant 0 : i32
    %c0_i32_2 = arith.constant 0 : i32
    return %c0_i32, %c0_i32_0, %c0_i32_1 : i32, i32, i32
  }
  func.func @transform_2(%arg0: i32) -> (i32, i32) {
    %c0_i32 = arith.constant 0 : i32
    %c0_i32_0 = arith.constant 0 : i32
    %c0_i32_1 = arith.constant 0 : i32
    return %c0_i32, %c0_i32_0 : i32, i32
  }
  func.func @transform_3(%arg0: i32) -> (i32, i32, i32) {
    %c0_i32 = arith.constant 0 : i32
    %c0_i32_0 = arith.constant 0 : i32
    %c0_i32_1 = arith.constant 0 : i32
    %c0_i32_2 = arith.constant 0 : i32
    return %c0_i32, %c0_i32_0, %c0_i32_1 : i32, i32, i32
  }
  func.func @transform_4(%arg0: i32) -> (i32, i32) {
    %c0_i32 = arith.constant 0 : i32
    %c0_i32_0 = arith.constant 0 : i32
    %c0_i32_1 = arith.constant 0 : i32
    return %c0_i32, %c0_i32_0 : i32, i32
  }
  func.func @transform_5(%arg0: i32) -> (i32, i32, i32, i32) {
    %c0_i32 = arith.constant 0 : i32
    %c0_i32_0 = arith.constant 0 : i32
    %c0_i32_1 = arith.constant 0 : i32
    %c0_i32_2 = arith.constant 0 : i32
    return %arg0, %c0_i32, %c0_i32_0, %c0_i32_1 : i32, i32, i32, i32
  }
}

</mosaic_0001>

<llo_original>
// kernel: residual_forward.1
$region0: #{residual_forward.1}
  #allocation0 [shape = 'u32[]', space=smem, size = 0x4, offset = 0x4, fixed_abs, tag = 'smem constant byte address 0x4 - core index']
  #allocation1 [shape = 'u32[144,128]{1,0:T(1,128)}', space=vmem, size = 0x12000, scoped, tag = 'internal scratch']
  #allocation2 [shape = 'f32[18,18,128]{2,1,0:T(8,128)}', space=vmem, size = 0x36000, scoped, tag = 'scratch operand']
  #allocation3 [shape = 'f32[18,18,128]{2,1,0:T(8,128)}', space=vmem, size = 0x36000, scoped, tag = 'scratch operand']
  %s0 = inlined_call_operand.vmem [shape: f32[2,16,16,128], index: 0, kind: input, shape index: {}]
  %s1 = inlined_call_operand.vmem [shape: bf16[9,128,128], index: 1, kind: input, shape index: {}]
  %s2 = inlined_call_operand.vmem [shape: f32[2,128], index: 2, kind: input, shape index: {}]
  %s3 = inlined_call_operand.vmem [shape: bf16[9,128,128], index: 3, kind: input, shape index: {}]
  %s4 = inlined_call_operand.vmem [shape: f32[2,128], index: 4, kind: input, shape index: {}]
  %s5 = inlined_call_operand.hbm [shape: f32[2,16,16,128], index: 5, kind: output, shape index: {}]
  %s6 = sld [smem:[#allocation0]]
  $region53: #{residual_forward.1} parent=0
    _
  %s8 = ssub.s32 1, %s6
  %s9 = scalar_select 0, %s8, %s6
  $region1: #{residual_forward.1} parent=0
    #allocation4 [shape = 'u8[262144]{0}', space=vmem, size = 0x40000, scoped, tag = 'output window, operand 0']
    #allocation5 [shape = 's32[2]{0}', space=sflag, size = 0x8, scoped, tag = 'scoped memory for residual_forward.1']
    %10 = vsyncpa [#allocation5], 0
    %s11 = scalar_lea.sflag [#allocation5], 1
    %12 = vsyncpa %s11, 0
    loop: start=0, step=1, limit=4
    $region2: #{residual_forward.1} parent=1 // loop_pre_header
      _
    $region3: #{residual_forward.1} parent=1 // loop_header
      %s14 = sphi 0, %s18
      %p15 = scmp.ge.s32.totalorder %s14, 4
      %s24 = sphi 0, %s26
      %s27 = sphi 0, %s24
      %s28 = sphi 0, %s27
      %s44 = sphi 0, %s28
      %s48 = sphi 0, %s48
      %s50 = sphi 0, %s48
      %s51 = sphi 0, %s50
      %s65 = sphi 0, %s51
      %s69 = sphi 0, %s69
      %s71 = sphi 0, %s69
      %s72 = sphi 0, %s71
      %s86 = sphi 0, %s72
      %s90 = sphi 0, %s90
      %s92 = sphi 0, %s90
      %s93 = sphi 0, %s92
      %s107 = sphi 0, %s93
      %s111 = sphi 0, %s111
      %s113 = sphi 0, %s111
      %s114 = sphi 0, %s113
      %s128 = sphi 0, %s114
      %s134 = sphi 0, %s136
      %s137 = sphi 0, %s134
      %s138 = sphi 0, %s137
      %s154 = sphi 0, %s138
    $region4: #{residual_forward.1} parent=1 // loop_header_branch
      %17 = sbr.rel (%p15) target = $region8
    $region5: #{residual_forward.1} parent=1 // loop_body
      %s19 = ssub.s32 %s14, 1
      %s20 = ssub.s32 %s14, 2
      %s21 = sadd.s32 %s14, 1
      %s22 = ssub.s32 %s14, %s21
      %p23 = scmp.eq.s32.totalorder %s22, 0
      %s25 = sadd.s32 %s24, 1
      %s26 = scalar_select %p23, %s24, %s25
      %p29 = pneg %p23
      %p30 = scmp.eq.s32.totalorder %s14, 1
      %p31 = por %p29, %p30
      %p32 = scmp.ne.s32.totalorder %s24, %s27
      %p33 = scmp.eq.s32.totalorder %s14, 0
      %p34 = por %p32, %p33
      %p35 = scmp.ne.s32.totalorder %s24, %s27
      %p36 = scmp.eq.s32.totalorder %s19, 1
      %p37 = por %p35, %p36
      %p38 = scmp.ne.s32.totalorder %s27, %s28
      %p39 = scmp.eq.s32.totalorder %s19, 0
      %p40 = por %p38, %p39
      %p41 = scmp.ne.s32.totalorder %s27, %s28
      %p42 = scmp.eq.s32.totalorder %s20, 1
      %p43 = por %p41, %p42
      %p45 = scmp.ne.s32.totalorder %s28, %s44
      %p46 = scmp.eq.s32.totalorder %s20, 0
      %p47 = por %p45, %p46
      %s49 = sadd.s32 %s48, 1
      %p52 = scmp.eq.s32.totalorder %s14, 1
      %p53 = scmp.ne.s32.totalorder %s48, %s50
      %p54 = scmp.eq.s32.totalorder %s14, 0
      %p55 = por %p53, %p54
      %p56 = scmp.ne.s32.totalorder %s48, %s50
      %p57 = scmp.eq.s32.totalorder %s19, 1
      %p58 = por %p56, %p57
      %p59 = scmp.ne.s32.totalorder %s50, %s51
      %p60 = scmp.eq.s32.totalorder %s19, 0
      %p61 = por %p59, %p60
      %p62 = scmp.ne.s32.totalorder %s50, %s51
      %p63 = scmp.eq.s32.totalorder %s20, 1
      %p64 = por %p62, %p63
      %p66 = scmp.ne.s32.totalorder %s51, %s65
      %p67 = scmp.eq.s32.totalorder %s20, 0
      %p68 = por %p66, %p67
      %s70 = sadd.s32 %s69, 1
      %p73 = scmp.eq.s32.totalorder %s14, 1
      %p74 = scmp.ne.s32.totalorder %s69, %s71
      %p75 = scmp.eq.s32.totalorder %s14, 0
      %p76 = por %p74, %p75
      %p77 = scmp.ne.s32.totalorder %s69, %s71
      %p78 = scmp.eq.s32.totalorder %s19, 1
      %p79 = por %p77, %p78
      %p80 = scmp.ne.s32.totalorder %s71, %s72
      %p81 = scmp.eq.s32.totalorder %s19, 0
      %p82 = por %p80, %p81
      %p83 = scmp.ne.s32.totalorder %s71, %s72
      %p84 = scmp.eq.s32.totalorder %s20, 1
      %p85 = por %p83, %p84
      %p87 = scmp.ne.s32.totalorder %s72, %s86
      %p88 = scmp.eq.s32.totalorder %s20, 0
      %p89 = por %p87, %p88
      %s91 = sadd.s32 %s90, 1
      %p94 = scmp.eq.s32.totalorder %s14, 1
      %p95 = scmp.ne.s32.totalorder %s90, %s92
      %p96 = scmp.eq.s32.totalorder %s14, 0
      %p97 = por %p95, %p96
      %p98 = scmp.ne.s32.totalorder %s90, %s92
      %p99 = scmp.eq.s32.totalorder %s19, 1
      %p100 = por %p98, %p99
      %p101 = scmp.ne.s32.totalorder %s92, %s93
      %p102 = scmp.eq.s32.totalorder %s19, 0
      %p103 = por %p101, %p102
      %p104 = scmp.ne.s32.totalorder %s92, %s93
      %p105 = scmp.eq.s32.totalorder %s20, 1
      %p106 = por %p104, %p105
      %p108 = scmp.ne.s32.totalorder %s93, %s107
      %p109 = scmp.eq.s32.totalorder %s20, 0
      %p110 = por %p108, %p109
      %s112 = sadd.s32 %s111, 1
      %p115 = scmp.eq.s32.totalorder %s14, 1
      %p116 = scmp.ne.s32.totalorder %s111, %s113
      %p117 = scmp.eq.s32.totalorder %s14, 0
      %p118 = por %p116, %p117
      %p119 = scmp.ne.s32.totalorder %s111, %s113
      %p120 = scmp.eq.s32.totalorder %s19, 1
      %p121 = por %p119, %p120
      %p122 = scmp.ne.s32.totalorder %s113, %s114
      %p123 = scmp.eq.s32.totalorder %s19, 0
      %p124 = por %p122, %p123
      %p125 = scmp.ne.s32.totalorder %s113, %s114
      %p126 = scmp.eq.s32.totalorder %s20, 1
      %p127 = por %p125, %p126
      %p129 = scmp.ne.s32.totalorder %s114, %s128
      %p130 = scmp.eq.s32.totalorder %s20, 0
      %p131 = por %p129, %p130
      %s132 = ssub.s32 %s14, %s21
      %p133 = scmp.eq.s32.totalorder %s132, 0
      %s135 = sadd.s32 %s134, 1
      %s136 = scalar_select %p133, %s134, %s135
      %p139 = pneg %p133
      %p140 = scmp.eq.s32.totalorder %s14, 1
      %p141 = por %p139, %p140
      %p142 = scmp.ne.s32.totalorder %s134, %s137
      %p143 = scmp.eq.s32.totalorder %s14, 0
      %p144 = por %p142, %p143
      %p145 = scmp.ne.s32.totalorder %s134, %s137
      %p146 = scmp.eq.s32.totalorder %s19, 1
      %p147 = por %p145, %p146
      %p148 = scmp.ne.s32.totalorder %s137, %s138
      %p149 = scmp.eq.s32.totalorder %s19, 0
      %p150 = por %p148, %p149
      %p151 = scmp.ne.s32.totalorder %s137, %s138
      %p152 = scmp.eq.s32.totalorder %s20, 1
      %p153 = por %p151, %p152
      %p155 = scmp.ne.s32.totalorder %s138, %s154
      %p156 = scmp.eq.s32.totalorder %s20, 0
      %p157 = por %p155, %p156
      %p158 = scmp.le.s32.totalorder 1, %s14
      %p159 = scmp.lt.s32.totalorder %s14, 3
      %p160 = pnand %p158, %p159
      %p161 = pneg %p160
      // Predicated region
      $region9: #{residual_forward.1} parent=5 // pred_check
        _
      $region10: #{residual_forward.1} parent=5 // pred_check_branch
        %163 = sbr.rel (%p160) target = $region12
      $region11: #{residual_forward.1} parent=5 // pred_region
        %s164 = ssub.s32 %s14, 1
        // Predicated region
        $region13: #{residual_forward.1} parent=11 // pred_check
          %p165 = pneg %p61
        $region14: #{residual_forward.1} parent=11 // pred_check_branch
          %167 = sbr.rel (%p165) target = $region16
        $region15: #{residual_forward.1} parent=11 // pred_region
          _
        $region16: #{residual_forward.1} parent=11 // pred_fallthru
          _
        // Predicated region
        $region17: #{residual_forward.1} parent=11 // pred_check
          %p168 = pneg %p82
        $region18: #{residual_forward.1} parent=11 // pred_check_branch
          %170 = sbr.rel (%p168) target = $region20
        $region19: #{residual_forward.1} parent=11 // pred_region
          _
        $region20: #{residual_forward.1} parent=11 // pred_fallthru
          _
        // Predicated region
        $region21: #{residual_forward.1} parent=11 // pred_check
          %p171 = pneg %p103
        $region22: #{residual_forward.1} parent=11 // pred_check_branch
          %173 = sbr.rel (%p171) target = $region24
        $region23: #{residual_forward.1} parent=11 // pred_region
          _
        $region24: #{residual_forward.1} parent=11 // pred_fallthru
          _
        // Predicated region
        $region25: #{residual_forward.1} parent=11 // pred_check
          %p174 = pneg %p124
        $region26: #{residual_forward.1} parent=11 // pred_check_branch
          %176 = sbr.rel (%p174) target = $region28
        $region27: #{residual_forward.1} parent=11 // pred_region
          _
        $region28: #{residual_forward.1} parent=11 // pred_fallthru
          _
      $region12: #{residual_forward.1} parent=5 // pred_fallthru
        _
      %p177 = scmp.lt.s32.totalorder %s14, 2
      // Predicated region
      $region29: #{residual_forward.1} parent=5 // pred_check
        %p178 = pneg %p177
      $region30: #{residual_forward.1} parent=5 // pred_check_branch
        %180 = sbr.rel (%p178) target = $region32
      $region31: #{residual_forward.1} parent=5 // pred_region
        // Predicated region
        $region33: #{residual_forward.1} parent=31 // pred_check
          %p181 = pneg %p34
        $region34: #{residual_forward.1} parent=31 // pred_check_branch
          %183 = sbr.rel (%p181) target = $region36
        $region35: #{residual_forward.1} parent=31 // pred_region
          %p184 = scmp.lt.s32.totalorder %s14, 1
          %s185 = scalar_select %p184, %s14, 1
          %s186 = smul.addr %s185, 32
          %s187 = smul.addr %s186, 8
          %s188 = scalar_lea.vmem %s0, %s187
        $region36: #{residual_forward.1} parent=31 // pred_fallthru
          _
      $region32: #{residual_forward.1} parent=5 // pred_fallthru
        _
      %p189 = scmp.le.s32.totalorder 1, %s14
      %p190 = scmp.lt.s32.totalorder %s14, 3
      %p191 = pnand %p189, %p190
      %p192 = pneg %p191
      // Predicated region
      $region37: #{residual_forward.1} parent=5 // pred_check
        _
      $region38: #{residual_forward.1} parent=5 // pred_check_branch
        %194 = sbr.rel (%p191) target = $region40
      $region39: #{residual_forward.1} parent=5 // pred_region
        %s195 = ssub.s32 %s14, 1
        %p196 = scmp.lt.s32.totalorder %s19, 1
        %s197 = scalar_select %p196, %s19, 1
        %s198 = smul.addr %s197, 32
        %s199 = smul.addr %s198, 8
        %s200 = scalar_lea.vmem %s0, %s199
        %p201 = pneg %p40
        %p202 = pneg %p37
        %p203 = pneg %p61
        %p204 = pneg %p58
        %p205 = pneg %p82
        %p206 = pneg %p79
        %p207 = pneg %p103
        %p208 = pneg %p100
        %p209 = pneg %p124
        %p210 = pneg %p121
        %p211 = pneg %p150
        %p212 = pneg %p147
        %s213 = sand.u32 %s137, 1
        %s214 = scalar_lea.sflag [#allocation5], %s213
        %s215 = sand.u32 %s137, 1
        %s216 = smul.addr %s215, 256
        %s217 = scalar_lea.vmem [#allocation4], %s216
        %p218 = scmp.lt.s32.totalorder %s19, 1
        %s219 = scalar_select %p218, %s19, 1
        %s220 = smul.addr %s219, 32
        %s221 = smul.addr %s220, 8
        %s222 = scalar_lea.vmem %s0, %s221
        %224 = vst [vmem:[#allocation2] sm:$0xff] 0.0
        %225 = vst [vmem:[#allocation2 + $0x8] sm:$0xff] 0.0
        %226 = vst [vmem:[#allocation2 + $0x10] sm:$0x3] 0.0
        %227 = vst [vmem:[#allocation2 + $0x18] sm:$0xff] 0.0
        %228 = vst [vmem:[#allocation2 + $0x20] sm:$0xff] 0.0
        %229 = vst [vmem:[#allocation2 + $0x28] sm:$0x3] 0.0
        %230 = vst [vmem:[#allocation2 + $0x30] sm:$0xff] 0.0
        %231 = vst [vmem:[#allocation2 + $0x38] sm:$0xff] 0.0
        %232 = vst [vmem:[#allocation2 + $0x40] sm:$0x3] 0.0
        %233 = vst [vmem:[#allocation2 + $0x48] sm:$0xff] 0.0
        %234 = vst [vmem:[#allocation2 + $0x50] sm:$0xff] 0.0
        %235 = vst [vmem:[#allocation2 + $0x58] sm:$0x3] 0.0
        %236 = vst [vmem:[#allocation2 + $0x60] sm:$0xff] 0.0
        %237 = vst [vmem:[#allocation2 + $0x68] sm:$0xff] 0.0
        %238 = vst [vmem:[#allocation2 + $0x70] sm:$0x3] 0.0
        %239 = vst [vmem:[#allocation2 + $0x78] sm:$0xff] 0.0
        %240 = vst [vmem:[#allocation2 + $0x80] sm:$0xff] 0.0
        %241 = vst [vmem:[#allocation2 + $0x88] sm:$0x3] 0.0
        %242 = vst [vmem:[#allocation2 + $0x90] sm:$0xff] 0.0
        %243 = vst [vmem:[#allocation2 + $0x98] sm:$0xff] 0.0
        %244 = vst [vmem:[#allocation2 + $0xa0] sm:$0x3] 0.0
        %245 = vst [vmem:[#allocation2 + $0xa8] sm:$0xff] 0.0
        %246 = vst [vmem:[#allocation2 + $0xb0] sm:$0xff] 0.0
        %247 = vst [vmem:[#allocation2 + $0xb8] sm:$0x3] 0.0
        %248 = vst [vmem:[#allocation2 + $0xc0] sm:$0xff] 0.0
        %249 = vst [vmem:[#allocation2 + $0xc8] sm:$0xff] 0.0
        %250 = vst [vmem:[#allocation2 + $0xd0] sm:$0x3] 0.0
        %251 = vst [vmem:[#allocation2 + $0xd8] sm:$0xff] 0.0
        %252 = vst [vmem:[#allocation2 + $0xe0] sm:$0xff] 0.0
        %253 = vst [vmem:[#allocation2 + $0xe8] sm:$0x3] 0.0
        %254 = vst [vmem:[#allocation2 + $0xf0] sm:$0xff] 0.0
        %255 = vst [vmem:[#allocation2 + $0xf8] sm:$0xff] 0.0
        %256 = vst [vmem:[#allocation2 + $0x100] sm:$0x3] 0.0
        %257 = vst [vmem:[#allocation2 + $0x108] sm:$0xff] 0.0
        %258 = vst [vmem:[#allocation2 + $0x110] sm:$0xff] 0.0
        %259 = vst [vmem:[#allocation2 + $0x118] sm:$0x3] 0.0
        %260 = vst [vmem:[#allocation2 + $0x120] sm:$0xff] 0.0
        %261 = vst [vmem:[#allocation2 + $0x128] sm:$0xff] 0.0
        %262 = vst [vmem:[#allocation2 + $0x130] sm:$0x3] 0.0
        %263 = vst [vmem:[#allocation2 + $0x138] sm:$0xff] 0.0
        %264 = vst [vmem:[#allocation2 + $0x140] sm:$0xff] 0.0
        %265 = vst [vmem:[#allocation2 + $0x148] sm:$0x3] 0.0
        %266 = vst [vmem:[#allocation2 + $0x150] sm:$0xff] 0.0
        %267 = vst [vmem:[#allocation2 + $0x158] sm:$0xff] 0.0
        %268 = vst [vmem:[#allocation2 + $0x160] sm:$0x3] 0.0
        %269 = vst [vmem:[#allocation2 + $0x168] sm:$0xff] 0.0
        %270 = vst [vmem:[#allocation2 + $0x170] sm:$0xff] 0.0
        %271 = vst [vmem:[#allocation2 + $0x178] sm:$0x3] 0.0
        %272 = vst [vmem:[#allocation2 + $0x180] sm:$0xff] 0.0
        %273 = vst [vmem:[#allocation2 + $0x188] sm:$0xff] 0.0
        %274 = vst [vmem:[#allocation2 + $0x190] sm:$0x3] 0.0
        %275 = vst [vmem:[#allocation2 + $0x198] sm:$0xff] 0.0
        %276 = vst [vmem:[#allocation2 + $0x1a0] sm:$0xff] 0.0
        %277 = vst [vmem:[#allocation2 + $0x1a8] sm:$0x3] 0.0
        %v278 = vld [vmem:[%s222] sm:$0xff]
        %v279 = vld [vmem:[%s222 + $0x8] sm:$0xff]
        %v280 = vld [vmem:[%s222 + $0x10] sm:$0xff]
        %v281 = vld [vmem:[%s222 + $0x18] sm:$0xff]
        %v282 = vld [vmem:[%s222 + $0x20] sm:$0xff]
        %v283 = vld [vmem:[%s222 + $0x28] sm:$0xff]
        %v284 = vld [vmem:[%s222 + $0x30] sm:$0xff]
        %v285 = vld [vmem:[%s222 + $0x38] sm:$0xff]
        %v286 = vld [vmem:[%s222 + $0x40] sm:$0xff]
        %v287 = vld [vmem:[%s222 + $0x48] sm:$0xff]
        %v288 = vld [vmem:[%s222 + $0x50] sm:$0xff]
        %v289 = vld [vmem:[%s222 + $0x58] sm:$0xff]
        %v290 = vld [vmem:[%s222 + $0x60] sm:$0xff]
        %v291 = vld [vmem:[%s222 + $0x68] sm:$0xff]
        %v292 = vld [vmem:[%s222 + $0x70] sm:$0xff]
        %v293 = vld [vmem:[%s222 + $0x78] sm:$0xff]
        %v294 = vld [vmem:[%s222 + $0x80] sm:$0xff]
        %v295 = vld [vmem:[%s222 + $0x88] sm:$0xff]
        %v296 = vld [vmem:[%s222 + $0x90] sm:$0xff]
        %v297 = vld [vmem:[%s222 + $0x98] sm:$0xff]
        %v298 = vld [vmem:[%s222 + $0xa0] sm:$0xff]
        %v299 = vld [vmem:[%s222 + $0xa8] sm:$0xff]
        %v300 = vld [vmem:[%s222 + $0xb0] sm:$0xff]
        %v301 = vld [vmem:[%s222 + $0xb8] sm:$0xff]
        %v302 = vld [vmem:[%s222 + $0xc0] sm:$0xff]
        %v303 = vld [vmem:[%s222 + $0xc8] sm:$0xff]
        %v304 = vld [vmem:[%s222 + $0xd0] sm:$0xff]
        %v305 = vld [vmem:[%s222 + $0xd8] sm:$0xff]
        %v306 = vld [vmem:[%s222 + $0xe0] sm:$0xff]
        %v307 = vld [vmem:[%s222 + $0xe8] sm:$0xff]
        %v308 = vld [vmem:[%s222 + $0xf0] sm:$0xff]
        %v309 = vld [vmem:[%s222 + $0xf8] sm:$0xff]
        %s310 = scalar_lea.vmem [#allocation2], 24
        %311 = vst [vmem:[%s310 + $0x1] sm:$0xff] %v278
        %312 = vst [vmem:[%s310 + $0x9] sm:$0xff] %v279
        %313 = vst [vmem:[%s310 + $0x19] sm:$0xff] %v280
        %314 = vst [vmem:[%s310 + $0x21] sm:$0xff] %v281
        %315 = vst [vmem:[%s310 + $0x31] sm:$0xff] %v282
        %316 = vst [vmem:[%s310 + $0x39] sm:$0xff] %v283
        %317 = vst [vmem:[%s310 + $0x49] sm:$0xff] %v284
        %318 = vst [vmem:[%s310 + $0x51] sm:$0xff] %v285
        %319 = vst [vmem:[%s310 + $0x61] sm:$0xff] %v286
        %320 = vst [vmem:[%s310 + $0x69] sm:$0xff] %v287
        %321 = vst [vmem:[%s310 + $0x79] sm:$0xff] %v288
        %322 = vst [vmem:[%s310 + $0x81] sm:$0xff] %v289
        %323 = vst [vmem:[%s310 + $0x91] sm:$0xff] %v290
        %324 = vst [vmem:[%s310 + $0x99] sm:$0xff] %v291
        %325 = vst [vmem:[%s310 + $0xa9] sm:$0xff] %v292
        %326 = vst [vmem:[%s310 + $0xb1] sm:$0xff] %v293
        %327 = vst [vmem:[%s310 + $0xc1] sm:$0xff] %v294
        %328 = vst [vmem:[%s310 + $0xc9] sm:$0xff] %v295
        %329 = vst [vmem:[%s310 + $0xd9] sm:$0xff] %v296
        %330 = vst [vmem:[%s310 + $0xe1] sm:$0xff] %v297
        %331 = vst [vmem:[%s310 + $0xf1] sm:$0xff] %v298
        %332 = vst [vmem:[%s310 + $0xf9] sm:$0xff] %v299
        %333 = vst [vmem:[%s310 + $0x109] sm:$0xff] %v300
        %334 = vst [vmem:[%s310 + $0x111] sm:$0xff] %v301
        %335 = vst [vmem:[%s310 + $0x121] sm:$0xff] %v302
        %336 = vst [vmem:[%s310 + $0x129] sm:$0xff] %v303
        %337 = vst [vmem:[%s310 + $0x139] sm:$0xff] %v304
        %338 = vst [vmem:[%s310 + $0x141] sm:$0xff] %v305
        %339 = vst [vmem:[%s310 + $0x151] sm:$0xff] %v306
        %340 = vst [vmem:[%s310 + $0x159] sm:$0xff] %v307
        %341 = vst [vmem:[%s310 + $0x169] sm:$0xff] %v308
        %342 = vst [vmem:[%s310 + $0x171] sm:$0xff] %v309
        %v343 = vld [vmem:[#allocation2] sm:$0xff]
        %v344 = vld [vmem:[#allocation2 + $0x8] sm:$0xff]
        %v345 = vld [vmem:[#allocation2 + $0x18] sm:$0xff]
        %v346 = vld [vmem:[#allocation2 + $0x20] sm:$0xff]
        %v347 = vld [vmem:[#allocation2 + $0x30] sm:$0xff]
        %v348 = vld [vmem:[#allocation2 + $0x38] sm:$0xff]
        %v349 = vld [vmem:[#allocation2 + $0x48] sm:$0xff]
        %v350 = vld [vmem:[#allocation2 + $0x50] sm:$0xff]
        %v351 = vld [vmem:[#allocation2 + $0x60] sm:$0xff]
        %v352 = vld [vmem:[#allocation2 + $0x68] sm:$0xff]
        %v353 = vld [vmem:[#allocation2 + $0x78] sm:$0xff]
        %v354 = vld [vmem:[#allocation2 + $0x80] sm:$0xff]
        %v355 = vld [vmem:[#allocation2 + $0x90] sm:$0xff]
        %v356 = vld [vmem:[#allocation2 + $0x98] sm:$0xff]
        %v357 = vld [vmem:[#allocation2 + $0xa8] sm:$0xff]
        %v358 = vld [vmem:[#allocation2 + $0xb0] sm:$0xff]
        %v359 = vld [vmem:[#allocation2 + $0xc0] sm:$0xff]
        %v360 = vld [vmem:[#allocation2 + $0xc8] sm:$0xff]
        %v361 = vld [vmem:[#allocation2 + $0xd8] sm:$0xff]
        %v362 = vld [vmem:[#allocation2 + $0xe0] sm:$0xff]
        %v363 = vld [vmem:[#allocation2 + $0xf0] sm:$0xff]
        %v364 = vld [vmem:[#allocation2 + $0xf8] sm:$0xff]
        %v365 = vld [vmem:[#allocation2 + $0x108] sm:$0xff]
        %v366 = vld [vmem:[#allocation2 + $0x110] sm:$0xff]
        %v367 = vld [vmem:[#allocation2 + $0x120] sm:$0xff]
        %v368 = vld [vmem:[#allocation2 + $0x128] sm:$0xff]
        %v369 = vld [vmem:[#allocation2 + $0x138] sm:$0xff]
        %v370 = vld [vmem:[#allocation2 + $0x140] sm:$0xff]
        %v371 = vld [vmem:[#allocation2 + $0x150] sm:$0xff]
        %v372 = vld [vmem:[#allocation2 + $0x158] sm:$0xff]
        %v373 = vld [vmem:[#allocation2 + $0x168] sm:$0xff]
        %v374 = vld [vmem:[#allocation2 + $0x170] sm:$0xff]
        %v375 = vpack.c.bf16 %v344, %v343
        %v376 = vpack.c.bf16 %v346, %v345
        %v377 = vpack.c.bf16 %v348, %v347
        %v378 = vpack.c.bf16 %v350, %v349
        %v379 = vpack.c.bf16 %v352, %v351
        %v380 = vpack.c.bf16 %v354, %v353
        %v381 = vpack.c.bf16 %v356, %v355
        %v382 = vpack.c.bf16 %v358, %v357
        %v383 = vpack.c.bf16 %v360, %v359
        %v384 = vpack.c.bf16 %v362, %v361
        %v385 = vpack.c.bf16 %v364, %v363
        %v386 = vpack.c.bf16 %v366, %v365
        %v387 = vpack.c.bf16 %v368, %v367
        %v388 = vpack.c.bf16 %v370, %v369
        %v389 = vpack.c.bf16 %v372, %v371
        %v390 = vpack.c.bf16 %v374, %v373
        %v391 = vld [vmem:[%s1] sm:$0xf]
        %v392 = vld [vmem:[%s1 + $0x4] sm:$0xf]
        %v393 = vld [vmem:[%s1 + $0x8] sm:$0xf]
        %v394 = vld [vmem:[%s1 + $0xc] sm:$0xf]
        %v395 = vld [vmem:[%s1 + $0x10] sm:$0xf]
        %v396 = vld [vmem:[%s1 + $0x14] sm:$0xf]
        %v397 = vld [vmem:[%s1 + $0x18] sm:$0xf]
        %v398 = vld [vmem:[%s1 + $0x1c] sm:$0xf]
        %v399 = vld [vmem:[%s1 + $0x20] sm:$0xf]
        %v400 = vld [vmem:[%s1 + $0x24] sm:$0xf]
        %v401 = vld [vmem:[%s1 + $0x28] sm:$0xf]
        %v402 = vld [vmem:[%s1 + $0x2c] sm:$0xf]
        %v403 = vld [vmem:[%s1 + $0x30] sm:$0xf]
        %v404 = vld [vmem:[%s1 + $0x34] sm:$0xf]
        %v405 = vld [vmem:[%s1 + $0x38] sm:$0xf]
        %v406 = vld [vmem:[%s1 + $0x3c] sm:$0xf]
        %v407 = vld [vmem:[#allocation2 + $0x1] sm:$0xff]
        %v408 = vld [vmem:[#allocation2 + $0x9] sm:$0xff]
        %v409 = vld [vmem:[#allocation2 + $0x19] sm:$0xff]
        %v410 = vld [vmem:[#allocation2 + $0x21] sm:$0xff]
        %v411 = vld [vmem:[#allocation2 + $0x31] sm:$0xff]
        %v412 = vld [vmem:[#allocation2 + $0x39] sm:$0xff]
        %v413 = vld [vmem:[#allocation2 + $0x49] sm:$0xff]
        %v414 = vld [vmem:[#allocation2 + $0x51] sm:$0xff]
        %v415 = vld [vmem:[#allocation2 + $0x61] sm:$0xff]
        %v416 = vld [vmem:[#allocation2 + $0x69] sm:$0xff]
        %v417 = vld [vmem:[#allocation2 + $0x79] sm:$0xff]
        %v418 = vld [vmem:[#allocation2 + $0x81] sm:$0xff]
        %v419 = vld [vmem:[#allocation2 + $0x91] sm:$0xff]
        %v420 = vld [vmem:[#allocation2 + $0x99] sm:$0xff]
        %v421 = vld [vmem:[#allocation2 + $0xa9] sm:$0xff]
        %v422 = vld [vmem:[#allocation2 + $0xb1] sm:$0xff]
        %v423 = vld [vmem:[#allocation2 + $0xc1] sm:$0xff]
        %v424 = vld [vmem:[#allocation2 + $0xc9] sm:$0xff]
        %v425 = vld [vmem:[#allocation2 + $0xd9] sm:$0xff]
        %v426 = vld [vmem:[#allocation2 + $0xe1] sm:$0xff]
        %v427 = vld [vmem:[#allocation2 + $0xf1] sm:$0xff]
        %v428 = vld [vmem:[#allocation2 + $0xf9] sm:$0xff]
        %v429 = vld [vmem:[#allocation2 + $0x109] sm:$0xff]
        %v430 = vld [vmem:[#allocation2 + $0x111] sm:$0xff]
        %v431 = vld [vmem:[#allocation2 + $0x121] sm:$0xff]
        %v432 = vld [vmem:[#allocation2 + $0x129] sm:$0xff]
        %v433 = vld [vmem:[#allocation2 + $0x139] sm:$0xff]
        %v434 = vld [vmem:[#allocation2 + $0x141] sm:$0xff]
        %v435 = vld [vmem:[#allocation2 + $0x151] sm:$0xff]
        %v436 = vld [vmem:[#allocation2 + $0x159] sm:$0xff]
        %v437 = vld [vmem:[#allocation2 + $0x169] sm:$0xff]
        %v438 = vld [vmem:[#allocation2 + $0x171] sm:$0xff]
        %v439 = vpack.c.bf16 %v408, %v407
        %v440 = vpack.c.bf16 %v410, %v409
        %v441 = vpack.c.bf16 %v412, %v411
        %v442 = vpack.c.bf16 %v414, %v413
        %v443 = vpack.c.bf16 %v416, %v415
        %v444 = vpack.c.bf16 %v418, %v417
        %v445 = vpack.c.bf16 %v420, %v419
        %v446 = vpack.c.bf16 %v422, %v421
        %v447 = vpack.c.bf16 %v424, %v423
        %v448 = vpack.c.bf16 %v426, %v425
        %v449 = vpack.c.bf16 %v428, %v427
        %v450 = vpack.c.bf16 %v430, %v429
        %v451 = vpack.c.bf16 %v432, %v431
        %v452 = vpack.c.bf16 %v434, %v433
        %v453 = vpack.c.bf16 %v436, %v435
        %v454 = vpack.c.bf16 %v438, %v437
        %s455 = scalar_lea.vmem %s1, 64
        %v456 = vld [vmem:[%s455] sm:$0xf]
        %v457 = vld [vmem:[%s455 + $0x4] sm:$0xf]
        %v458 = vld [vmem:[%s455 + $0x8] sm:$0xf]
        %v459 = vld [vmem:[%s455 + $0xc] sm:$0xf]
        %v460 = vld [vmem:[%s455 + $0x10] sm:$0xf]
        %v461 = vld [vmem:[%s455 + $0x14] sm:$0xf]
        %v462 = vld [vmem:[%s455 + $0x18] sm:$0xf]
        %v463 = vld [vmem:[%s455 + $0x1c] sm:$0xf]
        %v464 = vld [vmem:[%s455 + $0x20] sm:$0xf]
        %v465 = vld [vmem:[%s455 + $0x24] sm:$0xf]
        %v466 = vld [vmem:[%s455 + $0x28] sm:$0xf]
        %v467 = vld [vmem:[%s455 + $0x2c] sm:$0xf]
        %v468 = vld [vmem:[%s455 + $0x30] sm:$0xf]
        %v469 = vld [vmem:[%s455 + $0x34] sm:$0xf]
        %v470 = vld [vmem:[%s455 + $0x38] sm:$0xf]
        %v471 = vld [vmem:[%s455 + $0x3c] sm:$0xf]
        %v488 = vunpack.c.l.b16 %v456
        %v489 = vunpack.c.l.b16 %v457
        %v490 = vunpack.c.l.b16 %v458
        %v491 = vunpack.c.l.b16 %v459
        %v492 = vunpack.c.l.b16 %v460
        %v493 = vunpack.c.l.b16 %v461
        %v494 = vunpack.c.l.b16 %v462
        %v495 = vunpack.c.l.b16 %v463
        %v496 = vunpack.c.l.b16 %v464
        %v497 = vunpack.c.l.b16 %v465
        %v498 = vunpack.c.l.b16 %v466
        %v499 = vunpack.c.l.b16 %v467
        %v500 = vunpack.c.l.b16 %v468
        %v501 = vunpack.c.l.b16 %v469
        %v502 = vunpack.c.l.b16 %v470
        %v503 = vunpack.c.l.b16 %v471
        %v504 = vpack.c.b16 %v489, %v488
        %v505 = vpack.c.b16 %v491, %v490
        %v506 = vpack.c.b16 %v493, %v492
        %v507 = vpack.c.b16 %v495, %v494
        %v508 = vpack.c.b16 %v497, %v496
        %v509 = vpack.c.b16 %v499, %v498
        %v510 = vpack.c.b16 %v501, %v500
        %v511 = vpack.c.b16 %v503, %v502
        %520 = vmatprep.subr.bf16.mxu0 0
        %521 = vmatpush1.bf16.msra.mxu0 %v504
        %522 = vmatprep.subr.bf16.mxu0 0
        %523 = vmatpush1.bf16.msra.mxu0 %v505
        %524 = vmatprep.subr.bf16.mxu0 0
        %525 = vmatpush1.bf16.msra.mxu0 %v506
        %526 = vmatprep.subr.bf16.mxu0 0
        %527 = vmatpush1.bf16.msra.mxu0 %v507
        %528 = vmatprep.subr.bf16.mxu0 0
        %529 = vmatpush1.bf16.msra.mxu0 %v508
        %530 = vmatprep.subr.bf16.mxu0 0
        %531 = vmatpush1.bf16.msra.mxu0 %v509
        %532 = vmatprep.subr.bf16.mxu0 0
        %533 = vmatpush1.bf16.msra.mxu0 %v510
        %534 = vmatprep.subr.bf16.mxu0 0
        %535 = vmatpush1.bf16.msra.mxu0 %v511
        %536 = vmatprep.subr.bf16.mxu0 0
        %537 = vmatpush1.bf16.msra.mxu0 0
        %538 = vmatprep.subr.bf16.mxu0 0
        %539 = vmatpush1.bf16.msra.mxu0 0
        %540 = vmatprep.subr.bf16.mxu0 0
        %541 = vmatpush1.bf16.msra.mxu0 0
        %542 = vmatprep.subr.bf16.mxu0 0
        %543 = vmatpush1.bf16.msra.mxu0 0
        %544 = vmatprep.subr.bf16.mxu0 0
        %545 = vmatpush1.bf16.msra.mxu0 0
        %546 = vmatprep.subr.bf16.mxu0 0
        %547 = vmatpush1.bf16.msra.mxu0 0
        %548 = vmatprep.subr.bf16.mxu0 0
        %549 = vmatpush1.bf16.msra.mxu0 0
        %550 = vmatprep.subr.bf16.mxu0 0
        %551 = vmatpush1.bf16.msra.mxu0 0
        %552 = vmatprep.mubr.bf16.mxu0 0
        %553 = vmatmul.mubr.bf16.gmra.mrb[0].mxu0 %v439
        %v554 = vpop.f32.mrb[0].mxu0
        %v555 = vadd.f32 0.0, %v554
        %v556 = vpop.f32.mrb[0].mxu0
        %v557 = vpop.f32.mrb[0].mxu0
        %v558 = vadd.f32 0.0, %v557
        %v559 = vpop.f32.mrb[0].mxu0
        %560 = vmatprep.mubr.bf16.mxu0 0
        %561 = vmatmul.mubr.bf16.gmra.mrb[0].mxu0 %v440
        %v562 = vpop.f32.mrb[0].mxu0
        %v563 = vadd.f32 0.0, %v562
        %v564 = vpop.f32.mrb[0].mxu0
        %v565 = vpop.f32.mrb[0].mxu0
        %v566 = vadd.f32 0.0, %v565
        %v567 = vpop.f32.mrb[0].mxu0
        %568 = vmatprep.mubr.bf16.mxu0 0
        %569 = vmatmul.mubr.bf16.gmra.mrb[0].mxu0 %v441
        %v570 = vpop.f32.mrb[0].mxu0
        %v571 = vadd.f32 0.0, %v570
        %v572 = vpop.f32.mrb[0].mxu0
        %v573 = vpop.f32.mrb[0].mxu0
        %v574 = vadd.f32 0.0, %v573
        %v575 = vpop.f32.mrb[0].mxu0
        %576 = vmatprep.mubr.bf16.mxu0 0
        %577 = vmatmul.mubr.bf16.gmra.mrb[0].mxu0 %v442
        %v578 = vpop.f32.mrb[0].mxu0
        %v579 = vadd.f32 0.0, %v578
        %v580 = vpop.f32.mrb[0].mxu0
        %v581 = vpop.f32.mrb[0].mxu0
        %v582 = vadd.f32 0.0, %v581
        %v583 = vpop.f32.mrb[0].mxu0
        %584 = vmatprep.mubr.bf16.mxu0 0
        %585 = vmatmul.mubr.bf16.gmra.mrb[0].mxu0 %v443
        %v586 = vpop.f32.mrb[0].mxu0
        %v587 = vadd.f32 0.0, %v586
        %v588 = vpop.f32.mrb[0].mxu0
        %v589 = vpop.f32.mrb[0].mxu0
        %v590 = vadd.f32 0.0, %v589
        %v591 = vpop.f32.mrb[0].mxu0
        %592 = vmatprep.mubr.bf16.mxu0 0
        %593 = vmatmul.mubr.bf16.gmra.mrb[0].mxu0 %v444
        %v594 = vpop.f32.mrb[0].mxu0
        %v595 = vadd.f32 0.0, %v594
        %v596 = vpop.f32.mrb[0].mxu0
        %v597 = vpop.f32.mrb[0].mxu0
        %v598 = vadd.f32 0.0, %v597
        %v599 = vpop.f32.mrb[0].mxu0
        %600 = vmatprep.mubr.bf16.mxu0 0
        %601 = vmatmul.mubr.bf16.gmra.mrb[0].mxu0 %v445
        %v602 = vpop.f32.mrb[0].mxu0
        %v603 = vadd.f32 0.0, %v602
        %v604 = vpop.f32.mrb[0].mxu0
        %v605 = vpop.f32.mrb[0].mxu0
        %v606 = vadd.f32 0.0, %v605
        %v607 = vpop.f32.mrb[0].mxu0
        %608 = vmatprep.mubr.bf16.mxu0 0
        %609 = vmatmul.mubr.bf16.gmra.mrb[0].mxu0 %v446
        %v610 = vpop.f32.mrb[0].mxu0
        %v611 = vadd.f32 0.0, %v610
        %v612 = vpop.f32.mrb[0].mxu0
        %v613 = vpop.f32.mrb[0].mxu0
        %v614 = vadd.f32 0.0, %v613
        %v615 = vpop.f32.mrb[0].mxu0
        %616 = vmatprep.mubr.bf16.mxu0 0
        %617 = vmatmul.mubr.bf16.gmra.mrb[0].mxu0 %v447
        %v618 = vpop.f32.mrb[0].mxu0
        %v619 = vadd.f32 0.0, %v618
        %v620 = vpop.f32.mrb[0].mxu0
        %v621 = vpop.f32.mrb[0].mxu0
        %v622 = vadd.f32 0.0, %v621
        %v623 = vpop.f32.mrb[0].mxu0
        %624 = vmatprep.mubr.bf16.mxu0 0
        %625 = vmatmul.mubr.bf16.gmra.mrb[0].mxu0 %v448
        %v626 = vpop.f32.mrb[0].mxu0
        %v627 = vadd.f32 0.0, %v626
        %v628 = vpop.f32.mrb[0].mxu0
        %v629 = vpop.f32.mrb[0].mxu0
        %v630 = vadd.f32 0.0, %v629
        %v631 = vpop.f32.mrb[0].mxu0
        %632 = vmatprep.mubr.bf16.mxu0 0
        %633 = vmatmul.mubr.bf16.gmra.mrb[0].mxu0 %v449
        %v634 = vpop.f32.mrb[0].mxu0
        %v635 = vadd.f32 0.0, %v634
        %v636 = vpop.f32.mrb[0].mxu0
        %v637 = vpop.f32.mrb[0].mxu0
        %v638 = vadd.f32 0.0, %v637
        %v639 = vpop.f32.mrb[0].mxu0
        %640 = vmatprep.mubr.bf16.mxu0 0
        %641 = vmatmul.mubr.bf16.gmra.mrb[0].mxu0 %v450
        %v642 = vpop.f32.mrb[0].mxu0
        %v643 = vadd.f32 0.0, %v642
        %v644 = vpop.f32.mrb[0].mxu0
        %v645 = vpop.f32.mrb[0].mxu0
        %v646 = vadd.f32 0.0, %v645
        %v647 = vpop.f32.mrb[0].mxu0
        %648 = vmatprep.mubr.bf16.mxu0 0
        %649 = vmatmul.mubr.bf16.gmra.mrb[0].mxu0 %v451
        %v650 = vpop.f32.mrb[0].mxu0
        %v651 = vadd.f32 0.0, %v650
        %v652 = vpop.f32.mrb[0].mxu0
        %v653 = vpop.f32.mrb[0].mxu0
        %v654 = vadd.f32 0.0, %v653
        %v655 = vpop.f32.mrb[0].mxu0
        %656 = vmatprep.mubr.bf16.mxu0 0
        %657 = vmatmul.mubr.bf16.gmra.mrb[0].mxu0 %v452
        %v658 = vpop.f32.mrb[0].mxu0
        %v659 = vadd.f32 0.0, %v658
        %v660 = vpop.f32.mrb[0].mxu0
        %v661 = vpop.f32.mrb[0].mxu0
        %v662 = vadd.f32 0.0, %v661
        %v663 = vpop.f32.mrb[0].mxu0
        %664 = vmatprep.mubr.bf16.mxu0 0
        %665 = vmatmul.mubr.bf16.gmra.mrb[0].mxu0 %v453
        %v666 = vpop.f32.mrb[0].mxu0
        %v667 = vadd.f32 0.0, %v666
        %v668 = vpop.f32.mrb[0].mxu0
        %v669 = vpop.f32.mrb[0].mxu0
        %v670 = vadd.f32 0.0, %v669
        %v671 = vpop.f32.mrb[0].mxu0
        %672 = vmatprep.mubr.bf16.mxu0 0
        %673 = vmatmul.mubr.bf16.gmra.mrb[0].mxu0 %v454
        %v674 = vpop.f32.mrb[0].mxu0
        %v675 = vadd.f32 0.0, %v674
        %v676 = vpop.f32.mrb[0].mxu0
        %v677 = vpop.f32.mrb[0].mxu0
        %v678 = vadd.f32 0.0, %v677
        %v679 = vpop.f32.mrb[0].mxu0
        %680 = vdwg.mxu0
        %v697 = vunpack.c.l.b16 %v391
        %v698 = vunpack.c.l.b16 %v392
        %v699 = vunpack.c.l.b16 %v393
        %v700 = vunpack.c.l.b16 %v394
        %v701 = vunpack.c.l.b16 %v395
        %v702 = vunpack.c.l.b16 %v396
        %v703 = vunpack.c.l.b16 %v397
        %v704 = vunpack.c.l.b16 %v398
        %v705 = vunpack.c.l.b16 %v399
        %v706 = vunpack.c.l.b16 %v400
        %v707 = vunpack.c.l.b16 %v401
        %v708 = vunpack.c.l.b16 %v402
        %v709 = vunpack.c.l.b16 %v403
        %v710 = vunpack.c.l.b16 %v404
        %v711 = vunpack.c.l.b16 %v405
        %v712 = vunpack.c.l.b16 %v406
        %v713 = vpack.c.b16 %v698, %v697
        %v714 = vpack.c.b16 %v700, %v699
        %v715 = vpack.c.b16 %v702, %v701
        %v716 = vpack.c.b16 %v704, %v703
        %v717 = vpack.c.b16 %v706, %v705
        %v718 = vpack.c.b16 %v708, %v707
        %v719 = vpack.c.b16 %v710, %v709
        %v720 = vpack.c.b16 %v712, %v711
        %729 = vmatprep.subr.bf16.mxu0 0
        %730 = vmatpush1.bf16.msra.mxu0 %v713
        %731 = vmatprep.subr.bf16.mxu0 0
        %732 = vmatpush1.bf16.msra.mxu0 %v714
        %733 = vmatprep.subr.bf16.mxu0 0
        %734 = vmatpush1.bf16.msra.mxu0 %v715
        %735 = vmatprep.subr.bf16.mxu0 0
        %736 = vmatpush1.bf16.msra.mxu0 %v716
        %737 = vmatprep.subr.bf16.mxu0 0
        %738 = vmatpush1.bf16.msra.mxu0 %v717
        %739 = vmatprep.subr.bf16.mxu0 0
        %740 = vmatpush1.bf16.msra.mxu0 %v718
        %741 = vmatprep.subr.bf16.mxu0 0
        %742 = vmatpush1.bf16.msra.mxu0 %v719
        %743 = vmatprep.subr.bf16.mxu0 0
        %744 = vmatpush1.bf16.msra.mxu0 %v720
        %745 = vmatprep.subr.bf16.mxu0 0
        %746 = vmatpush1.bf16.msra.mxu0 0
        %747 = vmatprep.subr.bf16.mxu0 0
        %748 = vmatpush1.bf16.msra.mxu0 0
        %749 = vmatprep.subr.bf16.mxu0 0
        %750 = vmatpush1.bf16.msra.mxu0 0
        %751 = vmatprep.subr.bf16.mxu0 0
        %752 = vmatpush1.bf16.msra.mxu0 0
        %753 = vmatprep.subr.bf16.mxu0 0
        %754 = vmatpush1.bf16.msra.mxu0 0
        %755 = vmatprep.subr.bf16.mxu0 0
        %756 = vmatpush1.bf16.msra.mxu0 0
        %757 = vmatprep.subr.bf16.mxu0 0
        %758 = vmatpush1.bf16.msra.mxu0 0
        %759 = vmatprep.subr.bf16.mxu0 0
        %760 = vmatpush1.bf16.msra.mxu0 0
        %761 = vmatprep.mubr.bf16.mxu0 0
        %762 = vmatmul.mubr.bf16.gmra.mrb[0].mxu0 %v375
        %v763 = vpop.f32.mrb[0].mxu0
        %v764 = vadd.f32 %v555, %v763
        %v765 = vpop.f32.mrb[0].mxu0
        %v766 = vpop.f32.mrb[0].mxu0
        %v767 = vadd.f32 %v558, %v766
        %v768 = vpop.f32.mrb[0].mxu0
        %769 = vmatprep.mubr.bf16.mxu0 0
        %770 = vmatmul.mubr.bf16.gmra.mrb[0].mxu0 %v376
        %v771 = vpop.f32.mrb[0].mxu0
        %v772 = vadd.f32 %v563, %v771
        %v773 = vpop.f32.mrb[0].mxu0
        %v774 = vpop.f32.mrb[0].mxu0
        %v775 = vadd.f32 %v566, %v774
        %v776 = vpop.f32.mrb[0].mxu0
        %777 = vmatprep.mubr.bf16.mxu0 0
        %778 = vmatmul.mubr.bf16.gmra.mrb[0].mxu0 %v377
        %v779 = vpop.f32.mrb[0].mxu0
        %v780 = vadd.f32 %v571, %v779
        %v781 = vpop.f32.mrb[0].mxu0
        %v782 = vpop.f32.mrb[0].mxu0
        %v783 = vadd.f32 %v574, %v782
        %v784 = vpop.f32.mrb[0].mxu0
        %785 = vmatprep.mubr.bf16.mxu0 0
        %786 = vmatmul.mubr.bf16.gmra.mrb[0].mxu0 %v378
        %v787 = vpop.f32.mrb[0].mxu0
        %v788 = vadd.f32 %v579, %v787
        %v789 = vpop.f32.mrb[0].mxu0
        %v790 = vpop.f32.mrb[0].mxu0
        %v791 = vadd.f32 %v582, %v790
        %v792 = vpop.f32.mrb[0].mxu0
        %793 = vmatprep.mubr.bf16.mxu0 0
        %794 = vmatmul.mubr.bf16.gmra.mrb[0].mxu0 %v379
        %v795 = vpop.f32.mrb[0].mxu0
        %v796 = vadd.f32 %v587, %v795
        %v797 = vpop.f32.mrb[0].mxu0
        %v798 = vpop.f32.mrb[0].mxu0
        %v799 = vadd.f32 %v590, %v798
        %v800 = vpop.f32.mrb[0].mxu0
        %801 = vmatprep.mubr.bf16.mxu0 0
        %802 = vmatmul.mubr.bf16.gmra.mrb[0].mxu0 %v380
        %v803 = vpop.f32.mrb[0].mxu0
        %v804 = vadd.f32 %v595, %v803
        %v805 = vpop.f32.mrb[0].mxu0
        %v806 = vpop.f32.mrb[0].mxu0
        %v807 = vadd.f32 %v598, %v806
        %v808 = vpop.f32.mrb[0].mxu0
        %809 = vmatprep.mubr.bf16.mxu0 0
        %810 = vmatmul.mubr.bf16.gmra.mrb[0].mxu0 %v381
        %v811 = vpop.f32.mrb[0].mxu0
        %v812 = vadd.f32 %v603, %v811
        %v813 = vpop.f32.mrb[0].mxu0
        %v814 = vpop.f32.mrb[0].mxu0
        %v815 = vadd.f32 %v606, %v814
        %v816 = vpop.f32.mrb[0].mxu0
        %817 = vmatprep.mubr.bf16.mxu0 0
        %818 = vmatmul.mubr.bf16.gmra.mrb[0].mxu0 %v382
        %v819 = vpop.f32.mrb[0].mxu0
        %v820 = vadd.f32 %v611, %v819
        %v821 = vpop.f32.mrb[0].mxu0
        %v822 = vpop.f32.mrb[0].mxu0
        %v823 = vadd.f32 %v614, %v822
        %v824 = vpop.f32.mrb[0].mxu0
        %825 = vmatprep.mubr.bf16.mxu0 0
        %826 = vmatmul.mubr.bf16.gmra.mrb[0].mxu0 %v383
        %v827 = vpop.f32.mrb[0].mxu0
        %v828 = vadd.f32 %v619, %v827
        %v829 = vpop.f32.mrb[0].mxu0
        %v830 = vpop.f32.mrb[0].mxu0
        %v831 = vadd.f32 %v622, %v830
        %v832 = vpop.f32.mrb[0].mxu0
        %833 = vmatprep.mubr.bf16.mxu0 0
        %834 = vmatmul.mubr.bf16.gmra.mrb[0].mxu0 %v384
        %v835 = vpop.f32.mrb[0].mxu0
        %v836 = vadd.f32 %v627, %v835
        %v837 = vpop.f32.mrb[0].mxu0
        %v838 = vpop.f32.mrb[0].mxu0
        %v839 = vadd.f32 %v630, %v838
        %v840 = vpop.f32.mrb[0].mxu0
        %841 = vmatprep.mubr.bf16.mxu0 0
        %842 = vmatmul.mubr.bf16.gmra.mrb[0].mxu0 %v385
        %v843 = vpop.f32.mrb[0].mxu0
        %v844 = vadd.f32 %v635, %v843
        %v845 = vpop.f32.mrb[0].mxu0
        %v846 = vpop.f32.mrb[0].mxu0
        %v847 = vadd.f32 %v638, %v846
        %v848 = vpop.f32.mrb[0].mxu0
        %849 = vmatprep.mubr.bf16.mxu0 0
        %850 = vmatmul.mubr.bf16.gmra.mrb[0].mxu0 %v386
        %v851 = vpop.f32.mrb[0].mxu0
        %v852 = vadd.f32 %v643, %v851
        %v853 = vpop.f32.mrb[0].mxu0
        %v854 = vpop.f32.mrb[0].mxu0
        %v855 = vadd.f32 %v646, %v854
        %v856 = vpop.f32.mrb[0].mxu0
        %857 = vmatprep.mubr.bf16.mxu0 0
        %858 = vmatmul.mubr.bf16.gmra.mrb[0].mxu0 %v387
        %v859 = vpop.f32.mrb[0].mxu0
        %v860 = vadd.f32 %v651, %v859
        %v861 = vpop.f32.mrb[0].mxu0
        %v862 = vpop.f32.mrb[0].mxu0
        %v863 = vadd.f32 %v654, %v862
        %v864 = vpop.f32.mrb[0].mxu0
        %865 = vmatprep.mubr.bf16.mxu0 0
        %866 = vmatmul.mubr.bf16.gmra.mrb[0].mxu0 %v388
        %v867 = vpop.f32.mrb[0].mxu0
        %v868 = vadd.f32 %v659, %v867
        %v869 = vpop.f32.mrb[0].mxu0
        %v870 = vpop.f32.mrb[0].mxu0
        %v871 = vadd.f32 %v662, %v870
        %v872 = vpop.f32.mrb[0].mxu0
        %873 = vmatprep.mubr.bf16.mxu0 0
        %874 = vmatmul.mubr.bf16.gmra.mrb[0].mxu0 %v389
        %v875 = vpop.f32.mrb[0].mxu0
        %v876 = vadd.f32 %v667, %v875
        %v877 = vpop.f32.mrb[0].mxu0
        %v878 = vpop.f32.mrb[0].mxu0
        %v879 = vadd.f32 %v670, %v878
        %v880 = vpop.f32.mrb[0].mxu0
        %881 = vmatprep.mubr.bf16.mxu0 0
        %882 = vmatmul.mubr.bf16.gmra.mrb[0].mxu0 %v390
        %v883 = vpop.f32.mrb[0].mxu0
        %v884 = vadd.f32 %v675, %v883
        %v885 = vpop.f32.mrb[0].mxu0
        %v886 = vpop.f32.mrb[0].mxu0
        %v887 = vadd.f32 %v678, %v886
        %v888 = vpop.f32.mrb[0].mxu0
        %889 = vdwg.mxu0
        %v890 = vld [vmem:[#allocation2 + $0x2] sm:$0xff]
        %v891 = vld [vmem:[#allocation2 + $0xa] sm:$0xff]
        %v892 = vld [vmem:[#allocation2 + $0x1a] sm:$0xff]
        %v893 = vld [vmem:[#allocation2 + $0x22] sm:$0xff]
        %v894 = vld [vmem:[#allocation2 + $0x32] sm:$0xff]
        %v895 = vld [vmem:[#allocation2 + $0x3a] sm:$0xff]
        %v896 = vld [vmem:[#allocation2 + $0x4a] sm:$0xff]
        %v897 = vld [vmem:[#allocation2 + $0x52] sm:$0xff]
        %v898 = vld [vmem:[#allocation2 + $0x62] sm:$0xff]
        %v899 = vld [vmem:[#allocation2 + $0x6a] sm:$0xff]
        %v900 = vld [vmem:[#allocation2 + $0x7a] sm:$0xff]
        %v901 = vld [vmem:[#allocation2 + $0x82] sm:$0xff]
        %v902 = vld [vmem:[#allocation2 + $0x92] sm:$0xff]
        %v903 = vld [vmem:[#allocation2 + $0x9a] sm:$0xff]
        %v904 = vld [vmem:[#allocation2 + $0xaa] sm:$0xff]
        %v905 = vld [vmem:[#allocation2 + $0xb2] sm:$0xff]
        %v906 = vld [vmem:[#allocation2 + $0xc2] sm:$0xff]
        %v907 = vld [vmem:[#allocation2 + $0xca] sm:$0xff]
        %v908 = vld [vmem:[#allocation2 + $0xda] sm:$0xff]
        %v909 = vld [vmem:[#allocation2 + $0xe2] sm:$0xff]
        %v910 = vld [vmem:[#allocation2 + $0xf2] sm:$0xff]
        %v911 = vld [vmem:[#allocation2 + $0xfa] sm:$0xff]
        %v912 = vld [vmem:[#allocation2 + $0x10a] sm:$0xff]
        %v913 = vld [vmem:[#allocation2 + $0x112] sm:$0xff]
        %v914 = vld [vmem:[#allocation2 + $0x122] sm:$0xff]
        %v915 = vld [vmem:[#allocation2 + $0x12a] sm:$0xff]
        %v916 = vld [vmem:[#allocation2 + $0x13a] sm:$0xff]
        %v917 = vld [vmem:[#allocation2 + $0x142] sm:$0xff]
        %v918 = vld [vmem:[#allocation2 + $0x152] sm:$0xff]
        %v919 = vld [vmem:[#allocation2 + $0x15a] sm:$0xff]
        %v920 = vld [vmem:[#allocation2 + $0x16a] sm:$0xff]
        %v921 = vld [vmem:[#allocation2 + $0x172] sm:$0xff]
        %v922 = vpack.c.bf16 %v891, %v890
        %v923 = vpack.c.bf16 %v893, %v892
        %v924 = vpack.c.bf16 %v895, %v894
        %v925 = vpack.c.bf16 %v897, %v896
        %v926 = vpack.c.bf16 %v899, %v898
        %v927 = vpack.c.bf16 %v901, %v900
        %v928 = vpack.c.bf16 %v903, %v902
        %v929 = vpack.c.bf16 %v905, %v904
        %v930 = vpack.c.bf16 %v907, %v906
        %v931 = vpack.c.bf16 %v909, %v908
        %v932 = vpack.c.bf16 %v911, %v910
        %v933 = vpack.c.bf16 %v913, %v912
        %v934 = vpack.c.bf16 %v915, %v914
        %v935 = vpack.c.bf16 %v917, %v916
        %v936 = vpack.c.bf16 %v919, %v918
        %v937 = vpack.c.bf16 %v921, %v920
        %s938 = scalar_lea.vmem %s1, 128
        %v939 = vld [vmem:[%s938] sm:$0xf]
        %v940 = vld [vmem:[%s938 + $0x4] sm:$0xf]
        %v941 = vld [vmem:[%s938 + $0x8] sm:$0xf]
        %v942 = vld [vmem:[%s938 + $0xc] sm:$0xf]
        %v943 = vld [vmem:[%s938 + $0x10] sm:$0xf]
        %v944 = vld [vmem:[%s938 + $0x14] sm:$0xf]
        %v945 = vld [vmem:[%s938 + $0x18] sm:$0xf]
        %v946 = vld [vmem:[%s938 + $0x1c] sm:$0xf]
        %v947 = vld [vmem:[%s938 + $0x20] sm:$0xf]
        %v948 = vld [vmem:[%s938 + $0x24] sm:$0xf]
        %v949 = vld [vmem:[%s938 + $0x28] sm:$0xf]
        %v950 = vld [vmem:[%s938 + $0x2c] sm:$0xf]
        %v951 = vld [vmem:[%s938 + $0x30] sm:$0xf]
        %v952 = vld [vmem:[%s938 + $0x34] sm:$0xf]
        %v953 = vld [vmem:[%s938 + $0x38] sm:$0xf]
        %v954 = vld [vmem:[%s938 + $0x3c] sm:$0xf]
        %v971 = vunpack.c.l.b16 %v939
        %v972 = vunpack.c.l.b16 %v940
        %v973 = vunpack.c.l.b16 %v941
        %v974 = vunpack.c.l.b16 %v942
        %v975 = vunpack.c.l.b16 %v943
        %v976 = vunpack.c.l.b16 %v944
        %v977 = vunpack.c.l.b16 %v945
        %v978 = vunpack.c.l.b16 %v946
        %v979 = vunpack.c.l.b16 %v947
        %v980 = vunpack.c.l.b16 %v948
        %v981 = vunpack.c.l.b16 %v949
        %v982 = vunpack.c.l.b16 %v950
        %v983 = vunpack.c.l.b16 %v951
        %v984 = vunpack.c.l.b16 %v952
        %v985 = vunpack.c.l.b16 %v953
        %v986 = vunpack.c.l.b16 %v954
        %v987 = vpack.c.b16 %v972, %v971
        %v988 = vpack.c.b16 %v974, %v973
        %v989 = vpack.c.b16 %v976, %v975
        %v990 = vpack.c.b16 %v978, %v977
        %v991 = vpack.c.b16 %v980, %v979
        %v992 = vpack.c.b16 %v982, %v981
        %v993 = vpack.c.b16 %v984, %v983
        %v994 = vpack.c.b16 %v986, %v985
        %1003 = vmatprep.subr.bf16.mxu0 0
        %1004 = vmatpush1.bf16.msra.mxu0 %v987
        %1005 = vmatprep.subr.bf16.mxu0 0
        %1006 = vmatpush1.bf16.msra.mxu0 %v988
        %1007 = vmatprep.subr.bf16.mxu0 0
        %1008 = vmatpush1.bf16.msra.mxu0 %v989
        %1009 = vmatprep.subr.bf16.mxu0 0
        %1010 = vmatpush1.bf16.msra.mxu0 %v990
        %1011 = vmatprep.subr.bf16.mxu0 0
        %1012 = vmatpush1.bf16.msra.mxu0 %v991
        %1013 = vmatprep.subr.bf16.mxu0 0
        %1014 = vmatpush1.bf16.msra.mxu0 %v992
        %1015 = vmatprep.subr.bf16.mxu0 0
        %1016 = vmatpush1.bf16.msra.mxu0 %v993
        %1017 = vmatprep.subr.bf16.mxu0 0
        %1018 = vmatpush1.bf16.msra.mxu0 %v994
        %1019 = vmatprep.subr.bf16.mxu0 0
        %1020 = vmatpush1.bf16.msra.mxu0 0
        %1021 = vmatprep.subr.bf16.mxu0 0
        %1022 = vmatpush1.bf16.msra.mxu0 0
        %1023 = vmatprep.subr.bf16.mxu0 0
        %1024 = vmatpush1.bf16.msra.mxu0 0
        %1025 = vmatprep.subr.bf16.mxu0 0
        %1026 = vmatpush1.bf16.msra.mxu0 0
        %1027 = vmatprep.subr.bf16.mxu0 0
        %1028 = vmatpush1.bf16.msra.mxu0 0
        %1029 = vmatprep.subr.bf16.mxu0 0
        %1030 = vmatpush1.bf16.msra.mxu0 0
        %1031 = vmatprep.subr.bf16.mxu0 0
        %1032 = vmatpush1.bf16.msra.mxu0 0
        %1033 = vmatprep.subr.bf16.mxu0 0
        %1034 = vmatpush1.bf16.msra.mxu0 0
        %1035 = vmatprep.mubr.bf16.mxu0 0
        %1036 = vmatmul.mubr.bf16.gmra.mrb[0].mxu0 %v922
        %v1037 = vpop.f32.mrb[0].mxu0
        %v1038 = vadd.f32 0.0, %v1037
        %v1039 = vpop.f32.mrb[0].mxu0
        %v1040 = vpop.f32.mrb[0].mxu0
        %v1041 = vadd.f32 0.0, %v1040
        %v1042 = vpop.f32.mrb[0].mxu0
        %1043 = vmatprep.mubr.bf16.mxu0 0
        %1044 = vmatmul.mubr.bf16.gmra.mrb[0].mxu0 %v923
        %v1045 = vpop.f32.mrb[0].mxu0
        %v1046 = vadd.f32 0.0, %v1045
        %v1047 = vpop.f32.mrb[0].mxu0
        %v1048 = vpop.f32.mrb[0].mxu0
        %v1049 = vadd.f32 0.0, %v1048
        %v1050 = vpop.f32.mrb[0].mxu0
        %1051 = vmatprep.mubr.bf16.mxu0 0
        %1052 = vmatmul.mubr.bf16.gmra.mrb[0].mxu0 %v924
        %v1053 = vpop.f32.mrb[0].mxu0
        %v1054 = vadd.f32 0.0, %v1053
        %v1055 = vpop.f32.mrb[0].mxu0
        %v1056 = vpop.f32.mrb[0].mxu0
        %v1057 = vadd.f32 0.0, %v1056
        %v1058 = vpop.f32.mrb[0].mxu0
        %1059 = vmatprep.mubr.bf16.mxu0 0
        %1060 = vmatmul.mubr.bf16.gmra.mrb[0].mxu0 %v925
        %v1061 = vpop.f32.mrb[0].mxu0
        %v1062 = vadd.f32 0.0, %v1061
        %v1063 = vpop.f32.mrb[0].mxu0
        %v1064 = vpop.f32.mrb[0].mxu0
        %v1065 = vadd.f32 0.0, %v1064
        %v1066 = vpop.f32.mrb[0].mxu0
        %1067 = vmatprep.mubr.bf16.mxu0 0
        %1068 = vmatmul.mubr.bf16.gmra.mrb[0].mxu0 %v926
        %v1069 = vpop.f32.mrb[0].mxu0
        %v1070 = vadd.f32 0.0, %v1069
        %v1071 = vpop.f32.mrb[0].mxu0
        %v1072 = vpop.f32.mrb[0].mxu0
        %v1073 = vadd.f32 0.0, %v1072
        %v1074 = vpop.f32.mrb[0].mxu0
        %1075 = vmatprep.mubr.bf16.mxu0 0
        %1076 = vmatmul.mubr.bf16.gmra.mrb[0].mxu0 %v927
        %v1077 = vpop.f32.mrb[0].mxu0
        %v1078 = vadd.f32 0.0, %v1077
        %v1079 = vpop.f32.mrb[0].mxu0
        %v1080 = vpop.f32.mrb[0].mxu0
        %v1081 = vadd.f32 0.0, %v1080
        %v1082 = vpop.f32.mrb[0].mxu0
        %1083 = vmatprep.mubr.bf16.mxu0 0
        %1084 = vmatmul.mubr.bf16.gmra.mrb[0].mxu0 %v928
        %v1085 = vpop.f32.mrb[0].mxu0
        %v1086 = vadd.f32 0.0, %v1085
        %v1087 = vpop.f32.mrb[0].mxu0
        %v1088 = vpop.f32.mrb[0].mxu0
        %v1089 = vadd.f32 0.0, %v1088
        %v1090 = vpop.f32.mrb[0].mxu0
        %1091 = vmatprep.mubr.bf16.mxu0 0
        %1092 = vmatmul.mubr.bf16.gmra.mrb[0].mxu0 %v929
        %v1093 = vpop.f32.mrb[0].mxu0
        %v1094 = vadd.f32 0.0, %v1093
        %v1095 = vpop.f32.mrb[0].mxu0
        %v1096 = vpop.f32.mrb[0].mxu0
        %v1097 = vadd.f32 0.0, %v1096
        %v1098 = vpop.f32.mrb[0].mxu0
        %1099 = vmatprep.mubr.bf16.mxu0 0
        %1100 = vmatmul.mubr.bf16.gmra.mrb[0].mxu0 %v930
        %v1101 = vpop.f32.mrb[0].mxu0
        %v1102 = vadd.f32 0.0, %v1101
        %v1103 = vpop.f32.mrb[0].mxu0
        %v1104 = vpop.f32.mrb[0].mxu0
        %v1105 = vadd.f32 0.0, %v1104
        %v1106 = vpop.f32.mrb[0].mxu0
        %1107 = vmatprep.mubr.bf16.mxu0 0
        %1108 = vmatmul.mubr.bf16.gmra.mrb[0].mxu0 %v931
        %v1109 = vpop.f32.mrb[0].mxu0
        %v1110 = vadd.f32 0.0, %v1109
        %v1111 = vpop.f32.mrb[0].mxu0
        %v1112 = vpop.f32.mrb[0].mxu0
        %v1113 = vadd.f32 0.0, %v1112
        %v1114 = vpop.f32.mrb[0].mxu0
        %1115 = vmatprep.mubr.bf16.mxu0 0
        %1116 = vmatmul.mubr.bf16.gmra.mrb[0].mxu0 %v932
        %v1117 = vpop.f32.mrb[0].mxu0
        %v1118 = vadd.f32 0.0, %v1117
        %v1119 = vpop.f32.mrb[0].mxu0
        %v1120 = vpop.f32.mrb[0].mxu0
        %v1121 = vadd.f32 0.0, %v1120
        %v1122 = vpop.f32.mrb[0].mxu0
        %1123 = vmatprep.mubr.bf16.mxu0 0
        %1124 = vmatmul.mubr.bf16.gmra.mrb[0].mxu0 %v933
        %v1125 = vpop.f32.mrb[0].mxu0
        %v1126 = vadd.f32 0.0, %v1125
        %v1127 = vpop.f32.mrb[0].mxu0
        %v1128 = vpop.f32.mrb[0].mxu0
        %v1129 = vadd.f32 0.0, %v1128
        %v1130 = vpop.f32.mrb[0].mxu0
        %1131 = vmatprep.mubr.bf16.mxu0 0
        %1132 = vmatmul.mubr.bf16.gmra.mrb[0].mxu0 %v934
        %v1133 = vpop.f32.mrb[0].mxu0
        %v1134 = vadd.f32 0.0, %v1133
        %v1135 = vpop.f32.mrb[0].mxu0
        %v1136 = vpop.f32.mrb[0].mxu0
        %v1137 = vadd.f32 0.0, %v1136
        %v1138 = vpop.f32.mrb[0].mxu0
        %1139 = vmatprep.mubr.bf16.mxu0 0
        %1140 = vmatmul.mubr.bf16.gmra.mrb[0].mxu0 %v935
        %v1141 = vpop.f32.mrb[0].mxu0
        %v1142 = vadd.f32 0.0, %v1141
        %v1143 = vpop.f32.mrb[0].mxu0
        %v1144 = vpop.f32.mrb[0].mxu0
        %v1145 = vadd.f32 0.0, %v1144
        %v1146 = vpop.f32.mrb[0].mxu0
        %1147 = vmatprep.mubr.bf16.mxu0 0
        %1148 = vmatmul.mubr.bf16.gmra.mrb[0].mxu0 %v936
        %v1149 = vpop.f32.mrb[0].mxu0
        %v1150 = vadd.f32 0.0, %v1149
        %v1151 = vpop.f32.mrb[0].mxu0
        %v1152 = vpop.f32.mrb[0].mxu0
        %v1153 = vadd.f32 0.0, %v1152
        %v1154 = vpop.f32.mrb[0].mxu0
        %1155 = vmatprep.mubr.bf16.mxu0 0
        %1156 = vmatmul.mubr.bf16.gmra.mrb[0].mxu0 %v937
        %v1157 = vpop.f32.mrb[0].mxu0
        %v1158 = vadd.f32 0.0, %v1157
        %v1159 = vpop.f32.mrb[0].mxu0
        %v1160 = vpop.f32.mrb[0].mxu0
        %v1161 = vadd.f32 0.0, %v1160
        %v1162 = vpop.f32.mrb[0].mxu0
        %1163 = vdwg.mxu0
        %v1164 = vadd.f32 %v764, %v1038
        %v1165 = vadd.f32 %v767, %v1041
        %v1166 = vadd.f32 %v772, %v1046
        %v1167 = vadd.f32 %v775, %v1049
        %v1168 = vadd.f32 %v780, %v1054
        %v1169 = vadd.f32 %v783, %v1057
        %v1170 = vadd.f32 %v788, %v1062
        %v1171 = vadd.f32 %v791, %v1065
        %v1172 = vadd.f32 %v796, %v1070
        %v1173 = vadd.f32 %v799, %v1073
        %v1174 = vadd.f32 %v804, %v1078
        %v1175 = vadd.f32 %v807, %v1081
        %v1176 = vadd.f32 %v812, %v1086
        %v1177 = vadd.f32 %v815, %v1089
        %v1178 = vadd.f32 %v820, %v1094
        %v1179 = vadd.f32 %v823, %v1097
        %v1180 = vadd.f32 %v828, %v1102
        %v1181 = vadd.f32 %v831, %v1105
        %v1182 = vadd.f32 %v836, %v1110
        %v1183 = vadd.f32 %v839, %v1113
        %v1184 = vadd.f32 %v844, %v1118
        %v1185 = vadd.f32 %v847, %v1121
        %v1186 = vadd.f32 %v852, %v1126
        %v1187 = vadd.f32 %v855, %v1129
        %v1188 = vadd.f32 %v860, %v1134
        %v1189 = vadd.f32 %v863, %v1137
        %v1190 = vadd.f32 %v868, %v1142
        %v1191 = vadd.f32 %v871, %v1145
        %v1192 = vadd.f32 %v876, %v1150
        %v1193 = vadd.f32 %v879, %v1153
        %v1194 = vadd.f32 %v884, %v1158
        %v1195 = vadd.f32 %v887, %v1161
        %v1196 = vld [vmem:[%s310] sm:$0xff]
        %v1197 = vld [vmem:[%s310 + $0x8] sm:$0xff]
        %v1198 = vld [vmem:[%s310 + $0x18] sm:$0xff]
        %v1199 = vld [vmem:[%s310 + $0x20] sm:$0xff]
        %v1200 = vld [vmem:[%s310 + $0x30] sm:$0xff]
        %v1201 = vld [vmem:[%s310 + $0x38] sm:$0xff]
        %v1202 = vld [vmem:[%s310 + $0x48] sm:$0xff]
        %v1203 = vld [vmem:[%s310 + $0x50] sm:$0xff]
        %v1204 = vld [vmem:[%s310 + $0x60] sm:$0xff]
        %v1205 = vld [vmem:[%s310 + $0x68] sm:$0xff]
        %v1206 = vld [vmem:[%s310 + $0x78] sm:$0xff]
        %v1207 = vld [vmem:[%s310 + $0x80] sm:$0xff]
        %v1208 = vld [vmem:[%s310 + $0x90] sm:$0xff]
        %v1209 = vld [vmem:[%s310 + $0x98] sm:$0xff]
        %v1210 = vld [vmem:[%s310 + $0xa8] sm:$0xff]
        %v1211 = vld [vmem:[%s310 + $0xb0] sm:$0xff]
        %v1212 = vld [vmem:[%s310 + $0xc0] sm:$0xff]
        %v1213 = vld [vmem:[%s310 + $0xc8] sm:$0xff]
        %v1214 = vld [vmem:[%s310 + $0xd8] sm:$0xff]
        %v1215 = vld [vmem:[%s310 + $0xe0] sm:$0xff]
        %v1216 = vld [vmem:[%s310 + $0xf0] sm:$0xff]
        %v1217 = vld [vmem:[%s310 + $0xf8] sm:$0xff]
        %v1218 = vld [vmem:[%s310 + $0x108] sm:$0xff]
        %v1219 = vld [vmem:[%s310 + $0x110] sm:$0xff]
        %v1220 = vld [vmem:[%s310 + $0x120] sm:$0xff]
        %v1221 = vld [vmem:[%s310 + $0x128] sm:$0xff]
        %v1222 = vld [vmem:[%s310 + $0x138] sm:$0xff]
        %v1223 = vld [vmem:[%s310 + $0x140] sm:$0xff]
        %v1224 = vld [vmem:[%s310 + $0x150] sm:$0xff]
        %v1225 = vld [vmem:[%s310 + $0x158] sm:$0xff]
        %v1226 = vld [vmem:[%s310 + $0x168] sm:$0xff]
        %v1227 = vld [vmem:[%s310 + $0x170] sm:$0xff]
        %v1228 = vpack.c.bf16 %v1197, %v1196
        %v1229 = vpack.c.bf16 %v1199, %v1198
        %v1230 = vpack.c.bf16 %v1201, %v1200
        %v1231 = vpack.c.bf16 %v1203, %v1202
        %v1232 = vpack.c.bf16 %v1205, %v1204
        %v1233 = vpack.c.bf16 %v1207, %v1206
        %v1234 = vpack.c.bf16 %v1209, %v1208
        %v1235 = vpack.c.bf16 %v1211, %v1210
        %v1236 = vpack.c.bf16 %v1213, %v1212
        %v1237 = vpack.c.bf16 %v1215, %v1214
        %v1238 = vpack.c.bf16 %v1217, %v1216
        %v1239 = vpack.c.bf16 %v1219, %v1218
        %v1240 = vpack.c.bf16 %v1221, %v1220
        %v1241 = vpack.c.bf16 %v1223, %v1222
        %v1242 = vpack.c.bf16 %v1225, %v1224
        %v1243 = vpack.c.bf16 %v1227, %v1226
        %s1244 = scalar_lea.vmem %s1, 192
        %v1245 = vld [vmem:[%s1244] sm:$0xf]
        %v1246 = vld [vmem:[%s1244 + $0x4] sm:$0xf]
        %v1247 = vld [vmem:[%s1244 + $0x8] sm:$0xf]
        %v1248 = vld [vmem:[%s1244 + $0xc] sm:$0xf]
        %v1249 = vld [vmem:[%s1244 + $0x10] sm:$0xf]
        %v1250 = vld [vmem:[%s1244 + $0x14] sm:$0xf]
        %v1251 = vld [vmem:[%s1244 + $0x18] sm:$0xf]
        %v1252 = vld [vmem:[%s1244 + $0x1c] sm:$0xf]
        %v1253 = vld [vmem:[%s1244 + $0x20] sm:$0xf]
        %v1254 = vld [vmem:[%s1244 + $0x24] sm:$0xf]
        %v1255 = vld [vmem:[%s1244 + $0x28] sm:$0xf]
        %v1256 = vld [vmem:[%s1244 + $0x2c] sm:$0xf]
        %v1257 = vld [vmem:[%s1244 + $0x30] sm:$0xf]
        %v1258 = vld [vmem:[%s1244 + $0x34] sm:$0xf]
        %v1259 = vld [vmem:[%s1244 + $0x38] sm:$0xf]
        %v1260 = vld [vmem:[%s1244 + $0x3c] sm:$0xf]
        %v1277 = vunpack.c.l.b16 %v1245
        %v1278 = vunpack.c.l.b16 %v1246
        %v1279 = vunpack.c.l.b16 %v1247
        %v1280 = vunpack.c.l.b16 %v1248
        %v1281 = vunpack.c.l.b16 %v1249
        %v1282 = vunpack.c.l.b16 %v1250
        %v1283 = vunpack.c.l.b16 %v1251
        %v1284 = vunpack.c.l.b16 %v1252
        %v1285 = vunpack.c.l.b16 %v1253
        %v1286 = vunpack.c.l.b16 %v1254
        %v1287 = vunpack.c.l.b16 %v1255
        %v1288 = vunpack.c.l.b16 %v1256
        %v1289 = vunpack.c.l.b16 %v1257
        %v1290 = vunpack.c.l.b16 %v1258
        %v1291 = vunpack.c.l.b16 %v1259
        %v1292 = vunpack.c.l.b16 %v1260
        %v1293 = vpack.c.b16 %v1278, %v1277
        %v1294 = vpack.c.b16 %v1280, %v1279
        %v1295 = vpack.c.b16 %v1282, %v1281
        %v1296 = vpack.c.b16 %v1284, %v1283
        %v1297 = vpack.c.b16 %v1286, %v1285
        %v1298 = vpack.c.b16 %v1288, %v1287
        %v1299 = vpack.c.b16 %v1290, %v1289
        %v1300 = vpack.c.b16 %v1292, %v1291
        %1309 = vmatprep.subr.bf16.mxu0 0
        %1310 = vmatpush1.bf16.msra.mxu0 %v1293
        %1311 = vmatprep.subr.bf16.mxu0 0
        %1312 = vmatpush1.bf16.msra.mxu0 %v1294
        %1313 = vmatprep.subr.bf16.mxu0 0
        %1314 = vmatpush1.bf16.msra.mxu0 %v1295
        %1315 = vmatprep.subr.bf16.mxu0 0
        %1316 = vmatpush1.bf16.msra.mxu0 %v1296
        %1317 = vmatprep.subr.bf16.mxu0 0
        %1318 = vmatpush1.bf16.msra.mxu0 %v1297
        %1319 = vmatprep.subr.bf16.mxu0 0
        %1320 = vmatpush1.bf16.msra.mxu0 %v1298
        %1321 = vmatprep.subr.bf16.mxu0 0
        %1322 = vmatpush1.bf16.msra.mxu0 %v1299
        %1323 = vmatprep.subr.bf16.mxu0 0
        %1324 = vmatpush1.bf16.msra.mxu0 %v1300
        %1325 = vmatprep.subr.bf16.mxu0 0
        %1326 = vmatpush1.bf16.msra.mxu0 0
        %1327 = vmatprep.subr.bf16.mxu0 0
        %1328 = vmatpush1.bf16.msra.mxu0 0
        %1329 = vmatprep.subr.bf16.mxu0 0
        %1330 = vmatpush1.bf16.msra.mxu0 0
        %1331 = vmatprep.subr.bf16.mxu0 0
        %1332 = vmatpush1.bf16.msra.mxu0 0
        %1333 = vmatprep.subr.bf16.mxu0 0
        %1334 = vmatpush1.bf16.msra.mxu0 0
        %1335 = vmatprep.subr.bf16.mxu0 0
        %1336 = vmatpush1.bf16.msra.mxu0 0
        %1337 = vmatprep.subr.bf16.mxu0 0
        %1338 = vmatpush1.bf16.msra.mxu0 0
        %1339 = vmatprep.subr.bf16.mxu0 0
        %1340 = vmatpush1.bf16.msra.mxu0 0
        %1341 = vmatprep.mubr.bf16.mxu0 0
        %1342 = vmatmul.mubr.bf16.gmra.mrb[0].mxu0 %v1228
        %v1343 = vpop.f32.mrb[0].mxu0
        %v1344 = vadd.f32 0.0, %v1343
        %v1345 = vpop.f32.mrb[0].mxu0
        %v1346 = vpop.f32.mrb[0].mxu0
        %v1347 = vadd.f32 0.0, %v1346
        %v1348 = vpop.f32.mrb[0].mxu0
        %1349 = vmatprep.mubr.bf16.mxu0 0
        %1350 = vmatmul.mubr.bf16.gmra.mrb[0].mxu0 %v1229
        %v1351 = vpop.f32.mrb[0].mxu0
        %v1352 = vadd.f32 0.0, %v1351
        %v1353 = vpop.f32.mrb[0].mxu0
        %v1354 = vpop.f32.mrb[0].mxu0
        %v1355 = vadd.f32 0.0, %v1354
        %v1356 = vpop.f32.mrb[0].mxu0
        %1357 = vmatprep.mubr.bf16.mxu0 0
        %1358 = vmatmul.mubr.bf16.gmra.mrb[0].mxu0 %v1230
        %v1359 = vpop.f32.mrb[0].mxu0
        %v1360 = vadd.f32 0.0, %v1359
        %v1361 = vpop.f32.mrb[0].mxu0
        %v1362 = vpop.f32.mrb[0].mxu0
        %v1363 = vadd.f32 0.0, %v1362
        %v1364 = vpop.f32.mrb[0].mxu0
        %1365 = vmatprep.mubr.bf16.mxu0 0
        %1366 = vmatmul.mubr.bf16.gmra.mrb[0].mxu0 %v1231
        %v1367 = vpop.f32.mrb[0].mxu0
        %v1368 = vadd.f32 0.0, %v1367
        %v1369 = vpop.f32.mrb[0].mxu0
        %v1370 = vpop.f32.mrb[0].mxu0
        %v1371 = vadd.f32 0.0, %v1370
        %v1372 = vpop.f32.mrb[0].mxu0
        %1373 = vmatprep.mubr.bf16.mxu0 0
        %1374 = vmatmul.mubr.bf16.gmra.mrb[0].mxu0 %v1232
        %v1375 = vpop.f32.mrb[0].mxu0
        %v1376 = vadd.f32 0.0, %v1375
        %v1377 = vpop.f32.mrb[0].mxu0
        %v1378 = vpop.f32.mrb[0].mxu0
        %v1379 = vadd.f32 0.0, %v1378
        %v1380 = vpop.f32.mrb[0].mxu0
        %1381 = vmatprep.mubr.bf16.mxu0 0
        %1382 = vmatmul.mubr.bf16.gmra.mrb[0].mxu0 %v1233
        %v1383 = vpop.f32.mrb[0].mxu0
        %v1384 = vadd.f32 0.0, %v1383
        %v1385 = vpop.f32.mrb[0].mxu0
        %v1386 = vpop.f32.mrb[0].mxu0
        %v1387 = vadd.f32 0.0, %v1386
        %v1388 = vpop.f32.mrb[0].mxu0
        %1389 = vmatprep.mubr.bf16.mxu0 0
        %1390 = vmatmul.mubr.bf16.gmra.mrb[0].mxu0 %v1234
        %v1391 = vpop.f32.mrb[0].mxu0
        %v1392 = vadd.f32 0.0, %v1391
        %v1393 = vpop.f32.mrb[0].mxu0
        %v1394 = vpop.f32.mrb[0].mxu0
        %v1395 = vadd.f32 0.0, %v1394
        %v1396 = vpop.f32.mrb[0].mxu0
        %1397 = vmatprep.mubr.bf16.mxu0 0
        %1398 = vmatmul.mubr.bf16.gmra.mrb[0].mxu0 %v1235
        %v1399 = vpop.f32.mrb[0].mxu0
        %v1400 = vadd.f32 0.0, %v1399
        %v1401 = vpop.f32.mrb[0].mxu0
        %v1402 = vpop.f32.mrb[0].mxu0
        %v1403 = vadd.f32 0.0, %v1402
        %v1404 = vpop.f32.mrb[0].mxu0
        %1405 = vmatprep.mubr.bf16.mxu0 0
        %1406 = vmatmul.mubr.bf16.gmra.mrb[0].mxu0 %v1236
        %v1407 = vpop.f32.mrb[0].mxu0
        %v1408 = vadd.f32 0.0, %v1407
        %v1409 = vpop.f32.mrb[0].mxu0
        %v1410 = vpop.f32.mrb[0].mxu0
        %v1411 = vadd.f32 0.0, %v1410
        %v1412 = vpop.f32.mrb[0].mxu0
        %1413 = vmatprep.mubr.bf16.mxu0 0
        %1414 = vmatmul.mubr.bf16.gmra.mrb[0].mxu0 %v1237
        %v1415 = vpop.f32.mrb[0].mxu0
        %v1416 = vadd.f32 0.0, %v1415
        %v1417 = vpop.f32.mrb[0].mxu0
        %v1418 = vpop.f32.mrb[0].mxu0
        %v1419 = vadd.f32 0.0, %v1418
        %v1420 = vpop.f32.mrb[0].mxu0
        %1421 = vmatprep.mubr.bf16.mxu0 0
        %1422 = vmatmul.mubr.bf16.gmra.mrb[0].mxu0 %v1238
        %v1423 = vpop.f32.mrb[0].mxu0
        %v1424 = vadd.f32 0.0, %v1423
        %v1425 = vpop.f32.mrb[0].mxu0
        %v1426 = vpop.f32.mrb[0].mxu0
        %v1427 = vadd.f32 0.0, %v1426
        %v1428 = vpop.f32.mrb[0].mxu0
        %1429 = vmatprep.mubr.bf16.mxu0 0
        %1430 = vmatmul.mubr.bf16.gmra.mrb[0].mxu0 %v1239
        %v1431 = vpop.f32.mrb[0].mxu0
        %v1432 = vadd.f32 0.0, %v1431
        %v1433 = vpop.f32.mrb[0].mxu0
        %v1434 = vpop.f32.mrb[0].mxu0
        %v1435 = vadd.f32 0.0, %v1434
        %v1436 = vpop.f32.mrb[0].mxu0
        %1437 = vmatprep.mubr.bf16.mxu0 0
        %1438 = vmatmul.mubr.bf16.gmra.mrb[0].mxu0 %v1240
        %v1439 = vpop.f32.mrb[0].mxu0
        %v1440 = vadd.f32 0.0, %v1439
        %v1441 = vpop.f32.mrb[0].mxu0
        %v1442 = vpop.f32.mrb[0].mxu0
        %v1443 = vadd.f32 0.0, %v1442
        %v1444 = vpop.f32.mrb[0].mxu0
        %1445 = vmatprep.mubr.bf16.mxu0 0
        %1446 = vmatmul.mubr.bf16.gmra.mrb[0].mxu0 %v1241
        %v1447 = vpop.f32.mrb[0].mxu0
        %v1448 = vadd.f32 0.0, %v1447
        %v1449 = vpop.f32.mrb[0].mxu0
        %v1450 = vpop.f32.mrb[0].mxu0
        %v1451 = vadd.f32 0.0, %v1450
        %v1452 = vpop.f32.mrb[0].mxu0
        %1453 = vmatprep.mubr.bf16.mxu0 0
        %1454 = vmatmul.mubr.bf16.gmra.mrb[0].mxu0 %v1242
        %v1455 = vpop.f32.mrb[0].mxu0
        %v1456 = vadd.f32 0.0, %v1455
        %v1457 = vpop.f32.mrb[0].mxu0
        %v1458 = vpop.f32.mrb[0].mxu0
        %v1459 = vadd.f32 0.0, %v1458
        %v1460 = vpop.f32.mrb[0].mxu0
        %1461 = vmatprep.mubr.bf16.mxu0 0
        %1462 = vmatmul.mubr.bf16.gmra.mrb[0].mxu0 %v1243
        %v1463 = vpop.f32.mrb[0].mxu0
        %v1464 = vadd.f32 0.0, %v1463
        %v1465 = vpop.f32.mrb[0].mxu0
        %v1466 = vpop.f32.mrb[0].mxu0
        %v1467 = vadd.f32 0.0, %v1466
        %v1468 = vpop.f32.mrb[0].mxu0
        %1469 = vdwg.mxu0
        %v1470 = vadd.f32 %v1164, %v1344
        %v1471 = vadd.f32 %v1165, %v1347
        %v1472 = vadd.f32 %v1166, %v1352
        %v1473 = vadd.f32 %v1167, %v1355
        %v1474 = vadd.f32 %v1168, %v1360
        %v1475 = vadd.f32 %v1169, %v1363
        %v1476 = vadd.f32 %v1170, %v1368
        %v1477 = vadd.f32 %v1171, %v1371
        %v1478 = vadd.f32 %v1172, %v1376
        %v1479 = vadd.f32 %v1173, %v1379
        %v1480 = vadd.f32 %v1174, %v1384
        %v1481 = vadd.f32 %v1175, %v1387
        %v1482 = vadd.f32 %v1176, %v1392
        %v1483 = vadd.f32 %v1177, %v1395
        %v1484 = vadd.f32 %v1178, %v1400
        %v1485 = vadd.f32 %v1179, %v1403
        %v1486 = vadd.f32 %v1180, %v1408
        %v1487 = vadd.f32 %v1181, %v1411
        %v1488 = vadd.f32 %v1182, %v1416
        %v1489 = vadd.f32 %v1183, %v1419
        %v1490 = vadd.f32 %v1184, %v1424
        %v1491 = vadd.f32 %v1185, %v1427
        %v1492 = vadd.f32 %v1186, %v1432
        %v1493 = vadd.f32 %v1187, %v1435
        %v1494 = vadd.f32 %v1188, %v1440
        %v1495 = vadd.f32 %v1189, %v1443
        %v1496 = vadd.f32 %v1190, %v1448
        %v1497 = vadd.f32 %v1191, %v1451
        %v1498 = vadd.f32 %v1192, %v1456
        %v1499 = vadd.f32 %v1193, %v1459
        %v1500 = vadd.f32 %v1194, %v1464
        %v1501 = vadd.f32 %v1195, %v1467
        %v1502 = vld [vmem:[%s310 + $0x1] sm:$0xff]
        %v1503 = vld [vmem:[%s310 + $0x9] sm:$0xff]
        %v1504 = vld [vmem:[%s310 + $0x19] sm:$0xff]
        %v1505 = vld [vmem:[%s310 + $0x21] sm:$0xff]
        %v1506 = vld [vmem:[%s310 + $0x31] sm:$0xff]
        %v1507 = vld [vmem:[%s310 + $0x39] sm:$0xff]
        %v1508 = vld [vmem:[%s310 + $0x49] sm:$0xff]
        %v1509 = vld [vmem:[%s310 + $0x51] sm:$0xff]
        %v1510 = vld [vmem:[%s310 + $0x61] sm:$0xff]
        %v1511 = vld [vmem:[%s310 + $0x69] sm:$0xff]
        %v1512 = vld [vmem:[%s310 + $0x79] sm:$0xff]
        %v1513 = vld [vmem:[%s310 + $0x81] sm:$0xff]
        %v1514 = vld [vmem:[%s310 + $0x91] sm:$0xff]
        %v1515 = vld [vmem:[%s310 + $0x99] sm:$0xff]
        %v1516 = vld [vmem:[%s310 + $0xa9] sm:$0xff]
        %v1517 = vld [vmem:[%s310 + $0xb1] sm:$0xff]
        %v1518 = vld [vmem:[%s310 + $0xc1] sm:$0xff]
        %v1519 = vld [vmem:[%s310 + $0xc9] sm:$0xff]
        %v1520 = vld [vmem:[%s310 + $0xd9] sm:$0xff]
        %v1521 = vld [vmem:[%s310 + $0xe1] sm:$0xff]
        %v1522 = vld [vmem:[%s310 + $0xf1] sm:$0xff]
        %v1523 = vld [vmem:[%s310 + $0xf9] sm:$0xff]
        %v1524 = vld [vmem:[%s310 + $0x109] sm:$0xff]
        %v1525 = vld [vmem:[%s310 + $0x111] sm:$0xff]
        %v1526 = vld [vmem:[%s310 + $0x121] sm:$0xff]
        %v1527 = vld [vmem:[%s310 + $0x129] sm:$0xff]
        %v1528 = vld [vmem:[%s310 + $0x139] sm:$0xff]
        %v1529 = vld [vmem:[%s310 + $0x141] sm:$0xff]
        %v1530 = vld [vmem:[%s310 + $0x151] sm:$0xff]
        %v1531 = vld [vmem:[%s310 + $0x159] sm:$0xff]
        %v1532 = vld [vmem:[%s310 + $0x169] sm:$0xff]
        %v1533 = vld [vmem:[%s310 + $0x171] sm:$0xff]
        %v1534 = vpack.c.bf16 %v1503, %v1502
        %v1535 = vpack.c.bf16 %v1505, %v1504
        %v1536 = vpack.c.bf16 %v1507, %v1506
        %v1537 = vpack.c.bf16 %v1509, %v1508
        %v1538 = vpack.c.bf16 %v1511, %v1510
        %v1539 = vpack.c.bf16 %v1513, %v1512
        %v1540 = vpack.c.bf16 %v1515, %v1514
        %v1541 = vpack.c.bf16 %v1517, %v1516
        %v1542 = vpack.c.bf16 %v1519, %v1518
        %v1543 = vpack.c.bf16 %v1521, %v1520
        %v1544 = vpack.c.bf16 %v1523, %v1522
        %v1545 = vpack.c.bf16 %v1525, %v1524
        %v1546 = vpack.c.bf16 %v1527, %v1526
        %v1547 = vpack.c.bf16 %v1529, %v1528
        %v1548 = vpack.c.bf16 %v1531, %v1530
        %v1549 = vpack.c.bf16 %v1533, %v1532
        %s1550 = scalar_lea.vmem %s1, 256
        %v1551 = vld [vmem:[%s1550] sm:$0xf]
        %v1552 = vld [vmem:[%s1550 + $0x4] sm:$0xf]
        %v1553 = vld [vmem:[%s1550 + $0x8] sm:$0xf]
        %v1554 = vld [vmem:[%s1550 + $0xc] sm:$0xf]
        %v1555 = vld [vmem:[%s1550 + $0x10] sm:$0xf]
        %v1556 = vld [vmem:[%s1550 + $0x14] sm:$0xf]
        %v1557 = vld [vmem:[%s1550 + $0x18] sm:$0xf]
        %v1558 = vld [vmem:[%s1550 + $0x1c] sm:$0xf]
        %v1559 = vld [vmem:[%s1550 + $0x20] sm:$0xf]
        %v1560 = vld [vmem:[%s1550 + $0x24] sm:$0xf]
        %v1561 = vld [vmem:[%s1550 + $0x28] sm:$0xf]
        %v1562 = vld [vmem:[%s1550 + $0x2c] sm:$0xf]
        %v1563 = vld [vmem:[%s1550 + $0x30] sm:$0xf]
        %v1564 = vld [vmem:[%s1550 + $0x34] sm:$0xf]
        %v1565 = vld [vmem:[%s1550 + $0x38] sm:$0xf]
        %v1566 = vld [vmem:[%s1550 + $0x3c] sm:$0xf]
        %v1583 = vunpack.c.l.b16 %v1551
        %v1584 = vunpack.c.l.b16 %v1552
        %v1585 = vunpack.c.l.b16 %v1553
        %v1586 = vunpack.c.l.b16 %v1554
        %v1587 = vunpack.c.l.b16 %v1555
        %v1588 = vunpack.c.l.b16 %v1556
        %v1589 = vunpack.c.l.b16 %v1557
        %v1590 = vunpack.c.l.b16 %v1558
        %v1591 = vunpack.c.l.b16 %v1559
        %v1592 = vunpack.c.l.b16 %v1560
        %v1593 = vunpack.c.l.b16 %v1561
        %v1594 = vunpack.c.l.b16 %v1562
        %v1595 = vunpack.c.l.b16 %v1563
        %v1596 = vunpack.c.l.b16 %v1564
        %v1597 = vunpack.c.l.b16 %v1565
        %v1598 = vunpack.c.l.b16 %v1566
        %v1599 = vpack.c.b16 %v1584, %v1583
        %v1600 = vpack.c.b16 %v1586, %v1585
        %v1601 = vpack.c.b16 %v1588, %v1587
        %v1602 = vpack.c.b16 %v1590, %v1589
        %v1603 = vpack.c.b16 %v1592, %v1591
        %v1604 = vpack.c.b16 %v1594, %v1593
        %v1605 = vpack.c.b16 %v1596, %v1595
        %v1606 = vpack.c.b16 %v1598, %v1597
        %1615 = vmatprep.subr.bf16.mxu0 0
        %1616 = vmatpush1.bf16.msra.mxu0 %v1599
        %1617 = vmatprep.subr.bf16.mxu0 0
        %1618 = vmatpush1.bf16.msra.mxu0 %v1600
        %1619 = vmatprep.subr.bf16.mxu0 0
        %1620 = vmatpush1.bf16.msra.mxu0 %v1601
        %1621 = vmatprep.subr.bf16.mxu0 0
        %1622 = vmatpush1.bf16.msra.mxu0 %v1602
        %1623 = vmatprep.subr.bf16.mxu0 0
        %1624 = vmatpush1.bf16.msra.mxu0 %v1603
        %1625 = vmatprep.subr.bf16.mxu0 0
        %1626 = vmatpush1.bf16.msra.mxu0 %v1604
        %1627 = vmatprep.subr.bf16.mxu0 0
        %1628 = vmatpush1.bf16.msra.mxu0 %v1605
        %1629 = vmatprep.subr.bf16.mxu0 0
        %1630 = vmatpush1.bf16.msra.mxu0 %v1606
        %1631 = vmatprep.subr.bf16.mxu0 0
        %1632 = vmatpush1.bf16.msra.mxu0 0
        %1633 = vmatprep.subr.bf16.mxu0 0
        %1634 = vmatpush1.bf16.msra.mxu0 0
        %1635 = vmatprep.subr.bf16.mxu0 0
        %1636 = vmatpush1.bf16.msra.mxu0 0
        %1637 = vmatprep.subr.bf16.mxu0 0
        %1638 = vmatpush1.bf16.msra.mxu0 0
        %1639 = vmatprep.subr.bf16.mxu0 0
        %1640 = vmatpush1.bf16.msra.mxu0 0
        %1641 = vmatprep.subr.bf16.mxu0 0
        %1642 = vmatpush1.bf16.msra.mxu0 0
        %1643 = vmatprep.subr.bf16.mxu0 0
        %1644 = vmatpush1.bf16.msra.mxu0 0
        %1645 = vmatprep.subr.bf16.mxu0 0
        %1646 = vmatpush1.bf16.msra.mxu0 0
        %1647 = vmatprep.mubr.bf16.mxu0 0
        %1648 = vmatmul.mubr.bf16.gmra.mrb[0].mxu0 %v1534
        %v1649 = vpop.f32.mrb[0].mxu0
        %v1650 = vadd.f32 0.0, %v1649
        %v1651 = vpop.f32.mrb[0].mxu0
        %v1652 = vpop.f32.mrb[0].mxu0
        %v1653 = vadd.f32 0.0, %v1652
        %v1654 = vpop.f32.mrb[0].mxu0
        %1655 = vmatprep.mubr.bf16.mxu0 0
        %1656 = vmatmul.mubr.bf16.gmra.mrb[0].mxu0 %v1535
        %v1657 = vpop.f32.mrb[0].mxu0
        %v1658 = vadd.f32 0.0, %v1657
        %v1659 = vpop.f32.mrb[0].mxu0
        %v1660 = vpop.f32.mrb[0].mxu0
        %v1661 = vadd.f32 0.0, %v1660
        %v1662 = vpop.f32.mrb[0].mxu0
        %1663 = vmatprep.mubr.bf16.mxu0 0
        %1664 = vmatmul.mubr.bf16.gmra.mrb[0].mxu0 %v1536
        %v1665 = vpop.f32.mrb[0].mxu0
        %v1666 = vadd.f32 0.0, %v1665
        %v1667 = vpop.f32.mrb[0].mxu0
        %v1668 = vpop.f32.mrb[0].mxu0
        %v1669 = vadd.f32 0.0, %v1668
        %v1670 = vpop.f32.mrb[0].mxu0
        %1671 = vmatprep.mubr.bf16.mxu0 0
        %1672 = vmatmul.mubr.bf16.gmra.mrb[0].mxu0 %v1537
        %v1673 = vpop.f32.mrb[0].mxu0
        %v1674 = vadd.f32 0.0, %v1673
        %v1675 = vpop.f32.mrb[0].mxu0
        %v1676 = vpop.f32.mrb[0].mxu0
        %v1677 = vadd.f32 0.0, %v1676
        %v1678 = vpop.f32.mrb[0].mxu0
        %1679 = vmatprep.mubr.bf16.mxu0 0
        %1680 = vmatmul.mubr.bf16.gmra.mrb[0].mxu0 %v1538
        %v1681 = vpop.f32.mrb[0].mxu0
        %v1682 = vadd.f32 0.0, %v1681
        %v1683 = vpop.f32.mrb[0].mxu0
        %v1684 = vpop.f32.mrb[0].mxu0
        %v1685 = vadd.f32 0.0, %v1684
        %v1686 = vpop.f32.mrb[0].mxu0
        %1687 = vmatprep.mubr.bf16.mxu0 0
        %1688 = vmatmul.mubr.bf16.gmra.mrb[0].mxu0 %v1539
        %v1689 = vpop.f32.mrb[0].mxu0
        %v1690 = vadd.f32 0.0, %v1689
        %v1691 = vpop.f32.mrb[0].mxu0
        %v1692 = vpop.f32.mrb[0].mxu0
        %v1693 = vadd.f32 0.0, %v1692
        %v1694 = vpop.f32.mrb[0].mxu0
        %1695 = vmatprep.mubr.bf16.mxu0 0
        %1696 = vmatmul.mubr.bf16.gmra.mrb[0].mxu0 %v1540
        %v1697 = vpop.f32.mrb[0].mxu0
        %v1698 = vadd.f32 0.0, %v1697
        %v1699 = vpop.f32.mrb[0].mxu0
        %v1700 = vpop.f32.mrb[0].mxu0
        %v1701 = vadd.f32 0.0, %v1700
        %v1702 = vpop.f32.mrb[0].mxu0
        %1703 = vmatprep.mubr.bf16.mxu0 0
        %1704 = vmatmul.mubr.bf16.gmra.mrb[0].mxu0 %v1541
        %v1705 = vpop.f32.mrb[0].mxu0
        %v1706 = vadd.f32 0.0, %v1705
        %v1707 = vpop.f32.mrb[0].mxu0
        %v1708 = vpop.f32.mrb[0].mxu0
        %v1709 = vadd.f32 0.0, %v1708
        %v1710 = vpop.f32.mrb[0].mxu0
        %1711 = vmatprep.mubr.bf16.mxu0 0
        %1712 = vmatmul.mubr.bf16.gmra.mrb[0].mxu0 %v1542
        %v1713 = vpop.f32.mrb[0].mxu0
        %v1714 = vadd.f32 0.0, %v1713
        %v1715 = vpop.f32.mrb[0].mxu0
        %v1716 = vpop.f32.mrb[0].mxu0
        %v1717 = vadd.f32 0.0, %v1716
        %v1718 = vpop.f32.mrb[0].mxu0
        %1719 = vmatprep.mubr.bf16.mxu0 0
        %1720 = vmatmul.mubr.bf16.gmra.mrb[0].mxu0 %v1543
        %v1721 = vpop.f32.mrb[0].mxu0
        %v1722 = vadd.f32 0.0, %v1721
        %v1723 = vpop.f32.mrb[0].mxu0
        %v1724 = vpop.f32.mrb[0].mxu0
        %v1725 = vadd.f32 0.0, %v1724
        %v1726 = vpop.f32.mrb[0].mxu0
        %1727 = vmatprep.mubr.bf16.mxu0 0
        %1728 = vmatmul.mubr.bf16.gmra.mrb[0].mxu0 %v1544
        %v1729 = vpop.f32.mrb[0].mxu0
        %v1730 = vadd.f32 0.0, %v1729
        %v1731 = vpop.f32.mrb[0].mxu0
        %v1732 = vpop.f32.mrb[0].mxu0
        %v1733 = vadd.f32 0.0, %v1732
        %v1734 = vpop.f32.mrb[0].mxu0
        %1735 = vmatprep.mubr.bf16.mxu0 0
        %1736 = vmatmul.mubr.bf16.gmra.mrb[0].mxu0 %v1545
        %v1737 = vpop.f32.mrb[0].mxu0
        %v1738 = vadd.f32 0.0, %v1737
        %v1739 = vpop.f32.mrb[0].mxu0
        %v1740 = vpop.f32.mrb[0].mxu0
        %v1741 = vadd.f32 0.0, %v1740
        %v1742 = vpop.f32.mrb[0].mxu0
        %1743 = vmatprep.mubr.bf16.mxu0 0
        %1744 = vmatmul.mubr.bf16.gmra.mrb[0].mxu0 %v1546
        %v1745 = vpop.f32.mrb[0].mxu0
        %v1746 = vadd.f32 0.0, %v1745
        %v1747 = vpop.f32.mrb[0].mxu0
        %v1748 = vpop.f32.mrb[0].mxu0
        %v1749 = vadd.f32 0.0, %v1748
        %v1750 = vpop.f32.mrb[0].mxu0
        %1751 = vmatprep.mubr.bf16.mxu0 0
        %1752 = vmatmul.mubr.bf16.gmra.mrb[0].mxu0 %v1547
        %v1753 = vpop.f32.mrb[0].mxu0
        %v1754 = vadd.f32 0.0, %v1753
        %v1755 = vpop.f32.mrb[0].mxu0
        %v1756 = vpop.f32.mrb[0].mxu0
        %v1757 = vadd.f32 0.0, %v1756
        %v1758 = vpop.f32.mrb[0].mxu0
        %1759 = vmatprep.mubr.bf16.mxu0 0
        %1760 = vmatmul.mubr.bf16.gmra.mrb[0].mxu0 %v1548
        %v1761 = vpop.f32.mrb[0].mxu0
        %v1762 = vadd.f32 0.0, %v1761
        %v1763 = vpop.f32.mrb[0].mxu0
        %v1764 = vpop.f32.mrb[0].mxu0
        %v1765 = vadd.f32 0.0, %v1764
        %v1766 = vpop.f32.mrb[0].mxu0
        %1767 = vmatprep.mubr.bf16.mxu0 0
        %1768 = vmatmul.mubr.bf16.gmra.mrb[0].mxu0 %v1549
        %v1769 = vpop.f32.mrb[0].mxu0
        %v1770 = vadd.f32 0.0, %v1769
        %v1771 = vpop.f32.mrb[0].mxu0
        %v1772 = vpop.f32.mrb[0].mxu0
        %v1773 = vadd.f32 0.0, %v1772
        %v1774 = vpop.f32.mrb[0].mxu0
        %1775 = vdwg.mxu0
        %v1776 = vadd.f32 %v1470, %v1650
        %v1777 = vadd.f32 %v1471, %v1653
        %v1778 = vadd.f32 %v1472, %v1658
        %v1779 = vadd.f32 %v1473, %v1661
        %v1780 = vadd.f32 %v1474, %v1666
        %v1781 = vadd.f32 %v1475, %v1669
        %v1782 = vadd.f32 %v1476, %v1674
        %v1783 = vadd.f32 %v1477, %v1677
        %v1784 = vadd.f32 %v1478, %v1682
        %v1785 = vadd.f32 %v1479, %v1685
        %v1786 = vadd.f32 %v1480, %v1690
        %v1787 = vadd.f32 %v1481, %v1693
        %v1788 = vadd.f32 %v1482, %v1698
        %v1789 = vadd.f32 %v1483, %v1701
        %v1790 = vadd.f32 %v1484, %v1706
        %v1791 = vadd.f32 %v1485, %v1709
        %v1792 = vadd.f32 %v1486, %v1714
        %v1793 = vadd.f32 %v1487, %v1717
        %v1794 = vadd.f32 %v1488, %v1722
        %v1795 = vadd.f32 %v1489, %v1725
        %v1796 = vadd.f32 %v1490, %v1730
        %v1797 = vadd.f32 %v1491, %v1733
        %v1798 = vadd.f32 %v1492, %v1738
        %v1799 = vadd.f32 %v1493, %v1741
        %v1800 = vadd.f32 %v1494, %v1746
        %v1801 = vadd.f32 %v1495, %v1749
        %v1802 = vadd.f32 %v1496, %v1754
        %v1803 = vadd.f32 %v1497, %v1757
        %v1804 = vadd.f32 %v1498, %v1762
        %v1805 = vadd.f32 %v1499, %v1765
        %v1806 = vadd.f32 %v1500, %v1770
        %v1807 = vadd.f32 %v1501, %v1773
        %v1808 = vld [vmem:[%s310 + $0x2] sm:$0xff]
        %v1809 = vld [vmem:[%s310 + $0xa] sm:$0xff]
        %v1810 = vld [vmem:[%s310 + $0x1a] sm:$0xff]
        %v1811 = vld [vmem:[%s310 + $0x22] sm:$0xff]
        %v1812 = vld [vmem:[%s310 + $0x32] sm:$0xff]
        %v1813 = vld [vmem:[%s310 + $0x3a] sm:$0xff]
        %v1814 = vld [vmem:[%s310 + $0x4a] sm:$0xff]
        %v1815 = vld [vmem:[%s310 + $0x52] sm:$0xff]
        %v1816 = vld [vmem:[%s310 + $0x62] sm:$0xff]
        %v1817 = vld [vmem:[%s310 + $0x6a] sm:$0xff]
        %v1818 = vld [vmem:[%s310 + $0x7a] sm:$0xff]
        %v1819 = vld [vmem:[%s310 + $0x82] sm:$0xff]
        %v1820 = vld [vmem:[%s310 + $0x92] sm:$0xff]
        %v1821 = vld [vmem:[%s310 + $0x9a] sm:$0xff]
        %v1822 = vld [vmem:[%s310 + $0xaa] sm:$0xff]
        %v1823 = vld [vmem:[%s310 + $0xb2] sm:$0xff]
        %v1824 = vld [vmem:[%s310 + $0xc2] sm:$0xff]
        %v1825 = vld [vmem:[%s310 + $0xca] sm:$0xff]
        %v1826 = vld [vmem:[%s310 + $0xda] sm:$0xff]
        %v1827 = vld [vmem:[%s310 + $0xe2] sm:$0xff]
        %v1828 = vld [vmem:[%s310 + $0xf2] sm:$0xff]
        %v1829 = vld [vmem:[%s310 + $0xfa] sm:$0xff]
        %v1830 = vld [vmem:[%s310 + $0x10a] sm:$0xff]
        %v1831 = vld [vmem:[%s310 + $0x112] sm:$0xff]
        %v1832 = vld [vmem:[%s310 + $0x122] sm:$0xff]
        %v1833 = vld [vmem:[%s310 + $0x12a] sm:$0xff]
        %v1834 = vld [vmem:[%s310 + $0x13a] sm:$0xff]
        %v1835 = vld [vmem:[%s310 + $0x142] sm:$0xff]
        %v1836 = vld [vmem:[%s310 + $0x152] sm:$0xff]
        %v1837 = vld [vmem:[%s310 + $0x15a] sm:$0xff]
        %v1838 = vld [vmem:[%s310 + $0x16a] sm:$0xff]
        %v1839 = vld [vmem:[%s310 + $0x172] sm:$0xff]
        %v1840 = vpack.c.bf16 %v1809, %v1808
        %v1841 = vpack.c.bf16 %v1811, %v1810
        %v1842 = vpack.c.bf16 %v1813, %v1812
        %v1843 = vpack.c.bf16 %v1815, %v1814
        %v1844 = vpack.c.bf16 %v1817, %v1816
        %v1845 = vpack.c.bf16 %v1819, %v1818
        %v1846 = vpack.c.bf16 %v1821, %v1820
        %v1847 = vpack.c.bf16 %v1823, %v1822
        %v1848 = vpack.c.bf16 %v1825, %v1824
        %v1849 = vpack.c.bf16 %v1827, %v1826
        %v1850 = vpack.c.bf16 %v1829, %v1828
        %v1851 = vpack.c.bf16 %v1831, %v1830
        %v1852 = vpack.c.bf16 %v1833, %v1832
        %v1853 = vpack.c.bf16 %v1835, %v1834
        %v1854 = vpack.c.bf16 %v1837, %v1836
        %v1855 = vpack.c.bf16 %v1839, %v1838
        %s1856 = scalar_lea.vmem %s1, 320
        %v1857 = vld [vmem:[%s1856] sm:$0xf]
        %v1858 = vld [vmem:[%s1856 + $0x4] sm:$0xf]
        %v1859 = vld [vmem:[%s1856 + $0x8] sm:$0xf]
        %v1860 = vld [vmem:[%s1856 + $0xc] sm:$0xf]
        %v1861 = vld [vmem:[%s1856 + $0x10] sm:$0xf]
        %v1862 = vld [vmem:[%s1856 + $0x14] sm:$0xf]
        %v1863 = vld [vmem:[%s1856 + $0x18] sm:$0xf]
        %v1864 = vld [vmem:[%s1856 + $0x1c] sm:$0xf]
        %v1865 = vld [vmem:[%s1856 + $0x20] sm:$0xf]
        %v1866 = vld [vmem:[%s1856 + $0x24] sm:$0xf]
        %v1867 = vld [vmem:[%s1856 + $0x28] sm:$0xf]
        %v1868 = vld [vmem:[%s1856 + $0x2c] sm:$0xf]
        %v1869 = vld [vmem:[%s1856 + $0x30] sm:$0xf]
        %v1870 = vld [vmem:[%s1856 + $0x34] sm:$0xf]
        %v1871 = vld [vmem:[%s1856 + $0x38] sm:$0xf]
        %v1872 = vld [vmem:[%s1856 + $0x3c] sm:$0xf]
        %v1889 = vunpack.c.l.b16 %v1857
        %v1890 = vunpack.c.l.b16 %v1858
        %v1891 = vunpack.c.l.b16 %v1859
        %v1892 = vunpack.c.l.b16 %v1860
        %v1893 = vunpack.c.l.b16 %v1861
        %v1894 = vunpack.c.l.b16 %v1862
        %v1895 = vunpack.c.l.b16 %v1863
        %v1896 = vunpack.c.l.b16 %v1864
        %v1897 = vunpack.c.l.b16 %v1865
        %v1898 = vunpack.c.l.b16 %v1866
        %v1899 = vunpack.c.l.b16 %v1867
        %v1900 = vunpack.c.l.b16 %v1868
        %v1901 = vunpack.c.l.b16 %v1869
        %v1902 = vunpack.c.l.b16 %v1870
        %v1903 = vunpack.c.l.b16 %v1871
        %v1904 = vunpack.c.l.b16 %v1872
        %v1905 = vpack.c.b16 %v1890, %v1889
        %v1906 = vpack.c.b16 %v1892, %v1891
        %v1907 = vpack.c.b16 %v1894, %v1893
        %v1908 = vpack.c.b16 %v1896, %v1895
        %v1909 = vpack.c.b16 %v1898, %v1897
        %v1910 = vpack.c.b16 %v1900, %v1899
        %v1911 = vpack.c.b16 %v1902, %v1901
        %v1912 = vpack.c.b16 %v1904, %v1903
        %1921 = vmatprep.subr.bf16.mxu0 0
        %1922 = vmatpush1.bf16.msra.mxu0 %v1905
        %1923 = vmatprep.subr.bf16.mxu0 0
        %1924 = vmatpush1.bf16.msra.mxu0 %v1906
        %1925 = vmatprep.subr.bf16.mxu0 0
        %1926 = vmatpush1.bf16.msra.mxu0 %v1907
        %1927 = vmatprep.subr.bf16.mxu0 0
        %1928 = vmatpush1.bf16.msra.mxu0 %v1908
        %1929 = vmatprep.subr.bf16.mxu0 0
        %1930 = vmatpush1.bf16.msra.mxu0 %v1909
        %1931 = vmatprep.subr.bf16.mxu0 0
        %1932 = vmatpush1.bf16.msra.mxu0 %v1910
        %1933 = vmatprep.subr.bf16.mxu0 0
        %1934 = vmatpush1.bf16.msra.mxu0 %v1911
        %1935 = vmatprep.subr.bf16.mxu0 0
        %1936 = vmatpush1.bf16.msra.mxu0 %v1912
        %1937 = vmatprep.subr.bf16.mxu0 0
        %1938 = vmatpush1.bf16.msra.mxu0 0
        %1939 = vmatprep.subr.bf16.mxu0 0
        %1940 = vmatpush1.bf16.msra.mxu0 0
        %1941 = vmatprep.subr.bf16.mxu0 0
        %1942 = vmatpush1.bf16.msra.mxu0 0
        %1943 = vmatprep.subr.bf16.mxu0 0
        %1944 = vmatpush1.bf16.msra.mxu0 0
        %1945 = vmatprep.subr.bf16.mxu0 0
        %1946 = vmatpush1.bf16.msra.mxu0 0
        %1947 = vmatprep.subr.bf16.mxu0 0
        %1948 = vmatpush1.bf16.msra.mxu0 0
        %1949 = vmatprep.subr.bf16.mxu0 0
        %1950 = vmatpush1.bf16.msra.mxu0 0
        %1951 = vmatprep.subr.bf16.mxu0 0
        %1952 = vmatpush1.bf16.msra.mxu0 0
        %1953 = vmatprep.mubr.bf16.mxu0 0
        %1954 = vmatmul.mubr.bf16.gmra.mrb[0].mxu0 %v1840
        %v1955 = vpop.f32.mrb[0].mxu0
        %v1956 = vadd.f32 0.0, %v1955
        %v1957 = vpop.f32.mrb[0].mxu0
        %v1958 = vpop.f32.mrb[0].mxu0
        %v1959 = vadd.f32 0.0, %v1958
        %v1960 = vpop.f32.mrb[0].mxu0
        %1961 = vmatprep.mubr.bf16.mxu0 0
        %1962 = vmatmul.mubr.bf16.gmra.mrb[0].mxu0 %v1841
        %v1963 = vpop.f32.mrb[0].mxu0
        %v1964 = vadd.f32 0.0, %v1963
        %v1965 = vpop.f32.mrb[0].mxu0
        %v1966 = vpop.f32.mrb[0].mxu0
        %v1967 = vadd.f32 0.0, %v1966
        %v1968 = vpop.f32.mrb[0].mxu0
        %1969 = vmatprep.mubr.bf16.mxu0 0
        %1970 = vmatmul.mubr.bf16.gmra.mrb[0].mxu0 %v1842
        %v1971 = vpop.f32.mrb[0].mxu0
        %v1972 = vadd.f32 0.0, %v1971
        %v1973 = vpop.f32.mrb[0].mxu0
        %v1974 = vpop.f32.mrb[0].mxu0
        %v1975 = vadd.f32 0.0, %v1974
        %v1976 = vpop.f32.mrb[0].mxu0
        %1977 = vmatprep.mubr.bf16.mxu0 0
        %1978 = vmatmul.mubr.bf16.gmra.mrb[0].mxu0 %v1843
        %v1979 = vpop.f32.mrb[0].mxu0
        %v1980 = vadd.f32 0.0, %v1979
        %v1981 = vpop.f32.mrb[0].mxu0
        %v1982 = vpop.f32.mrb[0].mxu0
        %v1983 = vadd.f32 0.0, %v1982
        %v1984 = vpop.f32.mrb[0].mxu0
        %1985 = vmatprep.mubr.bf16.mxu0 0
        %1986 = vmatmul.mubr.bf16.gmra.mrb[0].mxu0 %v1844
        %v1987 = vpop.f32.mrb[0].mxu0
        %v1988 = vadd.f32 0.0, %v1987
        %v1989 = vpop.f32.mrb[0].mxu0
        %v1990 = vpop.f32.mrb[0].mxu0
        %v1991 = vadd.f32 0.0, %v1990
        %v1992 = vpop.f32.mrb[0].mxu0
        %1993 = vmatprep.mubr.bf16.mxu0 0
        %1994 = vmatmul.mubr.bf16.gmra.mrb[0].mxu0 %v1845
        %v1995 = vpop.f32.mrb[0].mxu0
        %v1996 = vadd.f32 0.0, %v1995
        %v1997 = vpop.f32.mrb[0].mxu0
        %v1998 = vpop.f32.mrb[0].mxu0
        %v1999 = vadd.f32 0.0, %v1998
        %v2000 = vpop.f32.mrb[0].mxu0
        %2001 = vmatprep.mubr.bf16.mxu0 0
        %2002 = vmatmul.mubr.bf16.gmra.mrb[0].mxu0 %v1846
        %v2003 = vpop.f32.mrb[0].mxu0
        %v2004 = vadd.f32 0.0, %v2003
        %v2005 = vpop.f32.mrb[0].mxu0
        %v2006 = vpop.f32.mrb[0].mxu0
        %v2007 = vadd.f32 0.0, %v2006
        %v2008 = vpop.f32.mrb[0].mxu0
        %2009 = vmatprep.mubr.bf16.mxu0 0
        %2010 = vmatmul.mubr.bf16.gmra.mrb[0].mxu0 %v1847
        %v2011 = vpop.f32.mrb[0].mxu0
        %v2012 = vadd.f32 0.0, %v2011
        %v2013 = vpop.f32.mrb[0].mxu0
        %v2014 = vpop.f32.mrb[0].mxu0
        %v2015 = vadd.f32 0.0, %v2014
        %v2016 = vpop.f32.mrb[0].mxu0
        %2017 = vmatprep.mubr.bf16.mxu0 0
        %2018 = vmatmul.mubr.bf16.gmra.mrb[0].mxu0 %v1848
        %v2019 = vpop.f32.mrb[0].mxu0
        %v2020 = vadd.f32 0.0, %v2019
        %v2021 = vpop.f32.mrb[0].mxu0
        %v2022 = vpop.f32.mrb[0].mxu0
        %v2023 = vadd.f32 0.0, %v2022
        %v2024 = vpop.f32.mrb[0].mxu0
        %2025 = vmatprep.mubr.bf16.mxu0 0
        %2026 = vmatmul.mubr.bf16.gmra.mrb[0].mxu0 %v1849
        %v2027 = vpop.f32.mrb[0].mxu0
        %v2028 = vadd.f32 0.0, %v2027
        %v2029 = vpop.f32.mrb[0].mxu0
        %v2030 = vpop.f32.mrb[0].mxu0
        %v2031 = vadd.f32 0.0, %v2030
        %v2032 = vpop.f32.mrb[0].mxu0
        %2033 = vmatprep.mubr.bf16.mxu0 0
        %2034 = vmatmul.mubr.bf16.gmra.mrb[0].mxu0 %v1850
        %v2035 = vpop.f32.mrb[0].mxu0
        %v2036 = vadd.f32 0.0, %v2035
        %v2037 = vpop.f32.mrb[0].mxu0
        %v2038 = vpop.f32.mrb[0].mxu0
        %v2039 = vadd.f32 0.0, %v2038
        %v2040 = vpop.f32.mrb[0].mxu0
        %2041 = vmatprep.mubr.bf16.mxu0 0
        %2042 = vmatmul.mubr.bf16.gmra.mrb[0].mxu0 %v1851
        %v2043 = vpop.f32.mrb[0].mxu0
        %v2044 = vadd.f32 0.0, %v2043
        %v2045 = vpop.f32.mrb[0].mxu0
        %v2046 = vpop.f32.mrb[0].mxu0
        %v2047 = vadd.f32 0.0, %v2046
        %v2048 = vpop.f32.mrb[0].mxu0
        %2049 = vmatprep.mubr.bf16.mxu0 0
        %2050 = vmatmul.mubr.bf16.gmra.mrb[0].mxu0 %v1852
        %v2051 = vpop.f32.mrb[0].mxu0
        %v2052 = vadd.f32 0.0, %v2051
        %v2053 = vpop.f32.mrb[0].mxu0
        %v2054 = vpop.f32.mrb[0].mxu0
        %v2055 = vadd.f32 0.0, %v2054
        %v2056 = vpop.f32.mrb[0].mxu0
        %2057 = vmatprep.mubr.bf16.mxu0 0
        %2058 = vmatmul.mubr.bf16.gmra.mrb[0].mxu0 %v1853
        %v2059 = vpop.f32.mrb[0].mxu0
        %v2060 = vadd.f32 0.0, %v2059
        %v2061 = vpop.f32.mrb[0].mxu0
        %v2062 = vpop.f32.mrb[0].mxu0
        %v2063 = vadd.f32 0.0, %v2062
        %v2064 = vpop.f32.mrb[0].mxu0
        %2065 = vmatprep.mubr.bf16.mxu0 0
        %2066 = vmatmul.mubr.bf16.gmra.mrb[0].mxu0 %v1854
        %v2067 = vpop.f32.mrb[0].mxu0
        %v2068 = vadd.f32 0.0, %v2067
        %v2069 = vpop.f32.mrb[0].mxu0
        %v2070 = vpop.f32.mrb[0].mxu0
        %v2071 = vadd.f32 0.0, %v2070
        %v2072 = vpop.f32.mrb[0].mxu0
        %2073 = vmatprep.mubr.bf16.mxu0 0
        %2074 = vmatmul.mubr.bf16.gmra.mrb[0].mxu0 %v1855
        %v2075 = vpop.f32.mrb[0].mxu0
        %v2076 = vadd.f32 0.0, %v2075
        %v2077 = vpop.f32.mrb[0].mxu0
        %v2078 = vpop.f32.mrb[0].mxu0
        %v2079 = vadd.f32 0.0, %v2078
        %v2080 = vpop.f32.mrb[0].mxu0
        %2081 = vdwg.mxu0
        %v2082 = vadd.f32 %v1776, %v1956
        %v2083 = vadd.f32 %v1777, %v1959
        %v2084 = vadd.f32 %v1778, %v1964
        %v2085 = vadd.f32 %v1779, %v1967
        %v2086 = vadd.f32 %v1780, %v1972
        %v2087 = vadd.f32 %v1781, %v1975
        %v2088 = vadd.f32 %v1782, %v1980
        %v2089 = vadd.f32 %v1783, %v1983
        %v2090 = vadd.f32 %v1784, %v1988
        %v2091 = vadd.f32 %v1785, %v1991
        %v2092 = vadd.f32 %v1786, %v1996
        %v2093 = vadd.f32 %v1787, %v1999
        %v2094 = vadd.f32 %v1788, %v2004
        %v2095 = vadd.f32 %v1789, %v2007
        %v2096 = vadd.f32 %v1790, %v2012
        %v2097 = vadd.f32 %v1791, %v2015
        %v2098 = vadd.f32 %v1792, %v2020
        %v2099 = vadd.f32 %v1793, %v2023
        %v2100 = vadd.f32 %v1794, %v2028
        %v2101 = vadd.f32 %v1795, %v2031
        %v2102 = vadd.f32 %v1796, %v2036
        %v2103 = vadd.f32 %v1797, %v2039
        %v2104 = vadd.f32 %v1798, %v2044
        %v2105 = vadd.f32 %v1799, %v2047
        %v2106 = vadd.f32 %v1800, %v2052
        %v2107 = vadd.f32 %v1801, %v2055
        %v2108 = vadd.f32 %v1802, %v2060
        %v2109 = vadd.f32 %v1803, %v2063
        %v2110 = vadd.f32 %v1804, %v2068
        %v2111 = vadd.f32 %v1805, %v2071
        %v2112 = vadd.f32 %v1806, %v2076
        %v2113 = vadd.f32 %v1807, %v2079
        %s2114 = scalar_lea.vmem [#allocation2], 48
        %v2115 = vld [vmem:[%s2114] sm:$0xff]
        %v2116 = vld [vmem:[%s2114 + $0x8] sm:$0xff]
        %v2117 = vld [vmem:[%s2114 + $0x18] sm:$0xff]
        %v2118 = vld [vmem:[%s2114 + $0x20] sm:$0xff]
        %v2119 = vld [vmem:[%s2114 + $0x30] sm:$0xff]
        %v2120 = vld [vmem:[%s2114 + $0x38] sm:$0xff]
        %v2121 = vld [vmem:[%s2114 + $0x48] sm:$0xff]
        %v2122 = vld [vmem:[%s2114 + $0x50] sm:$0xff]
        %v2123 = vld [vmem:[%s2114 + $0x60] sm:$0xff]
        %v2124 = vld [vmem:[%s2114 + $0x68] sm:$0xff]
        %v2125 = vld [vmem:[%s2114 + $0x78] sm:$0xff]
        %v2126 = vld [vmem:[%s2114 + $0x80] sm:$0xff]
        %v2127 = vld [vmem:[%s2114 + $0x90] sm:$0xff]
        %v2128 = vld [vmem:[%s2114 + $0x98] sm:$0xff]
        %v2129 = vld [vmem:[%s2114 + $0xa8] sm:$0xff]
        %v2130 = vld [vmem:[%s2114 + $0xb0] sm:$0xff]
        %v2131 = vld [vmem:[%s2114 + $0xc0] sm:$0xff]
        %v2132 = vld [vmem:[%s2114 + $0xc8] sm:$0xff]
        %v2133 = vld [vmem:[%s2114 + $0xd8] sm:$0xff]
        %v2134 = vld [vmem:[%s2114 + $0xe0] sm:$0xff]
        %v2135 = vld [vmem:[%s2114 + $0xf0] sm:$0xff]
        %v2136 = vld [vmem:[%s2114 + $0xf8] sm:$0xff]
        %v2137 = vld [vmem:[%s2114 + $0x108] sm:$0xff]
        %v2138 = vld [vmem:[%s2114 + $0x110] sm:$0xff]
        %v2139 = vld [vmem:[%s2114 + $0x120] sm:$0xff]
        %v2140 = vld [vmem:[%s2114 + $0x128] sm:$0xff]
        %v2141 = vld [vmem:[%s2114 + $0x138] sm:$0xff]
        %v2142 = vld [vmem:[%s2114 + $0x140] sm:$0xff]
        %v2143 = vld [vmem:[%s2114 + $0x150] sm:$0xff]
        %v2144 = vld [vmem:[%s2114 + $0x158] sm:$0xff]
        %v2145 = vld [vmem:[%s2114 + $0x168] sm:$0xff]
        %v2146 = vld [vmem:[%s2114 + $0x170] sm:$0xff]
        %v2147 = vpack.c.bf16 %v2116, %v2115
        %v2148 = vpack.c.bf16 %v2118, %v2117
        %v2149 = vpack.c.bf16 %v2120, %v2119
        %v2150 = vpack.c.bf16 %v2122, %v2121
        %v2151 = vpack.c.bf16 %v2124, %v2123
        %v2152 = vpack.c.bf16 %v2126, %v2125
        %v2153 = vpack.c.bf16 %v2128, %v2127
        %v2154 = vpack.c.bf16 %v2130, %v2129
        %v2155 = vpack.c.bf16 %v2132, %v2131
        %v2156 = vpack.c.bf16 %v2134, %v2133
        %v2157 = vpack.c.bf16 %v2136, %v2135
        %v2158 = vpack.c.bf16 %v2138, %v2137
        %v2159 = vpack.c.bf16 %v2140, %v2139
        %v2160 = vpack.c.bf16 %v2142, %v2141
        %v2161 = vpack.c.bf16 %v2144, %v2143
        %v2162 = vpack.c.bf16 %v2146, %v2145
        %s2163 = scalar_lea.vmem %s1, 384
        %v2164 = vld [vmem:[%s2163] sm:$0xf]
        %v2165 = vld [vmem:[%s2163 + $0x4] sm:$0xf]
        %v2166 = vld [vmem:[%s2163 + $0x8] sm:$0xf]
        %v2167 = vld [vmem:[%s2163 + $0xc] sm:$0xf]
        %v2168 = vld [vmem:[%s2163 + $0x10] sm:$0xf]
        %v2169 = vld [vmem:[%s2163 + $0x14] sm:$0xf]
        %v2170 = vld [vmem:[%s2163 + $0x18] sm:$0xf]
        %v2171 = vld [vmem:[%s2163 + $0x1c] sm:$0xf]
        %v2172 = vld [vmem:[%s2163 + $0x20] sm:$0xf]
        %v2173 = vld [vmem:[%s2163 + $0x24] sm:$0xf]
        %v2174 = vld [vmem:[%s2163 + $0x28] sm:$0xf]
        %v2175 = vld [vmem:[%s2163 + $0x2c] sm:$0xf]
        %v2176 = vld [vmem:[%s2163 + $0x30] sm:$0xf]
        %v2177 = vld [vmem:[%s2163 + $0x34] sm:$0xf]
        %v2178 = vld [vmem:[%s2163 + $0x38] sm:$0xf]
        %v2179 = vld [vmem:[%s2163 + $0x3c] sm:$0xf]
        %v2196 = vunpack.c.l.b16 %v2164
        %v2197 = vunpack.c.l.b16 %v2165
        %v2198 = vunpack.c.l.b16 %v2166
        %v2199 = vunpack.c.l.b16 %v2167
        %v2200 = vunpack.c.l.b16 %v2168
        %v2201 = vunpack.c.l.b16 %v2169
        %v2202 = vunpack.c.l.b16 %v2170
        %v2203 = vunpack.c.l.b16 %v2171
        %v2204 = vunpack.c.l.b16 %v2172
        %v2205 = vunpack.c.l.b16 %v2173
        %v2206 = vunpack.c.l.b16 %v2174
        %v2207 = vunpack.c.l.b16 %v2175
        %v2208 = vunpack.c.l.b16 %v2176
        %v2209 = vunpack.c.l.b16 %v2177
        %v2210 = vunpack.c.l.b16 %v2178
        %v2211 = vunpack.c.l.b16 %v2179
        %v2212 = vpack.c.b16 %v2197, %v2196
        %v2213 = vpack.c.b16 %v2199, %v2198
        %v2214 = vpack.c.b16 %v2201, %v2200
        %v2215 = vpack.c.b16 %v2203, %v2202
        %v2216 = vpack.c.b16 %v2205, %v2204
        %v2217 = vpack.c.b16 %v2207, %v2206
        %v2218 = vpack.c.b16 %v2209, %v2208
        %v2219 = vpack.c.b16 %v2211, %v2210
        %2228 = vmatprep.subr.bf16.mxu0 0
        %2229 = vmatpush1.bf16.msra.mxu0 %v2212
        %2230 = vmatprep.subr.bf16.mxu0 0
        %2231 = vmatpush1.bf16.msra.mxu0 %v2213
        %2232 = vmatprep.subr.bf16.mxu0 0
        %2233 = vmatpush1.bf16.msra.mxu0 %v2214
        %2234 = vmatprep.subr.bf16.mxu0 0
        %2235 = vmatpush1.bf16.msra.mxu0 %v2215
        %2236 = vmatprep.subr.bf16.mxu0 0
        %2237 = vmatpush1.bf16.msra.mxu0 %v2216
        %2238 = vmatprep.subr.bf16.mxu0 0
        %2239 = vmatpush1.bf16.msra.mxu0 %v2217
        %2240 = vmatprep.subr.bf16.mxu0 0
        %2241 = vmatpush1.bf16.msra.mxu0 %v2218
        %2242 = vmatprep.subr.bf16.mxu0 0
        %2243 = vmatpush1.bf16.msra.mxu0 %v2219
        %2244 = vmatprep.subr.bf16.mxu0 0
        %2245 = vmatpush1.bf16.msra.mxu0 0
        %2246 = vmatprep.subr.bf16.mxu0 0
        %2247 = vmatpush1.bf16.msra.mxu0 0
        %2248 = vmatprep.subr.bf16.mxu0 0
        %2249 = vmatpush1.bf16.msra.mxu0 0
        %2250 = vmatprep.subr.bf16.mxu0 0
        %2251 = vmatpush1.bf16.msra.mxu0 0
        %2252 = vmatprep.subr.bf16.mxu0 0
        %2253 = vmatpush1.bf16.msra.mxu0 0
        %2254 = vmatprep.subr.bf16.mxu0 0
        %2255 = vmatpush1.bf16.msra.mxu0 0
        %2256 = vmatprep.subr.bf16.mxu0 0
        %2257 = vmatpush1.bf16.msra.mxu0 0
        %2258 = vmatprep.subr.bf16.mxu0 0
        %2259 = vmatpush1.bf16.msra.mxu0 0
        %2260 = vmatprep.mubr.bf16.mxu0 0
        %2261 = vmatmul.mubr.bf16.gmra.mrb[0].mxu0 %v2147
        %v2262 = vpop.f32.mrb[0].mxu0
        %v2263 = vadd.f32 0.0, %v2262
        %v2264 = vpop.f32.mrb[0].mxu0
        %v2265 = vpop.f32.mrb[0].mxu0
        %v2266 = vadd.f32 0.0, %v2265
        %v2267 = vpop.f32.mrb[0].mxu0
        %2268 = vmatprep.mubr.bf16.mxu0 0
        %2269 = vmatmul.mubr.bf16.gmra.mrb[0].mxu0 %v2148
        %v2270 = vpop.f32.mrb[0].mxu0
        %v2271 = vadd.f32 0.0, %v2270
        %v2272 = vpop.f32.mrb[0].mxu0
        %v2273 = vpop.f32.mrb[0].mxu0
        %v2274 = vadd.f32 0.0, %v2273
        %v2275 = vpop.f32.mrb[0].mxu0
        %2276 = vmatprep.mubr.bf16.mxu0 0
        %2277 = vmatmul.mubr.bf16.gmra.mrb[0].mxu0 %v2149
        %v2278 = vpop.f32.mrb[0].mxu0
        %v2279 = vadd.f32 0.0, %v2278
        %v2280 = vpop.f32.mrb[0].mxu0
        %v2281 = vpop.f32.mrb[0].mxu0
        %v2282 = vadd.f32 0.0, %v2281
        %v2283 = vpop.f32.mrb[0].mxu0
        %2284 = vmatprep.mubr.bf16.mxu0 0
        %2285 = vmatmul.mubr.bf16.gmra.mrb[0].mxu0 %v2150
        %v2286 = vpop.f32.mrb[0].mxu0
        %v2287 = vadd.f32 0.0, %v2286
        %v2288 = vpop.f32.mrb[0].mxu0
        %v2289 = vpop.f32.mrb[0].mxu0
        %v2290 = vadd.f32 0.0, %v2289
        %v2291 = vpop.f32.mrb[0].mxu0
        %2292 = vmatprep.mubr.bf16.mxu0 0
        %2293 = vmatmul.mubr.bf16.gmra.mrb[0].mxu0 %v2151
        %v2294 = vpop.f32.mrb[0].mxu0
        %v2295 = vadd.f32 0.0, %v2294
        %v2296 = vpop.f32.mrb[0].mxu0
        %v2297 = vpop.f32.mrb[0].mxu0
        %v2298 = vadd.f32 0.0, %v2297
        %v2299 = vpop.f32.mrb[0].mxu0
        %2300 = vmatprep.mubr.bf16.mxu0 0
        %2301 = vmatmul.mubr.bf16.gmra.mrb[0].mxu0 %v2152
        %v2302 = vpop.f32.mrb[0].mxu0
        %v2303 = vadd.f32 0.0, %v2302
        %v2304 = vpop.f32.mrb[0].mxu0
        %v2305 = vpop.f32.mrb[0].mxu0
        %v2306 = vadd.f32 0.0, %v2305
        %v2307 = vpop.f32.mrb[0].mxu0
        %2308 = vmatprep.mubr.bf16.mxu0 0
        %2309 = vmatmul.mubr.bf16.gmra.mrb[0].mxu0 %v2153
        %v2310 = vpop.f32.mrb[0].mxu0
        %v2311 = vadd.f32 0.0, %v2310
        %v2312 = vpop.f32.mrb[0].mxu0
        %v2313 = vpop.f32.mrb[0].mxu0
        %v2314 = vadd.f32 0.0, %v2313
        %v2315 = vpop.f32.mrb[0].mxu0
        %2316 = vmatprep.mubr.bf16.mxu0 0
        %2317 = vmatmul.mubr.bf16.gmra.mrb[0].mxu0 %v2154
        %v2318 = vpop.f32.mrb[0].mxu0
        %v2319 = vadd.f32 0.0, %v2318
        %v2320 = vpop.f32.mrb[0].mxu0
        %v2321 = vpop.f32.mrb[0].mxu0
        %v2322 = vadd.f32 0.0, %v2321
        %v2323 = vpop.f32.mrb[0].mxu0
        %2324 = vmatprep.mubr.bf16.mxu0 0
        %2325 = vmatmul.mubr.bf16.gmra.mrb[0].mxu0 %v2155
        %v2326 = vpop.f32.mrb[0].mxu0
        %v2327 = vadd.f32 0.0, %v2326
        %v2328 = vpop.f32.mrb[0].mxu0
        %v2329 = vpop.f32.mrb[0].mxu0
        %v2330 = vadd.f32 0.0, %v2329
        %v2331 = vpop.f32.mrb[0].mxu0
        %2332 = vmatprep.mubr.bf16.mxu0 0
        %2333 = vmatmul.mubr.bf16.gmra.mrb[0].mxu0 %v2156
        %v2334 = vpop.f32.mrb[0].mxu0
        %v2335 = vadd.f32 0.0, %v2334
        %v2336 = vpop.f32.mrb[0].mxu0
        %v2337 = vpop.f32.mrb[0].mxu0
        %v2338 = vadd.f32 0.0, %v2337
        %v2339 = vpop.f32.mrb[0].mxu0
        %2340 = vmatprep.mubr.bf16.mxu0 0
        %2341 = vmatmul.mubr.bf16.gmra.mrb[0].mxu0 %v2157
        %v2342 = vpop.f32.mrb[0].mxu0
        %v2343 = vadd.f32 0.0, %v2342
        %v2344 = vpop.f32.mrb[0].mxu0
        %v2345 = vpop.f32.mrb[0].mxu0
        %v2346 = vadd.f32 0.0, %v2345
        %v2347 = vpop.f32.mrb[0].mxu0
        %2348 = vmatprep.mubr.bf16.mxu0 0
        %2349 = vmatmul.mubr.bf16.gmra.mrb[0].mxu0 %v2158
        %v2350 = vpop.f32.mrb[0].mxu0
        %v2351 = vadd.f32 0.0, %v2350
        %v2352 = vpop.f32.mrb[0].mxu0
        %v2353 = vpop.f32.mrb[0].mxu0
        %v2354 = vadd.f32 0.0, %v2353
        %v2355 = vpop.f32.mrb[0].mxu0
        %2356 = vmatprep.mubr.bf16.mxu0 0
        %2357 = vmatmul.mubr.bf16.gmra.mrb[0].mxu0 %v2159
        %v2358 = vpop.f32.mrb[0].mxu0
        %v2359 = vadd.f32 0.0, %v2358
        %v2360 = vpop.f32.mrb[0].mxu0
        %v2361 = vpop.f32.mrb[0].mxu0
        %v2362 = vadd.f32 0.0, %v2361
        %v2363 = vpop.f32.mrb[0].mxu0
        %2364 = vmatprep.mubr.bf16.mxu0 0
        %2365 = vmatmul.mubr.bf16.gmra.mrb[0].mxu0 %v2160
        %v2366 = vpop.f32.mrb[0].mxu0
        %v2367 = vadd.f32 0.0, %v2366
        %v2368 = vpop.f32.mrb[0].mxu0
        %v2369 = vpop.f32.mrb[0].mxu0
        %v2370 = vadd.f32 0.0, %v2369
        %v2371 = vpop.f32.mrb[0].mxu0
        %2372 = vmatprep.mubr.bf16.mxu0 0
        %2373 = vmatmul.mubr.bf16.gmra.mrb[0].mxu0 %v2161
        %v2374 = vpop.f32.mrb[0].mxu0
        %v2375 = vadd.f32 0.0, %v2374
        %v2376 = vpop.f32.mrb[0].mxu0
        %v2377 = vpop.f32.mrb[0].mxu0
        %v2378 = vadd.f32 0.0, %v2377
        %v2379 = vpop.f32.mrb[0].mxu0
        %2380 = vmatprep.mubr.bf16.mxu0 0
        %2381 = vmatmul.mubr.bf16.gmra.mrb[0].mxu0 %v2162
        %v2382 = vpop.f32.mrb[0].mxu0
        %v2383 = vadd.f32 0.0, %v2382
        %v2384 = vpop.f32.mrb[0].mxu0
        %v2385 = vpop.f32.mrb[0].mxu0
        %v2386 = vadd.f32 0.0, %v2385
        %v2387 = vpop.f32.mrb[0].mxu0
        %2388 = vdwg.mxu0
        %v2389 = vadd.f32 %v2082, %v2263
        %v2390 = vadd.f32 %v2083, %v2266
        %v2391 = vadd.f32 %v2084, %v2271
        %v2392 = vadd.f32 %v2085, %v2274
        %v2393 = vadd.f32 %v2086, %v2279
        %v2394 = vadd.f32 %v2087, %v2282
        %v2395 = vadd.f32 %v2088, %v2287
        %v2396 = vadd.f32 %v2089, %v2290
        %v2397 = vadd.f32 %v2090, %v2295
        %v2398 = vadd.f32 %v2091, %v2298
        %v2399 = vadd.f32 %v2092, %v2303
        %v2400 = vadd.f32 %v2093, %v2306
        %v2401 = vadd.f32 %v2094, %v2311
        %v2402 = vadd.f32 %v2095, %v2314
        %v2403 = vadd.f32 %v2096, %v2319
        %v2404 = vadd.f32 %v2097, %v2322
        %v2405 = vadd.f32 %v2098, %v2327
        %v2406 = vadd.f32 %v2099, %v2330
        %v2407 = vadd.f32 %v2100, %v2335
        %v2408 = vadd.f32 %v2101, %v2338
        %v2409 = vadd.f32 %v2102, %v2343
        %v2410 = vadd.f32 %v2103, %v2346
        %v2411 = vadd.f32 %v2104, %v2351
        %v2412 = vadd.f32 %v2105, %v2354
        %v2413 = vadd.f32 %v2106, %v2359
        %v2414 = vadd.f32 %v2107, %v2362
        %v2415 = vadd.f32 %v2108, %v2367
        %v2416 = vadd.f32 %v2109, %v2370
        %v2417 = vadd.f32 %v2110, %v2375
        %v2418 = vadd.f32 %v2111, %v2378
        %v2419 = vadd.f32 %v2112, %v2383
        %v2420 = vadd.f32 %v2113, %v2386
        %v2421 = vld [vmem:[%s2114 + $0x1] sm:$0xff]
        %v2422 = vld [vmem:[%s2114 + $0x9] sm:$0xff]
        %v2423 = vld [vmem:[%s2114 + $0x19] sm:$0xff]
        %v2424 = vld [vmem:[%s2114 + $0x21] sm:$0xff]
        %v2425 = vld [vmem:[%s2114 + $0x31] sm:$0xff]
        %v2426 = vld [vmem:[%s2114 + $0x39] sm:$0xff]
        %v2427 = vld [vmem:[%s2114 + $0x49] sm:$0xff]
        %v2428 = vld [vmem:[%s2114 + $0x51] sm:$0xff]
        %v2429 = vld [vmem:[%s2114 + $0x61] sm:$0xff]
        %v2430 = vld [vmem:[%s2114 + $0x69] sm:$0xff]
        %v2431 = vld [vmem:[%s2114 + $0x79] sm:$0xff]
        %v2432 = vld [vmem:[%s2114 + $0x81] sm:$0xff]
        %v2433 = vld [vmem:[%s2114 + $0x91] sm:$0xff]
        %v2434 = vld [vmem:[%s2114 + $0x99] sm:$0xff]
        %v2435 = vld [vmem:[%s2114 + $0xa9] sm:$0xff]
        %v2436 = vld [vmem:[%s2114 + $0xb1] sm:$0xff]
        %v2437 = vld [vmem:[%s2114 + $0xc1] sm:$0xff]
        %v2438 = vld [vmem:[%s2114 + $0xc9] sm:$0xff]
        %v2439 = vld [vmem:[%s2114 + $0xd9] sm:$0xff]
        %v2440 = vld [vmem:[%s2114 + $0xe1] sm:$0xff]
        %v2441 = vld [vmem:[%s2114 + $0xf1] sm:$0xff]
        %v2442 = vld [vmem:[%s2114 + $0xf9] sm:$0xff]
        %v2443 = vld [vmem:[%s2114 + $0x109] sm:$0xff]
        %v2444 = vld [vmem:[%s2114 + $0x111] sm:$0xff]
        %v2445 = vld [vmem:[%s2114 + $0x121] sm:$0xff]
        %v2446 = vld [vmem:[%s2114 + $0x129] sm:$0xff]
        %v2447 = vld [vmem:[%s2114 + $0x139] sm:$0xff]
        %v2448 = vld [vmem:[%s2114 + $0x141] sm:$0xff]
        %v2449 = vld [vmem:[%s2114 + $0x151] sm:$0xff]
        %v2450 = vld [vmem:[%s2114 + $0x159] sm:$0xff]
        %v2451 = vld [vmem:[%s2114 + $0x169] sm:$0xff]
        %v2452 = vld [vmem:[%s2114 + $0x171] sm:$0xff]
        %v2453 = vpack.c.bf16 %v2422, %v2421
        %v2454 = vpack.c.bf16 %v2424, %v2423
        %v2455 = vpack.c.bf16 %v2426, %v2425
        %v2456 = vpack.c.bf16 %v2428, %v2427
        %v2457 = vpack.c.bf16 %v2430, %v2429
        %v2458 = vpack.c.bf16 %v2432, %v2431
        %v2459 = vpack.c.bf16 %v2434, %v2433
        %v2460 = vpack.c.bf16 %v2436, %v2435
        %v2461 = vpack.c.bf16 %v2438, %v2437
        %v2462 = vpack.c.bf16 %v2440, %v2439
        %v2463 = vpack.c.bf16 %v2442, %v2441
        %v2464 = vpack.c.bf16 %v2444, %v2443
        %v2465 = vpack.c.bf16 %v2446, %v2445
        %v2466 = vpack.c.bf16 %v2448, %v2447
        %v2467 = vpack.c.bf16 %v2450, %v2449
        %v2468 = vpack.c.bf16 %v2452, %v2451
        %s2469 = scalar_lea.vmem %s1, 448
        %v2470 = vld [vmem:[%s2469] sm:$0xf]
        %v2471 = vld [vmem:[%s2469 + $0x4] sm:$0xf]
        %v2472 = vld [vmem:[%s2469 + $0x8] sm:$0xf]
        %v2473 = vld [vmem:[%s2469 + $0xc] sm:$0xf]
        %v2474 = vld [vmem:[%s2469 + $0x10] sm:$0xf]
        %v2475 = vld [vmem:[%s2469 + $0x14] sm:$0xf]
        %v2476 = vld [vmem:[%s2469 + $0x18] sm:$0xf]
        %v2477 = vld [vmem:[%s2469 + $0x1c] sm:$0xf]
        %v2478 = vld [vmem:[%s2469 + $0x20] sm:$0xf]
        %v2479 = vld [vmem:[%s2469 + $0x24] sm:$0xf]
        %v2480 = vld [vmem:[%s2469 + $0x28] sm:$0xf]
        %v2481 = vld [vmem:[%s2469 + $0x2c] sm:$0xf]
        %v2482 = vld [vmem:[%s2469 + $0x30] sm:$0xf]
        %v2483 = vld [vmem:[%s2469 + $0x34] sm:$0xf]
        %v2484 = vld [vmem:[%s2469 + $0x38] sm:$0xf]
        %v2485 = vld [vmem:[%s2469 + $0x3c] sm:$0xf]
        %v2502 = vunpack.c.l.b16 %v2470
        %v2503 = vunpack.c.l.b16 %v2471
        %v2504 = vunpack.c.l.b16 %v2472
        %v2505 = vunpack.c.l.b16 %v2473
        %v2506 = vunpack.c.l.b16 %v2474
        %v2507 = vunpack.c.l.b16 %v2475
        %v2508 = vunpack.c.l.b16 %v2476
        %v2509 = vunpack.c.l.b16 %v2477
        %v2510 = vunpack.c.l.b16 %v2478
        %v2511 = vunpack.c.l.b16 %v2479
        %v2512 = vunpack.c.l.b16 %v2480
        %v2513 = vunpack.c.l.b16 %v2481
        %v2514 = vunpack.c.l.b16 %v2482
        %v2515 = vunpack.c.l.b16 %v2483
        %v2516 = vunpack.c.l.b16 %v2484
        %v2517 = vunpack.c.l.b16 %v2485
        %v2518 = vpack.c.b16 %v2503, %v2502
        %v2519 = vpack.c.b16 %v2505, %v2504
        %v2520 = vpack.c.b16 %v2507, %v2506
        %v2521 = vpack.c.b16 %v2509, %v2508
        %v2522 = vpack.c.b16 %v2511, %v2510
        %v2523 = vpack.c.b16 %v2513, %v2512
        %v2524 = vpack.c.b16 %v2515, %v2514
        %v2525 = vpack.c.b16 %v2517, %v2516
        %2534 = vmatprep.subr.bf16.mxu0 0
        %2535 = vmatpush1.bf16.msra.mxu0 %v2518
        %2536 = vmatprep.subr.bf16.mxu0 0
        %2537 = vmatpush1.bf16.msra.mxu0 %v2519
        %2538 = vmatprep.subr.bf16.mxu0 0
        %2539 = vmatpush1.bf16.msra.mxu0 %v2520
        %2540 = vmatprep.subr.bf16.mxu0 0
        %2541 = vmatpush1.bf16.msra.mxu0 %v2521
        %2542 = vmatprep.subr.bf16.mxu0 0
        %2543 = vmatpush1.bf16.msra.mxu0 %v2522
        %2544 = vmatprep.subr.bf16.mxu0 0
        %2545 = vmatpush1.bf16.msra.mxu0 %v2523
        %2546 = vmatprep.subr.bf16.mxu0 0
        %2547 = vmatpush1.bf16.msra.mxu0 %v2524
        %2548 = vmatprep.subr.bf16.mxu0 0
        %2549 = vmatpush1.bf16.msra.mxu0 %v2525
        %2550 = vmatprep.subr.bf16.mxu0 0
        %2551 = vmatpush1.bf16.msra.mxu0 0
        %2552 = vmatprep.subr.bf16.mxu0 0
        %2553 = vmatpush1.bf16.msra.mxu0 0
        %2554 = vmatprep.subr.bf16.mxu0 0
        %2555 = vmatpush1.bf16.msra.mxu0 0
        %2556 = vmatprep.subr.bf16.mxu0 0
        %2557 = vmatpush1.bf16.msra.mxu0 0
        %2558 = vmatprep.subr.bf16.mxu0 0
        %2559 = vmatpush1.bf16.msra.mxu0 0
        %2560 = vmatprep.subr.bf16.mxu0 0
        %2561 = vmatpush1.bf16.msra.mxu0 0
        %2562 = vmatprep.subr.bf16.mxu0 0
        %2563 = vmatpush1.bf16.msra.mxu0 0
        %2564 = vmatprep.subr.bf16.mxu0 0
        %2565 = vmatpush1.bf16.msra.mxu0 0
        %2566 = vmatprep.mubr.bf16.mxu0 0
        %2567 = vmatmul.mubr.bf16.gmra.mrb[0].mxu0 %v2453
        %v2568 = vpop.f32.mrb[0].mxu0
        %v2569 = vadd.f32 0.0, %v2568
        %v2570 = vpop.f32.mrb[0].mxu0
        %v2571 = vpop.f32.mrb[0].mxu0
        %v2572 = vadd.f32 0.0, %v2571
        %v2573 = vpop.f32.mrb[0].mxu0
        %2574 = vmatprep.mubr.bf16.mxu0 0
        %2575 = vmatmul.mubr.bf16.gmra.mrb[0].mxu0 %v2454
        %v2576 = vpop.f32.mrb[0].mxu0
        %v2577 = vadd.f32 0.0, %v2576
        %v2578 = vpop.f32.mrb[0].mxu0
        %v2579 = vpop.f32.mrb[0].mxu0
        %v2580 = vadd.f32 0.0, %v2579
        %v2581 = vpop.f32.mrb[0].mxu0
        %2582 = vmatprep.mubr.bf16.mxu0 0
        %2583 = vmatmul.mubr.bf16.gmra.mrb[0].mxu0 %v2455
        %v2584 = vpop.f32.mrb[0].mxu0
        %v2585 = vadd.f32 0.0, %v2584
        %v2586 = vpop.f32.mrb[0].mxu0
        %v2587 = vpop.f32.mrb[0].mxu0
        %v2588 = vadd.f32 0.0, %v2587
        %v2589 = vpop.f32.mrb[0].mxu0
        %2590 = vmatprep.mubr.bf16.mxu0 0
        %2591 = vmatmul.mubr.bf16.gmra.mrb[0].mxu0 %v2456
        %v2592 = vpop.f32.mrb[0].mxu0
        %v2593 = vadd.f32 0.0, %v2592
        %v2594 = vpop.f32.mrb[0].mxu0
        %v2595 = vpop.f32.mrb[0].mxu0
        %v2596 = vadd.f32 0.0, %v2595
        %v2597 = vpop.f32.mrb[0].mxu0
        %2598 = vmatprep.mubr.bf16.mxu0 0
        %2599 = vmatmul.mubr.bf16.gmra.mrb[0].mxu0 %v2457
        %v2600 = vpop.f32.mrb[0].mxu0
        %v2601 = vadd.f32 0.0, %v2600
        %v2602 = vpop.f32.mrb[0].mxu0
        %v2603 = vpop.f32.mrb[0].mxu0
        %v2604 = vadd.f32 0.0, %v2603
        %v2605 = vpop.f32.mrb[0].mxu0
        %2606 = vmatprep.mubr.bf16.mxu0 0
        %2607 = vmatmul.mubr.bf16.gmra.mrb[0].mxu0 %v2458
        %v2608 = vpop.f32.mrb[0].mxu0
        %v2609 = vadd.f32 0.0, %v2608
        %v2610 = vpop.f32.mrb[0].mxu0
        %v2611 = vpop.f32.mrb[0].mxu0
        %v2612 = vadd.f32 0.0, %v2611
        %v2613 = vpop.f32.mrb[0].mxu0
        %2614 = vmatprep.mubr.bf16.mxu0 0
        %2615 = vmatmul.mubr.bf16.gmra.mrb[0].mxu0 %v2459
        %v2616 = vpop.f32.mrb[0].mxu0
        %v2617 = vadd.f32 0.0, %v2616
        %v2618 = vpop.f32.mrb[0].mxu0
        %v2619 = vpop.f32.mrb[0].mxu0
        %v2620 = vadd.f32 0.0, %v2619
        %v2621 = vpop.f32.mrb[0].mxu0
        %2622 = vmatprep.mubr.bf16.mxu0 0
        %2623 = vmatmul.mubr.bf16.gmra.mrb[0].mxu0 %v2460
        %v2624 = vpop.f32.mrb[0].mxu0
        %v2625 = vadd.f32 0.0, %v2624
        %v2626 = vpop.f32.mrb[0].mxu0
        %v2627 = vpop.f32.mrb[0].mxu0
        %v2628 = vadd.f32 0.0, %v2627
        %v2629 = vpop.f32.mrb[0].mxu0
        %2630 = vmatprep.mubr.bf16.mxu0 0
        %2631 = vmatmul.mubr.bf16.gmra.mrb[0].mxu0 %v2461
        %v2632 = vpop.f32.mrb[0].mxu0
        %v2633 = vadd.f32 0.0, %v2632
        %v2634 = vpop.f32.mrb[0].mxu0
        %v2635 = vpop.f32.mrb[0].mxu0
        %v2636 = vadd.f32 0.0, %v2635
        %v2637 = vpop.f32.mrb[0].mxu0
        %2638 = vmatprep.mubr.bf16.mxu0 0
        %2639 = vmatmul.mubr.bf16.gmra.mrb[0].mxu0 %v2462
        %v2640 = vpop.f32.mrb[0].mxu0
        %v2641 = vadd.f32 0.0, %v2640
        %v2642 = vpop.f32.mrb[0].mxu0
        %v2643 = vpop.f32.mrb[0].mxu0
        %v2644 = vadd.f32 0.0, %v2643
        %v2645 = vpop.f32.mrb[0].mxu0
        %2646 = vmatprep.mubr.bf16.mxu0 0
        %2647 = vmatmul.mubr.bf16.gmra.mrb[0].mxu0 %v2463
        %v2648 = vpop.f32.mrb[0].mxu0
        %v2649 = vadd.f32 0.0, %v2648
        %v2650 = vpop.f32.mrb[0].mxu0
        %v2651 = vpop.f32.mrb[0].mxu0
        %v2652 = vadd.f32 0.0, %v2651
        %v2653 = vpop.f32.mrb[0].mxu0
        %2654 = vmatprep.mubr.bf16.mxu0 0
        %2655 = vmatmul.mubr.bf16.gmra.mrb[0].mxu0 %v2464
        %v2656 = vpop.f32.mrb[0].mxu0
        %v2657 = vadd.f32 0.0, %v2656
        %v2658 = vpop.f32.mrb[0].mxu0
        %v2659 = vpop.f32.mrb[0].mxu0
        %v2660 = vadd.f32 0.0, %v2659
        %v2661 = vpop.f32.mrb[0].mxu0
        %2662 = vmatprep.mubr.bf16.mxu0 0
        %2663 = vmatmul.mubr.bf16.gmra.mrb[0].mxu0 %v2465
        %v2664 = vpop.f32.mrb[0].mxu0
        %v2665 = vadd.f32 0.0, %v2664
        %v2666 = vpop.f32.mrb[0].mxu0
        %v2667 = vpop.f32.mrb[0].mxu0
        %v2668 = vadd.f32 0.0, %v2667
        %v2669 = vpop.f32.mrb[0].mxu0
        %2670 = vmatprep.mubr.bf16.mxu0 0
        %2671 = vmatmul.mubr.bf16.gmra.mrb[0].mxu0 %v2466
        %v2672 = vpop.f32.mrb[0].mxu0
        %v2673 = vadd.f32 0.0, %v2672
        %v2674 = vpop.f32.mrb[0].mxu0
        %v2675 = vpop.f32.mrb[0].mxu0
        %v2676 = vadd.f32 0.0, %v2675
        %v2677 = vpop.f32.mrb[0].mxu0
        %2678 = vmatprep.mubr.bf16.mxu0 0
        %2679 = vmatmul.mubr.bf16.gmra.mrb[0].mxu0 %v2467
        %v2680 = vpop.f32.mrb[0].mxu0
        %v2681 = vadd.f32 0.0, %v2680
        %v2682 = vpop.f32.mrb[0].mxu0
        %v2683 = vpop.f32.mrb[0].mxu0
        %v2684 = vadd.f32 0.0, %v2683
        %v2685 = vpop.f32.mrb[0].mxu0
        %2686 = vmatprep.mubr.bf16.mxu0 0
        %2687 = vmatmul.mubr.bf16.gmra.mrb[0].mxu0 %v2468
        %v2688 = vpop.f32.mrb[0].mxu0
        %v2689 = vadd.f32 0.0, %v2688
        %v2690 = vpop.f32.mrb[0].mxu0
        %v2691 = vpop.f32.mrb[0].mxu0
        %v2692 = vadd.f32 0.0, %v2691
        %v2693 = vpop.f32.mrb[0].mxu0
        %2694 = vdwg.mxu0
        %v2695 = vadd.f32 %v2389, %v2569
        %v2696 = vadd.f32 %v2390, %v2572
        %v2697 = vadd.f32 %v2391, %v2577
        %v2698 = vadd.f32 %v2392, %v2580
        %v2699 = vadd.f32 %v2393, %v2585
        %v2700 = vadd.f32 %v2394, %v2588
        %v2701 = vadd.f32 %v2395, %v2593
        %v2702 = vadd.f32 %v2396, %v2596
        %v2703 = vadd.f32 %v2397, %v2601
        %v2704 = vadd.f32 %v2398, %v2604
        %v2705 = vadd.f32 %v2399, %v2609
        %v2706 = vadd.f32 %v2400, %v2612
        %v2707 = vadd.f32 %v2401, %v2617
        %v2708 = vadd.f32 %v2402, %v2620
        %v2709 = vadd.f32 %v2403, %v2625
        %v2710 = vadd.f32 %v2404, %v2628
        %v2711 = vadd.f32 %v2405, %v2633
        %v2712 = vadd.f32 %v2406, %v2636
        %v2713 = vadd.f32 %v2407, %v2641
        %v2714 = vadd.f32 %v2408, %v2644
        %v2715 = vadd.f32 %v2409, %v2649
        %v2716 = vadd.f32 %v2410, %v2652
        %v2717 = vadd.f32 %v2411, %v2657
        %v2718 = vadd.f32 %v2412, %v2660
        %v2719 = vadd.f32 %v2413, %v2665
        %v2720 = vadd.f32 %v2414, %v2668
        %v2721 = vadd.f32 %v2415, %v2673
        %v2722 = vadd.f32 %v2416, %v2676
        %v2723 = vadd.f32 %v2417, %v2681
        %v2724 = vadd.f32 %v2418, %v2684
        %v2725 = vadd.f32 %v2419, %v2689
        %v2726 = vadd.f32 %v2420, %v2692
        %v2727 = vld [vmem:[%s2114 + $0x2] sm:$0xff]
        %v2728 = vld [vmem:[%s2114 + $0xa] sm:$0xff]
        %v2729 = vld [vmem:[%s2114 + $0x1a] sm:$0xff]
        %v2730 = vld [vmem:[%s2114 + $0x22] sm:$0xff]
        %v2731 = vld [vmem:[%s2114 + $0x32] sm:$0xff]
        %v2732 = vld [vmem:[%s2114 + $0x3a] sm:$0xff]
        %v2733 = vld [vmem:[%s2114 + $0x4a] sm:$0xff]
        %v2734 = vld [vmem:[%s2114 + $0x52] sm:$0xff]
        %v2735 = vld [vmem:[%s2114 + $0x62] sm:$0xff]
        %v2736 = vld [vmem:[%s2114 + $0x6a] sm:$0xff]
        %v2737 = vld [vmem:[%s2114 + $0x7a] sm:$0xff]
        %v2738 = vld [vmem:[%s2114 + $0x82] sm:$0xff]
        %v2739 = vld [vmem:[%s2114 + $0x92] sm:$0xff]
        %v2740 = vld [vmem:[%s2114 + $0x9a] sm:$0xff]
        %v2741 = vld [vmem:[%s2114 + $0xaa] sm:$0xff]
        %v2742 = vld [vmem:[%s2114 + $0xb2] sm:$0xff]
        %v2743 = vld [vmem:[%s2114 + $0xc2] sm:$0xff]
        %v2744 = vld [vmem:[%s2114 + $0xca] sm:$0xff]
        %v2745 = vld [vmem:[%s2114 + $0xda] sm:$0xff]
        %v2746 = vld [vmem:[%s2114 + $0xe2] sm:$0xff]
        %v2747 = vld [vmem:[%s2114 + $0xf2] sm:$0xff]
        %v2748 = vld [vmem:[%s2114 + $0xfa] sm:$0xff]
        %v2749 = vld [vmem:[%s2114 + $0x10a] sm:$0xff]
        %v2750 = vld [vmem:[%s2114 + $0x112] sm:$0xff]
        %v2751 = vld [vmem:[%s2114 + $0x122] sm:$0xff]
        %v2752 = vld [vmem:[%s2114 + $0x12a] sm:$0xff]
        %v2753 = vld [vmem:[%s2114 + $0x13a] sm:$0xff]
        %v2754 = vld [vmem:[%s2114 + $0x142] sm:$0xff]
        %v2755 = vld [vmem:[%s2114 + $0x152] sm:$0xff]
        %v2756 = vld [vmem:[%s2114 + $0x15a] sm:$0xff]
        %v2757 = vld [vmem:[%s2114 + $0x16a] sm:$0xff]
        %v2758 = vld [vmem:[%s2114 + $0x172] sm:$0xff]
        %v2759 = vpack.c.bf16 %v2728, %v2727
        %v2760 = vpack.c.bf16 %v2730, %v2729
        %v2761 = vpack.c.bf16 %v2732, %v2731
        %v2762 = vpack.c.bf16 %v2734, %v2733
        %v2763 = vpack.c.bf16 %v2736, %v2735
        %v2764 = vpack.c.bf16 %v2738, %v2737
        %v2765 = vpack.c.bf16 %v2740, %v2739
        %v2766 = vpack.c.bf16 %v2742, %v2741
        %v2767 = vpack.c.bf16 %v2744, %v2743
        %v2768 = vpack.c.bf16 %v2746, %v2745
        %v2769 = vpack.c.bf16 %v2748, %v2747
        %v2770 = vpack.c.bf16 %v2750, %v2749
        %v2771 = vpack.c.bf16 %v2752, %v2751
        %v2772 = vpack.c.bf16 %v2754, %v2753
        %v2773 = vpack.c.bf16 %v2756, %v2755
        %v2774 = vpack.c.bf16 %v2758, %v2757
        %s2775 = scalar_lea.vmem %s1, 512
        %v2776 = vld [vmem:[%s2775] sm:$0xf]
        %v2777 = vld [vmem:[%s2775 + $0x4] sm:$0xf]
        %v2778 = vld [vmem:[%s2775 + $0x8] sm:$0xf]
        %v2779 = vld [vmem:[%s2775 + $0xc] sm:$0xf]
        %v2780 = vld [vmem:[%s2775 + $0x10] sm:$0xf]
        %v2781 = vld [vmem:[%s2775 + $0x14] sm:$0xf]
        %v2782 = vld [vmem:[%s2775 + $0x18] sm:$0xf]
        %v2783 = vld [vmem:[%s2775 + $0x1c] sm:$0xf]
        %v2784 = vld [vmem:[%s2775 + $0x20] sm:$0xf]
        %v2785 = vld [vmem:[%s2775 + $0x24] sm:$0xf]
        %v2786 = vld [vmem:[%s2775 + $0x28] sm:$0xf]
        %v2787 = vld [vmem:[%s2775 + $0x2c] sm:$0xf]
        %v2788 = vld [vmem:[%s2775 + $0x30] sm:$0xf]
        %v2789 = vld [vmem:[%s2775 + $0x34] sm:$0xf]
        %v2790 = vld [vmem:[%s2775 + $0x38] sm:$0xf]
        %v2791 = vld [vmem:[%s2775 + $0x3c] sm:$0xf]
        %v2808 = vunpack.c.l.b16 %v2776
        %v2809 = vunpack.c.l.b16 %v2777
        %v2810 = vunpack.c.l.b16 %v2778
        %v2811 = vunpack.c.l.b16 %v2779
        %v2812 = vunpack.c.l.b16 %v2780
        %v2813 = vunpack.c.l.b16 %v2781
        %v2814 = vunpack.c.l.b16 %v2782
        %v2815 = vunpack.c.l.b16 %v2783
        %v2816 = vunpack.c.l.b16 %v2784
        %v2817 = vunpack.c.l.b16 %v2785
        %v2818 = vunpack.c.l.b16 %v2786
        %v2819 = vunpack.c.l.b16 %v2787
        %v2820 = vunpack.c.l.b16 %v2788
        %v2821 = vunpack.c.l.b16 %v2789
        %v2822 = vunpack.c.l.b16 %v2790
        %v2823 = vunpack.c.l.b16 %v2791
        %v2824 = vpack.c.b16 %v2809, %v2808
        %v2825 = vpack.c.b16 %v2811, %v2810
        %v2826 = vpack.c.b16 %v2813, %v2812
        %v2827 = vpack.c.b16 %v2815, %v2814
        %v2828 = vpack.c.b16 %v2817, %v2816
        %v2829 = vpack.c.b16 %v2819, %v2818
        %v2830 = vpack.c.b16 %v2821, %v2820
        %v2831 = vpack.c.b16 %v2823, %v2822
        %2840 = vmatprep.subr.bf16.mxu0 0
        %2841 = vmatpush1.bf16.msra.mxu0 %v2824
        %2842 = vmatprep.subr.bf16.mxu0 0
        %2843 = vmatpush1.bf16.msra.mxu0 %v2825
        %2844 = vmatprep.subr.bf16.mxu0 0
        %2845 = vmatpush1.bf16.msra.mxu0 %v2826
        %2846 = vmatprep.subr.bf16.mxu0 0
        %2847 = vmatpush1.bf16.msra.mxu0 %v2827
        %2848 = vmatprep.subr.bf16.mxu0 0
        %2849 = vmatpush1.bf16.msra.mxu0 %v2828
        %2850 = vmatprep.subr.bf16.mxu0 0
        %2851 = vmatpush1.bf16.msra.mxu0 %v2829
        %2852 = vmatprep.subr.bf16.mxu0 0
        %2853 = vmatpush1.bf16.msra.mxu0 %v2830
        %2854 = vmatprep.subr.bf16.mxu0 0
        %2855 = vmatpush1.bf16.msra.mxu0 %v2831
        %2856 = vmatprep.subr.bf16.mxu0 0
        %2857 = vmatpush1.bf16.msra.mxu0 0
        %2858 = vmatprep.subr.bf16.mxu0 0
        %2859 = vmatpush1.bf16.msra.mxu0 0
        %2860 = vmatprep.subr.bf16.mxu0 0
        %2861 = vmatpush1.bf16.msra.mxu0 0
        %2862 = vmatprep.subr.bf16.mxu0 0
        %2863 = vmatpush1.bf16.msra.mxu0 0
        %2864 = vmatprep.subr.bf16.mxu0 0
        %2865 = vmatpush1.bf16.msra.mxu0 0
        %2866 = vmatprep.subr.bf16.mxu0 0
        %2867 = vmatpush1.bf16.msra.mxu0 0
        %2868 = vmatprep.subr.bf16.mxu0 0
        %2869 = vmatpush1.bf16.msra.mxu0 0
        %2870 = vmatprep.subr.bf16.mxu0 0
        %2871 = vmatpush1.bf16.msra.mxu0 0
        %2872 = vmatprep.mubr.bf16.mxu0 0
        %2873 = vmatmul.mubr.bf16.gmra.mrb[0].mxu0 %v2759
        %v2874 = vpop.f32.mrb[0].mxu0
        %v2875 = vadd.f32 0.0, %v2874
        %v2876 = vpop.f32.mrb[0].mxu0
        %v2877 = vpop.f32.mrb[0].mxu0
        %v2878 = vadd.f32 0.0, %v2877
        %v2879 = vpop.f32.mrb[0].mxu0
        %2880 = vmatprep.mubr.bf16.mxu0 0
        %2881 = vmatmul.mubr.bf16.gmra.mrb[0].mxu0 %v2760
        %v2882 = vpop.f32.mrb[0].mxu0
        %v2883 = vadd.f32 0.0, %v2882
        %v2884 = vpop.f32.mrb[0].mxu0
        %v2885 = vpop.f32.mrb[0].mxu0
        %v2886 = vadd.f32 0.0, %v2885
        %v2887 = vpop.f32.mrb[0].mxu0
        %2888 = vmatprep.mubr.bf16.mxu0 0
        %2889 = vmatmul.mubr.bf16.gmra.mrb[0].mxu0 %v2761
        %v2890 = vpop.f32.mrb[0].mxu0
        %v2891 = vadd.f32 0.0, %v2890
        %v2892 = vpop.f32.mrb[0].mxu0
        %v2893 = vpop.f32.mrb[0].mxu0
        %v2894 = vadd.f32 0.0, %v2893
        %v2895 = vpop.f32.mrb[0].mxu0
        %2896 = vmatprep.mubr.bf16.mxu0 0
        %2897 = vmatmul.mubr.bf16.gmra.mrb[0].mxu0 %v2762
        %v2898 = vpop.f32.mrb[0].mxu0
        %v2899 = vadd.f32 0.0, %v2898
        %v2900 = vpop.f32.mrb[0].mxu0
        %v2901 = vpop.f32.mrb[0].mxu0
        %v2902 = vadd.f32 0.0, %v2901
        %v2903 = vpop.f32.mrb[0].mxu0
        %2904 = vmatprep.mubr.bf16.mxu0 0
        %2905 = vmatmul.mubr.bf16.gmra.mrb[0].mxu0 %v2763
        %v2906 = vpop.f32.mrb[0].mxu0
        %v2907 = vadd.f32 0.0, %v2906
        %v2908 = vpop.f32.mrb[0].mxu0
        %v2909 = vpop.f32.mrb[0].mxu0
        %v2910 = vadd.f32 0.0, %v2909
        %v2911 = vpop.f32.mrb[0].mxu0
        %2912 = vmatprep.mubr.bf16.mxu0 0
        %2913 = vmatmul.mubr.bf16.gmra.mrb[0].mxu0 %v2764
        %v2914 = vpop.f32.mrb[0].mxu0
        %v2915 = vadd.f32 0.0, %v2914
        %v2916 = vpop.f32.mrb[0].mxu0
        %v2917 = vpop.f32.mrb[0].mxu0
        %v2918 = vadd.f32 0.0, %v2917
        %v2919 = vpop.f32.mrb[0].mxu0
        %2920 = vmatprep.mubr.bf16.mxu0 0
        %2921 = vmatmul.mubr.bf16.gmra.mrb[0].mxu0 %v2765
        %v2922 = vpop.f32.mrb[0].mxu0
        %v2923 = vadd.f32 0.0, %v2922
        %v2924 = vpop.f32.mrb[0].mxu0
        %v2925 = vpop.f32.mrb[0].mxu0
        %v2926 = vadd.f32 0.0, %v2925
        %v2927 = vpop.f32.mrb[0].mxu0
        %2928 = vmatprep.mubr.bf16.mxu0 0
        %2929 = vmatmul.mubr.bf16.gmra.mrb[0].mxu0 %v2766
        %v2930 = vpop.f32.mrb[0].mxu0
        %v2931 = vadd.f32 0.0, %v2930
        %v2932 = vpop.f32.mrb[0].mxu0
        %v2933 = vpop.f32.mrb[0].mxu0
        %v2934 = vadd.f32 0.0, %v2933
        %v2935 = vpop.f32.mrb[0].mxu0
        %2936 = vmatprep.mubr.bf16.mxu0 0
        %2937 = vmatmul.mubr.bf16.gmra.mrb[0].mxu0 %v2767
        %v2938 = vpop.f32.mrb[0].mxu0
        %v2939 = vadd.f32 0.0, %v2938
        %v2940 = vpop.f32.mrb[0].mxu0
        %v2941 = vpop.f32.mrb[0].mxu0
        %v2942 = vadd.f32 0.0, %v2941
        %v2943 = vpop.f32.mrb[0].mxu0
        %2944 = vmatprep.mubr.bf16.mxu0 0
        %2945 = vmatmul.mubr.bf16.gmra.mrb[0].mxu0 %v2768
        %v2946 = vpop.f32.mrb[0].mxu0
        %v2947 = vadd.f32 0.0, %v2946
        %v2948 = vpop.f32.mrb[0].mxu0
        %v2949 = vpop.f32.mrb[0].mxu0
        %v2950 = vadd.f32 0.0, %v2949
        %v2951 = vpop.f32.mrb[0].mxu0
        %2952 = vmatprep.mubr.bf16.mxu0 0
        %2953 = vmatmul.mubr.bf16.gmra.mrb[0].mxu0 %v2769
        %v2954 = vpop.f32.mrb[0].mxu0
        %v2955 = vadd.f32 0.0, %v2954
        %v2956 = vpop.f32.mrb[0].mxu0
        %v2957 = vpop.f32.mrb[0].mxu0
        %v2958 = vadd.f32 0.0, %v2957
        %v2959 = vpop.f32.mrb[0].mxu0
        %2960 = vmatprep.mubr.bf16.mxu0 0
        %2961 = vmatmul.mubr.bf16.gmra.mrb[0].mxu0 %v2770
        %v2962 = vpop.f32.mrb[0].mxu0
        %v2963 = vadd.f32 0.0, %v2962
        %v2964 = vpop.f32.mrb[0].mxu0
        %v2965 = vpop.f32.mrb[0].mxu0
        %v2966 = vadd.f32 0.0, %v2965
        %v2967 = vpop.f32.mrb[0].mxu0
        %2968 = vmatprep.mubr.bf16.mxu0 0
        %2969 = vmatmul.mubr.bf16.gmra.mrb[0].mxu0 %v2771
        %v2970 = vpop.f32.mrb[0].mxu0
        %v2971 = vadd.f32 0.0, %v2970
        %v2972 = vpop.f32.mrb[0].mxu0
        %v2973 = vpop.f32.mrb[0].mxu0
        %v2974 = vadd.f32 0.0, %v2973
        %v2975 = vpop.f32.mrb[0].mxu0
        %2976 = vmatprep.mubr.bf16.mxu0 0
        %2977 = vmatmul.mubr.bf16.gmra.mrb[0].mxu0 %v2772
        %v2978 = vpop.f32.mrb[0].mxu0
        %v2979 = vadd.f32 0.0, %v2978
        %v2980 = vpop.f32.mrb[0].mxu0
        %v2981 = vpop.f32.mrb[0].mxu0
        %v2982 = vadd.f32 0.0, %v2981
        %v2983 = vpop.f32.mrb[0].mxu0
        %2984 = vmatprep.mubr.bf16.mxu0 0
        %2985 = vmatmul.mubr.bf16.gmra.mrb[0].mxu0 %v2773
        %v2986 = vpop.f32.mrb[0].mxu0
        %v2987 = vadd.f32 0.0, %v2986
        %v2988 = vpop.f32.mrb[0].mxu0
        %v2989 = vpop.f32.mrb[0].mxu0
        %v2990 = vadd.f32 0.0, %v2989
        %v2991 = vpop.f32.mrb[0].mxu0
        %2992 = vmatprep.mubr.bf16.mxu0 0
        %2993 = vmatmul.mubr.bf16.gmra.mrb[0].mxu0 %v2774
        %v2994 = vpop.f32.mrb[0].mxu0
        %v2995 = vadd.f32 0.0, %v2994
        %v2996 = vpop.f32.mrb[0].mxu0
        %v2997 = vpop.f32.mrb[0].mxu0
        %v2998 = vadd.f32 0.0, %v2997
        %v2999 = vpop.f32.mrb[0].mxu0
        %3000 = vdwg.mxu0
        %v3001 = vadd.f32 %v2695, %v2875
        %v3002 = vadd.f32 %v2696, %v2878
        %v3003 = vadd.f32 %v2697, %v2883
        %v3004 = vadd.f32 %v2698, %v2886
        %v3005 = vadd.f32 %v2699, %v2891
        %v3006 = vadd.f32 %v2700, %v2894
        %v3007 = vadd.f32 %v2701, %v2899
        %v3008 = vadd.f32 %v2702, %v2902
        %v3009 = vadd.f32 %v2703, %v2907
        %v3010 = vadd.f32 %v2704, %v2910
        %v3011 = vadd.f32 %v2705, %v2915
        %v3012 = vadd.f32 %v2706, %v2918
        %v3013 = vadd.f32 %v2707, %v2923
        %v3014 = vadd.f32 %v2708, %v2926
        %v3015 = vadd.f32 %v2709, %v2931
        %v3016 = vadd.f32 %v2710, %v2934
        %v3017 = vadd.f32 %v2711, %v2939
        %v3018 = vadd.f32 %v2712, %v2942
        %v3019 = vadd.f32 %v2713, %v2947
        %v3020 = vadd.f32 %v2714, %v2950
        %v3021 = vadd.f32 %v2715, %v2955
        %v3022 = vadd.f32 %v2716, %v2958
        %v3023 = vadd.f32 %v2717, %v2963
        %v3024 = vadd.f32 %v2718, %v2966
        %v3025 = vadd.f32 %v2719, %v2971
        %v3026 = vadd.f32 %v2720, %v2974
        %v3027 = vadd.f32 %v2721, %v2979
        %v3028 = vadd.f32 %v2722, %v2982
        %v3029 = vadd.f32 %v2723, %v2987
        %v3030 = vadd.f32 %v2724, %v2990
        %v3031 = vadd.f32 %v2725, %v2995
        %v3032 = vadd.f32 %v2726, %v2998
        %v3033 = vld [vmem:[%s2] sm:$0x1]
        %v3034 = vlaneseq
        %v3035 = vshrl.u32 %v3034, 7
        %v3036 = vsub.s32 0, %v3035
        %v3037 = vrot.slane %v3033, %v3036
        %v3038 = vmul.f32 %v3001, %v3037
        %v3039 = vmul.f32 %v3002, %v3037
        %v3040 = vmul.f32 %v3003, %v3037
        %v3041 = vmul.f32 %v3004, %v3037
        %v3042 = vmul.f32 %v3005, %v3037
        %v3043 = vmul.f32 %v3006, %v3037
        %v3044 = vmul.f32 %v3007, %v3037
        %v3045 = vmul.f32 %v3008, %v3037
        %v3046 = vmul.f32 %v3009, %v3037
        %v3047 = vmul.f32 %v3010, %v3037
        %v3048 = vmul.f32 %v3011, %v3037
        %v3049 = vmul.f32 %v3012, %v3037
        %v3050 = vmul.f32 %v3013, %v3037
        %v3051 = vmul.f32 %v3014, %v3037
        %v3052 = vmul.f32 %v3015, %v3037
        %v3053 = vmul.f32 %v3016, %v3037
        %v3054 = vmul.f32 %v3017, %v3037
        %v3055 = vmul.f32 %v3018, %v3037
        %v3056 = vmul.f32 %v3019, %v3037
        %v3057 = vmul.f32 %v3020, %v3037
        %v3058 = vmul.f32 %v3021, %v3037
        %v3059 = vmul.f32 %v3022, %v3037
        %v3060 = vmul.f32 %v3023, %v3037
        %v3061 = vmul.f32 %v3024, %v3037
        %v3062 = vmul.f32 %v3025, %v3037
        %v3063 = vmul.f32 %v3026, %v3037
        %v3064 = vmul.f32 %v3027, %v3037
        %v3065 = vmul.f32 %v3028, %v3037
        %v3066 = vmul.f32 %v3029, %v3037
        %v3067 = vmul.f32 %v3030, %v3037
        %v3068 = vmul.f32 %v3031, %v3037
        %v3069 = vmul.f32 %v3032, %v3037
        %v3070 = vld [vmem:[%s2 + $0x1] sm:$0x1]
        %v3071 = vlaneseq
        %v3072 = vshrl.u32 %v3071, 7
        %v3073 = vsub.s32 0, %v3072
        %v3074 = vrot.slane %v3070, %v3073
        %v3075 = vadd.f32 %v3038, %v3074
        %v3076 = vadd.f32 %v3039, %v3074
        %v3077 = vadd.f32 %v3040, %v3074
        %v3078 = vadd.f32 %v3041, %v3074
        %v3079 = vadd.f32 %v3042, %v3074
        %v3080 = vadd.f32 %v3043, %v3074
        %v3081 = vadd.f32 %v3044, %v3074
        %v3082 = vadd.f32 %v3045, %v3074
        %v3083 = vadd.f32 %v3046, %v3074
        %v3084 = vadd.f32 %v3047, %v3074
        %v3085 = vadd.f32 %v3048, %v3074
        %v3086 = vadd.f32 %v3049, %v3074
        %v3087 = vadd.f32 %v3050, %v3074
        %v3088 = vadd.f32 %v3051, %v3074
        %v3089 = vadd.f32 %v3052, %v3074
        %v3090 = vadd.f32 %v3053, %v3074
        %v3091 = vadd.f32 %v3054, %v3074
        %v3092 = vadd.f32 %v3055, %v3074
        %v3093 = vadd.f32 %v3056, %v3074
        %v3094 = vadd.f32 %v3057, %v3074
        %v3095 = vadd.f32 %v3058, %v3074
        %v3096 = vadd.f32 %v3059, %v3074
        %v3097 = vadd.f32 %v3060, %v3074
        %v3098 = vadd.f32 %v3061, %v3074
        %v3099 = vadd.f32 %v3062, %v3074
        %v3100 = vadd.f32 %v3063, %v3074
        %v3101 = vadd.f32 %v3064, %v3074
        %v3102 = vadd.f32 %v3065, %v3074
        %v3103 = vadd.f32 %v3066, %v3074
        %v3104 = vadd.f32 %v3067, %v3074
        %v3105 = vadd.f32 %v3068, %v3074
        %v3106 = vadd.f32 %v3069, %v3074
        %v3107 = vmax.f32 %v3075, 0.0
        %v3108 = vmax.f32 %v3076, 0.0
        %v3109 = vmax.f32 %v3077, 0.0
        %v3110 = vmax.f32 %v3078, 0.0
        %v3111 = vmax.f32 %v3079, 0.0
        %v3112 = vmax.f32 %v3080, 0.0
        %v3113 = vmax.f32 %v3081, 0.0
        %v3114 = vmax.f32 %v3082, 0.0
        %v3115 = vmax.f32 %v3083, 0.0
        %v3116 = vmax.f32 %v3084, 0.0
        %v3117 = vmax.f32 %v3085, 0.0
        %v3118 = vmax.f32 %v3086, 0.0
        %v3119 = vmax.f32 %v3087, 0.0
        %v3120 = vmax.f32 %v3088, 0.0
        %v3121 = vmax.f32 %v3089, 0.0
        %v3122 = vmax.f32 %v3090, 0.0
        %v3123 = vmax.f32 %v3091, 0.0
        %v3124 = vmax.f32 %v3092, 0.0
        %v3125 = vmax.f32 %v3093, 0.0
        %v3126 = vmax.f32 %v3094, 0.0
        %v3127 = vmax.f32 %v3095, 0.0
        %v3128 = vmax.f32 %v3096, 0.0
        %v3129 = vmax.f32 %v3097, 0.0
        %v3130 = vmax.f32 %v3098, 0.0
        %v3131 = vmax.f32 %v3099, 0.0
        %v3132 = vmax.f32 %v3100, 0.0
        %v3133 = vmax.f32 %v3101, 0.0
        %v3134 = vmax.f32 %v3102, 0.0
        %v3135 = vmax.f32 %v3103, 0.0
        %v3136 = vmax.f32 %v3104, 0.0
        %v3137 = vmax.f32 %v3105, 0.0
        %v3138 = vmax.f32 %v3106, 0.0
        %3139 = vst [vmem:[#allocation3] sm:$0xff] 0.0
        %3140 = vst [vmem:[#allocation3 + $0x8] sm:$0xff] 0.0
        %3141 = vst [vmem:[#allocation3 + $0x10] sm:$0x3] 0.0
        %3142 = vst [vmem:[#allocation3 + $0x18] sm:$0xff] 0.0
        %3143 = vst [vmem:[#allocation3 + $0x20] sm:$0xff] 0.0
        %3144 = vst [vmem:[#allocation3 + $0x28] sm:$0x3] 0.0
        %3145 = vst [vmem:[#allocation3 + $0x30] sm:$0xff] 0.0
        %3146 = vst [vmem:[#allocation3 + $0x38] sm:$0xff] 0.0
        %3147 = vst [vmem:[#allocation3 + $0x40] sm:$0x3] 0.0
        %3148 = vst [vmem:[#allocation3 + $0x48] sm:$0xff] 0.0
        %3149 = vst [vmem:[#allocation3 + $0x50] sm:$0xff] 0.0
        %3150 = vst [vmem:[#allocation3 + $0x58] sm:$0x3] 0.0
        %3151 = vst [vmem:[#allocation3 + $0x60] sm:$0xff] 0.0
        %3152 = vst [vmem:[#allocation3 + $0x68] sm:$0xff] 0.0
        %3153 = vst [vmem:[#allocation3 + $0x70] sm:$0x3] 0.0
        %3154 = vst [vmem:[#allocation3 + $0x78] sm:$0xff] 0.0
        %3155 = vst [vmem:[#allocation3 + $0x80] sm:$0xff] 0.0
        %3156 = vst [vmem:[#allocation3 + $0x88] sm:$0x3] 0.0
        %3157 = vst [vmem:[#allocation3 + $0x90] sm:$0xff] 0.0
        %3158 = vst [vmem:[#allocation3 + $0x98] sm:$0xff] 0.0
        %3159 = vst [vmem:[#allocation3 + $0xa0] sm:$0x3] 0.0
        %3160 = vst [vmem:[#allocation3 + $0xa8] sm:$0xff] 0.0
        %3161 = vst [vmem:[#allocation3 + $0xb0] sm:$0xff] 0.0
        %3162 = vst [vmem:[#allocation3 + $0xb8] sm:$0x3] 0.0
        %3163 = vst [vmem:[#allocation3 + $0xc0] sm:$0xff] 0.0
        %3164 = vst [vmem:[#allocation3 + $0xc8] sm:$0xff] 0.0
        %3165 = vst [vmem:[#allocation3 + $0xd0] sm:$0x3] 0.0
        %3166 = vst [vmem:[#allocation3 + $0xd8] sm:$0xff] 0.0
        %3167 = vst [vmem:[#allocation3 + $0xe0] sm:$0xff] 0.0
        %3168 = vst [vmem:[#allocation3 + $0xe8] sm:$0x3] 0.0
        %3169 = vst [vmem:[#allocation3 + $0xf0] sm:$0xff] 0.0
        %3170 = vst [vmem:[#allocation3 + $0xf8] sm:$0xff] 0.0
        %3171 = vst [vmem:[#allocation3 + $0x100] sm:$0x3] 0.0
        %3172 = vst [vmem:[#allocation3 + $0x108] sm:$0xff] 0.0
        %3173 = vst [vmem:[#allocation3 + $0x110] sm:$0xff] 0.0
        %3174 = vst [vmem:[#allocation3 + $0x118] sm:$0x3] 0.0
        %3175 = vst [vmem:[#allocation3 + $0x120] sm:$0xff] 0.0
        %3176 = vst [vmem:[#allocation3 + $0x128] sm:$0xff] 0.0
        %3177 = vst [vmem:[#allocation3 + $0x130] sm:$0x3] 0.0
        %3178 = vst [vmem:[#allocation3 + $0x138] sm:$0xff] 0.0
        %3179 = vst [vmem:[#allocation3 + $0x140] sm:$0xff] 0.0
        %3180 = vst [vmem:[#allocation3 + $0x148] sm:$0x3] 0.0
        %3181 = vst [vmem:[#allocation3 + $0x150] sm:$0xff] 0.0
        %3182 = vst [vmem:[#allocation3 + $0x158] sm:$0xff] 0.0
        %3183 = vst [vmem:[#allocation3 + $0x160] sm:$0x3] 0.0
        %3184 = vst [vmem:[#allocation3 + $0x168] sm:$0xff] 0.0
        %3185 = vst [vmem:[#allocation3 + $0x170] sm:$0xff] 0.0
        %3186 = vst [vmem:[#allocation3 + $0x178] sm:$0x3] 0.0
        %3187 = vst [vmem:[#allocation3 + $0x180] sm:$0xff] 0.0
        %3188 = vst [vmem:[#allocation3 + $0x188] sm:$0xff] 0.0
        %3189 = vst [vmem:[#allocation3 + $0x190] sm:$0x3] 0.0
        %3190 = vst [vmem:[#allocation3 + $0x198] sm:$0xff] 0.0
        %3191 = vst [vmem:[#allocation3 + $0x1a0] sm:$0xff] 0.0
        %3192 = vst [vmem:[#allocation3 + $0x1a8] sm:$0x3] 0.0
        %s3193 = scalar_lea.vmem [#allocation3], 24
        %3194 = vst [vmem:[%s3193 + $0x1] sm:$0xff] %v3107
        %3195 = vst [vmem:[%s3193 + $0x9] sm:$0xff] %v3108
        %3196 = vst [vmem:[%s3193 + $0x19] sm:$0xff] %v3109
        %3197 = vst [vmem:[%s3193 + $0x21] sm:$0xff] %v3110
        %3198 = vst [vmem:[%s3193 + $0x31] sm:$0xff] %v3111
        %3199 = vst [vmem:[%s3193 + $0x39] sm:$0xff] %v3112
        %3200 = vst [vmem:[%s3193 + $0x49] sm:$0xff] %v3113
        %3201 = vst [vmem:[%s3193 + $0x51] sm:$0xff] %v3114
        %3202 = vst [vmem:[%s3193 + $0x61] sm:$0xff] %v3115
        %3203 = vst [vmem:[%s3193 + $0x69] sm:$0xff] %v3116
        %3204 = vst [vmem:[%s3193 + $0x79] sm:$0xff] %v3117
        %3205 = vst [vmem:[%s3193 + $0x81] sm:$0xff] %v3118
        %3206 = vst [vmem:[%s3193 + $0x91] sm:$0xff] %v3119
        %3207 = vst [vmem:[%s3193 + $0x99] sm:$0xff] %v3120
        %3208 = vst [vmem:[%s3193 + $0xa9] sm:$0xff] %v3121
        %3209 = vst [vmem:[%s3193 + $0xb1] sm:$0xff] %v3122
        %3210 = vst [vmem:[%s3193 + $0xc1] sm:$0xff] %v3123
        %3211 = vst [vmem:[%s3193 + $0xc9] sm:$0xff] %v3124
        %3212 = vst [vmem:[%s3193 + $0xd9] sm:$0xff] %v3125
        %3213 = vst [vmem:[%s3193 + $0xe1] sm:$0xff] %v3126
        %3214 = vst [vmem:[%s3193 + $0xf1] sm:$0xff] %v3127
        %3215 = vst [vmem:[%s3193 + $0xf9] sm:$0xff] %v3128
        %3216 = vst [vmem:[%s3193 + $0x109] sm:$0xff] %v3129
        %3217 = vst [vmem:[%s3193 + $0x111] sm:$0xff] %v3130
        %3218 = vst [vmem:[%s3193 + $0x121] sm:$0xff] %v3131
        %3219 = vst [vmem:[%s3193 + $0x129] sm:$0xff] %v3132
        %3220 = vst [vmem:[%s3193 + $0x139] sm:$0xff] %v3133
        %3221 = vst [vmem:[%s3193 + $0x141] sm:$0xff] %v3134
        %3222 = vst [vmem:[%s3193 + $0x151] sm:$0xff] %v3135
        %3223 = vst [vmem:[%s3193 + $0x159] sm:$0xff] %v3136
        %3224 = vst [vmem:[%s3193 + $0x169] sm:$0xff] %v3137
        %3225 = vst [vmem:[%s3193 + $0x171] sm:$0xff] %v3138
        %v3226 = vld [vmem:[#allocation3] sm:$0xff]
        %v3227 = vld [vmem:[#allocation3 + $0x8] sm:$0xff]
        %v3228 = vld [vmem:[#allocation3 + $0x18] sm:$0xff]
        %v3229 = vld [vmem:[#allocation3 + $0x20] sm:$0xff]
        %v3230 = vld [vmem:[#allocation3 + $0x30] sm:$0xff]
        %v3231 = vld [vmem:[#allocation3 + $0x38] sm:$0xff]
        %v3232 = vld [vmem:[#allocation3 + $0x48] sm:$0xff]
        %v3233 = vld [vmem:[#allocation3 + $0x50] sm:$0xff]
        %v3234 = vld [vmem:[#allocation3 + $0x60] sm:$0xff]
        %v3235 = vld [vmem:[#allocation3 + $0x68] sm:$0xff]
        %v3236 = vld [vmem:[#allocation3 + $0x78] sm:$0xff]
        %v3237 = vld [vmem:[#allocation3 + $0x80] sm:$0xff]
        %v3238 = vld [vmem:[#allocation3 + $0x90] sm:$0xff]
        %v3239 = vld [vmem:[#allocation3 + $0x98] sm:$0xff]
        %v3240 = vld [vmem:[#allocation3 + $0xa8] sm:$0xff]
        %v3241 = vld [vmem:[#allocation3 + $0xb0] sm:$0xff]
        %v3242 = vld [vmem:[#allocation3 + $0xc0] sm:$0xff]
        %v3243 = vld [vmem:[#allocation3 + $0xc8] sm:$0xff]
        %v3244 = vld [vmem:[#allocation3 + $0xd8] sm:$0xff]
        %v3245 = vld [vmem:[#allocation3 + $0xe0] sm:$0xff]
        %v3246 = vld [vmem:[#allocation3 + $0xf0] sm:$0xff]
        %v3247 = vld [vmem:[#allocation3 + $0xf8] sm:$0xff]
        %v3248 = vld [vmem:[#allocation3 + $0x108] sm:$0xff]
        %v3249 = vld [vmem:[#allocation3 + $0x110] sm:$0xff]
        %v3250 = vld [vmem:[#allocation3 + $0x120] sm:$0xff]
        %v3251 = vld [vmem:[#allocation3 + $0x128] sm:$0xff]
        %v3252 = vld [vmem:[#allocation3 + $0x138] sm:$0xff]
        %v3253 = vld [vmem:[#allocation3 + $0x140] sm:$0xff]
        %v3254 = vld [vmem:[#allocation3 + $0x150] sm:$0xff]
        %v3255 = vld [vmem:[#allocation3 + $0x158] sm:$0xff]
        %v3256 = vld [vmem:[#allocation3 + $0x168] sm:$0xff]
        %v3257 = vld [vmem:[#allocation3 + $0x170] sm:$0xff]
        %v3258 = vpack.c.bf16 %v3227, %v3226
        %v3259 = vpack.c.bf16 %v3229, %v3228
        %v3260 = vpack.c.bf16 %v3231, %v3230
        %v3261 = vpack.c.bf16 %v3233, %v3232
        %v3262 = vpack.c.bf16 %v3235, %v3234
        %v3263 = vpack.c.bf16 %v3237, %v3236
        %v3264 = vpack.c.bf16 %v3239, %v3238
        %v3265 = vpack.c.bf16 %v3241, %v3240
        %v3266 = vpack.c.bf16 %v3243, %v3242
        %v3267 = vpack.c.bf16 %v3245, %v3244
        %v3268 = vpack.c.bf16 %v3247, %v3246
        %v3269 = vpack.c.bf16 %v3249, %v3248
        %v3270 = vpack.c.bf16 %v3251, %v3250
        %v3271 = vpack.c.bf16 %v3253, %v3252
        %v3272 = vpack.c.bf16 %v3255, %v3254
        %v3273 = vpack.c.bf16 %v3257, %v3256
        %v3274 = vld [vmem:[%s3] sm:$0xf]
        %v3275 = vld [vmem:[%s3 + $0x4] sm:$0xf]
        %v3276 = vld [vmem:[%s3 + $0x8] sm:$0xf]
        %v3277 = vld [vmem:[%s3 + $0xc] sm:$0xf]
        %v3278 = vld [vmem:[%s3 + $0x10] sm:$0xf]
        %v3279 = vld [vmem:[%s3 + $0x14] sm:$0xf]
        %v3280 = vld [vmem:[%s3 + $0x18] sm:$0xf]
        %v3281 = vld [vmem:[%s3 + $0x1c] sm:$0xf]
        %v3282 = vld [vmem:[%s3 + $0x20] sm:$0xf]
        %v3283 = vld [vmem:[%s3 + $0x24] sm:$0xf]
        %v3284 = vld [vmem:[%s3 + $0x28] sm:$0xf]
        %v3285 = vld [vmem:[%s3 + $0x2c] sm:$0xf]
        %v3286 = vld [vmem:[%s3 + $0x30] sm:$0xf]
        %v3287 = vld [vmem:[%s3 + $0x34] sm:$0xf]
        %v3288 = vld [vmem:[%s3 + $0x38] sm:$0xf]
        %v3289 = vld [vmem:[%s3 + $0x3c] sm:$0xf]
        %v3290 = vld [vmem:[#allocation3 + $0x1] sm:$0xff]
        %v3291 = vld [vmem:[#allocation3 + $0x9] sm:$0xff]
        %v3292 = vld [vmem:[#allocation3 + $0x19] sm:$0xff]
        %v3293 = vld [vmem:[#allocation3 + $0x21] sm:$0xff]
        %v3294 = vld [vmem:[#allocation3 + $0x31] sm:$0xff]
        %v3295 = vld [vmem:[#allocation3 + $0x39] sm:$0xff]
        %v3296 = vld [vmem:[#allocation3 + $0x49] sm:$0xff]
        %v3297 = vld [vmem:[#allocation3 + $0x51] sm:$0xff]
        %v3298 = vld [vmem:[#allocation3 + $0x61] sm:$0xff]
        %v3299 = vld [vmem:[#allocation3 + $0x69] sm:$0xff]
        %v3300 = vld [vmem:[#allocation3 + $0x79] sm:$0xff]
        %v3301 = vld [vmem:[#allocation3 + $0x81] sm:$0xff]
        %v3302 = vld [vmem:[#allocation3 + $0x91] sm:$0xff]
        %v3303 = vld [vmem:[#allocation3 + $0x99] sm:$0xff]
        %v3304 = vld [vmem:[#allocation3 + $0xa9] sm:$0xff]
        %v3305 = vld [vmem:[#allocation3 + $0xb1] sm:$0xff]
        %v3306 = vld [vmem:[#allocation3 + $0xc1] sm:$0xff]
        %v3307 = vld [vmem:[#allocation3 + $0xc9] sm:$0xff]
        %v3308 = vld [vmem:[#allocation3 + $0xd9] sm:$0xff]
        %v3309 = vld [vmem:[#allocation3 + $0xe1] sm:$0xff]
        %v3310 = vld [vmem:[#allocation3 + $0xf1] sm:$0xff]
        %v3311 = vld [vmem:[#allocation3 + $0xf9] sm:$0xff]
        %v3312 = vld [vmem:[#allocation3 + $0x109] sm:$0xff]
        %v3313 = vld [vmem:[#allocation3 + $0x111] sm:$0xff]
        %v3314 = vld [vmem:[#allocation3 + $0x121] sm:$0xff]
        %v3315 = vld [vmem:[#allocation3 + $0x129] sm:$0xff]
        %v3316 = vld [vmem:[#allocation3 + $0x139] sm:$0xff]
        %v3317 = vld [vmem:[#allocation3 + $0x141] sm:$0xff]
        %v3318 = vld [vmem:[#allocation3 + $0x151] sm:$0xff]
        %v3319 = vld [vmem:[#allocation3 + $0x159] sm:$0xff]
        %v3320 = vld [vmem:[#allocation3 + $0x169] sm:$0xff]
        %v3321 = vld [vmem:[#allocation3 + $0x171] sm:$0xff]
        %v3322 = vpack.c.bf16 %v3291, %v3290
        %v3323 = vpack.c.bf16 %v3293, %v3292
        %v3324 = vpack.c.bf16 %v3295, %v3294
        %v3325 = vpack.c.bf16 %v3297, %v3296
        %v3326 = vpack.c.bf16 %v3299, %v3298
        %v3327 = vpack.c.bf16 %v3301, %v3300
        %v3328 = vpack.c.bf16 %v3303, %v3302
        %v3329 = vpack.c.bf16 %v3305, %v3304
        %v3330 = vpack.c.bf16 %v3307, %v3306
        %v3331 = vpack.c.bf16 %v3309, %v3308
        %v3332 = vpack.c.bf16 %v3311, %v3310
        %v3333 = vpack.c.bf16 %v3313, %v3312
        %v3334 = vpack.c.bf16 %v3315, %v3314
        %v3335 = vpack.c.bf16 %v3317, %v3316
        %v3336 = vpack.c.bf16 %v3319, %v3318
        %v3337 = vpack.c.bf16 %v3321, %v3320
        %s3338 = scalar_lea.vmem %s3, 64
        %v3339 = vld [vmem:[%s3338] sm:$0xf]
        %v3340 = vld [vmem:[%s3338 + $0x4] sm:$0xf]
        %v3341 = vld [vmem:[%s3338 + $0x8] sm:$0xf]
        %v3342 = vld [vmem:[%s3338 + $0xc] sm:$0xf]
        %v3343 = vld [vmem:[%s3338 + $0x10] sm:$0xf]
        %v3344 = vld [vmem:[%s3338 + $0x14] sm:$0xf]
        %v3345 = vld [vmem:[%s3338 + $0x18] sm:$0xf]
        %v3346 = vld [vmem:[%s3338 + $0x1c] sm:$0xf]
        %v3347 = vld [vmem:[%s3338 + $0x20] sm:$0xf]
        %v3348 = vld [vmem:[%s3338 + $0x24] sm:$0xf]
        %v3349 = vld [vmem:[%s3338 + $0x28] sm:$0xf]
        %v3350 = vld [vmem:[%s3338 + $0x2c] sm:$0xf]
        %v3351 = vld [vmem:[%s3338 + $0x30] sm:$0xf]
        %v3352 = vld [vmem:[%s3338 + $0x34] sm:$0xf]
        %v3353 = vld [vmem:[%s3338 + $0x38] sm:$0xf]
        %v3354 = vld [vmem:[%s3338 + $0x3c] sm:$0xf]
        %v3371 = vunpack.c.l.b16 %v3339
        %v3372 = vunpack.c.l.b16 %v3340
        %v3373 = vunpack.c.l.b16 %v3341
        %v3374 = vunpack.c.l.b16 %v3342
        %v3375 = vunpack.c.l.b16 %v3343
        %v3376 = vunpack.c.l.b16 %v3344
        %v3377 = vunpack.c.l.b16 %v3345
        %v3378 = vunpack.c.l.b16 %v3346
        %v3379 = vunpack.c.l.b16 %v3347
        %v3380 = vunpack.c.l.b16 %v3348
        %v3381 = vunpack.c.l.b16 %v3349
        %v3382 = vunpack.c.l.b16 %v3350
        %v3383 = vunpack.c.l.b16 %v3351
        %v3384 = vunpack.c.l.b16 %v3352
        %v3385 = vunpack.c.l.b16 %v3353
        %v3386 = vunpack.c.l.b16 %v3354
        %v3387 = vpack.c.b16 %v3372, %v3371
        %v3388 = vpack.c.b16 %v3374, %v3373
        %v3389 = vpack.c.b16 %v3376, %v3375
        %v3390 = vpack.c.b16 %v3378, %v3377
        %v3391 = vpack.c.b16 %v3380, %v3379
        %v3392 = vpack.c.b16 %v3382, %v3381
        %v3393 = vpack.c.b16 %v3384, %v3383
        %v3394 = vpack.c.b16 %v3386, %v3385
        %3403 = vmatprep.subr.bf16.mxu0 0
        %3404 = vmatpush1.bf16.msra.mxu0 %v3387
        %3405 = vmatprep.subr.bf16.mxu0 0
        %3406 = vmatpush1.bf16.msra.mxu0 %v3388
        %3407 = vmatprep.subr.bf16.mxu0 0
        %3408 = vmatpush1.bf16.msra.mxu0 %v3389
        %3409 = vmatprep.subr.bf16.mxu0 0
        %3410 = vmatpush1.bf16.msra.mxu0 %v3390
        %3411 = vmatprep.subr.bf16.mxu0 0
        %3412 = vmatpush1.bf16.msra.mxu0 %v3391
        %3413 = vmatprep.subr.bf16.mxu0 0
        %3414 = vmatpush1.bf16.msra.mxu0 %v3392
        %3415 = vmatprep.subr.bf16.mxu0 0
        %3416 = vmatpush1.bf16.msra.mxu0 %v3393
        %3417 = vmatprep.subr.bf16.mxu0 0
        %3418 = vmatpush1.bf16.msra.mxu0 %v3394
        %3419 = vmatprep.subr.bf16.mxu0 0
        %3420 = vmatpush1.bf16.msra.mxu0 0
        %3421 = vmatprep.subr.bf16.mxu0 0
        %3422 = vmatpush1.bf16.msra.mxu0 0
        %3423 = vmatprep.subr.bf16.mxu0 0
        %3424 = vmatpush1.bf16.msra.mxu0 0
        %3425 = vmatprep.subr.bf16.mxu0 0
        %3426 = vmatpush1.bf16.msra.mxu0 0
        %3427 = vmatprep.subr.bf16.mxu0 0
        %3428 = vmatpush1.bf16.msra.mxu0 0
        %3429 = vmatprep.subr.bf16.mxu0 0
        %3430 = vmatpush1.bf16.msra.mxu0 0
        %3431 = vmatprep.subr.bf16.mxu0 0
        %3432 = vmatpush1.bf16.msra.mxu0 0
        %3433 = vmatprep.subr.bf16.mxu0 0
        %3434 = vmatpush1.bf16.msra.mxu0 0
        %3435 = vmatprep.mubr.bf16.mxu0 0
        %3436 = vmatmul.mubr.bf16.gmra.mrb[0].mxu0 %v3322
        %v3437 = vpop.f32.mrb[0].mxu0
        %v3438 = vadd.f32 0.0, %v3437
        %v3439 = vpop.f32.mrb[0].mxu0
        %v3440 = vpop.f32.mrb[0].mxu0
        %v3441 = vadd.f32 0.0, %v3440
        %v3442 = vpop.f32.mrb[0].mxu0
        %3443 = vmatprep.mubr.bf16.mxu0 0
        %3444 = vmatmul.mubr.bf16.gmra.mrb[0].mxu0 %v3323
        %v3445 = vpop.f32.mrb[0].mxu0
        %v3446 = vadd.f32 0.0, %v3445
        %v3447 = vpop.f32.mrb[0].mxu0
        %v3448 = vpop.f32.mrb[0].mxu0
        %v3449 = vadd.f32 0.0, %v3448
        %v3450 = vpop.f32.mrb[0].mxu0
        %3451 = vmatprep.mubr.bf16.mxu0 0
        %3452 = vmatmul.mubr.bf16.gmra.mrb[0].mxu0 %v3324
        %v3453 = vpop.f32.mrb[0].mxu0
        %v3454 = vadd.f32 0.0, %v3453
        %v3455 = vpop.f32.mrb[0].mxu0
        %v3456 = vpop.f32.mrb[0].mxu0
        %v3457 = vadd.f32 0.0, %v3456
        %v3458 = vpop.f32.mrb[0].mxu0
        %3459 = vmatprep.mubr.bf16.mxu0 0
        %3460 = vmatmul.mubr.bf16.gmra.mrb[0].mxu0 %v3325
        %v3461 = vpop.f32.mrb[0].mxu0
        %v3462 = vadd.f32 0.0, %v3461
        %v3463 = vpop.f32.mrb[0].mxu0
        %v3464 = vpop.f32.mrb[0].mxu0
        %v3465 = vadd.f32 0.0, %v3464
        %v3466 = vpop.f32.mrb[0].mxu0
        %3467 = vmatprep.mubr.bf16.mxu0 0
        %3468 = vmatmul.mubr.bf16.gmra.mrb[0].mxu0 %v3326
        %v3469 = vpop.f32.mrb[0].mxu0
        %v3470 = vadd.f32 0.0, %v3469
        %v3471 = vpop.f32.mrb[0].mxu0
        %v3472 = vpop.f32.mrb[0].mxu0
        %v3473 = vadd.f32 0.0, %v3472
        %v3474 = vpop.f32.mrb[0].mxu0
        %3475 = vmatprep.mubr.bf16.mxu0 0
        %3476 = vmatmul.mubr.bf16.gmra.mrb[0].mxu0 %v3327
        %v3477 = vpop.f32.mrb[0].mxu0
        %v3478 = vadd.f32 0.0, %v3477
        %v3479 = vpop.f32.mrb[0].mxu0
        %v3480 = vpop.f32.mrb[0].mxu0
        %v3481 = vadd.f32 0.0, %v3480
        %v3482 = vpop.f32.mrb[0].mxu0
        %3483 = vmatprep.mubr.bf16.mxu0 0
        %3484 = vmatmul.mubr.bf16.gmra.mrb[0].mxu0 %v3328
        %v3485 = vpop.f32.mrb[0].mxu0
        %v3486 = vadd.f32 0.0, %v3485
        %v3487 = vpop.f32.mrb[0].mxu0
        %v3488 = vpop.f32.mrb[0].mxu0
        %v3489 = vadd.f32 0.0, %v3488
        %v3490 = vpop.f32.mrb[0].mxu0
        %3491 = vmatprep.mubr.bf16.mxu0 0
        %3492 = vmatmul.mubr.bf16.gmra.mrb[0].mxu0 %v3329
        %v3493 = vpop.f32.mrb[0].mxu0
        %v3494 = vadd.f32 0.0, %v3493
        %v3495 = vpop.f32.mrb[0].mxu0
        %v3496 = vpop.f32.mrb[0].mxu0
        %v3497 = vadd.f32 0.0, %v3496
        %v3498 = vpop.f32.mrb[0].mxu0
        %3499 = vmatprep.mubr.bf16.mxu0 0
        %3500 = vmatmul.mubr.bf16.gmra.mrb[0].mxu0 %v3330
        %v3501 = vpop.f32.mrb[0].mxu0
        %v3502 = vadd.f32 0.0, %v3501
        %v3503 = vpop.f32.mrb[0].mxu0
        %v3504 = vpop.f32.mrb[0].mxu0
        %v3505 = vadd.f32 0.0, %v3504
        %v3506 = vpop.f32.mrb[0].mxu0
        %3507 = vmatprep.mubr.bf16.mxu0 0
        %3508 = vmatmul.mubr.bf16.gmra.mrb[0].mxu0 %v3331
        %v3509 = vpop.f32.mrb[0].mxu0
        %v3510 = vadd.f32 0.0, %v3509
        %v3511 = vpop.f32.mrb[0].mxu0
        %v3512 = vpop.f32.mrb[0].mxu0
        %v3513 = vadd.f32 0.0, %v3512
        %v3514 = vpop.f32.mrb[0].mxu0
        %3515 = vmatprep.mubr.bf16.mxu0 0
        %3516 = vmatmul.mubr.bf16.gmra.mrb[0].mxu0 %v3332
        %v3517 = vpop.f32.mrb[0].mxu0
        %v3518 = vadd.f32 0.0, %v3517
        %v3519 = vpop.f32.mrb[0].mxu0
        %v3520 = vpop.f32.mrb[0].mxu0
        %v3521 = vadd.f32 0.0, %v3520
        %v3522 = vpop.f32.mrb[0].mxu0
        %3523 = vmatprep.mubr.bf16.mxu0 0
        %3524 = vmatmul.mubr.bf16.gmra.mrb[0].mxu0 %v3333
        %v3525 = vpop.f32.mrb[0].mxu0
        %v3526 = vadd.f32 0.0, %v3525
        %v3527 = vpop.f32.mrb[0].mxu0
        %v3528 = vpop.f32.mrb[0].mxu0
        %v3529 = vadd.f32 0.0, %v3528
        %v3530 = vpop.f32.mrb[0].mxu0
        %3531 = vmatprep.mubr.bf16.mxu0 0
        %3532 = vmatmul.mubr.bf16.gmra.mrb[0].mxu0 %v3334
        %v3533 = vpop.f32.mrb[0].mxu0
        %v3534 = vadd.f32 0.0, %v3533
        %v3535 = vpop.f32.mrb[0].mxu0
        %v3536 = vpop.f32.mrb[0].mxu0
        %v3537 = vadd.f32 0.0, %v3536
        %v3538 = vpop.f32.mrb[0].mxu0
        %3539 = vmatprep.mubr.bf16.mxu0 0
        %3540 = vmatmul.mubr.bf16.gmra.mrb[0].mxu0 %v3335
        %v3541 = vpop.f32.mrb[0].mxu0
        %v3542 = vadd.f32 0.0, %v3541
        %v3543 = vpop.f32.mrb[0].mxu0
        %v3544 = vpop.f32.mrb[0].mxu0
        %v3545 = vadd.f32 0.0, %v3544
        %v3546 = vpop.f32.mrb[0].mxu0
        %3547 = vmatprep.mubr.bf16.mxu0 0
        %3548 = vmatmul.mubr.bf16.gmra.mrb[0].mxu0 %v3336
        %v3549 = vpop.f32.mrb[0].mxu0
        %v3550 = vadd.f32 0.0, %v3549
        %v3551 = vpop.f32.mrb[0].mxu0
        %v3552 = vpop.f32.mrb[0].mxu0
        %v3553 = vadd.f32 0.0, %v3552
        %v3554 = vpop.f32.mrb[0].mxu0
        %3555 = vmatprep.mubr.bf16.mxu0 0
        %3556 = vmatmul.mubr.bf16.gmra.mrb[0].mxu0 %v3337
        %v3557 = vpop.f32.mrb[0].mxu0
        %v3558 = vadd.f32 0.0, %v3557
        %v3559 = vpop.f32.mrb[0].mxu0
        %v3560 = vpop.f32.mrb[0].mxu0
        %v3561 = vadd.f32 0.0, %v3560
        %v3562 = vpop.f32.mrb[0].mxu0
        %3563 = vdwg.mxu0
        %v3580 = vunpack.c.l.b16 %v3274
        %v3581 = vunpack.c.l.b16 %v3275
        %v3582 = vunpack.c.l.b16 %v3276
        %v3583 = vunpack.c.l.b16 %v3277
        %v3584 = vunpack.c.l.b16 %v3278
        %v3585 = vunpack.c.l.b16 %v3279
        %v3586 = vunpack.c.l.b16 %v3280
        %v3587 = vunpack.c.l.b16 %v3281
        %v3588 = vunpack.c.l.b16 %v3282
        %v3589 = vunpack.c.l.b16 %v3283
        %v3590 = vunpack.c.l.b16 %v3284
        %v3591 = vunpack.c.l.b16 %v3285
        %v3592 = vunpack.c.l.b16 %v3286
        %v3593 = vunpack.c.l.b16 %v3287
        %v3594 = vunpack.c.l.b16 %v3288
        %v3595 = vunpack.c.l.b16 %v3289
        %v3596 = vpack.c.b16 %v3581, %v3580
        %v3597 = vpack.c.b16 %v3583, %v3582
        %v3598 = vpack.c.b16 %v3585, %v3584
        %v3599 = vpack.c.b16 %v3587, %v3586
        %v3600 = vpack.c.b16 %v3589, %v3588
        %v3601 = vpack.c.b16 %v3591, %v3590
        %v3602 = vpack.c.b16 %v3593, %v3592
        %v3603 = vpack.c.b16 %v3595, %v3594
        %3612 = vmatprep.subr.bf16.mxu0 0
        %3613 = vmatpush1.bf16.msra.mxu0 %v3596
        %3614 = vmatprep.subr.bf16.mxu0 0
        %3615 = vmatpush1.bf16.msra.mxu0 %v3597
        %3616 = vmatprep.subr.bf16.mxu0 0
        %3617 = vmatpush1.bf16.msra.mxu0 %v3598
        %3618 = vmatprep.subr.bf16.mxu0 0
        %3619 = vmatpush1.bf16.msra.mxu0 %v3599
        %3620 = vmatprep.subr.bf16.mxu0 0
        %3621 = vmatpush1.bf16.msra.mxu0 %v3600
        %3622 = vmatprep.subr.bf16.mxu0 0
        %3623 = vmatpush1.bf16.msra.mxu0 %v3601
        %3624 = vmatprep.subr.bf16.mxu0 0
        %3625 = vmatpush1.bf16.msra.mxu0 %v3602
        %3626 = vmatprep.subr.bf16.mxu0 0
        %3627 = vmatpush1.bf16.msra.mxu0 %v3603
        %3628 = vmatprep.subr.bf16.mxu0 0
        %3629 = vmatpush1.bf16.msra.mxu0 0
        %3630 = vmatprep.subr.bf16.mxu0 0
        %3631 = vmatpush1.bf16.msra.mxu0 0
        %3632 = vmatprep.subr.bf16.mxu0 0
        %3633 = vmatpush1.bf16.msra.mxu0 0
        %3634 = vmatprep.subr.bf16.mxu0 0
        %3635 = vmatpush1.bf16.msra.mxu0 0
        %3636 = vmatprep.subr.bf16.mxu0 0
        %3637 = vmatpush1.bf16.msra.mxu0 0
        %3638 = vmatprep.subr.bf16.mxu0 0
        %3639 = vmatpush1.bf16.msra.mxu0 0
        %3640 = vmatprep.subr.bf16.mxu0 0
        %3641 = vmatpush1.bf16.msra.mxu0 0
        %3642 = vmatprep.subr.bf16.mxu0 0
        %3643 = vmatpush1.bf16.msra.mxu0 0
        %3644 = vmatprep.mubr.bf16.mxu0 0
        %3645 = vmatmul.mubr.bf16.gmra.mrb[0].mxu0 %v3258
        %v3646 = vpop.f32.mrb[0].mxu0
        %v3647 = vadd.f32 %v3438, %v3646
        %v3648 = vpop.f32.mrb[0].mxu0
        %v3649 = vpop.f32.mrb[0].mxu0
        %v3650 = vadd.f32 %v3441, %v3649
        %v3651 = vpop.f32.mrb[0].mxu0
        %3652 = vmatprep.mubr.bf16.mxu0 0
        %3653 = vmatmul.mubr.bf16.gmra.mrb[0].mxu0 %v3259
        %v3654 = vpop.f32.mrb[0].mxu0
        %v3655 = vadd.f32 %v3446, %v3654
        %v3656 = vpop.f32.mrb[0].mxu0
        %v3657 = vpop.f32.mrb[0].mxu0
        %v3658 = vadd.f32 %v3449, %v3657
        %v3659 = vpop.f32.mrb[0].mxu0
        %3660 = vmatprep.mubr.bf16.mxu0 0
        %3661 = vmatmul.mubr.bf16.gmra.mrb[0].mxu0 %v3260
        %v3662 = vpop.f32.mrb[0].mxu0
        %v3663 = vadd.f32 %v3454, %v3662
        %v3664 = vpop.f32.mrb[0].mxu0
        %v3665 = vpop.f32.mrb[0].mxu0
        %v3666 = vadd.f32 %v3457, %v3665
        %v3667 = vpop.f32.mrb[0].mxu0
        %3668 = vmatprep.mubr.bf16.mxu0 0
        %3669 = vmatmul.mubr.bf16.gmra.mrb[0].mxu0 %v3261
        %v3670 = vpop.f32.mrb[0].mxu0
        %v3671 = vadd.f32 %v3462, %v3670
        %v3672 = vpop.f32.mrb[0].mxu0
        %v3673 = vpop.f32.mrb[0].mxu0
        %v3674 = vadd.f32 %v3465, %v3673
        %v3675 = vpop.f32.mrb[0].mxu0
        %3676 = vmatprep.mubr.bf16.mxu0 0
        %3677 = vmatmul.mubr.bf16.gmra.mrb[0].mxu0 %v3262
        %v3678 = vpop.f32.mrb[0].mxu0
        %v3679 = vadd.f32 %v3470, %v3678
        %v3680 = vpop.f32.mrb[0].mxu0
        %v3681 = vpop.f32.mrb[0].mxu0
        %v3682 = vadd.f32 %v3473, %v3681
        %v3683 = vpop.f32.mrb[0].mxu0
        %3684 = vmatprep.mubr.bf16.mxu0 0
        %3685 = vmatmul.mubr.bf16.gmra.mrb[0].mxu0 %v3263
        %v3686 = vpop.f32.mrb[0].mxu0
        %v3687 = vadd.f32 %v3478, %v3686
        %v3688 = vpop.f32.mrb[0].mxu0
        %v3689 = vpop.f32.mrb[0].mxu0
        %v3690 = vadd.f32 %v3481, %v3689
        %v3691 = vpop.f32.mrb[0].mxu0
        %3692 = vmatprep.mubr.bf16.mxu0 0
        %3693 = vmatmul.mubr.bf16.gmra.mrb[0].mxu0 %v3264
        %v3694 = vpop.f32.mrb[0].mxu0
        %v3695 = vadd.f32 %v3486, %v3694
        %v3696 = vpop.f32.mrb[0].mxu0
        %v3697 = vpop.f32.mrb[0].mxu0
        %v3698 = vadd.f32 %v3489, %v3697
        %v3699 = vpop.f32.mrb[0].mxu0
        %3700 = vmatprep.mubr.bf16.mxu0 0
        %3701 = vmatmul.mubr.bf16.gmra.mrb[0].mxu0 %v3265
        %v3702 = vpop.f32.mrb[0].mxu0
        %v3703 = vadd.f32 %v3494, %v3702
        %v3704 = vpop.f32.mrb[0].mxu0
        %v3705 = vpop.f32.mrb[0].mxu0
        %v3706 = vadd.f32 %v3497, %v3705
        %v3707 = vpop.f32.mrb[0].mxu0
        %3708 = vmatprep.mubr.bf16.mxu0 0
        %3709 = vmatmul.mubr.bf16.gmra.mrb[0].mxu0 %v3266
        %v3710 = vpop.f32.mrb[0].mxu0
        %v3711 = vadd.f32 %v3502, %v3710
        %v3712 = vpop.f32.mrb[0].mxu0
        %v3713 = vpop.f32.mrb[0].mxu0
        %v3714 = vadd.f32 %v3505, %v3713
        %v3715 = vpop.f32.mrb[0].mxu0
        %3716 = vmatprep.mubr.bf16.mxu0 0
        %3717 = vmatmul.mubr.bf16.gmra.mrb[0].mxu0 %v3267
        %v3718 = vpop.f32.mrb[0].mxu0
        %v3719 = vadd.f32 %v3510, %v3718
        %v3720 = vpop.f32.mrb[0].mxu0
        %v3721 = vpop.f32.mrb[0].mxu0
        %v3722 = vadd.f32 %v3513, %v3721
        %v3723 = vpop.f32.mrb[0].mxu0
        %3724 = vmatprep.mubr.bf16.mxu0 0
        %3725 = vmatmul.mubr.bf16.gmra.mrb[0].mxu0 %v3268
        %v3726 = vpop.f32.mrb[0].mxu0
        %v3727 = vadd.f32 %v3518, %v3726
        %v3728 = vpop.f32.mrb[0].mxu0
        %v3729 = vpop.f32.mrb[0].mxu0
        %v3730 = vadd.f32 %v3521, %v3729
        %v3731 = vpop.f32.mrb[0].mxu0
        %3732 = vmatprep.mubr.bf16.mxu0 0
        %3733 = vmatmul.mubr.bf16.gmra.mrb[0].mxu0 %v3269
        %v3734 = vpop.f32.mrb[0].mxu0
        %v3735 = vadd.f32 %v3526, %v3734
        %v3736 = vpop.f32.mrb[0].mxu0
        %v3737 = vpop.f32.mrb[0].mxu0
        %v3738 = vadd.f32 %v3529, %v3737
        %v3739 = vpop.f32.mrb[0].mxu0
        %3740 = vmatprep.mubr.bf16.mxu0 0
        %3741 = vmatmul.mubr.bf16.gmra.mrb[0].mxu0 %v3270
        %v3742 = vpop.f32.mrb[0].mxu0
        %v3743 = vadd.f32 %v3534, %v3742
        %v3744 = vpop.f32.mrb[0].mxu0
        %v3745 = vpop.f32.mrb[0].mxu0
        %v3746 = vadd.f32 %v3537, %v3745
        %v3747 = vpop.f32.mrb[0].mxu0
        %3748 = vmatprep.mubr.bf16.mxu0 0
        %3749 = vmatmul.mubr.bf16.gmra.mrb[0].mxu0 %v3271
        %v3750 = vpop.f32.mrb[0].mxu0
        %v3751 = vadd.f32 %v3542, %v3750
        %v3752 = vpop.f32.mrb[0].mxu0
        %v3753 = vpop.f32.mrb[0].mxu0
        %v3754 = vadd.f32 %v3545, %v3753
        %v3755 = vpop.f32.mrb[0].mxu0
        %3756 = vmatprep.mubr.bf16.mxu0 0
        %3757 = vmatmul.mubr.bf16.gmra.mrb[0].mxu0 %v3272
        %v3758 = vpop.f32.mrb[0].mxu0
        %v3759 = vadd.f32 %v3550, %v3758
        %v3760 = vpop.f32.mrb[0].mxu0
        %v3761 = vpop.f32.mrb[0].mxu0
        %v3762 = vadd.f32 %v3553, %v3761
        %v3763 = vpop.f32.mrb[0].mxu0
        %3764 = vmatprep.mubr.bf16.mxu0 0
        %3765 = vmatmul.mubr.bf16.gmra.mrb[0].mxu0 %v3273
        %v3766 = vpop.f32.mrb[0].mxu0
        %v3767 = vadd.f32 %v3558, %v3766
        %v3768 = vpop.f32.mrb[0].mxu0
        %v3769 = vpop.f32.mrb[0].mxu0
        %v3770 = vadd.f32 %v3561, %v3769
        %v3771 = vpop.f32.mrb[0].mxu0
        %3772 = vdwg.mxu0
        %v3773 = vld [vmem:[#allocation3 + $0x2] sm:$0xff]
        %v3774 = vld [vmem:[#allocation3 + $0xa] sm:$0xff]
        %v3775 = vld [vmem:[#allocation3 + $0x1a] sm:$0xff]
        %v3776 = vld [vmem:[#allocation3 + $0x22] sm:$0xff]
        %v3777 = vld [vmem:[#allocation3 + $0x32] sm:$0xff]
        %v3778 = vld [vmem:[#allocation3 + $0x3a] sm:$0xff]
        %v3779 = vld [vmem:[#allocation3 + $0x4a] sm:$0xff]
        %v3780 = vld [vmem:[#allocation3 + $0x52] sm:$0xff]
        %v3781 = vld [vmem:[#allocation3 + $0x62] sm:$0xff]
        %v3782 = vld [vmem:[#allocation3 + $0x6a] sm:$0xff]
        %v3783 = vld [vmem:[#allocation3 + $0x7a] sm:$0xff]
        %v3784 = vld [vmem:[#allocation3 + $0x82] sm:$0xff]
        %v3785 = vld [vmem:[#allocation3 + $0x92] sm:$0xff]
        %v3786 = vld [vmem:[#allocation3 + $0x9a] sm:$0xff]
        %v3787 = vld [vmem:[#allocation3 + $0xaa] sm:$0xff]
        %v3788 = vld [vmem:[#allocation3 + $0xb2] sm:$0xff]
        %v3789 = vld [vmem:[#allocation3 + $0xc2] sm:$0xff]
        %v3790 = vld [vmem:[#allocation3 + $0xca] sm:$0xff]
        %v3791 = vld [vmem:[#allocation3 + $0xda] sm:$0xff]
        %v3792 = vld [vmem:[#allocation3 + $0xe2] sm:$0xff]
        %v3793 = vld [vmem:[#allocation3 + $0xf2] sm:$0xff]
        %v3794 = vld [vmem:[#allocation3 + $0xfa] sm:$0xff]
        %v3795 = vld [vmem:[#allocation3 + $0x10a] sm:$0xff]
        %v3796 = vld [vmem:[#allocation3 + $0x112] sm:$0xff]
        %v3797 = vld [vmem:[#allocation3 + $0x122] sm:$0xff]
        %v3798 = vld [vmem:[#allocation3 + $0x12a] sm:$0xff]
        %v3799 = vld [vmem:[#allocation3 + $0x13a] sm:$0xff]
        %v3800 = vld [vmem:[#allocation3 + $0x142] sm:$0xff]
        %v3801 = vld [vmem:[#allocation3 + $0x152] sm:$0xff]
        %v3802 = vld [vmem:[#allocation3 + $0x15a] sm:$0xff]
        %v3803 = vld [vmem:[#allocation3 + $0x16a] sm:$0xff]
        %v3804 = vld [vmem:[#allocation3 + $0x172] sm:$0xff]
        %v3805 = vpack.c.bf16 %v3774, %v3773
        %v3806 = vpack.c.bf16 %v3776, %v3775
        %v3807 = vpack.c.bf16 %v3778, %v3777
        %v3808 = vpack.c.bf16 %v3780, %v3779
        %v3809 = vpack.c.bf16 %v3782, %v3781
        %v3810 = vpack.c.bf16 %v3784, %v3783
        %v3811 = vpack.c.bf16 %v3786, %v3785
        %v3812 = vpack.c.bf16 %v3788, %v3787
        %v3813 = vpack.c.bf16 %v3790, %v3789
        %v3814 = vpack.c.bf16 %v3792, %v3791
        %v3815 = vpack.c.bf16 %v3794, %v3793
        %v3816 = vpack.c.bf16 %v3796, %v3795
        %v3817 = vpack.c.bf16 %v3798, %v3797
        %v3818 = vpack.c.bf16 %v3800, %v3799
        %v3819 = vpack.c.bf16 %v3802, %v3801
        %v3820 = vpack.c.bf16 %v3804, %v3803
        %s3821 = scalar_lea.vmem %s3, 128
        %v3822 = vld [vmem:[%s3821] sm:$0xf]
        %v3823 = vld [vmem:[%s3821 + $0x4] sm:$0xf]
        %v3824 = vld [vmem:[%s3821 + $0x8] sm:$0xf]
        %v3825 = vld [vmem:[%s3821 + $0xc] sm:$0xf]
        %v3826 = vld [vmem:[%s3821 + $0x10] sm:$0xf]
        %v3827 = vld [vmem:[%s3821 + $0x14] sm:$0xf]
        %v3828 = vld [vmem:[%s3821 + $0x18] sm:$0xf]
        %v3829 = vld [vmem:[%s3821 + $0x1c] sm:$0xf]
        %v3830 = vld [vmem:[%s3821 + $0x20] sm:$0xf]
        %v3831 = vld [vmem:[%s3821 + $0x24] sm:$0xf]
        %v3832 = vld [vmem:[%s3821 + $0x28] sm:$0xf]
        %v3833 = vld [vmem:[%s3821 + $0x2c] sm:$0xf]
        %v3834 = vld [vmem:[%s3821 + $0x30] sm:$0xf]
        %v3835 = vld [vmem:[%s3821 + $0x34] sm:$0xf]
        %v3836 = vld [vmem:[%s3821 + $0x38] sm:$0xf]
        %v3837 = vld [vmem:[%s3821 + $0x3c] sm:$0xf]
        %v3854 = vunpack.c.l.b16 %v3822
        %v3855 = vunpack.c.l.b16 %v3823
        %v3856 = vunpack.c.l.b16 %v3824
        %v3857 = vunpack.c.l.b16 %v3825
        %v3858 = vunpack.c.l.b16 %v3826
        %v3859 = vunpack.c.l.b16 %v3827
        %v3860 = vunpack.c.l.b16 %v3828
        %v3861 = vunpack.c.l.b16 %v3829
        %v3862 = vunpack.c.l.b16 %v3830
        %v3863 = vunpack.c.l.b16 %v3831
        %v3864 = vunpack.c.l.b16 %v3832
        %v3865 = vunpack.c.l.b16 %v3833
        %v3866 = vunpack.c.l.b16 %v3834
        %v3867 = vunpack.c.l.b16 %v3835
        %v3868 = vunpack.c.l.b16 %v3836
        %v3869 = vunpack.c.l.b16 %v3837
        %v3870 = vpack.c.b16 %v3855, %v3854
        %v3871 = vpack.c.b16 %v3857, %v3856
        %v3872 = vpack.c.b16 %v3859, %v3858
        %v3873 = vpack.c.b16 %v3861, %v3860
        %v3874 = vpack.c.b16 %v3863, %v3862
        %v3875 = vpack.c.b16 %v3865, %v3864
        %v3876 = vpack.c.b16 %v3867, %v3866
        %v3877 = vpack.c.b16 %v3869, %v3868
        %3886 = vmatprep.subr.bf16.mxu0 0
        %3887 = vmatpush1.bf16.msra.mxu0 %v3870
        %3888 = vmatprep.subr.bf16.mxu0 0
        %3889 = vmatpush1.bf16.msra.mxu0 %v3871
        %3890 = vmatprep.subr.bf16.mxu0 0
        %3891 = vmatpush1.bf16.msra.mxu0 %v3872
        %3892 = vmatprep.subr.bf16.mxu0 0
        %3893 = vmatpush1.bf16.msra.mxu0 %v3873
        %3894 = vmatprep.subr.bf16.mxu0 0
        %3895 = vmatpush1.bf16.msra.mxu0 %v3874
        %3896 = vmatprep.subr.bf16.mxu0 0
        %3897 = vmatpush1.bf16.msra.mxu0 %v3875
        %3898 = vmatprep.subr.bf16.mxu0 0
        %3899 = vmatpush1.bf16.msra.mxu0 %v3876
        %3900 = vmatprep.subr.bf16.mxu0 0
        %3901 = vmatpush1.bf16.msra.mxu0 %v3877
        %3902 = vmatprep.subr.bf16.mxu0 0
        %3903 = vmatpush1.bf16.msra.mxu0 0
        %3904 = vmatprep.subr.bf16.mxu0 0
        %3905 = vmatpush1.bf16.msra.mxu0 0
        %3906 = vmatprep.subr.bf16.mxu0 0
        %3907 = vmatpush1.bf16.msra.mxu0 0
        %3908 = vmatprep.subr.bf16.mxu0 0
        %3909 = vmatpush1.bf16.msra.mxu0 0
        %3910 = vmatprep.subr.bf16.mxu0 0
        %3911 = vmatpush1.bf16.msra.mxu0 0
        %3912 = vmatprep.subr.bf16.mxu0 0
        %3913 = vmatpush1.bf16.msra.mxu0 0
        %3914 = vmatprep.subr.bf16.mxu0 0
        %3915 = vmatpush1.bf16.msra.mxu0 0
        %3916 = vmatprep.subr.bf16.mxu0 0
        %3917 = vmatpush1.bf16.msra.mxu0 0
        %3918 = vmatprep.mubr.bf16.mxu0 0
        %3919 = vmatmul.mubr.bf16.gmra.mrb[0].mxu0 %v3805
        %v3920 = vpop.f32.mrb[0].mxu0
        %v3921 = vadd.f32 0.0, %v3920
        %v3922 = vpop.f32.mrb[0].mxu0
        %v3923 = vpop.f32.mrb[0].mxu0
        %v3924 = vadd.f32 0.0, %v3923
        %v3925 = vpop.f32.mrb[0].mxu0
        %3926 = vmatprep.mubr.bf16.mxu0 0
        %3927 = vmatmul.mubr.bf16.gmra.mrb[0].mxu0 %v3806
        %v3928 = vpop.f32.mrb[0].mxu0
        %v3929 = vadd.f32 0.0, %v3928
        %v3930 = vpop.f32.mrb[0].mxu0
        %v3931 = vpop.f32.mrb[0].mxu0
        %v3932 = vadd.f32 0.0, %v3931
        %v3933 = vpop.f32.mrb[0].mxu0
        %3934 = vmatprep.mubr.bf16.mxu0 0
        %3935 = vmatmul.mubr.bf16.gmra.mrb[0].mxu0 %v3807
        %v3936 = vpop.f32.mrb[0].mxu0
        %v3937 = vadd.f32 0.0, %v3936
        %v3938 = vpop.f32.mrb[0].mxu0
        %v3939 = vpop.f32.mrb[0].mxu0
        %v3940 = vadd.f32 0.0, %v3939
        %v3941 = vpop.f32.mrb[0].mxu0
        %3942 = vmatprep.mubr.bf16.mxu0 0
        %3943 = vmatmul.mubr.bf16.gmra.mrb[0].mxu0 %v3808
        %v3944 = vpop.f32.mrb[0].mxu0
        %v3945 = vadd.f32 0.0, %v3944
        %v3946 = vpop.f32.mrb[0].mxu0
        %v3947 = vpop.f32.mrb[0].mxu0
        %v3948 = vadd.f32 0.0, %v3947
        %v3949 = vpop.f32.mrb[0].mxu0
        %3950 = vmatprep.mubr.bf16.mxu0 0
        %3951 = vmatmul.mubr.bf16.gmra.mrb[0].mxu0 %v3809
        %v3952 = vpop.f32.mrb[0].mxu0
        %v3953 = vadd.f32 0.0, %v3952
        %v3954 = vpop.f32.mrb[0].mxu0
        %v3955 = vpop.f32.mrb[0].mxu0
        %v3956 = vadd.f32 0.0, %v3955
        %v3957 = vpop.f32.mrb[0].mxu0
        %3958 = vmatprep.mubr.bf16.mxu0 0
        %3959 = vmatmul.mubr.bf16.gmra.mrb[0].mxu0 %v3810
        %v3960 = vpop.f32.mrb[0].mxu0
        %v3961 = vadd.f32 0.0, %v3960
        %v3962 = vpop.f32.mrb[0].mxu0
        %v3963 = vpop.f32.mrb[0].mxu0
        %v3964 = vadd.f32 0.0, %v3963
        %v3965 = vpop.f32.mrb[0].mxu0
        %3966 = vmatprep.mubr.bf16.mxu0 0
        %3967 = vmatmul.mubr.bf16.gmra.mrb[0].mxu0 %v3811
        %v3968 = vpop.f32.mrb[0].mxu0
        %v3969 = vadd.f32 0.0, %v3968
        %v3970 = vpop.f32.mrb[0].mxu0
        %v3971 = vpop.f32.mrb[0].mxu0
        %v3972 = vadd.f32 0.0, %v3971
        %v3973 = vpop.f32.mrb[0].mxu0
        %3974 = vmatprep.mubr.bf16.mxu0 0
        %3975 = vmatmul.mubr.bf16.gmra.mrb[0].mxu0 %v3812
        %v3976 = vpop.f32.mrb[0].mxu0
        %v3977 = vadd.f32 0.0, %v3976
        %v3978 = vpop.f32.mrb[0].mxu0
        %v3979 = vpop.f32.mrb[0].mxu0
        %v3980 = vadd.f32 0.0, %v3979
        %v3981 = vpop.f32.mrb[0].mxu0
        %3982 = vmatprep.mubr.bf16.mxu0 0
        %3983 = vmatmul.mubr.bf16.gmra.mrb[0].mxu0 %v3813
        %v3984 = vpop.f32.mrb[0].mxu0
        %v3985 = vadd.f32 0.0, %v3984
        %v3986 = vpop.f32.mrb[0].mxu0
        %v3987 = vpop.f32.mrb[0].mxu0
        %v3988 = vadd.f32 0.0, %v3987
        %v3989 = vpop.f32.mrb[0].mxu0
        %3990 = vmatprep.mubr.bf16.mxu0 0
        %3991 = vmatmul.mubr.bf16.gmra.mrb[0].mxu0 %v3814
        %v3992 = vpop.f32.mrb[0].mxu0
        %v3993 = vadd.f32 0.0, %v3992
        %v3994 = vpop.f32.mrb[0].mxu0
        %v3995 = vpop.f32.mrb[0].mxu0
        %v3996 = vadd.f32 0.0, %v3995
        %v3997 = vpop.f32.mrb[0].mxu0
        %3998 = vmatprep.mubr.bf16.mxu0 0
        %3999 = vmatmul.mubr.bf16.gmra.mrb[0].mxu0 %v3815
        %v4000 = vpop.f32.mrb[0].mxu0
        %v4001 = vadd.f32 0.0, %v4000
        %v4002 = vpop.f32.mrb[0].mxu0
        %v4003 = vpop.f32.mrb[0].mxu0
        %v4004 = vadd.f32 0.0, %v4003
        %v4005 = vpop.f32.mrb[0].mxu0
        %4006 = vmatprep.mubr.bf16.mxu0 0
        %4007 = vmatmul.mubr.bf16.gmra.mrb[0].mxu0 %v3816
        %v4008 = vpop.f32.mrb[0].mxu0
        %v4009 = vadd.f32 0.0, %v4008
        %v4010 = vpop.f32.mrb[0].mxu0
        %v4011 = vpop.f32.mrb[0].mxu0
        %v4012 = vadd.f32 0.0, %v4011
        %v4013 = vpop.f32.mrb[0].mxu0
        %4014 = vmatprep.mubr.bf16.mxu0 0
        %4015 = vmatmul.mubr.bf16.gmra.mrb[0].mxu0 %v3817
        %v4016 = vpop.f32.mrb[0].mxu0
        %v4017 = vadd.f32 0.0, %v4016
        %v4018 = vpop.f32.mrb[0].mxu0
        %v4019 = vpop.f32.mrb[0].mxu0
        %v4020 = vadd.f32 0.0, %v4019
        %v4021 = vpop.f32.mrb[0].mxu0
        %4022 = vmatprep.mubr.bf16.mxu0 0
        %4023 = vmatmul.mubr.bf16.gmra.mrb[0].mxu0 %v3818
        %v4024 = vpop.f32.mrb[0].mxu0
        %v4025 = vadd.f32 0.0, %v4024
        %v4026 = vpop.f32.mrb[0].mxu0
        %v4027 = vpop.f32.mrb[0].mxu0
        %v4028 = vadd.f32 0.0, %v4027
        %v4029 = vpop.f32.mrb[0].mxu0
        %4030 = vmatprep.mubr.bf16.mxu0 0
        %4031 = vmatmul.mubr.bf16.gmra.mrb[0].mxu0 %v3819
        %v4032 = vpop.f32.mrb[0].mxu0
        %v4033 = vadd.f32 0.0, %v4032
        %v4034 = vpop.f32.mrb[0].mxu0
        %v4035 = vpop.f32.mrb[0].mxu0
        %v4036 = vadd.f32 0.0, %v4035
        %v4037 = vpop.f32.mrb[0].mxu0
        %4038 = vmatprep.mubr.bf16.mxu0 0
        %4039 = vmatmul.mubr.bf16.gmra.mrb[0].mxu0 %v3820
        %v4040 = vpop.f32.mrb[0].mxu0
        %v4041 = vadd.f32 0.0, %v4040
        %v4042 = vpop.f32.mrb[0].mxu0
        %v4043 = vpop.f32.mrb[0].mxu0
        %v4044 = vadd.f32 0.0, %v4043
        %v4045 = vpop.f32.mrb[0].mxu0
        %4046 = vdwg.mxu0
        %v4047 = vadd.f32 %v3647, %v3921
        %v4048 = vadd.f32 %v3650, %v3924
        %v4049 = vadd.f32 %v3655, %v3929
        %v4050 = vadd.f32 %v3658, %v3932
        %v4051 = vadd.f32 %v3663, %v3937
        %v4052 = vadd.f32 %v3666, %v3940
        %v4053 = vadd.f32 %v3671, %v3945
        %v4054 = vadd.f32 %v3674, %v3948
        %v4055 = vadd.f32 %v3679, %v3953
        %v4056 = vadd.f32 %v3682, %v3956
        %v4057 = vadd.f32 %v3687, %v3961
        %v4058 = vadd.f32 %v3690, %v3964
        %v4059 = vadd.f32 %v3695, %v3969
        %v4060 = vadd.f32 %v3698, %v3972
        %v4061 = vadd.f32 %v3703, %v3977
        %v4062 = vadd.f32 %v3706, %v3980
        %v4063 = vadd.f32 %v3711, %v3985
        %v4064 = vadd.f32 %v3714, %v3988
        %v4065 = vadd.f32 %v3719, %v3993
        %v4066 = vadd.f32 %v3722, %v3996
        %v4067 = vadd.f32 %v3727, %v4001
        %v4068 = vadd.f32 %v3730, %v4004
        %v4069 = vadd.f32 %v3735, %v4009
        %v4070 = vadd.f32 %v3738, %v4012
        %v4071 = vadd.f32 %v3743, %v4017
        %v4072 = vadd.f32 %v3746, %v4020
        %v4073 = vadd.f32 %v3751, %v4025
        %v4074 = vadd.f32 %v3754, %v4028
        %v4075 = vadd.f32 %v3759, %v4033
        %v4076 = vadd.f32 %v3762, %v4036
        %v4077 = vadd.f32 %v3767, %v4041
        %v4078 = vadd.f32 %v3770, %v4044
        %v4079 = vld [vmem:[%s3193] sm:$0xff]
        %v4080 = vld [vmem:[%s3193 + $0x8] sm:$0xff]
        %v4081 = vld [vmem:[%s3193 + $0x18] sm:$0xff]
        %v4082 = vld [vmem:[%s3193 + $0x20] sm:$0xff]
        %v4083 = vld [vmem:[%s3193 + $0x30] sm:$0xff]
        %v4084 = vld [vmem:[%s3193 + $0x38] sm:$0xff]
        %v4085 = vld [vmem:[%s3193 + $0x48] sm:$0xff]
        %v4086 = vld [vmem:[%s3193 + $0x50] sm:$0xff]
        %v4087 = vld [vmem:[%s3193 + $0x60] sm:$0xff]
        %v4088 = vld [vmem:[%s3193 + $0x68] sm:$0xff]
        %v4089 = vld [vmem:[%s3193 + $0x78] sm:$0xff]
        %v4090 = vld [vmem:[%s3193 + $0x80] sm:$0xff]
        %v4091 = vld [vmem:[%s3193 + $0x90] sm:$0xff]
        %v4092 = vld [vmem:[%s3193 + $0x98] sm:$0xff]
        %v4093 = vld [vmem:[%s3193 + $0xa8] sm:$0xff]
        %v4094 = vld [vmem:[%s3193 + $0xb0] sm:$0xff]
        %v4095 = vld [vmem:[%s3193 + $0xc0] sm:$0xff]
        %v4096 = vld [vmem:[%s3193 + $0xc8] sm:$0xff]
        %v4097 = vld [vmem:[%s3193 + $0xd8] sm:$0xff]
        %v4098 = vld [vmem:[%s3193 + $0xe0] sm:$0xff]
        %v4099 = vld [vmem:[%s3193 + $0xf0] sm:$0xff]
        %v4100 = vld [vmem:[%s3193 + $0xf8] sm:$0xff]
        %v4101 = vld [vmem:[%s3193 + $0x108] sm:$0xff]
        %v4102 = vld [vmem:[%s3193 + $0x110] sm:$0xff]
        %v4103 = vld [vmem:[%s3193 + $0x120] sm:$0xff]
        %v4104 = vld [vmem:[%s3193 + $0x128] sm:$0xff]
        %v4105 = vld [vmem:[%s3193 + $0x138] sm:$0xff]
        %v4106 = vld [vmem:[%s3193 + $0x140] sm:$0xff]
        %v4107 = vld [vmem:[%s3193 + $0x150] sm:$0xff]
        %v4108 = vld [vmem:[%s3193 + $0x158] sm:$0xff]
        %v4109 = vld [vmem:[%s3193 + $0x168] sm:$0xff]
        %v4110 = vld [vmem:[%s3193 + $0x170] sm:$0xff]
        %v4111 = vpack.c.bf16 %v4080, %v4079
        %v4112 = vpack.c.bf16 %v4082, %v4081
        %v4113 = vpack.c.bf16 %v4084, %v4083
        %v4114 = vpack.c.bf16 %v4086, %v4085
        %v4115 = vpack.c.bf16 %v4088, %v4087
        %v4116 = vpack.c.bf16 %v4090, %v4089
        %v4117 = vpack.c.bf16 %v4092, %v4091
        %v4118 = vpack.c.bf16 %v4094, %v4093
        %v4119 = vpack.c.bf16 %v4096, %v4095
        %v4120 = vpack.c.bf16 %v4098, %v4097
        %v4121 = vpack.c.bf16 %v4100, %v4099
        %v4122 = vpack.c.bf16 %v4102, %v4101
        %v4123 = vpack.c.bf16 %v4104, %v4103
        %v4124 = vpack.c.bf16 %v4106, %v4105
        %v4125 = vpack.c.bf16 %v4108, %v4107
        %v4126 = vpack.c.bf16 %v4110, %v4109
        %s4127 = scalar_lea.vmem %s3, 192
        %v4128 = vld [vmem:[%s4127] sm:$0xf]
        %v4129 = vld [vmem:[%s4127 + $0x4] sm:$0xf]
        %v4130 = vld [vmem:[%s4127 + $0x8] sm:$0xf]
        %v4131 = vld [vmem:[%s4127 + $0xc] sm:$0xf]
        %v4132 = vld [vmem:[%s4127 + $0x10] sm:$0xf]
        %v4133 = vld [vmem:[%s4127 + $0x14] sm:$0xf]
        %v4134 = vld [vmem:[%s4127 + $0x18] sm:$0xf]
        %v4135 = vld [vmem:[%s4127 + $0x1c] sm:$0xf]
        %v4136 = vld [vmem:[%s4127 + $0x20] sm:$0xf]
        %v4137 = vld [vmem:[%s4127 + $0x24] sm:$0xf]
        %v4138 = vld [vmem:[%s4127 + $0x28] sm:$0xf]
        %v4139 = vld [vmem:[%s4127 + $0x2c] sm:$0xf]
        %v4140 = vld [vmem:[%s4127 + $0x30] sm:$0xf]
        %v4141 = vld [vmem:[%s4127 + $0x34] sm:$0xf]
        %v4142 = vld [vmem:[%s4127 + $0x38] sm:$0xf]
        %v4143 = vld [vmem:[%s4127 + $0x3c] sm:$0xf]
        %v4160 = vunpack.c.l.b16 %v4128
        %v4161 = vunpack.c.l.b16 %v4129
        %v4162 = vunpack.c.l.b16 %v4130
        %v4163 = vunpack.c.l.b16 %v4131
        %v4164 = vunpack.c.l.b16 %v4132
        %v4165 = vunpack.c.l.b16 %v4133
        %v4166 = vunpack.c.l.b16 %v4134
        %v4167 = vunpack.c.l.b16 %v4135
        %v4168 = vunpack.c.l.b16 %v4136
        %v4169 = vunpack.c.l.b16 %v4137
        %v4170 = vunpack.c.l.b16 %v4138
        %v4171 = vunpack.c.l.b16 %v4139
        %v4172 = vunpack.c.l.b16 %v4140
        %v4173 = vunpack.c.l.b16 %v4141
        %v4174 = vunpack.c.l.b16 %v4142
        %v4175 = vunpack.c.l.b16 %v4143
        %v4176 = vpack.c.b16 %v4161, %v4160
        %v4177 = vpack.c.b16 %v4163, %v4162
        %v4178 = vpack.c.b16 %v4165, %v4164
        %v4179 = vpack.c.b16 %v4167, %v4166
        %v4180 = vpack.c.b16 %v4169, %v4168
        %v4181 = vpack.c.b16 %v4171, %v4170
        %v4182 = vpack.c.b16 %v4173, %v4172
        %v4183 = vpack.c.b16 %v4175, %v4174
        %4192 = vmatprep.subr.bf16.mxu0 0
        %4193 = vmatpush1.bf16.msra.mxu0 %v4176
        %4194 = vmatprep.subr.bf16.mxu0 0
        %4195 = vmatpush1.bf16.msra.mxu0 %v4177
        %4196 = vmatprep.subr.bf16.mxu0 0
        %4197 = vmatpush1.bf16.msra.mxu0 %v4178
        %4198 = vmatprep.subr.bf16.mxu0 0
        %4199 = vmatpush1.bf16.msra.mxu0 %v4179
        %4200 = vmatprep.subr.bf16.mxu0 0
        %4201 = vmatpush1.bf16.msra.mxu0 %v4180
        %4202 = vmatprep.subr.bf16.mxu0 0
        %4203 = vmatpush1.bf16.msra.mxu0 %v4181
        %4204 = vmatprep.subr.bf16.mxu0 0
        %4205 = vmatpush1.bf16.msra.mxu0 %v4182
        %4206 = vmatprep.subr.bf16.mxu0 0
        %4207 = vmatpush1.bf16.msra.mxu0 %v4183
        %4208 = vmatprep.subr.bf16.mxu0 0
        %4209 = vmatpush1.bf16.msra.mxu0 0
        %4210 = vmatprep.subr.bf16.mxu0 0
        %4211 = vmatpush1.bf16.msra.mxu0 0
        %4212 = vmatprep.subr.bf16.mxu0 0
        %4213 = vmatpush1.bf16.msra.mxu0 0
        %4214 = vmatprep.subr.bf16.mxu0 0
        %4215 = vmatpush1.bf16.msra.mxu0 0
        %4216 = vmatprep.subr.bf16.mxu0 0
        %4217 = vmatpush1.bf16.msra.mxu0 0
        %4218 = vmatprep.subr.bf16.mxu0 0
        %4219 = vmatpush1.bf16.msra.mxu0 0
        %4220 = vmatprep.subr.bf16.mxu0 0
        %4221 = vmatpush1.bf16.msra.mxu0 0
        %4222 = vmatprep.subr.bf16.mxu0 0
        %4223 = vmatpush1.bf16.msra.mxu0 0
        %4224 = vmatprep.mubr.bf16.mxu0 0
        %4225 = vmatmul.mubr.bf16.gmra.mrb[0].mxu0 %v4111
        %v4226 = vpop.f32.mrb[0].mxu0
        %v4227 = vadd.f32 0.0, %v4226
        %v4228 = vpop.f32.mrb[0].mxu0
        %v4229 = vpop.f32.mrb[0].mxu0
        %v4230 = vadd.f32 0.0, %v4229
        %v4231 = vpop.f32.mrb[0].mxu0
        %4232 = vmatprep.mubr.bf16.mxu0 0
        %4233 = vmatmul.mubr.bf16.gmra.mrb[0].mxu0 %v4112
        %v4234 = vpop.f32.mrb[0].mxu0
        %v4235 = vadd.f32 0.0, %v4234
        %v4236 = vpop.f32.mrb[0].mxu0
        %v4237 = vpop.f32.mrb[0].mxu0
        %v4238 = vadd.f32 0.0, %v4237
        %v4239 = vpop.f32.mrb[0].mxu0
        %4240 = vmatprep.mubr.bf16.mxu0 0
        %4241 = vmatmul.mubr.bf16.gmra.mrb[0].mxu0 %v4113
        %v4242 = vpop.f32.mrb[0].mxu0
        %v4243 = vadd.f32 0.0, %v4242
        %v4244 = vpop.f32.mrb[0].mxu0
        %v4245 = vpop.f32.mrb[0].mxu0
        %v4246 = vadd.f32 0.0, %v4245
        %v4247 = vpop.f32.mrb[0].mxu0
        %4248 = vmatprep.mubr.bf16.mxu0 0
        %4249 = vmatmul.mubr.bf16.gmra.mrb[0].mxu0 %v4114
        %v4250 = vpop.f32.mrb[0].mxu0
        %v4251 = vadd.f32 0.0, %v4250
        %v4252 = vpop.f32.mrb[0].mxu0
        %v4253 = vpop.f32.mrb[0].mxu0
        %v4254 = vadd.f32 0.0, %v4253
        %v4255 = vpop.f32.mrb[0].mxu0
        %4256 = vmatprep.mubr.bf16.mxu0 0
        %4257 = vmatmul.mubr.bf16.gmra.mrb[0].mxu0 %v4115
        %v4258 = vpop.f32.mrb[0].mxu0
        %v4259 = vadd.f32 0.0, %v4258
        %v4260 = vpop.f32.mrb[0].mxu0
        %v4261 = vpop.f32.mrb[0].mxu0
        %v4262 = vadd.f32 0.0, %v4261
        %v4263 = vpop.f32.mrb[0].mxu0
        %4264 = vmatprep.mubr.bf16.mxu0 0
        %4265 = vmatmul.mubr.bf16.gmra.mrb[0].mxu0 %v4116
        %v4266 = vpop.f32.mrb[0].mxu0
        %v4267 = vadd.f32 0.0, %v4266
        %v4268 = vpop.f32.mrb[0].mxu0
        %v4269 = vpop.f32.mrb[0].mxu0
        %v4270 = vadd.f32 0.0, %v4269
        %v4271 = vpop.f32.mrb[0].mxu0
        %4272 = vmatprep.mubr.bf16.mxu0 0
        %4273 = vmatmul.mubr.bf16.gmra.mrb[0].mxu0 %v4117
        %v4274 = vpop.f32.mrb[0].mxu0
        %v4275 = vadd.f32 0.0, %v4274
        %v4276 = vpop.f32.mrb[0].mxu0
        %v4277 = vpop.f32.mrb[0].mxu0
        %v4278 = vadd.f32 0.0, %v4277
        %v4279 = vpop.f32.mrb[0].mxu0
        %4280 = vmatprep.mubr.bf16.mxu0 0
        %4281 = vmatmul.mubr.bf16.gmra.mrb[0].mxu0 %v4118
        %v4282 = vpop.f32.mrb[0].mxu0
        %v4283 = vadd.f32 0.0, %v4282
        %v4284 = vpop.f32.mrb[0].mxu0
        %v4285 = vpop.f32.mrb[0].mxu0
        %v4286 = vadd.f32 0.0, %v4285
        %v4287 = vpop.f32.mrb[0].mxu0
        %4288 = vmatprep.mubr.bf16.mxu0 0
        %4289 = vmatmul.mubr.bf16.gmra.mrb[0].mxu0 %v4119
        %v4290 = vpop.f32.mrb[0].mxu0
        %v4291 = vadd.f32 0.0, %v4290
        %v4292 = vpop.f32.mrb[0].mxu0
        %v4293 = vpop.f32.mrb[0].mxu0
        %v4294 = vadd.f32 0.0, %v4293
        %v4295 = vpop.f32.mrb[0].mxu0
        %4296 = vmatprep.mubr.bf16.mxu0 0
        %4297 = vmatmul.mubr.bf16.gmra.mrb[0].mxu0 %v4120
        %v4298 = vpop.f32.mrb[0].mxu0
        %v4299 = vadd.f32 0.0, %v4298
        %v4300 = vpop.f32.mrb[0].mxu0
        %v4301 = vpop.f32.mrb[0].mxu0
        %v4302 = vadd.f32 0.0, %v4301
        %v4303 = vpop.f32.mrb[0].mxu0
        %4304 = vmatprep.mubr.bf16.mxu0 0
        %4305 = vmatmul.mubr.bf16.gmra.mrb[0].mxu0 %v4121
        %v4306 = vpop.f32.mrb[0].mxu0
        %v4307 = vadd.f32 0.0, %v4306
        %v4308 = vpop.f32.mrb[0].mxu0
        %v4309 = vpop.f32.mrb[0].mxu0
        %v4310 = vadd.f32 0.0, %v4309
        %v4311 = vpop.f32.mrb[0].mxu0
        %4312 = vmatprep.mubr.bf16.mxu0 0
        %4313 = vmatmul.mubr.bf16.gmra.mrb[0].mxu0 %v4122
        %v4314 = vpop.f32.mrb[0].mxu0
        %v4315 = vadd.f32 0.0, %v4314
        %v4316 = vpop.f32.mrb[0].mxu0
        %v4317 = vpop.f32.mrb[0].mxu0
        %v4318 = vadd.f32 0.0, %v4317
        %v4319 = vpop.f32.mrb[0].mxu0
        %4320 = vmatprep.mubr.bf16.mxu0 0
        %4321 = vmatmul.mubr.bf16.gmra.mrb[0].mxu0 %v4123
        %v4322 = vpop.f32.mrb[0].mxu0
        %v4323 = vadd.f32 0.0, %v4322
        %v4324 = vpop.f32.mrb[0].mxu0
        %v4325 = vpop.f32.mrb[0].mxu0
        %v4326 = vadd.f32 0.0, %v4325
        %v4327 = vpop.f32.mrb[0].mxu0
        %4328 = vmatprep.mubr.bf16.mxu0 0
        %4329 = vmatmul.mubr.bf16.gmra.mrb[0].mxu0 %v4124
        %v4330 = vpop.f32.mrb[0].mxu0
        %v4331 = vadd.f32 0.0, %v4330
        %v4332 = vpop.f32.mrb[0].mxu0
        %v4333 = vpop.f32.mrb[0].mxu0
        %v4334 = vadd.f32 0.0, %v4333
        %v4335 = vpop.f32.mrb[0].mxu0
        %4336 = vmatprep.mubr.bf16.mxu0 0
        %4337 = vmatmul.mubr.bf16.gmra.mrb[0].mxu0 %v4125
        %v4338 = vpop.f32.mrb[0].mxu0
        %v4339 = vadd.f32 0.0, %v4338
        %v4340 = vpop.f32.mrb[0].mxu0
        %v4341 = vpop.f32.mrb[0].mxu0
        %v4342 = vadd.f32 0.0, %v4341
        %v4343 = vpop.f32.mrb[0].mxu0
        %4344 = vmatprep.mubr.bf16.mxu0 0
        %4345 = vmatmul.mubr.bf16.gmra.mrb[0].mxu0 %v4126
        %v4346 = vpop.f32.mrb[0].mxu0
        %v4347 = vadd.f32 0.0, %v4346
        %v4348 = vpop.f32.mrb[0].mxu0
        %v4349 = vpop.f32.mrb[0].mxu0
        %v4350 = vadd.f32 0.0, %v4349
        %v4351 = vpop.f32.mrb[0].mxu0
        %4352 = vdwg.mxu0
        %v4353 = vadd.f32 %v4047, %v4227
        %v4354 = vadd.f32 %v4048, %v4230
        %v4355 = vadd.f32 %v4049, %v4235
        %v4356 = vadd.f32 %v4050, %v4238
        %v4357 = vadd.f32 %v4051, %v4243
        %v4358 = vadd.f32 %v4052, %v4246
        %v4359 = vadd.f32 %v4053, %v4251
        %v4360 = vadd.f32 %v4054, %v4254
        %v4361 = vadd.f32 %v4055, %v4259
        %v4362 = vadd.f32 %v4056, %v4262
        %v4363 = vadd.f32 %v4057, %v4267
        %v4364 = vadd.f32 %v4058, %v4270
        %v4365 = vadd.f32 %v4059, %v4275
        %v4366 = vadd.f32 %v4060, %v4278
        %v4367 = vadd.f32 %v4061, %v4283
        %v4368 = vadd.f32 %v4062, %v4286
        %v4369 = vadd.f32 %v4063, %v4291
        %v4370 = vadd.f32 %v4064, %v4294
        %v4371 = vadd.f32 %v4065, %v4299
        %v4372 = vadd.f32 %v4066, %v4302
        %v4373 = vadd.f32 %v4067, %v4307
        %v4374 = vadd.f32 %v4068, %v4310
        %v4375 = vadd.f32 %v4069, %v4315
        %v4376 = vadd.f32 %v4070, %v4318
        %v4377 = vadd.f32 %v4071, %v4323
        %v4378 = vadd.f32 %v4072, %v4326
        %v4379 = vadd.f32 %v4073, %v4331
        %v4380 = vadd.f32 %v4074, %v4334
        %v4381 = vadd.f32 %v4075, %v4339
        %v4382 = vadd.f32 %v4076, %v4342
        %v4383 = vadd.f32 %v4077, %v4347
        %v4384 = vadd.f32 %v4078, %v4350
        %v4385 = vld [vmem:[%s3193 + $0x1] sm:$0xff]
        %v4386 = vld [vmem:[%s3193 + $0x9] sm:$0xff]
        %v4387 = vld [vmem:[%s3193 + $0x19] sm:$0xff]
        %v4388 = vld [vmem:[%s3193 + $0x21] sm:$0xff]
        %v4389 = vld [vmem:[%s3193 + $0x31] sm:$0xff]
        %v4390 = vld [vmem:[%s3193 + $0x39] sm:$0xff]
        %v4391 = vld [vmem:[%s3193 + $0x49] sm:$0xff]
        %v4392 = vld [vmem:[%s3193 + $0x51] sm:$0xff]
        %v4393 = vld [vmem:[%s3193 + $0x61] sm:$0xff]
        %v4394 = vld [vmem:[%s3193 + $0x69] sm:$0xff]
        %v4395 = vld [vmem:[%s3193 + $0x79] sm:$0xff]
        %v4396 = vld [vmem:[%s3193 + $0x81] sm:$0xff]
        %v4397 = vld [vmem:[%s3193 + $0x91] sm:$0xff]
        %v4398 = vld [vmem:[%s3193 + $0x99] sm:$0xff]
        %v4399 = vld [vmem:[%s3193 + $0xa9] sm:$0xff]
        %v4400 = vld [vmem:[%s3193 + $0xb1] sm:$0xff]
        %v4401 = vld [vmem:[%s3193 + $0xc1] sm:$0xff]
        %v4402 = vld [vmem:[%s3193 + $0xc9] sm:$0xff]
        %v4403 = vld [vmem:[%s3193 + $0xd9] sm:$0xff]
        %v4404 = vld [vmem:[%s3193 + $0xe1] sm:$0xff]
        %v4405 = vld [vmem:[%s3193 + $0xf1] sm:$0xff]
        %v4406 = vld [vmem:[%s3193 + $0xf9] sm:$0xff]
        %v4407 = vld [vmem:[%s3193 + $0x109] sm:$0xff]
        %v4408 = vld [vmem:[%s3193 + $0x111] sm:$0xff]
        %v4409 = vld [vmem:[%s3193 + $0x121] sm:$0xff]
        %v4410 = vld [vmem:[%s3193 + $0x129] sm:$0xff]
        %v4411 = vld [vmem:[%s3193 + $0x139] sm:$0xff]
        %v4412 = vld [vmem:[%s3193 + $0x141] sm:$0xff]
        %v4413 = vld [vmem:[%s3193 + $0x151] sm:$0xff]
        %v4414 = vld [vmem:[%s3193 + $0x159] sm:$0xff]
        %v4415 = vld [vmem:[%s3193 + $0x169] sm:$0xff]
        %v4416 = vld [vmem:[%s3193 + $0x171] sm:$0xff]
        %v4417 = vpack.c.bf16 %v4386, %v4385
        %v4418 = vpack.c.bf16 %v4388, %v4387
        %v4419 = vpack.c.bf16 %v4390, %v4389
        %v4420 = vpack.c.bf16 %v4392, %v4391
        %v4421 = vpack.c.bf16 %v4394, %v4393
        %v4422 = vpack.c.bf16 %v4396, %v4395
        %v4423 = vpack.c.bf16 %v4398, %v4397
        %v4424 = vpack.c.bf16 %v4400, %v4399
        %v4425 = vpack.c.bf16 %v4402, %v4401
        %v4426 = vpack.c.bf16 %v4404, %v4403
        %v4427 = vpack.c.bf16 %v4406, %v4405
        %v4428 = vpack.c.bf16 %v4408, %v4407
        %v4429 = vpack.c.bf16 %v4410, %v4409
        %v4430 = vpack.c.bf16 %v4412, %v4411
        %v4431 = vpack.c.bf16 %v4414, %v4413
        %v4432 = vpack.c.bf16 %v4416, %v4415
        %s4433 = scalar_lea.vmem %s3, 256
        %v4434 = vld [vmem:[%s4433] sm:$0xf]
        %v4435 = vld [vmem:[%s4433 + $0x4] sm:$0xf]
        %v4436 = vld [vmem:[%s4433 + $0x8] sm:$0xf]
        %v4437 = vld [vmem:[%s4433 + $0xc] sm:$0xf]
        %v4438 = vld [vmem:[%s4433 + $0x10] sm:$0xf]
        %v4439 = vld [vmem:[%s4433 + $0x14] sm:$0xf]
        %v4440 = vld [vmem:[%s4433 + $0x18] sm:$0xf]
        %v4441 = vld [vmem:[%s4433 + $0x1c] sm:$0xf]
        %v4442 = vld [vmem:[%s4433 + $0x20] sm:$0xf]
        %v4443 = vld [vmem:[%s4433 + $0x24] sm:$0xf]
        %v4444 = vld [vmem:[%s4433 + $0x28] sm:$0xf]
        %v4445 = vld [vmem:[%s4433 + $0x2c] sm:$0xf]
        %v4446 = vld [vmem:[%s4433 + $0x30] sm:$0xf]
        %v4447 = vld [vmem:[%s4433 + $0x34] sm:$0xf]
        %v4448 = vld [vmem:[%s4433 + $0x38] sm:$0xf]
        %v4449 = vld [vmem:[%s4433 + $0x3c] sm:$0xf]
        %v4466 = vunpack.c.l.b16 %v4434
        %v4467 = vunpack.c.l.b16 %v4435
        %v4468 = vunpack.c.l.b16 %v4436
        %v4469 = vunpack.c.l.b16 %v4437
        %v4470 = vunpack.c.l.b16 %v4438
        %v4471 = vunpack.c.l.b16 %v4439
        %v4472 = vunpack.c.l.b16 %v4440
        %v4473 = vunpack.c.l.b16 %v4441
        %v4474 = vunpack.c.l.b16 %v4442
        %v4475 = vunpack.c.l.b16 %v4443
        %v4476 = vunpack.c.l.b16 %v4444
        %v4477 = vunpack.c.l.b16 %v4445
        %v4478 = vunpack.c.l.b16 %v4446
        %v4479 = vunpack.c.l.b16 %v4447
        %v4480 = vunpack.c.l.b16 %v4448
        %v4481 = vunpack.c.l.b16 %v4449
        %v4482 = vpack.c.b16 %v4467, %v4466
        %v4483 = vpack.c.b16 %v4469, %v4468
        %v4484 = vpack.c.b16 %v4471, %v4470
        %v4485 = vpack.c.b16 %v4473, %v4472
        %v4486 = vpack.c.b16 %v4475, %v4474
        %v4487 = vpack.c.b16 %v4477, %v4476
        %v4488 = vpack.c.b16 %v4479, %v4478
        %v4489 = vpack.c.b16 %v4481, %v4480
        %4498 = vmatprep.subr.bf16.mxu0 0
        %4499 = vmatpush1.bf16.msra.mxu0 %v4482
        %4500 = vmatprep.subr.bf16.mxu0 0
        %4501 = vmatpush1.bf16.msra.mxu0 %v4483
        %4502 = vmatprep.subr.bf16.mxu0 0
        %4503 = vmatpush1.bf16.msra.mxu0 %v4484
        %4504 = vmatprep.subr.bf16.mxu0 0
        %4505 = vmatpush1.bf16.msra.mxu0 %v4485
        %4506 = vmatprep.subr.bf16.mxu0 0
        %4507 = vmatpush1.bf16.msra.mxu0 %v4486
        %4508 = vmatprep.subr.bf16.mxu0 0
        %4509 = vmatpush1.bf16.msra.mxu0 %v4487
        %4510 = vmatprep.subr.bf16.mxu0 0
        %4511 = vmatpush1.bf16.msra.mxu0 %v4488
        %4512 = vmatprep.subr.bf16.mxu0 0
        %4513 = vmatpush1.bf16.msra.mxu0 %v4489
        %4514 = vmatprep.subr.bf16.mxu0 0
        %4515 = vmatpush1.bf16.msra.mxu0 0
        %4516 = vmatprep.subr.bf16.mxu0 0
        %4517 = vmatpush1.bf16.msra.mxu0 0
        %4518 = vmatprep.subr.bf16.mxu0 0
        %4519 = vmatpush1.bf16.msra.mxu0 0
        %4520 = vmatprep.subr.bf16.mxu0 0
        %4521 = vmatpush1.bf16.msra.mxu0 0
        %4522 = vmatprep.subr.bf16.mxu0 0
        %4523 = vmatpush1.bf16.msra.mxu0 0
        %4524 = vmatprep.subr.bf16.mxu0 0
        %4525 = vmatpush1.bf16.msra.mxu0 0
        %4526 = vmatprep.subr.bf16.mxu0 0
        %4527 = vmatpush1.bf16.msra.mxu0 0
        %4528 = vmatprep.subr.bf16.mxu0 0
        %4529 = vmatpush1.bf16.msra.mxu0 0
        %4530 = vmatprep.mubr.bf16.mxu0 0
        %4531 = vmatmul.mubr.bf16.gmra.mrb[0].mxu0 %v4417
        %v4532 = vpop.f32.mrb[0].mxu0
        %v4533 = vadd.f32 0.0, %v4532
        %v4534 = vpop.f32.mrb[0].mxu0
        %v4535 = vpop.f32.mrb[0].mxu0
        %v4536 = vadd.f32 0.0, %v4535
        %v4537 = vpop.f32.mrb[0].mxu0
        %4538 = vmatprep.mubr.bf16.mxu0 0
        %4539 = vmatmul.mubr.bf16.gmra.mrb[0].mxu0 %v4418
        %v4540 = vpop.f32.mrb[0].mxu0
        %v4541 = vadd.f32 0.0, %v4540
        %v4542 = vpop.f32.mrb[0].mxu0
        %v4543 = vpop.f32.mrb[0].mxu0
        %v4544 = vadd.f32 0.0, %v4543
        %v4545 = vpop.f32.mrb[0].mxu0
        %4546 = vmatprep.mubr.bf16.mxu0 0
        %4547 = vmatmul.mubr.bf16.gmra.mrb[0].mxu0 %v4419
        %v4548 = vpop.f32.mrb[0].mxu0
        %v4549 = vadd.f32 0.0, %v4548
        %v4550 = vpop.f32.mrb[0].mxu0
        %v4551 = vpop.f32.mrb[0].mxu0
        %v4552 = vadd.f32 0.0, %v4551
        %v4553 = vpop.f32.mrb[0].mxu0
        %4554 = vmatprep.mubr.bf16.mxu0 0
        %4555 = vmatmul.mubr.bf16.gmra.mrb[0].mxu0 %v4420
        %v4556 = vpop.f32.mrb[0].mxu0
        %v4557 = vadd.f32 0.0, %v4556
        %v4558 = vpop.f32.mrb[0].mxu0
        %v4559 = vpop.f32.mrb[0].mxu0
        %v4560 = vadd.f32 0.0, %v4559
        %v4561 = vpop.f32.mrb[0].mxu0
        %4562 = vmatprep.mubr.bf16.mxu0 0
        %4563 = vmatmul.mubr.bf16.gmra.mrb[0].mxu0 %v4421
        %v4564 = vpop.f32.mrb[0].mxu0
        %v4565 = vadd.f32 0.0, %v4564
        %v4566 = vpop.f32.mrb[0].mxu0
        %v4567 = vpop.f32.mrb[0].mxu0
        %v4568 = vadd.f32 0.0, %v4567
        %v4569 = vpop.f32.mrb[0].mxu0
        %4570 = vmatprep.mubr.bf16.mxu0 0
        %4571 = vmatmul.mubr.bf16.gmra.mrb[0].mxu0 %v4422
        %v4572 = vpop.f32.mrb[0].mxu0
        %v4573 = vadd.f32 0.0, %v4572
        %v4574 = vpop.f32.mrb[0].mxu0
        %v4575 = vpop.f32.mrb[0].mxu0
        %v4576 = vadd.f32 0.0, %v4575
        %v4577 = vpop.f32.mrb[0].mxu0
        %4578 = vmatprep.mubr.bf16.mxu0 0
        %4579 = vmatmul.mubr.bf16.gmra.mrb[0].mxu0 %v4423
        %v4580 = vpop.f32.mrb[0].mxu0
        %v4581 = vadd.f32 0.0, %v4580
        %v4582 = vpop.f32.mrb[0].mxu0
        %v4583 = vpop.f32.mrb[0].mxu0
        %v4584 = vadd.f32 0.0, %v4583
        %v4585 = vpop.f32.mrb[0].mxu0
        %4586 = vmatprep.mubr.bf16.mxu0 0
        %4587 = vmatmul.mubr.bf16.gmra.mrb[0].mxu0 %v4424
        %v4588 = vpop.f32.mrb[0].mxu0
        %v4589 = vadd.f32 0.0, %v4588
        %v4590 = vpop.f32.mrb[0].mxu0
        %v4591 = vpop.f32.mrb[0].mxu0
        %v4592 = vadd.f32 0.0, %v4591
        %v4593 = vpop.f32.mrb[0].mxu0
        %4594 = vmatprep.mubr.bf16.mxu0 0
        %4595 = vmatmul.mubr.bf16.gmra.mrb[0].mxu0 %v4425
        %v4596 = vpop.f32.mrb[0].mxu0
        %v4597 = vadd.f32 0.0, %v4596
        %v4598 = vpop.f32.mrb[0].mxu0
        %v4599 = vpop.f32.mrb[0].mxu0
        %v4600 = vadd.f32 0.0, %v4599
        %v4601 = vpop.f32.mrb[0].mxu0
        %4602 = vmatprep.mubr.bf16.mxu0 0
        %4603 = vmatmul.mubr.bf16.gmra.mrb[0].mxu0 %v4426
        %v4604 = vpop.f32.mrb[0].mxu0
        %v4605 = vadd.f32 0.0, %v4604
        %v4606 = vpop.f32.mrb[0].mxu0
        %v4607 = vpop.f32.mrb[0].mxu0
        %v4608 = vadd.f32 0.0, %v4607
        %v4609 = vpop.f32.mrb[0].mxu0
        %4610 = vmatprep.mubr.bf16.mxu0 0
        %4611 = vmatmul.mubr.bf16.gmra.mrb[0].mxu0 %v4427
        %v4612 = vpop.f32.mrb[0].mxu0
        %v4613 = vadd.f32 0.0, %v4612
        %v4614 = vpop.f32.mrb[0].mxu0
        %v4615 = vpop.f32.mrb[0].mxu0
        %v4616 = vadd.f32 0.0, %v4615
        %v4617 = vpop.f32.mrb[0].mxu0
        %4618 = vmatprep.mubr.bf16.mxu0 0
        %4619 = vmatmul.mubr.bf16.gmra.mrb[0].mxu0 %v4428
        %v4620 = vpop.f32.mrb[0].mxu0
        %v4621 = vadd.f32 0.0, %v4620
        %v4622 = vpop.f32.mrb[0].mxu0
        %v4623 = vpop.f32.mrb[0].mxu0
        %v4624 = vadd.f32 0.0, %v4623
        %v4625 = vpop.f32.mrb[0].mxu0
        %4626 = vmatprep.mubr.bf16.mxu0 0
        %4627 = vmatmul.mubr.bf16.gmra.mrb[0].mxu0 %v4429
        %v4628 = vpop.f32.mrb[0].mxu0
        %v4629 = vadd.f32 0.0, %v4628
        %v4630 = vpop.f32.mrb[0].mxu0
        %v4631 = vpop.f32.mrb[0].mxu0
        %v4632 = vadd.f32 0.0, %v4631
        %v4633 = vpop.f32.mrb[0].mxu0
        %4634 = vmatprep.mubr.bf16.mxu0 0
        %4635 = vmatmul.mubr.bf16.gmra.mrb[0].mxu0 %v4430
        %v4636 = vpop.f32.mrb[0].mxu0
        %v4637 = vadd.f32 0.0, %v4636
        %v4638 = vpop.f32.mrb[0].mxu0
        %v4639 = vpop.f32.mrb[0].mxu0
        %v4640 = vadd.f32 0.0, %v4639
        %v4641 = vpop.f32.mrb[0].mxu0
        %4642 = vmatprep.mubr.bf16.mxu0 0
        %4643 = vmatmul.mubr.bf16.gmra.mrb[0].mxu0 %v4431
        %v4644 = vpop.f32.mrb[0].mxu0
        %v4645 = vadd.f32 0.0, %v4644
        %v4646 = vpop.f32.mrb[0].mxu0
        %v4647 = vpop.f32.mrb[0].mxu0
        %v4648 = vadd.f32 0.0, %v4647
        %v4649 = vpop.f32.mrb[0].mxu0
        %4650 = vmatprep.mubr.bf16.mxu0 0
        %4651 = vmatmul.mubr.bf16.gmra.mrb[0].mxu0 %v4432
        %v4652 = vpop.f32.mrb[0].mxu0
        %v4653 = vadd.f32 0.0, %v4652
        %v4654 = vpop.f32.mrb[0].mxu0
        %v4655 = vpop.f32.mrb[0].mxu0
        %v4656 = vadd.f32 0.0, %v4655
        %v4657 = vpop.f32.mrb[0].mxu0
        %4658 = vdwg.mxu0
        %v4659 = vadd.f32 %v4353, %v4533
        %v4660 = vadd.f32 %v4354, %v4536
        %v4661 = vadd.f32 %v4355, %v4541
        %v4662 = vadd.f32 %v4356, %v4544
        %v4663 = vadd.f32 %v4357, %v4549
        %v4664 = vadd.f32 %v4358, %v4552
        %v4665 = vadd.f32 %v4359, %v4557
        %v4666 = vadd.f32 %v4360, %v4560
        %v4667 = vadd.f32 %v4361, %v4565
        %v4668 = vadd.f32 %v4362, %v4568
        %v4669 = vadd.f32 %v4363, %v4573
        %v4670 = vadd.f32 %v4364, %v4576
        %v4671 = vadd.f32 %v4365, %v4581
        %v4672 = vadd.f32 %v4366, %v4584
        %v4673 = vadd.f32 %v4367, %v4589
        %v4674 = vadd.f32 %v4368, %v4592
        %v4675 = vadd.f32 %v4369, %v4597
        %v4676 = vadd.f32 %v4370, %v4600
        %v4677 = vadd.f32 %v4371, %v4605
        %v4678 = vadd.f32 %v4372, %v4608
        %v4679 = vadd.f32 %v4373, %v4613
        %v4680 = vadd.f32 %v4374, %v4616
        %v4681 = vadd.f32 %v4375, %v4621
        %v4682 = vadd.f32 %v4376, %v4624
        %v4683 = vadd.f32 %v4377, %v4629
        %v4684 = vadd.f32 %v4378, %v4632
        %v4685 = vadd.f32 %v4379, %v4637
        %v4686 = vadd.f32 %v4380, %v4640
        %v4687 = vadd.f32 %v4381, %v4645
        %v4688 = vadd.f32 %v4382, %v4648
        %v4689 = vadd.f32 %v4383, %v4653
        %v4690 = vadd.f32 %v4384, %v4656
        %v4691 = vld [vmem:[%s3193 + $0x2] sm:$0xff]
        %v4692 = vld [vmem:[%s3193 + $0xa] sm:$0xff]
        %v4693 = vld [vmem:[%s3193 + $0x1a] sm:$0xff]
        %v4694 = vld [vmem:[%s3193 + $0x22] sm:$0xff]
        %v4695 = vld [vmem:[%s3193 + $0x32] sm:$0xff]
        %v4696 = vld [vmem:[%s3193 + $0x3a] sm:$0xff]
        %v4697 = vld [vmem:[%s3193 + $0x4a] sm:$0xff]
        %v4698 = vld [vmem:[%s3193 + $0x52] sm:$0xff]
        %v4699 = vld [vmem:[%s3193 + $0x62] sm:$0xff]
        %v4700 = vld [vmem:[%s3193 + $0x6a] sm:$0xff]
        %v4701 = vld [vmem:[%s3193 + $0x7a] sm:$0xff]
        %v4702 = vld [vmem:[%s3193 + $0x82] sm:$0xff]
        %v4703 = vld [vmem:[%s3193 + $0x92] sm:$0xff]
        %v4704 = vld [vmem:[%s3193 + $0x9a] sm:$0xff]
        %v4705 = vld [vmem:[%s3193 + $0xaa] sm:$0xff]
        %v4706 = vld [vmem:[%s3193 + $0xb2] sm:$0xff]
        %v4707 = vld [vmem:[%s3193 + $0xc2] sm:$0xff]
        %v4708 = vld [vmem:[%s3193 + $0xca] sm:$0xff]
        %v4709 = vld [vmem:[%s3193 + $0xda] sm:$0xff]
        %v4710 = vld [vmem:[%s3193 + $0xe2] sm:$0xff]
        %v4711 = vld [vmem:[%s3193 + $0xf2] sm:$0xff]
        %v4712 = vld [vmem:[%s3193 + $0xfa] sm:$0xff]
        %v4713 = vld [vmem:[%s3193 + $0x10a] sm:$0xff]
        %v4714 = vld [vmem:[%s3193 + $0x112] sm:$0xff]
        %v4715 = vld [vmem:[%s3193 + $0x122] sm:$0xff]
        %v4716 = vld [vmem:[%s3193 + $0x12a] sm:$0xff]
        %v4717 = vld [vmem:[%s3193 + $0x13a] sm:$0xff]
        %v4718 = vld [vmem:[%s3193 + $0x142] sm:$0xff]
        %v4719 = vld [vmem:[%s3193 + $0x152] sm:$0xff]
        %v4720 = vld [vmem:[%s3193 + $0x15a] sm:$0xff]
        %v4721 = vld [vmem:[%s3193 + $0x16a] sm:$0xff]
        %v4722 = vld [vmem:[%s3193 + $0x172] sm:$0xff]
        %v4723 = vpack.c.bf16 %v4692, %v4691
        %v4724 = vpack.c.bf16 %v4694, %v4693
        %v4725 = vpack.c.bf16 %v4696, %v4695
        %v4726 = vpack.c.bf16 %v4698, %v4697
        %v4727 = vpack.c.bf16 %v4700, %v4699
        %v4728 = vpack.c.bf16 %v4702, %v4701
        %v4729 = vpack.c.bf16 %v4704, %v4703
        %v4730 = vpack.c.bf16 %v4706, %v4705
        %v4731 = vpack.c.bf16 %v4708, %v4707
        %v4732 = vpack.c.bf16 %v4710, %v4709
        %v4733 = vpack.c.bf16 %v4712, %v4711
        %v4734 = vpack.c.bf16 %v4714, %v4713
        %v4735 = vpack.c.bf16 %v4716, %v4715
        %v4736 = vpack.c.bf16 %v4718, %v4717
        %v4737 = vpack.c.bf16 %v4720, %v4719
        %v4738 = vpack.c.bf16 %v4722, %v4721
        %s4739 = scalar_lea.vmem %s3, 320
        %v4740 = vld [vmem:[%s4739] sm:$0xf]
        %v4741 = vld [vmem:[%s4739 + $0x4] sm:$0xf]
        %v4742 = vld [vmem:[%s4739 + $0x8] sm:$0xf]
        %v4743 = vld [vmem:[%s4739 + $0xc] sm:$0xf]
        %v4744 = vld [vmem:[%s4739 + $0x10] sm:$0xf]
        %v4745 = vld [vmem:[%s4739 + $0x14] sm:$0xf]
        %v4746 = vld [vmem:[%s4739 + $0x18] sm:$0xf]
        %v4747 = vld [vmem:[%s4739 + $0x1c] sm:$0xf]
        %v4748 = vld [vmem:[%s4739 + $0x20] sm:$0xf]
        %v4749 = vld [vmem:[%s4739 + $0x24] sm:$0xf]
        %v4750 = vld [vmem:[%s4739 + $0x28] sm:$0xf]
        %v4751 = vld [vmem:[%s4739 + $0x2c] sm:$0xf]
        %v4752 = vld [vmem:[%s4739 + $0x30] sm:$0xf]
        %v4753 = vld [vmem:[%s4739 + $0x34] sm:$0xf]
        %v4754 = vld [vmem:[%s4739 + $0x38] sm:$0xf]
        %v4755 = vld [vmem:[%s4739 + $0x3c] sm:$0xf]
        %v4772 = vunpack.c.l.b16 %v4740
        %v4773 = vunpack.c.l.b16 %v4741
        %v4774 = vunpack.c.l.b16 %v4742
        %v4775 = vunpack.c.l.b16 %v4743
        %v4776 = vunpack.c.l.b16 %v4744
        %v4777 = vunpack.c.l.b16 %v4745
        %v4778 = vunpack.c.l.b16 %v4746
        %v4779 = vunpack.c.l.b16 %v4747
        %v4780 = vunpack.c.l.b16 %v4748
        %v4781 = vunpack.c.l.b16 %v4749
        %v4782 = vunpack.c.l.b16 %v4750
        %v4783 = vunpack.c.l.b16 %v4751
        %v4784 = vunpack.c.l.b16 %v4752
        %v4785 = vunpack.c.l.b16 %v4753
        %v4786 = vunpack.c.l.b16 %v4754
        %v4787 = vunpack.c.l.b16 %v4755
        %v4788 = vpack.c.b16 %v4773, %v4772
        %v4789 = vpack.c.b16 %v4775, %v4774
        %v4790 = vpack.c.b16 %v4777, %v4776
        %v4791 = vpack.c.b16 %v4779, %v4778
        %v4792 = vpack.c.b16 %v4781, %v4780
        %v4793 = vpack.c.b16 %v4783, %v4782
        %v4794 = vpack.c.b16 %v4785, %v4784
        %v4795 = vpack.c.b16 %v4787, %v4786
        %4804 = vmatprep.subr.bf16.mxu0 0
        %4805 = vmatpush1.bf16.msra.mxu0 %v4788
        %4806 = vmatprep.subr.bf16.mxu0 0
        %4807 = vmatpush1.bf16.msra.mxu0 %v4789
        %4808 = vmatprep.subr.bf16.mxu0 0
        %4809 = vmatpush1.bf16.msra.mxu0 %v4790
        %4810 = vmatprep.subr.bf16.mxu0 0
        %4811 = vmatpush1.bf16.msra.mxu0 %v4791
        %4812 = vmatprep.subr.bf16.mxu0 0
        %4813 = vmatpush1.bf16.msra.mxu0 %v4792
        %4814 = vmatprep.subr.bf16.mxu0 0
        %4815 = vmatpush1.bf16.msra.mxu0 %v4793
        %4816 = vmatprep.subr.bf16.mxu0 0
        %4817 = vmatpush1.bf16.msra.mxu0 %v4794
        %4818 = vmatprep.subr.bf16.mxu0 0
        %4819 = vmatpush1.bf16.msra.mxu0 %v4795
        %4820 = vmatprep.subr.bf16.mxu0 0
        %4821 = vmatpush1.bf16.msra.mxu0 0
        %4822 = vmatprep.subr.bf16.mxu0 0
        %4823 = vmatpush1.bf16.msra.mxu0 0
        %4824 = vmatprep.subr.bf16.mxu0 0
        %4825 = vmatpush1.bf16.msra.mxu0 0
        %4826 = vmatprep.subr.bf16.mxu0 0
        %4827 = vmatpush1.bf16.msra.mxu0 0
        %4828 = vmatprep.subr.bf16.mxu0 0
        %4829 = vmatpush1.bf16.msra.mxu0 0
        %4830 = vmatprep.subr.bf16.mxu0 0
        %4831 = vmatpush1.bf16.msra.mxu0 0
        %4832 = vmatprep.subr.bf16.mxu0 0
        %4833 = vmatpush1.bf16.msra.mxu0 0
        %4834 = vmatprep.subr.bf16.mxu0 0
        %4835 = vmatpush1.bf16.msra.mxu0 0
        %4836 = vmatprep.mubr.bf16.mxu0 0
        %4837 = vmatmul.mubr.bf16.gmra.mrb[0].mxu0 %v4723
        %v4838 = vpop.f32.mrb[0].mxu0
        %v4839 = vadd.f32 0.0, %v4838
        %v4840 = vpop.f32.mrb[0].mxu0
        %v4841 = vpop.f32.mrb[0].mxu0
        %v4842 = vadd.f32 0.0, %v4841
        %v4843 = vpop.f32.mrb[0].mxu0
        %4844 = vmatprep.mubr.bf16.mxu0 0
        %4845 = vmatmul.mubr.bf16.gmra.mrb[0].mxu0 %v4724
        %v4846 = vpop.f32.mrb[0].mxu0
        %v4847 = vadd.f32 0.0, %v4846
        %v4848 = vpop.f32.mrb[0].mxu0
        %v4849 = vpop.f32.mrb[0].mxu0
        %v4850 = vadd.f32 0.0, %v4849
        %v4851 = vpop.f32.mrb[0].mxu0
        %4852 = vmatprep.mubr.bf16.mxu0 0
        %4853 = vmatmul.mubr.bf16.gmra.mrb[0].mxu0 %v4725
        %v4854 = vpop.f32.mrb[0].mxu0
        %v4855 = vadd.f32 0.0, %v4854
        %v4856 = vpop.f32.mrb[0].mxu0
        %v4857 = vpop.f32.mrb[0].mxu0
        %v4858 = vadd.f32 0.0, %v4857
        %v4859 = vpop.f32.mrb[0].mxu0
        %4860 = vmatprep.mubr.bf16.mxu0 0
        %4861 = vmatmul.mubr.bf16.gmra.mrb[0].mxu0 %v4726
        %v4862 = vpop.f32.mrb[0].mxu0
        %v4863 = vadd.f32 0.0, %v4862
        %v4864 = vpop.f32.mrb[0].mxu0
        %v4865 = vpop.f32.mrb[0].mxu0
        %v4866 = vadd.f32 0.0, %v4865
        %v4867 = vpop.f32.mrb[0].mxu0
        %4868 = vmatprep.mubr.bf16.mxu0 0
        %4869 = vmatmul.mubr.bf16.gmra.mrb[0].mxu0 %v4727
        %v4870 = vpop.f32.mrb[0].mxu0
        %v4871 = vadd.f32 0.0, %v4870
        %v4872 = vpop.f32.mrb[0].mxu0
        %v4873 = vpop.f32.mrb[0].mxu0
        %v4874 = vadd.f32 0.0, %v4873
        %v4875 = vpop.f32.mrb[0].mxu0
        %4876 = vmatprep.mubr.bf16.mxu0 0
        %4877 = vmatmul.mubr.bf16.gmra.mrb[0].mxu0 %v4728
        %v4878 = vpop.f32.mrb[0].mxu0
        %v4879 = vadd.f32 0.0, %v4878
        %v4880 = vpop.f32.mrb[0].mxu0
        %v4881 = vpop.f32.mrb[0].mxu0
        %v4882 = vadd.f32 0.0, %v4881
        %v4883 = vpop.f32.mrb[0].mxu0
        %4884 = vmatprep.mubr.bf16.mxu0 0
        %4885 = vmatmul.mubr.bf16.gmra.mrb[0].mxu0 %v4729
        %v4886 = vpop.f32.mrb[0].mxu0
        %v4887 = vadd.f32 0.0, %v4886
        %v4888 = vpop.f32.mrb[0].mxu0
        %v4889 = vpop.f32.mrb[0].mxu0
        %v4890 = vadd.f32 0.0, %v4889
        %v4891 = vpop.f32.mrb[0].mxu0
        %4892 = vmatprep.mubr.bf16.mxu0 0
        %4893 = vmatmul.mubr.bf16.gmra.mrb[0].mxu0 %v4730
        %v4894 = vpop.f32.mrb[0].mxu0
        %v4895 = vadd.f32 0.0, %v4894
        %v4896 = vpop.f32.mrb[0].mxu0
        %v4897 = vpop.f32.mrb[0].mxu0
        %v4898 = vadd.f32 0.0, %v4897
        %v4899 = vpop.f32.mrb[0].mxu0
        %4900 = vmatprep.mubr.bf16.mxu0 0
        %4901 = vmatmul.mubr.bf16.gmra.mrb[0].mxu0 %v4731
        %v4902 = vpop.f32.mrb[0].mxu0
        %v4903 = vadd.f32 0.0, %v4902
        %v4904 = vpop.f32.mrb[0].mxu0
        %v4905 = vpop.f32.mrb[0].mxu0
        %v4906 = vadd.f32 0.0, %v4905
        %v4907 = vpop.f32.mrb[0].mxu0
        %4908 = vmatprep.mubr.bf16.mxu0 0
        %4909 = vmatmul.mubr.bf16.gmra.mrb[0].mxu0 %v4732
        %v4910 = vpop.f32.mrb[0].mxu0
        %v4911 = vadd.f32 0.0, %v4910
        %v4912 = vpop.f32.mrb[0].mxu0
        %v4913 = vpop.f32.mrb[0].mxu0
        %v4914 = vadd.f32 0.0, %v4913
        %v4915 = vpop.f32.mrb[0].mxu0
        %4916 = vmatprep.mubr.bf16.mxu0 0
        %4917 = vmatmul.mubr.bf16.gmra.mrb[0].mxu0 %v4733
        %v4918 = vpop.f32.mrb[0].mxu0
        %v4919 = vadd.f32 0.0, %v4918
        %v4920 = vpop.f32.mrb[0].mxu0
        %v4921 = vpop.f32.mrb[0].mxu0
        %v4922 = vadd.f32 0.0, %v4921
        %v4923 = vpop.f32.mrb[0].mxu0
        %4924 = vmatprep.mubr.bf16.mxu0 0
        %4925 = vmatmul.mubr.bf16.gmra.mrb[0].mxu0 %v4734
        %v4926 = vpop.f32.mrb[0].mxu0
        %v4927 = vadd.f32 0.0, %v4926
        %v4928 = vpop.f32.mrb[0].mxu0
        %v4929 = vpop.f32.mrb[0].mxu0
        %v4930 = vadd.f32 0.0, %v4929
        %v4931 = vpop.f32.mrb[0].mxu0
        %4932 = vmatprep.mubr.bf16.mxu0 0
        %4933 = vmatmul.mubr.bf16.gmra.mrb[0].mxu0 %v4735
        %v4934 = vpop.f32.mrb[0].mxu0
        %v4935 = vadd.f32 0.0, %v4934
        %v4936 = vpop.f32.mrb[0].mxu0
        %v4937 = vpop.f32.mrb[0].mxu0
        %v4938 = vadd.f32 0.0, %v4937
        %v4939 = vpop.f32.mrb[0].mxu0
        %4940 = vmatprep.mubr.bf16.mxu0 0
        %4941 = vmatmul.mubr.bf16.gmra.mrb[0].mxu0 %v4736
        %v4942 = vpop.f32.mrb[0].mxu0
        %v4943 = vadd.f32 0.0, %v4942
        %v4944 = vpop.f32.mrb[0].mxu0
        %v4945 = vpop.f32.mrb[0].mxu0
        %v4946 = vadd.f32 0.0, %v4945
        %v4947 = vpop.f32.mrb[0].mxu0
        %4948 = vmatprep.mubr.bf16.mxu0 0
        %4949 = vmatmul.mubr.bf16.gmra.mrb[0].mxu0 %v4737
        %v4950 = vpop.f32.mrb[0].mxu0
        %v4951 = vadd.f32 0.0, %v4950
        %v4952 = vpop.f32.mrb[0].mxu0
        %v4953 = vpop.f32.mrb[0].mxu0
        %v4954 = vadd.f32 0.0, %v4953
        %v4955 = vpop.f32.mrb[0].mxu0
        %4956 = vmatprep.mubr.bf16.mxu0 0
        %4957 = vmatmul.mubr.bf16.gmra.mrb[0].mxu0 %v4738
        %v4958 = vpop.f32.mrb[0].mxu0
        %v4959 = vadd.f32 0.0, %v4958
        %v4960 = vpop.f32.mrb[0].mxu0
        %v4961 = vpop.f32.mrb[0].mxu0
        %v4962 = vadd.f32 0.0, %v4961
        %v4963 = vpop.f32.mrb[0].mxu0
        %4964 = vdwg.mxu0
        %v4965 = vadd.f32 %v4659, %v4839
        %v4966 = vadd.f32 %v4660, %v4842
        %v4967 = vadd.f32 %v4661, %v4847
        %v4968 = vadd.f32 %v4662, %v4850
        %v4969 = vadd.f32 %v4663, %v4855
        %v4970 = vadd.f32 %v4664, %v4858
        %v4971 = vadd.f32 %v4665, %v4863
        %v4972 = vadd.f32 %v4666, %v4866
        %v4973 = vadd.f32 %v4667, %v4871
        %v4974 = vadd.f32 %v4668, %v4874
        %v4975 = vadd.f32 %v4669, %v4879
        %v4976 = vadd.f32 %v4670, %v4882
        %v4977 = vadd.f32 %v4671, %v4887
        %v4978 = vadd.f32 %v4672, %v4890
        %v4979 = vadd.f32 %v4673, %v4895
        %v4980 = vadd.f32 %v4674, %v4898
        %v4981 = vadd.f32 %v4675, %v4903
        %v4982 = vadd.f32 %v4676, %v4906
        %v4983 = vadd.f32 %v4677, %v4911
        %v4984 = vadd.f32 %v4678, %v4914
        %v4985 = vadd.f32 %v4679, %v4919
        %v4986 = vadd.f32 %v4680, %v4922
        %v4987 = vadd.f32 %v4681, %v4927
        %v4988 = vadd.f32 %v4682, %v4930
        %v4989 = vadd.f32 %v4683, %v4935
        %v4990 = vadd.f32 %v4684, %v4938
        %v4991 = vadd.f32 %v4685, %v4943
        %v4992 = vadd.f32 %v4686, %v4946
        %v4993 = vadd.f32 %v4687, %v4951
        %v4994 = vadd.f32 %v4688, %v4954
        %v4995 = vadd.f32 %v4689, %v4959
        %v4996 = vadd.f32 %v4690, %v4962
        %s4997 = scalar_lea.vmem [#allocation3], 48
        %v4998 = vld [vmem:[%s4997] sm:$0xff]
        %v4999 = vld [vmem:[%s4997 + $0x8] sm:$0xff]
        %v5000 = vld [vmem:[%s4997 + $0x18] sm:$0xff]
        %v5001 = vld [vmem:[%s4997 + $0x20] sm:$0xff]
        %v5002 = vld [vmem:[%s4997 + $0x30] sm:$0xff]
        %v5003 = vld [vmem:[%s4997 + $0x38] sm:$0xff]
        %v5004 = vld [vmem:[%s4997 + $0x48] sm:$0xff]
        %v5005 = vld [vmem:[%s4997 + $0x50] sm:$0xff]
        %v5006 = vld [vmem:[%s4997 + $0x60] sm:$0xff]
        %v5007 = vld [vmem:[%s4997 + $0x68] sm:$0xff]
        %v5008 = vld [vmem:[%s4997 + $0x78] sm:$0xff]
        %v5009 = vld [vmem:[%s4997 + $0x80] sm:$0xff]
        %v5010 = vld [vmem:[%s4997 + $0x90] sm:$0xff]
        %v5011 = vld [vmem:[%s4997 + $0x98] sm:$0xff]
        %v5012 = vld [vmem:[%s4997 + $0xa8] sm:$0xff]
        %v5013 = vld [vmem:[%s4997 + $0xb0] sm:$0xff]
        %v5014 = vld [vmem:[%s4997 + $0xc0] sm:$0xff]
        %v5015 = vld [vmem:[%s4997 + $0xc8] sm:$0xff]
        %v5016 = vld [vmem:[%s4997 + $0xd8] sm:$0xff]
        %v5017 = vld [vmem:[%s4997 + $0xe0] sm:$0xff]
        %v5018 = vld [vmem:[%s4997 + $0xf0] sm:$0xff]
        %v5019 = vld [vmem:[%s4997 + $0xf8] sm:$0xff]
        %v5020 = vld [vmem:[%s4997 + $0x108] sm:$0xff]
        %v5021 = vld [vmem:[%s4997 + $0x110] sm:$0xff]
        %v5022 = vld [vmem:[%s4997 + $0x120] sm:$0xff]
        %v5023 = vld [vmem:[%s4997 + $0x128] sm:$0xff]
        %v5024 = vld [vmem:[%s4997 + $0x138] sm:$0xff]
        %v5025 = vld [vmem:[%s4997 + $0x140] sm:$0xff]
        %v5026 = vld [vmem:[%s4997 + $0x150] sm:$0xff]
        %v5027 = vld [vmem:[%s4997 + $0x158] sm:$0xff]
        %v5028 = vld [vmem:[%s4997 + $0x168] sm:$0xff]
        %v5029 = vld [vmem:[%s4997 + $0x170] sm:$0xff]
        %v5030 = vpack.c.bf16 %v4999, %v4998
        %v5031 = vpack.c.bf16 %v5001, %v5000
        %v5032 = vpack.c.bf16 %v5003, %v5002
        %v5033 = vpack.c.bf16 %v5005, %v5004
        %v5034 = vpack.c.bf16 %v5007, %v5006
        %v5035 = vpack.c.bf16 %v5009, %v5008
        %v5036 = vpack.c.bf16 %v5011, %v5010
        %v5037 = vpack.c.bf16 %v5013, %v5012
        %v5038 = vpack.c.bf16 %v5015, %v5014
        %v5039 = vpack.c.bf16 %v5017, %v5016
        %v5040 = vpack.c.bf16 %v5019, %v5018
        %v5041 = vpack.c.bf16 %v5021, %v5020
        %v5042 = vpack.c.bf16 %v5023, %v5022
        %v5043 = vpack.c.bf16 %v5025, %v5024
        %v5044 = vpack.c.bf16 %v5027, %v5026
        %v5045 = vpack.c.bf16 %v5029, %v5028
        %s5046 = scalar_lea.vmem %s3, 384
        %v5047 = vld [vmem:[%s5046] sm:$0xf]
        %v5048 = vld [vmem:[%s5046 + $0x4] sm:$0xf]
        %v5049 = vld [vmem:[%s5046 + $0x8] sm:$0xf]
        %v5050 = vld [vmem:[%s5046 + $0xc] sm:$0xf]
        %v5051 = vld [vmem:[%s5046 + $0x10] sm:$0xf]
        %v5052 = vld [vmem:[%s5046 + $0x14] sm:$0xf]
        %v5053 = vld [vmem:[%s5046 + $0x18] sm:$0xf]
        %v5054 = vld [vmem:[%s5046 + $0x1c] sm:$0xf]
        %v5055 = vld [vmem:[%s5046 + $0x20] sm:$0xf]
        %v5056 = vld [vmem:[%s5046 + $0x24] sm:$0xf]
        %v5057 = vld [vmem:[%s5046 + $0x28] sm:$0xf]
        %v5058 = vld [vmem:[%s5046 + $0x2c] sm:$0xf]
        %v5059 = vld [vmem:[%s5046 + $0x30] sm:$0xf]
        %v5060 = vld [vmem:[%s5046 + $0x34] sm:$0xf]
        %v5061 = vld [vmem:[%s5046 + $0x38] sm:$0xf]
        %v5062 = vld [vmem:[%s5046 + $0x3c] sm:$0xf]
        %v5079 = vunpack.c.l.b16 %v5047
        %v5080 = vunpack.c.l.b16 %v5048
        %v5081 = vunpack.c.l.b16 %v5049
        %v5082 = vunpack.c.l.b16 %v5050
        %v5083 = vunpack.c.l.b16 %v5051
        %v5084 = vunpack.c.l.b16 %v5052
        %v5085 = vunpack.c.l.b16 %v5053
        %v5086 = vunpack.c.l.b16 %v5054
        %v5087 = vunpack.c.l.b16 %v5055
        %v5088 = vunpack.c.l.b16 %v5056
        %v5089 = vunpack.c.l.b16 %v5057
        %v5090 = vunpack.c.l.b16 %v5058
        %v5091 = vunpack.c.l.b16 %v5059
        %v5092 = vunpack.c.l.b16 %v5060
        %v5093 = vunpack.c.l.b16 %v5061
        %v5094 = vunpack.c.l.b16 %v5062
        %v5095 = vpack.c.b16 %v5080, %v5079
        %v5096 = vpack.c.b16 %v5082, %v5081
        %v5097 = vpack.c.b16 %v5084, %v5083
        %v5098 = vpack.c.b16 %v5086, %v5085
        %v5099 = vpack.c.b16 %v5088, %v5087
        %v5100 = vpack.c.b16 %v5090, %v5089
        %v5101 = vpack.c.b16 %v5092, %v5091
        %v5102 = vpack.c.b16 %v5094, %v5093
        %5111 = vmatprep.subr.bf16.mxu0 0
        %5112 = vmatpush1.bf16.msra.mxu0 %v5095
        %5113 = vmatprep.subr.bf16.mxu0 0
        %5114 = vmatpush1.bf16.msra.mxu0 %v5096
        %5115 = vmatprep.subr.bf16.mxu0 0
        %5116 = vmatpush1.bf16.msra.mxu0 %v5097
        %5117 = vmatprep.subr.bf16.mxu0 0
        %5118 = vmatpush1.bf16.msra.mxu0 %v5098
        %5119 = vmatprep.subr.bf16.mxu0 0
        %5120 = vmatpush1.bf16.msra.mxu0 %v5099
        %5121 = vmatprep.subr.bf16.mxu0 0
        %5122 = vmatpush1.bf16.msra.mxu0 %v5100
        %5123 = vmatprep.subr.bf16.mxu0 0
        %5124 = vmatpush1.bf16.msra.mxu0 %v5101
        %5125 = vmatprep.subr.bf16.mxu0 0
        %5126 = vmatpush1.bf16.msra.mxu0 %v5102
        %5127 = vmatprep.subr.bf16.mxu0 0
        %5128 = vmatpush1.bf16.msra.mxu0 0
        %5129 = vmatprep.subr.bf16.mxu0 0
        %5130 = vmatpush1.bf16.msra.mxu0 0
        %5131 = vmatprep.subr.bf16.mxu0 0
        %5132 = vmatpush1.bf16.msra.mxu0 0
        %5133 = vmatprep.subr.bf16.mxu0 0
        %5134 = vmatpush1.bf16.msra.mxu0 0
        %5135 = vmatprep.subr.bf16.mxu0 0
        %5136 = vmatpush1.bf16.msra.mxu0 0
        %5137 = vmatprep.subr.bf16.mxu0 0
        %5138 = vmatpush1.bf16.msra.mxu0 0
        %5139 = vmatprep.subr.bf16.mxu0 0
        %5140 = vmatpush1.bf16.msra.mxu0 0
        %5141 = vmatprep.subr.bf16.mxu0 0
        %5142 = vmatpush1.bf16.msra.mxu0 0
        %5143 = vmatprep.mubr.bf16.mxu0 0
        %5144 = vmatmul.mubr.bf16.gmra.mrb[0].mxu0 %v5030
        %v5145 = vpop.f32.mrb[0].mxu0
        %v5146 = vadd.f32 0.0, %v5145
        %v5147 = vpop.f32.mrb[0].mxu0
        %v5148 = vpop.f32.mrb[0].mxu0
        %v5149 = vadd.f32 0.0, %v5148
        %v5150 = vpop.f32.mrb[0].mxu0
        %5151 = vmatprep.mubr.bf16.mxu0 0
        %5152 = vmatmul.mubr.bf16.gmra.mrb[0].mxu0 %v5031
        %v5153 = vpop.f32.mrb[0].mxu0
        %v5154 = vadd.f32 0.0, %v5153
        %v5155 = vpop.f32.mrb[0].mxu0
        %v5156 = vpop.f32.mrb[0].mxu0
        %v5157 = vadd.f32 0.0, %v5156
        %v5158 = vpop.f32.mrb[0].mxu0
        %5159 = vmatprep.mubr.bf16.mxu0 0
        %5160 = vmatmul.mubr.bf16.gmra.mrb[0].mxu0 %v5032
        %v5161 = vpop.f32.mrb[0].mxu0
        %v5162 = vadd.f32 0.0, %v5161
        %v5163 = vpop.f32.mrb[0].mxu0
        %v5164 = vpop.f32.mrb[0].mxu0
        %v5165 = vadd.f32 0.0, %v5164
        %v5166 = vpop.f32.mrb[0].mxu0
        %5167 = vmatprep.mubr.bf16.mxu0 0
        %5168 = vmatmul.mubr.bf16.gmra.mrb[0].mxu0 %v5033
        %v5169 = vpop.f32.mrb[0].mxu0
        %v5170 = vadd.f32 0.0, %v5169
        %v5171 = vpop.f32.mrb[0].mxu0
        %v5172 = vpop.f32.mrb[0].mxu0
        %v5173 = vadd.f32 0.0, %v5172
        %v5174 = vpop.f32.mrb[0].mxu0
        %5175 = vmatprep.mubr.bf16.mxu0 0
        %5176 = vmatmul.mubr.bf16.gmra.mrb[0].mxu0 %v5034
        %v5177 = vpop.f32.mrb[0].mxu0
        %v5178 = vadd.f32 0.0, %v5177
        %v5179 = vpop.f32.mrb[0].mxu0
        %v5180 = vpop.f32.mrb[0].mxu0
        %v5181 = vadd.f32 0.0, %v5180
        %v5182 = vpop.f32.mrb[0].mxu0
        %5183 = vmatprep.mubr.bf16.mxu0 0
        %5184 = vmatmul.mubr.bf16.gmra.mrb[0].mxu0 %v5035
        %v5185 = vpop.f32.mrb[0].mxu0
        %v5186 = vadd.f32 0.0, %v5185
        %v5187 = vpop.f32.mrb[0].mxu0
        %v5188 = vpop.f32.mrb[0].mxu0
        %v5189 = vadd.f32 0.0, %v5188
        %v5190 = vpop.f32.mrb[0].mxu0
        %5191 = vmatprep.mubr.bf16.mxu0 0
        %5192 = vmatmul.mubr.bf16.gmra.mrb[0].mxu0 %v5036
        %v5193 = vpop.f32.mrb[0].mxu0
        %v5194 = vadd.f32 0.0, %v5193
        %v5195 = vpop.f32.mrb[0].mxu0
        %v5196 = vpop.f32.mrb[0].mxu0
        %v5197 = vadd.f32 0.0, %v5196
        %v5198 = vpop.f32.mrb[0].mxu0
        %5199 = vmatprep.mubr.bf16.mxu0 0
        %5200 = vmatmul.mubr.bf16.gmra.mrb[0].mxu0 %v5037
        %v5201 = vpop.f32.mrb[0].mxu0
        %v5202 = vadd.f32 0.0, %v5201
        %v5203 = vpop.f32.mrb[0].mxu0
        %v5204 = vpop.f32.mrb[0].mxu0
        %v5205 = vadd.f32 0.0, %v5204
        %v5206 = vpop.f32.mrb[0].mxu0
        %5207 = vmatprep.mubr.bf16.mxu0 0
        %5208 = vmatmul.mubr.bf16.gmra.mrb[0].mxu0 %v5038
        %v5209 = vpop.f32.mrb[0].mxu0
        %v5210 = vadd.f32 0.0, %v5209
        %v5211 = vpop.f32.mrb[0].mxu0
        %v5212 = vpop.f32.mrb[0].mxu0
        %v5213 = vadd.f32 0.0, %v5212
        %v5214 = vpop.f32.mrb[0].mxu0
        %5215 = vmatprep.mubr.bf16.mxu0 0
        %5216 = vmatmul.mubr.bf16.gmra.mrb[0].mxu0 %v5039
        %v5217 = vpop.f32.mrb[0].mxu0
        %v5218 = vadd.f32 0.0, %v5217
        %v5219 = vpop.f32.mrb[0].mxu0
        %v5220 = vpop.f32.mrb[0].mxu0
        %v5221 = vadd.f32 0.0, %v5220
        %v5222 = vpop.f32.mrb[0].mxu0
        %5223 = vmatprep.mubr.bf16.mxu0 0
        %5224 = vmatmul.mubr.bf16.gmra.mrb[0].mxu0 %v5040
        %v5225 = vpop.f32.mrb[0].mxu0
        %v5226 = vadd.f32 0.0, %v5225
        %v5227 = vpop.f32.mrb[0].mxu0
        %v5228 = vpop.f32.mrb[0].mxu0
        %v5229 = vadd.f32 0.0, %v5228
        %v5230 = vpop.f32.mrb[0].mxu0
        %5231 = vmatprep.mubr.bf16.mxu0 0
        %5232 = vmatmul.mubr.bf16.gmra.mrb[0].mxu0 %v5041
        %v5233 = vpop.f32.mrb[0].mxu0
        %v5234 = vadd.f32 0.0, %v5233
        %v5235 = vpop.f32.mrb[0].mxu0
        %v5236 = vpop.f32.mrb[0].mxu0
        %v5237 = vadd.f32 0.0, %v5236
        %v5238 = vpop.f32.mrb[0].mxu0
        %5239 = vmatprep.mubr.bf16.mxu0 0
        %5240 = vmatmul.mubr.bf16.gmra.mrb[0].mxu0 %v5042
        %v5241 = vpop.f32.mrb[0].mxu0
        %v5242 = vadd.f32 0.0, %v5241
        %v5243 = vpop.f32.mrb[0].mxu0
        %v5244 = vpop.f32.mrb[0].mxu0
        %v5245 = vadd.f32 0.0, %v5244
        %v5246 = vpop.f32.mrb[0].mxu0
        %5247 = vmatprep.mubr.bf16.mxu0 0
        %5248 = vmatmul.mubr.bf16.gmra.mrb[0].mxu0 %v5043
        %v5249 = vpop.f32.mrb[0].mxu0
        %v5250 = vadd.f32 0.0, %v5249
        %v5251 = vpop.f32.mrb[0].mxu0
        %v5252 = vpop.f32.mrb[0].mxu0
        %v5253 = vadd.f32 0.0, %v5252
        %v5254 = vpop.f32.mrb[0].mxu0
        %5255 = vmatprep.mubr.bf16.mxu0 0
        %5256 = vmatmul.mubr.bf16.gmra.mrb[0].mxu0 %v5044
        %v5257 = vpop.f32.mrb[0].mxu0
        %v5258 = vadd.f32 0.0, %v5257
        %v5259 = vpop.f32.mrb[0].mxu0
        %v5260 = vpop.f32.mrb[0].mxu0
        %v5261 = vadd.f32 0.0, %v5260
        %v5262 = vpop.f32.mrb[0].mxu0
        %5263 = vmatprep.mubr.bf16.mxu0 0
        %5264 = vmatmul.mubr.bf16.gmra.mrb[0].mxu0 %v5045
        %v5265 = vpop.f32.mrb[0].mxu0
        %v5266 = vadd.f32 0.0, %v5265
        %v5267 = vpop.f32.mrb[0].mxu0
        %v5268 = vpop.f32.mrb[0].mxu0
        %v5269 = vadd.f32 0.0, %v5268
        %v5270 = vpop.f32.mrb[0].mxu0
        %5271 = vdwg.mxu0
        %v5272 = vadd.f32 %v4965, %v5146
        %v5273 = vadd.f32 %v4966, %v5149
        %v5274 = vadd.f32 %v4967, %v5154
        %v5275 = vadd.f32 %v4968, %v5157
        %v5276 = vadd.f32 %v4969, %v5162
        %v5277 = vadd.f32 %v4970, %v5165
        %v5278 = vadd.f32 %v4971, %v5170
        %v5279 = vadd.f32 %v4972, %v5173
        %v5280 = vadd.f32 %v4973, %v5178
        %v5281 = vadd.f32 %v4974, %v5181
        %v5282 = vadd.f32 %v4975, %v5186
        %v5283 = vadd.f32 %v4976, %v5189
        %v5284 = vadd.f32 %v4977, %v5194
        %v5285 = vadd.f32 %v4978, %v5197
        %v5286 = vadd.f32 %v4979, %v5202
        %v5287 = vadd.f32 %v4980, %v5205
        %v5288 = vadd.f32 %v4981, %v5210
        %v5289 = vadd.f32 %v4982, %v5213
        %v5290 = vadd.f32 %v4983, %v5218
        %v5291 = vadd.f32 %v4984, %v5221
        %v5292 = vadd.f32 %v4985, %v5226
        %v5293 = vadd.f32 %v4986, %v5229
        %v5294 = vadd.f32 %v4987, %v5234
        %v5295 = vadd.f32 %v4988, %v5237
        %v5296 = vadd.f32 %v4989, %v5242
        %v5297 = vadd.f32 %v4990, %v5245
        %v5298 = vadd.f32 %v4991, %v5250
        %v5299 = vadd.f32 %v4992, %v5253
        %v5300 = vadd.f32 %v4993, %v5258
        %v5301 = vadd.f32 %v4994, %v5261
        %v5302 = vadd.f32 %v4995, %v5266
        %v5303 = vadd.f32 %v4996, %v5269
        %v5304 = vld [vmem:[%s4997 + $0x1] sm:$0xff]
        %v5305 = vld [vmem:[%s4997 + $0x9] sm:$0xff]
        %v5306 = vld [vmem:[%s4997 + $0x19] sm:$0xff]
        %v5307 = vld [vmem:[%s4997 + $0x21] sm:$0xff]
        %v5308 = vld [vmem:[%s4997 + $0x31] sm:$0xff]
        %v5309 = vld [vmem:[%s4997 + $0x39] sm:$0xff]
        %v5310 = vld [vmem:[%s4997 + $0x49] sm:$0xff]
        %v5311 = vld [vmem:[%s4997 + $0x51] sm:$0xff]
        %v5312 = vld [vmem:[%s4997 + $0x61] sm:$0xff]
        %v5313 = vld [vmem:[%s4997 + $0x69] sm:$0xff]
        %v5314 = vld [vmem:[%s4997 + $0x79] sm:$0xff]
        %v5315 = vld [vmem:[%s4997 + $0x81] sm:$0xff]
        %v5316 = vld [vmem:[%s4997 + $0x91] sm:$0xff]
        %v5317 = vld [vmem:[%s4997 + $0x99] sm:$0xff]
        %v5318 = vld [vmem:[%s4997 + $0xa9] sm:$0xff]
        %v5319 = vld [vmem:[%s4997 + $0xb1] sm:$0xff]
        %v5320 = vld [vmem:[%s4997 + $0xc1] sm:$0xff]
        %v5321 = vld [vmem:[%s4997 + $0xc9] sm:$0xff]
        %v5322 = vld [vmem:[%s4997 + $0xd9] sm:$0xff]
        %v5323 = vld [vmem:[%s4997 + $0xe1] sm:$0xff]
        %v5324 = vld [vmem:[%s4997 + $0xf1] sm:$0xff]
        %v5325 = vld [vmem:[%s4997 + $0xf9] sm:$0xff]
        %v5326 = vld [vmem:[%s4997 + $0x109] sm:$0xff]
        %v5327 = vld [vmem:[%s4997 + $0x111] sm:$0xff]
        %v5328 = vld [vmem:[%s4997 + $0x121] sm:$0xff]
        %v5329 = vld [vmem:[%s4997 + $0x129] sm:$0xff]
        %v5330 = vld [vmem:[%s4997 + $0x139] sm:$0xff]
        %v5331 = vld [vmem:[%s4997 + $0x141] sm:$0xff]
        %v5332 = vld [vmem:[%s4997 + $0x151] sm:$0xff]
        %v5333 = vld [vmem:[%s4997 + $0x159] sm:$0xff]
        %v5334 = vld [vmem:[%s4997 + $0x169] sm:$0xff]
        %v5335 = vld [vmem:[%s4997 + $0x171] sm:$0xff]
        %v5336 = vpack.c.bf16 %v5305, %v5304
        %v5337 = vpack.c.bf16 %v5307, %v5306
        %v5338 = vpack.c.bf16 %v5309, %v5308
        %v5339 = vpack.c.bf16 %v5311, %v5310
        %v5340 = vpack.c.bf16 %v5313, %v5312
        %v5341 = vpack.c.bf16 %v5315, %v5314
        %v5342 = vpack.c.bf16 %v5317, %v5316
        %v5343 = vpack.c.bf16 %v5319, %v5318
        %v5344 = vpack.c.bf16 %v5321, %v5320
        %v5345 = vpack.c.bf16 %v5323, %v5322
        %v5346 = vpack.c.bf16 %v5325, %v5324
        %v5347 = vpack.c.bf16 %v5327, %v5326
        %v5348 = vpack.c.bf16 %v5329, %v5328
        %v5349 = vpack.c.bf16 %v5331, %v5330
        %v5350 = vpack.c.bf16 %v5333, %v5332
        %v5351 = vpack.c.bf16 %v5335, %v5334
        %s5352 = scalar_lea.vmem %s3, 448
        %v5353 = vld [vmem:[%s5352] sm:$0xf]
        %v5354 = vld [vmem:[%s5352 + $0x4] sm:$0xf]
        %v5355 = vld [vmem:[%s5352 + $0x8] sm:$0xf]
        %v5356 = vld [vmem:[%s5352 + $0xc] sm:$0xf]
        %v5357 = vld [vmem:[%s5352 + $0x10] sm:$0xf]
        %v5358 = vld [vmem:[%s5352 + $0x14] sm:$0xf]
        %v5359 = vld [vmem:[%s5352 + $0x18] sm:$0xf]
        %v5360 = vld [vmem:[%s5352 + $0x1c] sm:$0xf]
        %v5361 = vld [vmem:[%s5352 + $0x20] sm:$0xf]
        %v5362 = vld [vmem:[%s5352 + $0x24] sm:$0xf]
        %v5363 = vld [vmem:[%s5352 + $0x28] sm:$0xf]
        %v5364 = vld [vmem:[%s5352 + $0x2c] sm:$0xf]
        %v5365 = vld [vmem:[%s5352 + $0x30] sm:$0xf]
        %v5366 = vld [vmem:[%s5352 + $0x34] sm:$0xf]
        %v5367 = vld [vmem:[%s5352 + $0x38] sm:$0xf]
        %v5368 = vld [vmem:[%s5352 + $0x3c] sm:$0xf]
        %v5385 = vunpack.c.l.b16 %v5353
        %v5386 = vunpack.c.l.b16 %v5354
        %v5387 = vunpack.c.l.b16 %v5355
        %v5388 = vunpack.c.l.b16 %v5356
        %v5389 = vunpack.c.l.b16 %v5357
        %v5390 = vunpack.c.l.b16 %v5358
        %v5391 = vunpack.c.l.b16 %v5359
        %v5392 = vunpack.c.l.b16 %v5360
        %v5393 = vunpack.c.l.b16 %v5361
        %v5394 = vunpack.c.l.b16 %v5362
        %v5395 = vunpack.c.l.b16 %v5363
        %v5396 = vunpack.c.l.b16 %v5364
        %v5397 = vunpack.c.l.b16 %v5365
        %v5398 = vunpack.c.l.b16 %v5366
        %v5399 = vunpack.c.l.b16 %v5367
        %v5400 = vunpack.c.l.b16 %v5368
        %v5401 = vpack.c.b16 %v5386, %v5385
        %v5402 = vpack.c.b16 %v5388, %v5387
        %v5403 = vpack.c.b16 %v5390, %v5389
        %v5404 = vpack.c.b16 %v5392, %v5391
        %v5405 = vpack.c.b16 %v5394, %v5393
        %v5406 = vpack.c.b16 %v5396, %v5395
        %v5407 = vpack.c.b16 %v5398, %v5397
        %v5408 = vpack.c.b16 %v5400, %v5399
        %5417 = vmatprep.subr.bf16.mxu0 0
        %5418 = vmatpush1.bf16.msra.mxu0 %v5401
        %5419 = vmatprep.subr.bf16.mxu0 0
        %5420 = vmatpush1.bf16.msra.mxu0 %v5402
        %5421 = vmatprep.subr.bf16.mxu0 0
        %5422 = vmatpush1.bf16.msra.mxu0 %v5403
        %5423 = vmatprep.subr.bf16.mxu0 0
        %5424 = vmatpush1.bf16.msra.mxu0 %v5404
        %5425 = vmatprep.subr.bf16.mxu0 0
        %5426 = vmatpush1.bf16.msra.mxu0 %v5405
        %5427 = vmatprep.subr.bf16.mxu0 0
        %5428 = vmatpush1.bf16.msra.mxu0 %v5406
        %5429 = vmatprep.subr.bf16.mxu0 0
        %5430 = vmatpush1.bf16.msra.mxu0 %v5407
        %5431 = vmatprep.subr.bf16.mxu0 0
        %5432 = vmatpush1.bf16.msra.mxu0 %v5408
        %5433 = vmatprep.subr.bf16.mxu0 0
        %5434 = vmatpush1.bf16.msra.mxu0 0
        %5435 = vmatprep.subr.bf16.mxu0 0
        %5436 = vmatpush1.bf16.msra.mxu0 0
        %5437 = vmatprep.subr.bf16.mxu0 0
        %5438 = vmatpush1.bf16.msra.mxu0 0
        %5439 = vmatprep.subr.bf16.mxu0 0
        %5440 = vmatpush1.bf16.msra.mxu0 0
        %5441 = vmatprep.subr.bf16.mxu0 0
        %5442 = vmatpush1.bf16.msra.mxu0 0
        %5443 = vmatprep.subr.bf16.mxu0 0
        %5444 = vmatpush1.bf16.msra.mxu0 0
        %5445 = vmatprep.subr.bf16.mxu0 0
        %5446 = vmatpush1.bf16.msra.mxu0 0
        %5447 = vmatprep.subr.bf16.mxu0 0
        %5448 = vmatpush1.bf16.msra.mxu0 0
        %5449 = vmatprep.mubr.bf16.mxu0 0
        %5450 = vmatmul.mubr.bf16.gmra.mrb[0].mxu0 %v5336
        %v5451 = vpop.f32.mrb[0].mxu0
        %v5452 = vadd.f32 0.0, %v5451
        %v5453 = vpop.f32.mrb[0].mxu0
        %v5454 = vpop.f32.mrb[0].mxu0
        %v5455 = vadd.f32 0.0, %v5454
        %v5456 = vpop.f32.mrb[0].mxu0
        %5457 = vmatprep.mubr.bf16.mxu0 0
        %5458 = vmatmul.mubr.bf16.gmra.mrb[0].mxu0 %v5337
        %v5459 = vpop.f32.mrb[0].mxu0
        %v5460 = vadd.f32 0.0, %v5459
        %v5461 = vpop.f32.mrb[0].mxu0
        %v5462 = vpop.f32.mrb[0].mxu0
        %v5463 = vadd.f32 0.0, %v5462
        %v5464 = vpop.f32.mrb[0].mxu0
        %5465 = vmatprep.mubr.bf16.mxu0 0
        %5466 = vmatmul.mubr.bf16.gmra.mrb[0].mxu0 %v5338
        %v5467 = vpop.f32.mrb[0].mxu0
        %v5468 = vadd.f32 0.0, %v5467
        %v5469 = vpop.f32.mrb[0].mxu0
        %v5470 = vpop.f32.mrb[0].mxu0
        %v5471 = vadd.f32 0.0, %v5470
        %v5472 = vpop.f32.mrb[0].mxu0
        %5473 = vmatprep.mubr.bf16.mxu0 0
        %5474 = vmatmul.mubr.bf16.gmra.mrb[0].mxu0 %v5339
        %v5475 = vpop.f32.mrb[0].mxu0
        %v5476 = vadd.f32 0.0, %v5475
        %v5477 = vpop.f32.mrb[0].mxu0
        %v5478 = vpop.f32.mrb[0].mxu0
        %v5479 = vadd.f32 0.0, %v5478
        %v5480 = vpop.f32.mrb[0].mxu0
        %5481 = vmatprep.mubr.bf16.mxu0 0
        %5482 = vmatmul.mubr.bf16.gmra.mrb[0].mxu0 %v5340
        %v5483 = vpop.f32.mrb[0].mxu0
        %v5484 = vadd.f32 0.0, %v5483
        %v5485 = vpop.f32.mrb[0].mxu0
        %v5486 = vpop.f32.mrb[0].mxu0
        %v5487 = vadd.f32 0.0, %v5486
        %v5488 = vpop.f32.mrb[0].mxu0
        %5489 = vmatprep.mubr.bf16.mxu0 0
        %5490 = vmatmul.mubr.bf16.gmra.mrb[0].mxu0 %v5341
        %v5491 = vpop.f32.mrb[0].mxu0
        %v5492 = vadd.f32 0.0, %v5491
        %v5493 = vpop.f32.mrb[0].mxu0
        %v5494 = vpop.f32.mrb[0].mxu0
        %v5495 = vadd.f32 0.0, %v5494
        %v5496 = vpop.f32.mrb[0].mxu0
        %5497 = vmatprep.mubr.bf16.mxu0 0
        %5498 = vmatmul.mubr.bf16.gmra.mrb[0].mxu0 %v5342
        %v5499 = vpop.f32.mrb[0].mxu0
        %v5500 = vadd.f32 0.0, %v5499
        %v5501 = vpop.f32.mrb[0].mxu0
        %v5502 = vpop.f32.mrb[0].mxu0
        %v5503 = vadd.f32 0.0, %v5502
        %v5504 = vpop.f32.mrb[0].mxu0
        %5505 = vmatprep.mubr.bf16.mxu0 0
        %5506 = vmatmul.mubr.bf16.gmra.mrb[0].mxu0 %v5343
        %v5507 = vpop.f32.mrb[0].mxu0
        %v5508 = vadd.f32 0.0, %v5507
        %v5509 = vpop.f32.mrb[0].mxu0
        %v5510 = vpop.f32.mrb[0].mxu0
        %v5511 = vadd.f32 0.0, %v5510
        %v5512 = vpop.f32.mrb[0].mxu0
        %5513 = vmatprep.mubr.bf16.mxu0 0
        %5514 = vmatmul.mubr.bf16.gmra.mrb[0].mxu0 %v5344
        %v5515 = vpop.f32.mrb[0].mxu0
        %v5516 = vadd.f32 0.0, %v5515
        %v5517 = vpop.f32.mrb[0].mxu0
        %v5518 = vpop.f32.mrb[0].mxu0
        %v5519 = vadd.f32 0.0, %v5518
        %v5520 = vpop.f32.mrb[0].mxu0
        %5521 = vmatprep.mubr.bf16.mxu0 0
        %5522 = vmatmul.mubr.bf16.gmra.mrb[0].mxu0 %v5345
        %v5523 = vpop.f32.mrb[0].mxu0
        %v5524 = vadd.f32 0.0, %v5523
        %v5525 = vpop.f32.mrb[0].mxu0
        %v5526 = vpop.f32.mrb[0].mxu0
        %v5527 = vadd.f32 0.0, %v5526
        %v5528 = vpop.f32.mrb[0].mxu0
        %5529 = vmatprep.mubr.bf16.mxu0 0
        %5530 = vmatmul.mubr.bf16.gmra.mrb[0].mxu0 %v5346
        %v5531 = vpop.f32.mrb[0].mxu0
        %v5532 = vadd.f32 0.0, %v5531
        %v5533 = vpop.f32.mrb[0].mxu0
        %v5534 = vpop.f32.mrb[0].mxu0
        %v5535 = vadd.f32 0.0, %v5534
        %v5536 = vpop.f32.mrb[0].mxu0
        %5537 = vmatprep.mubr.bf16.mxu0 0
        %5538 = vmatmul.mubr.bf16.gmra.mrb[0].mxu0 %v5347
        %v5539 = vpop.f32.mrb[0].mxu0
        %v5540 = vadd.f32 0.0, %v5539
        %v5541 = vpop.f32.mrb[0].mxu0
        %v5542 = vpop.f32.mrb[0].mxu0
        %v5543 = vadd.f32 0.0, %v5542
        %v5544 = vpop.f32.mrb[0].mxu0
        %5545 = vmatprep.mubr.bf16.mxu0 0
        %5546 = vmatmul.mubr.bf16.gmra.mrb[0].mxu0 %v5348
        %v5547 = vpop.f32.mrb[0].mxu0
        %v5548 = vadd.f32 0.0, %v5547
        %v5549 = vpop.f32.mrb[0].mxu0
        %v5550 = vpop.f32.mrb[0].mxu0
        %v5551 = vadd.f32 0.0, %v5550
        %v5552 = vpop.f32.mrb[0].mxu0
        %5553 = vmatprep.mubr.bf16.mxu0 0
        %5554 = vmatmul.mubr.bf16.gmra.mrb[0].mxu0 %v5349
        %v5555 = vpop.f32.mrb[0].mxu0
        %v5556 = vadd.f32 0.0, %v5555
        %v5557 = vpop.f32.mrb[0].mxu0
        %v5558 = vpop.f32.mrb[0].mxu0
        %v5559 = vadd.f32 0.0, %v5558
        %v5560 = vpop.f32.mrb[0].mxu0
        %5561 = vmatprep.mubr.bf16.mxu0 0
        %5562 = vmatmul.mubr.bf16.gmra.mrb[0].mxu0 %v5350
        %v5563 = vpop.f32.mrb[0].mxu0
        %v5564 = vadd.f32 0.0, %v5563
        %v5565 = vpop.f32.mrb[0].mxu0
        %v5566 = vpop.f32.mrb[0].mxu0
        %v5567 = vadd.f32 0.0, %v5566
        %v5568 = vpop.f32.mrb[0].mxu0
        %5569 = vmatprep.mubr.bf16.mxu0 0
        %5570 = vmatmul.mubr.bf16.gmra.mrb[0].mxu0 %v5351
        %v5571 = vpop.f32.mrb[0].mxu0
        %v5572 = vadd.f32 0.0, %v5571
        %v5573 = vpop.f32.mrb[0].mxu0
        %v5574 = vpop.f32.mrb[0].mxu0
        %v5575 = vadd.f32 0.0, %v5574
        %v5576 = vpop.f32.mrb[0].mxu0
        %5577 = vdwg.mxu0
        %v5578 = vadd.f32 %v5272, %v5452
        %v5579 = vadd.f32 %v5273, %v5455
        %v5580 = vadd.f32 %v5274, %v5460
        %v5581 = vadd.f32 %v5275, %v5463
        %v5582 = vadd.f32 %v5276, %v5468
        %v5583 = vadd.f32 %v5277, %v5471
        %v5584 = vadd.f32 %v5278, %v5476
        %v5585 = vadd.f32 %v5279, %v5479
        %v5586 = vadd.f32 %v5280, %v5484
        %v5587 = vadd.f32 %v5281, %v5487
        %v5588 = vadd.f32 %v5282, %v5492
        %v5589 = vadd.f32 %v5283, %v5495
        %v5590 = vadd.f32 %v5284, %v5500
        %v5591 = vadd.f32 %v5285, %v5503
        %v5592 = vadd.f32 %v5286, %v5508
        %v5593 = vadd.f32 %v5287, %v5511
        %v5594 = vadd.f32 %v5288, %v5516
        %v5595 = vadd.f32 %v5289, %v5519
        %v5596 = vadd.f32 %v5290, %v5524
        %v5597 = vadd.f32 %v5291, %v5527
        %v5598 = vadd.f32 %v5292, %v5532
        %v5599 = vadd.f32 %v5293, %v5535
        %v5600 = vadd.f32 %v5294, %v5540
        %v5601 = vadd.f32 %v5295, %v5543
        %v5602 = vadd.f32 %v5296, %v5548
        %v5603 = vadd.f32 %v5297, %v5551
        %v5604 = vadd.f32 %v5298, %v5556
        %v5605 = vadd.f32 %v5299, %v5559
        %v5606 = vadd.f32 %v5300, %v5564
        %v5607 = vadd.f32 %v5301, %v5567
        %v5608 = vadd.f32 %v5302, %v5572
        %v5609 = vadd.f32 %v5303, %v5575
        %v5610 = vld [vmem:[%s4997 + $0x2] sm:$0xff]
        %v5611 = vld [vmem:[%s4997 + $0xa] sm:$0xff]
        %v5612 = vld [vmem:[%s4997 + $0x1a] sm:$0xff]
        %v5613 = vld [vmem:[%s4997 + $0x22] sm:$0xff]
        %v5614 = vld [vmem:[%s4997 + $0x32] sm:$0xff]
        %v5615 = vld [vmem:[%s4997 + $0x3a] sm:$0xff]
        %v5616 = vld [vmem:[%s4997 + $0x4a] sm:$0xff]
        %v5617 = vld [vmem:[%s4997 + $0x52] sm:$0xff]
        %v5618 = vld [vmem:[%s4997 + $0x62] sm:$0xff]
        %v5619 = vld [vmem:[%s4997 + $0x6a] sm:$0xff]
        %v5620 = vld [vmem:[%s4997 + $0x7a] sm:$0xff]
        %v5621 = vld [vmem:[%s4997 + $0x82] sm:$0xff]
        %v5622 = vld [vmem:[%s4997 + $0x92] sm:$0xff]
        %v5623 = vld [vmem:[%s4997 + $0x9a] sm:$0xff]
        %v5624 = vld [vmem:[%s4997 + $0xaa] sm:$0xff]
        %v5625 = vld [vmem:[%s4997 + $0xb2] sm:$0xff]
        %v5626 = vld [vmem:[%s4997 + $0xc2] sm:$0xff]
        %v5627 = vld [vmem:[%s4997 + $0xca] sm:$0xff]
        %v5628 = vld [vmem:[%s4997 + $0xda] sm:$0xff]
        %v5629 = vld [vmem:[%s4997 + $0xe2] sm:$0xff]
        %v5630 = vld [vmem:[%s4997 + $0xf2] sm:$0xff]
        %v5631 = vld [vmem:[%s4997 + $0xfa] sm:$0xff]
        %v5632 = vld [vmem:[%s4997 + $0x10a] sm:$0xff]
        %v5633 = vld [vmem:[%s4997 + $0x112] sm:$0xff]
        %v5634 = vld [vmem:[%s4997 + $0x122] sm:$0xff]
        %v5635 = vld [vmem:[%s4997 + $0x12a] sm:$0xff]
        %v5636 = vld [vmem:[%s4997 + $0x13a] sm:$0xff]
        %v5637 = vld [vmem:[%s4997 + $0x142] sm:$0xff]
        %v5638 = vld [vmem:[%s4997 + $0x152] sm:$0xff]
        %v5639 = vld [vmem:[%s4997 + $0x15a] sm:$0xff]
        %v5640 = vld [vmem:[%s4997 + $0x16a] sm:$0xff]
        %v5641 = vld [vmem:[%s4997 + $0x172] sm:$0xff]
        %v5642 = vpack.c.bf16 %v5611, %v5610
        %v5643 = vpack.c.bf16 %v5613, %v5612
        %v5644 = vpack.c.bf16 %v5615, %v5614
        %v5645 = vpack.c.bf16 %v5617, %v5616
        %v5646 = vpack.c.bf16 %v5619, %v5618
        %v5647 = vpack.c.bf16 %v5621, %v5620
        %v5648 = vpack.c.bf16 %v5623, %v5622
        %v5649 = vpack.c.bf16 %v5625, %v5624
        %v5650 = vpack.c.bf16 %v5627, %v5626
        %v5651 = vpack.c.bf16 %v5629, %v5628
        %v5652 = vpack.c.bf16 %v5631, %v5630
        %v5653 = vpack.c.bf16 %v5633, %v5632
        %v5654 = vpack.c.bf16 %v5635, %v5634
        %v5655 = vpack.c.bf16 %v5637, %v5636
        %v5656 = vpack.c.bf16 %v5639, %v5638
        %v5657 = vpack.c.bf16 %v5641, %v5640
        %s5658 = scalar_lea.vmem %s3, 512
        %v5659 = vld [vmem:[%s5658] sm:$0xf]
        %v5660 = vld [vmem:[%s5658 + $0x4] sm:$0xf]
        %v5661 = vld [vmem:[%s5658 + $0x8] sm:$0xf]
        %v5662 = vld [vmem:[%s5658 + $0xc] sm:$0xf]
        %v5663 = vld [vmem:[%s5658 + $0x10] sm:$0xf]
        %v5664 = vld [vmem:[%s5658 + $0x14] sm:$0xf]
        %v5665 = vld [vmem:[%s5658 + $0x18] sm:$0xf]
        %v5666 = vld [vmem:[%s5658 + $0x1c] sm:$0xf]
        %v5667 = vld [vmem:[%s5658 + $0x20] sm:$0xf]
        %v5668 = vld [vmem:[%s5658 + $0x24] sm:$0xf]
        %v5669 = vld [vmem:[%s5658 + $0x28] sm:$0xf]
        %v5670 = vld [vmem:[%s5658 + $0x2c] sm:$0xf]
        %v5671 = vld [vmem:[%s5658 + $0x30] sm:$0xf]
        %v5672 = vld [vmem:[%s5658 + $0x34] sm:$0xf]
        %v5673 = vld [vmem:[%s5658 + $0x38] sm:$0xf]
        %v5674 = vld [vmem:[%s5658 + $0x3c] sm:$0xf]
        %v5691 = vunpack.c.l.b16 %v5659
        %v5692 = vunpack.c.l.b16 %v5660
        %v5693 = vunpack.c.l.b16 %v5661
        %v5694 = vunpack.c.l.b16 %v5662
        %v5695 = vunpack.c.l.b16 %v5663
        %v5696 = vunpack.c.l.b16 %v5664
        %v5697 = vunpack.c.l.b16 %v5665
        %v5698 = vunpack.c.l.b16 %v5666
        %v5699 = vunpack.c.l.b16 %v5667
        %v5700 = vunpack.c.l.b16 %v5668
        %v5701 = vunpack.c.l.b16 %v5669
        %v5702 = vunpack.c.l.b16 %v5670
        %v5703 = vunpack.c.l.b16 %v5671
        %v5704 = vunpack.c.l.b16 %v5672
        %v5705 = vunpack.c.l.b16 %v5673
        %v5706 = vunpack.c.l.b16 %v5674
        %v5707 = vpack.c.b16 %v5692, %v5691
        %v5708 = vpack.c.b16 %v5694, %v5693
        %v5709 = vpack.c.b16 %v5696, %v5695
        %v5710 = vpack.c.b16 %v5698, %v5697
        %v5711 = vpack.c.b16 %v5700, %v5699
        %v5712 = vpack.c.b16 %v5702, %v5701
        %v5713 = vpack.c.b16 %v5704, %v5703
        %v5714 = vpack.c.b16 %v5706, %v5705
        %5723 = vmatprep.subr.bf16.mxu0 0
        %5724 = vmatpush1.bf16.msra.mxu0 %v5707
        %5725 = vmatprep.subr.bf16.mxu0 0
        %5726 = vmatpush1.bf16.msra.mxu0 %v5708
        %5727 = vmatprep.subr.bf16.mxu0 0
        %5728 = vmatpush1.bf16.msra.mxu0 %v5709
        %5729 = vmatprep.subr.bf16.mxu0 0
        %5730 = vmatpush1.bf16.msra.mxu0 %v5710
        %5731 = vmatprep.subr.bf16.mxu0 0
        %5732 = vmatpush1.bf16.msra.mxu0 %v5711
        %5733 = vmatprep.subr.bf16.mxu0 0
        %5734 = vmatpush1.bf16.msra.mxu0 %v5712
        %5735 = vmatprep.subr.bf16.mxu0 0
        %5736 = vmatpush1.bf16.msra.mxu0 %v5713
        %5737 = vmatprep.subr.bf16.mxu0 0
        %5738 = vmatpush1.bf16.msra.mxu0 %v5714
        %5739 = vmatprep.subr.bf16.mxu0 0
        %5740 = vmatpush1.bf16.msra.mxu0 0
        %5741 = vmatprep.subr.bf16.mxu0 0
        %5742 = vmatpush1.bf16.msra.mxu0 0
        %5743 = vmatprep.subr.bf16.mxu0 0
        %5744 = vmatpush1.bf16.msra.mxu0 0
        %5745 = vmatprep.subr.bf16.mxu0 0
        %5746 = vmatpush1.bf16.msra.mxu0 0
        %5747 = vmatprep.subr.bf16.mxu0 0
        %5748 = vmatpush1.bf16.msra.mxu0 0
        %5749 = vmatprep.subr.bf16.mxu0 0
        %5750 = vmatpush1.bf16.msra.mxu0 0
        %5751 = vmatprep.subr.bf16.mxu0 0
        %5752 = vmatpush1.bf16.msra.mxu0 0
        %5753 = vmatprep.subr.bf16.mxu0 0
        %5754 = vmatpush1.bf16.msra.mxu0 0
        %5755 = vmatprep.mubr.bf16.mxu0 0
        %5756 = vmatmul.mubr.bf16.gmra.mrb[0].mxu0 %v5642
        %v5757 = vpop.f32.mrb[0].mxu0
        %v5758 = vadd.f32 0.0, %v5757
        %v5759 = vpop.f32.mrb[0].mxu0
        %v5760 = vpop.f32.mrb[0].mxu0
        %v5761 = vadd.f32 0.0, %v5760
        %v5762 = vpop.f32.mrb[0].mxu0
        %5763 = vmatprep.mubr.bf16.mxu0 0
        %5764 = vmatmul.mubr.bf16.gmra.mrb[0].mxu0 %v5643
        %v5765 = vpop.f32.mrb[0].mxu0
        %v5766 = vadd.f32 0.0, %v5765
        %v5767 = vpop.f32.mrb[0].mxu0
        %v5768 = vpop.f32.mrb[0].mxu0
        %v5769 = vadd.f32 0.0, %v5768
        %v5770 = vpop.f32.mrb[0].mxu0
        %5771 = vmatprep.mubr.bf16.mxu0 0
        %5772 = vmatmul.mubr.bf16.gmra.mrb[0].mxu0 %v5644
        %v5773 = vpop.f32.mrb[0].mxu0
        %v5774 = vadd.f32 0.0, %v5773
        %v5775 = vpop.f32.mrb[0].mxu0
        %v5776 = vpop.f32.mrb[0].mxu0
        %v5777 = vadd.f32 0.0, %v5776
        %v5778 = vpop.f32.mrb[0].mxu0
        %5779 = vmatprep.mubr.bf16.mxu0 0
        %5780 = vmatmul.mubr.bf16.gmra.mrb[0].mxu0 %v5645
        %v5781 = vpop.f32.mrb[0].mxu0
        %v5782 = vadd.f32 0.0, %v5781
        %v5783 = vpop.f32.mrb[0].mxu0
        %v5784 = vpop.f32.mrb[0].mxu0
        %v5785 = vadd.f32 0.0, %v5784
        %v5786 = vpop.f32.mrb[0].mxu0
        %5787 = vmatprep.mubr.bf16.mxu0 0
        %5788 = vmatmul.mubr.bf16.gmra.mrb[0].mxu0 %v5646
        %v5789 = vpop.f32.mrb[0].mxu0
        %v5790 = vadd.f32 0.0, %v5789
        %v5791 = vpop.f32.mrb[0].mxu0
        %v5792 = vpop.f32.mrb[0].mxu0
        %v5793 = vadd.f32 0.0, %v5792
        %v5794 = vpop.f32.mrb[0].mxu0
        %5795 = vmatprep.mubr.bf16.mxu0 0
        %5796 = vmatmul.mubr.bf16.gmra.mrb[0].mxu0 %v5647
        %v5797 = vpop.f32.mrb[0].mxu0
        %v5798 = vadd.f32 0.0, %v5797
        %v5799 = vpop.f32.mrb[0].mxu0
        %v5800 = vpop.f32.mrb[0].mxu0
        %v5801 = vadd.f32 0.0, %v5800
        %v5802 = vpop.f32.mrb[0].mxu0
        %5803 = vmatprep.mubr.bf16.mxu0 0
        %5804 = vmatmul.mubr.bf16.gmra.mrb[0].mxu0 %v5648
        %v5805 = vpop.f32.mrb[0].mxu0
        %v5806 = vadd.f32 0.0, %v5805
        %v5807 = vpop.f32.mrb[0].mxu0
        %v5808 = vpop.f32.mrb[0].mxu0
        %v5809 = vadd.f32 0.0, %v5808
        %v5810 = vpop.f32.mrb[0].mxu0
        %5811 = vmatprep.mubr.bf16.mxu0 0
        %5812 = vmatmul.mubr.bf16.gmra.mrb[0].mxu0 %v5649
        %v5813 = vpop.f32.mrb[0].mxu0
        %v5814 = vadd.f32 0.0, %v5813
        %v5815 = vpop.f32.mrb[0].mxu0
        %v5816 = vpop.f32.mrb[0].mxu0
        %v5817 = vadd.f32 0.0, %v5816
        %v5818 = vpop.f32.mrb[0].mxu0
        %5819 = vmatprep.mubr.bf16.mxu0 0
        %5820 = vmatmul.mubr.bf16.gmra.mrb[0].mxu0 %v5650
        %v5821 = vpop.f32.mrb[0].mxu0
        %v5822 = vadd.f32 0.0, %v5821
        %v5823 = vpop.f32.mrb[0].mxu0
        %v5824 = vpop.f32.mrb[0].mxu0
        %v5825 = vadd.f32 0.0, %v5824
        %v5826 = vpop.f32.mrb[0].mxu0
        %5827 = vmatprep.mubr.bf16.mxu0 0
        %5828 = vmatmul.mubr.bf16.gmra.mrb[0].mxu0 %v5651
        %v5829 = vpop.f32.mrb[0].mxu0
        %v5830 = vadd.f32 0.0, %v5829
        %v5831 = vpop.f32.mrb[0].mxu0
        %v5832 = vpop.f32.mrb[0].mxu0
        %v5833 = vadd.f32 0.0, %v5832
        %v5834 = vpop.f32.mrb[0].mxu0
        %5835 = vmatprep.mubr.bf16.mxu0 0
        %5836 = vmatmul.mubr.bf16.gmra.mrb[0].mxu0 %v5652
        %v5837 = vpop.f32.mrb[0].mxu0
        %v5838 = vadd.f32 0.0, %v5837
        %v5839 = vpop.f32.mrb[0].mxu0
        %v5840 = vpop.f32.mrb[0].mxu0
        %v5841 = vadd.f32 0.0, %v5840
        %v5842 = vpop.f32.mrb[0].mxu0
        %5843 = vmatprep.mubr.bf16.mxu0 0
        %5844 = vmatmul.mubr.bf16.gmra.mrb[0].mxu0 %v5653
        %v5845 = vpop.f32.mrb[0].mxu0
        %v5846 = vadd.f32 0.0, %v5845
        %v5847 = vpop.f32.mrb[0].mxu0
        %v5848 = vpop.f32.mrb[0].mxu0
        %v5849 = vadd.f32 0.0, %v5848
        %v5850 = vpop.f32.mrb[0].mxu0
        %5851 = vmatprep.mubr.bf16.mxu0 0
        %5852 = vmatmul.mubr.bf16.gmra.mrb[0].mxu0 %v5654
        %v5853 = vpop.f32.mrb[0].mxu0
        %v5854 = vadd.f32 0.0, %v5853
        %v5855 = vpop.f32.mrb[0].mxu0
        %v5856 = vpop.f32.mrb[0].mxu0
        %v5857 = vadd.f32 0.0, %v5856
        %v5858 = vpop.f32.mrb[0].mxu0
        %5859 = vmatprep.mubr.bf16.mxu0 0
        %5860 = vmatmul.mubr.bf16.gmra.mrb[0].mxu0 %v5655
        %v5861 = vpop.f32.mrb[0].mxu0
        %v5862 = vadd.f32 0.0, %v5861
        %v5863 = vpop.f32.mrb[0].mxu0
        %v5864 = vpop.f32.mrb[0].mxu0
        %v5865 = vadd.f32 0.0, %v5864
        %v5866 = vpop.f32.mrb[0].mxu0
        %5867 = vmatprep.mubr.bf16.mxu0 0
        %5868 = vmatmul.mubr.bf16.gmra.mrb[0].mxu0 %v5656
        %v5869 = vpop.f32.mrb[0].mxu0
        %v5870 = vadd.f32 0.0, %v5869
        %v5871 = vpop.f32.mrb[0].mxu0
        %v5872 = vpop.f32.mrb[0].mxu0
        %v5873 = vadd.f32 0.0, %v5872
        %v5874 = vpop.f32.mrb[0].mxu0
        %5875 = vmatprep.mubr.bf16.mxu0 0
        %5876 = vmatmul.mubr.bf16.gmra.mrb[0].mxu0 %v5657
        %v5877 = vpop.f32.mrb[0].mxu0
        %v5878 = vadd.f32 0.0, %v5877
        %v5879 = vpop.f32.mrb[0].mxu0
        %v5880 = vpop.f32.mrb[0].mxu0
        %v5881 = vadd.f32 0.0, %v5880
        %v5882 = vpop.f32.mrb[0].mxu0
        %5883 = vdwg.mxu0
        %v5884 = vadd.f32 %v5578, %v5758
        %v5885 = vadd.f32 %v5579, %v5761
        %v5886 = vadd.f32 %v5580, %v5766
        %v5887 = vadd.f32 %v5581, %v5769
        %v5888 = vadd.f32 %v5582, %v5774
        %v5889 = vadd.f32 %v5583, %v5777
        %v5890 = vadd.f32 %v5584, %v5782
        %v5891 = vadd.f32 %v5585, %v5785
        %v5892 = vadd.f32 %v5586, %v5790
        %v5893 = vadd.f32 %v5587, %v5793
        %v5894 = vadd.f32 %v5588, %v5798
        %v5895 = vadd.f32 %v5589, %v5801
        %v5896 = vadd.f32 %v5590, %v5806
        %v5897 = vadd.f32 %v5591, %v5809
        %v5898 = vadd.f32 %v5592, %v5814
        %v5899 = vadd.f32 %v5593, %v5817
        %v5900 = vadd.f32 %v5594, %v5822
        %v5901 = vadd.f32 %v5595, %v5825
        %v5902 = vadd.f32 %v5596, %v5830
        %v5903 = vadd.f32 %v5597, %v5833
        %v5904 = vadd.f32 %v5598, %v5838
        %v5905 = vadd.f32 %v5599, %v5841
        %v5906 = vadd.f32 %v5600, %v5846
        %v5907 = vadd.f32 %v5601, %v5849
        %v5908 = vadd.f32 %v5602, %v5854
        %v5909 = vadd.f32 %v5603, %v5857
        %v5910 = vadd.f32 %v5604, %v5862
        %v5911 = vadd.f32 %v5605, %v5865
        %v5912 = vadd.f32 %v5606, %v5870
        %v5913 = vadd.f32 %v5607, %v5873
        %v5914 = vadd.f32 %v5608, %v5878
        %v5915 = vadd.f32 %v5609, %v5881
        %v5916 = vld [vmem:[%s4] sm:$0x1]
        %v5917 = vlaneseq
        %v5918 = vshrl.u32 %v5917, 7
        %v5919 = vsub.s32 0, %v5918
        %v5920 = vrot.slane %v5916, %v5919
        %v5921 = vmul.f32 %v5884, %v5920
        %v5922 = vmul.f32 %v5885, %v5920
        %v5923 = vmul.f32 %v5886, %v5920
        %v5924 = vmul.f32 %v5887, %v5920
        %v5925 = vmul.f32 %v5888, %v5920
        %v5926 = vmul.f32 %v5889, %v5920
        %v5927 = vmul.f32 %v5890, %v5920
        %v5928 = vmul.f32 %v5891, %v5920
        %v5929 = vmul.f32 %v5892, %v5920
        %v5930 = vmul.f32 %v5893, %v5920
        %v5931 = vmul.f32 %v5894, %v5920
        %v5932 = vmul.f32 %v5895, %v5920
        %v5933 = vmul.f32 %v5896, %v5920
        %v5934 = vmul.f32 %v5897, %v5920
        %v5935 = vmul.f32 %v5898, %v5920
        %v5936 = vmul.f32 %v5899, %v5920
        %v5937 = vmul.f32 %v5900, %v5920
        %v5938 = vmul.f32 %v5901, %v5920
        %v5939 = vmul.f32 %v5902, %v5920
        %v5940 = vmul.f32 %v5903, %v5920
        %v5941 = vmul.f32 %v5904, %v5920
        %v5942 = vmul.f32 %v5905, %v5920
        %v5943 = vmul.f32 %v5906, %v5920
        %v5944 = vmul.f32 %v5907, %v5920
        %v5945 = vmul.f32 %v5908, %v5920
        %v5946 = vmul.f32 %v5909, %v5920
        %v5947 = vmul.f32 %v5910, %v5920
        %v5948 = vmul.f32 %v5911, %v5920
        %v5949 = vmul.f32 %v5912, %v5920
        %v5950 = vmul.f32 %v5913, %v5920
        %v5951 = vmul.f32 %v5914, %v5920
        %v5952 = vmul.f32 %v5915, %v5920
        %v5953 = vld [vmem:[%s4 + $0x1] sm:$0x1]
        %v5954 = vlaneseq
        %v5955 = vshrl.u32 %v5954, 7
        %v5956 = vsub.s32 0, %v5955
        %v5957 = vrot.slane %v5953, %v5956
        %v5958 = vadd.f32 %v5921, %v5957
        %v5959 = vadd.f32 %v5922, %v5957
        %v5960 = vadd.f32 %v5923, %v5957
        %v5961 = vadd.f32 %v5924, %v5957
        %v5962 = vadd.f32 %v5925, %v5957
        %v5963 = vadd.f32 %v5926, %v5957
        %v5964 = vadd.f32 %v5927, %v5957
        %v5965 = vadd.f32 %v5928, %v5957
        %v5966 = vadd.f32 %v5929, %v5957
        %v5967 = vadd.f32 %v5930, %v5957
        %v5968 = vadd.f32 %v5931, %v5957
        %v5969 = vadd.f32 %v5932, %v5957
        %v5970 = vadd.f32 %v5933, %v5957
        %v5971 = vadd.f32 %v5934, %v5957
        %v5972 = vadd.f32 %v5935, %v5957
        %v5973 = vadd.f32 %v5936, %v5957
        %v5974 = vadd.f32 %v5937, %v5957
        %v5975 = vadd.f32 %v5938, %v5957
        %v5976 = vadd.f32 %v5939, %v5957
        %v5977 = vadd.f32 %v5940, %v5957
        %v5978 = vadd.f32 %v5941, %v5957
        %v5979 = vadd.f32 %v5942, %v5957
        %v5980 = vadd.f32 %v5943, %v5957
        %v5981 = vadd.f32 %v5944, %v5957
        %v5982 = vadd.f32 %v5945, %v5957
        %v5983 = vadd.f32 %v5946, %v5957
        %v5984 = vadd.f32 %v5947, %v5957
        %v5985 = vadd.f32 %v5948, %v5957
        %v5986 = vadd.f32 %v5949, %v5957
        %v5987 = vadd.f32 %v5950, %v5957
        %v5988 = vadd.f32 %v5951, %v5957
        %v5989 = vadd.f32 %v5952, %v5957
        %v5990 = vld [vmem:[%s222] sm:$0xff]
        %v5991 = vld [vmem:[%s222 + $0x8] sm:$0xff]
        %v5992 = vld [vmem:[%s222 + $0x10] sm:$0xff]
        %v5993 = vld [vmem:[%s222 + $0x18] sm:$0xff]
        %v5994 = vld [vmem:[%s222 + $0x20] sm:$0xff]
        %v5995 = vld [vmem:[%s222 + $0x28] sm:$0xff]
        %v5996 = vld [vmem:[%s222 + $0x30] sm:$0xff]
        %v5997 = vld [vmem:[%s222 + $0x38] sm:$0xff]
        %v5998 = vld [vmem:[%s222 + $0x40] sm:$0xff]
        %v5999 = vld [vmem:[%s222 + $0x48] sm:$0xff]
        %v6000 = vld [vmem:[%s222 + $0x50] sm:$0xff]
        %v6001 = vld [vmem:[%s222 + $0x58] sm:$0xff]
        %v6002 = vld [vmem:[%s222 + $0x60] sm:$0xff]
        %v6003 = vld [vmem:[%s222 + $0x68] sm:$0xff]
        %v6004 = vld [vmem:[%s222 + $0x70] sm:$0xff]
        %v6005 = vld [vmem:[%s222 + $0x78] sm:$0xff]
        %v6006 = vld [vmem:[%s222 + $0x80] sm:$0xff]
        %v6007 = vld [vmem:[%s222 + $0x88] sm:$0xff]
        %v6008 = vld [vmem:[%s222 + $0x90] sm:$0xff]
        %v6009 = vld [vmem:[%s222 + $0x98] sm:$0xff]
        %v6010 = vld [vmem:[%s222 + $0xa0] sm:$0xff]
        %v6011 = vld [vmem:[%s222 + $0xa8] sm:$0xff]
        %v6012 = vld [vmem:[%s222 + $0xb0] sm:$0xff]
        %v6013 = vld [vmem:[%s222 + $0xb8] sm:$0xff]
        %v6014 = vld [vmem:[%s222 + $0xc0] sm:$0xff]
        %v6015 = vld [vmem:[%s222 + $0xc8] sm:$0xff]
        %v6016 = vld [vmem:[%s222 + $0xd0] sm:$0xff]
        %v6017 = vld [vmem:[%s222 + $0xd8] sm:$0xff]
        %v6018 = vld [vmem:[%s222 + $0xe0] sm:$0xff]
        %v6019 = vld [vmem:[%s222 + $0xe8] sm:$0xff]
        %v6020 = vld [vmem:[%s222 + $0xf0] sm:$0xff]
        %v6021 = vld [vmem:[%s222 + $0xf8] sm:$0xff]
        %v6022 = vadd.f32 %v5958, %v5990
        %v6023 = vadd.f32 %v5959, %v5991
        %v6024 = vadd.f32 %v5960, %v5992
        %v6025 = vadd.f32 %v5961, %v5993
        %v6026 = vadd.f32 %v5962, %v5994
        %v6027 = vadd.f32 %v5963, %v5995
        %v6028 = vadd.f32 %v5964, %v5996
        %v6029 = vadd.f32 %v5965, %v5997
        %v6030 = vadd.f32 %v5966, %v5998
        %v6031 = vadd.f32 %v5967, %v5999
        %v6032 = vadd.f32 %v5968, %v6000
        %v6033 = vadd.f32 %v5969, %v6001
        %v6034 = vadd.f32 %v5970, %v6002
        %v6035 = vadd.f32 %v5971, %v6003
        %v6036 = vadd.f32 %v5972, %v6004
        %v6037 = vadd.f32 %v5973, %v6005
        %v6038 = vadd.f32 %v5974, %v6006
        %v6039 = vadd.f32 %v5975, %v6007
        %v6040 = vadd.f32 %v5976, %v6008
        %v6041 = vadd.f32 %v5977, %v6009
        %v6042 = vadd.f32 %v5978, %v6010
        %v6043 = vadd.f32 %v5979, %v6011
        %v6044 = vadd.f32 %v5980, %v6012
        %v6045 = vadd.f32 %v5981, %v6013
        %v6046 = vadd.f32 %v5982, %v6014
        %v6047 = vadd.f32 %v5983, %v6015
        %v6048 = vadd.f32 %v5984, %v6016
        %v6049 = vadd.f32 %v5985, %v6017
        %v6050 = vadd.f32 %v5986, %v6018
        %v6051 = vadd.f32 %v5987, %v6019
        %v6052 = vadd.f32 %v5988, %v6020
        %v6053 = vadd.f32 %v5989, %v6021
        %v6054 = vmax.f32 %v6022, 0.0
        %v6055 = vmax.f32 %v6023, 0.0
        %v6056 = vmax.f32 %v6024, 0.0
        %v6057 = vmax.f32 %v6025, 0.0
        %v6058 = vmax.f32 %v6026, 0.0
        %v6059 = vmax.f32 %v6027, 0.0
        %v6060 = vmax.f32 %v6028, 0.0
        %v6061 = vmax.f32 %v6029, 0.0
        %v6062 = vmax.f32 %v6030, 0.0
        %v6063 = vmax.f32 %v6031, 0.0
        %v6064 = vmax.f32 %v6032, 0.0
        %v6065 = vmax.f32 %v6033, 0.0
        %v6066 = vmax.f32 %v6034, 0.0
        %v6067 = vmax.f32 %v6035, 0.0
        %v6068 = vmax.f32 %v6036, 0.0
        %v6069 = vmax.f32 %v6037, 0.0
        %v6070 = vmax.f32 %v6038, 0.0
        %v6071 = vmax.f32 %v6039, 0.0
        %v6072 = vmax.f32 %v6040, 0.0
        %v6073 = vmax.f32 %v6041, 0.0
        %v6074 = vmax.f32 %v6042, 0.0
        %v6075 = vmax.f32 %v6043, 0.0
        %v6076 = vmax.f32 %v6044, 0.0
        %v6077 = vmax.f32 %v6045, 0.0
        %v6078 = vmax.f32 %v6046, 0.0
        %v6079 = vmax.f32 %v6047, 0.0
        %v6080 = vmax.f32 %v6048, 0.0
        %v6081 = vmax.f32 %v6049, 0.0
        %v6082 = vmax.f32 %v6050, 0.0
        %v6083 = vmax.f32 %v6051, 0.0
        %v6084 = vmax.f32 %v6052, 0.0
        %v6085 = vmax.f32 %v6053, 0.0
        %6086 = vst [vmem:[%s217] sm:$0xff] %v6054
        %6087 = vst [vmem:[%s217 + $0x8] sm:$0xff] %v6055
        %6088 = vst [vmem:[%s217 + $0x10] sm:$0xff] %v6056
        %6089 = vst [vmem:[%s217 + $0x18] sm:$0xff] %v6057
        %6090 = vst [vmem:[%s217 + $0x20] sm:$0xff] %v6058
        %6091 = vst [vmem:[%s217 + $0x28] sm:$0xff] %v6059
        %6092 = vst [vmem:[%s217 + $0x30] sm:$0xff] %v6060
        %6093 = vst [vmem:[%s217 + $0x38] sm:$0xff] %v6061
        %6094 = vst [vmem:[%s217 + $0x40] sm:$0xff] %v6062
        %6095 = vst [vmem:[%s217 + $0x48] sm:$0xff] %v6063
        %6096 = vst [vmem:[%s217 + $0x50] sm:$0xff] %v6064
        %6097 = vst [vmem:[%s217 + $0x58] sm:$0xff] %v6065
        %6098 = vst [vmem:[%s217 + $0x60] sm:$0xff] %v6066
        %6099 = vst [vmem:[%s217 + $0x68] sm:$0xff] %v6067
        %6100 = vst [vmem:[%s217 + $0x70] sm:$0xff] %v6068
        %6101 = vst [vmem:[%s217 + $0x78] sm:$0xff] %v6069
        %6102 = vst [vmem:[%s217 + $0x80] sm:$0xff] %v6070
        %6103 = vst [vmem:[%s217 + $0x88] sm:$0xff] %v6071
        %6104 = vst [vmem:[%s217 + $0x90] sm:$0xff] %v6072
        %6105 = vst [vmem:[%s217 + $0x98] sm:$0xff] %v6073
        %6106 = vst [vmem:[%s217 + $0xa0] sm:$0xff] %v6074
        %6107 = vst [vmem:[%s217 + $0xa8] sm:$0xff] %v6075
        %6108 = vst [vmem:[%s217 + $0xb0] sm:$0xff] %v6076
        %6109 = vst [vmem:[%s217 + $0xb8] sm:$0xff] %v6077
        %6110 = vst [vmem:[%s217 + $0xc0] sm:$0xff] %v6078
        %6111 = vst [vmem:[%s217 + $0xc8] sm:$0xff] %v6079
        %6112 = vst [vmem:[%s217 + $0xd0] sm:$0xff] %v6080
        %6113 = vst [vmem:[%s217 + $0xd8] sm:$0xff] %v6081
        %6114 = vst [vmem:[%s217 + $0xe0] sm:$0xff] %v6082
        %6115 = vst [vmem:[%s217 + $0xe8] sm:$0xff] %v6083
        %6116 = vst [vmem:[%s217 + $0xf0] sm:$0xff] %v6084
        %6117 = vst [vmem:[%s217 + $0xf8] sm:$0xff] %v6085
        %s6118 = sand.u32 %s137, 1
        %s6119 = scalar_lea.sflag [#allocation5], %s6118
        %s6120 = sand.u32 %s137, 1
        %s6121 = smul.addr %s6120, 256
        %s6122 = scalar_lea.vmem [#allocation4], %s6121
        // Predicated region
        $region41: #{residual_forward.1} parent=39 // pred_check
          %p6123 = pneg %p147
        $region42: #{residual_forward.1} parent=39 // pred_check_branch
          %6125 = sbr.rel (%p6123) target = $region44
        $region43: #{residual_forward.1} parent=39 // pred_region
          %s6127 = ssub.s32 4096, 4096
          %6128 = vsyncadd %s6119, %s6127
          %s6129 = smul.addr %s19, 32
          %s6130 = smul.addr %s6129, 128
          %s6131 = scalar_lea.hbm %s5, %s6130
          %s6132 = sshll.u32 %s6122, 4
          %s6133 = int_to_ptr.vmem [resolvable:$true] %s6132
          %6138 = dma.vmem_to_hbm [thread:$0]  %s6133, 4096, %s6131, %s6119, 128, 128, 8
        $region44: #{residual_forward.1} parent=39 // pred_fallthru
          _
      $region40: #{residual_forward.1} parent=5 // pred_fallthru
        _
      %p6139 = scmp.le.s32.totalorder 2, %s14
      // Predicated region
      $region45: #{residual_forward.1} parent=5 // pred_check
        %p6140 = pneg %p6139
      $region46: #{residual_forward.1} parent=5 // pred_check_branch
        %6142 = sbr.rel (%p6140) target = $region48
      $region47: #{residual_forward.1} parent=5 // pred_region
        %s6143 = ssub.s32 %s14, 2
        // Predicated region
        $region49: #{residual_forward.1} parent=47 // pred_check
          %p6144 = pneg %p153
        $region50: #{residual_forward.1} parent=47 // pred_check_branch
          %6146 = sbr.rel (%p6144) target = $region52
        $region51: #{residual_forward.1} parent=47 // pred_region
          %s6147 = sand.u32 %s138, 1
          %s6148 = scalar_lea.sflag [#allocation5], %s6147
          %s6149 = sand.u32 %s138, 1
          %s6150 = smul.addr %s6149, 256
          %s6151 = scalar_lea.vmem [#allocation4], %s6150
          %6152 = dma.done %s6148, 4096
        $region52: #{residual_forward.1} parent=47 // pred_fallthru
          _
      $region48: #{residual_forward.1} parent=5 // pred_fallthru
        _
    $region6: #{residual_forward.1} parent=1 // loop_footer
      %s18 = sadd.s32 1, %s14
    $region7: #{residual_forward.1} parent=1 // loop_footer_branch
      %13 = sbr.rel target = $region3
    $region8: #{residual_forward.1} parent=1 // loop_exit
      _
    %6153 = vsyncpa [#allocation5], 1
    %s6154 = scalar_lea.sflag [#allocation5], 1
    %6155 = vsyncpa %s6154, 1

</llo_original>
